<compile_context>
chip_gen: v7x
topology: tpu7x:2x2x1
jax: 0.10.0
libtpu: 0.0.40
codegen_flags: <defaults>
</compile_context>

<pallas_src>
import functools
import math

import jax
import jax.numpy as jnp
from jax.experimental import pallas as pl
from jax.experimental.pallas import tpu as pltpu


# ----------------------------- helpers -------------------------------------

def _round_up(x, m):
    return ((x + m - 1) // m) * m


def _pick_tile(dim, prefs):
    for t in prefs:
        if dim % t == 0:
            return t
    return dim


_COMPILER_PARAMS_3D = pltpu.CompilerParams(
    dimension_semantics=("parallel", "parallel", "arbitrary"),
    vmem_limit_bytes=32 * 1024 * 1024)
_COMPILER_PARAMS_1D = pltpu.CompilerParams(
    dimension_semantics=("parallel",),
    vmem_limit_bytes=32 * 1024 * 1024)


# ------------------- fused conv(im2col-matmul)+BN(+ReLU/+res) ---------------

def _mm_bn_kernel(a_ref, b_ref, s_ref, c_ref, o_ref, acc_ref, *, relu):
    k = pl.program_id(2)

    @pl.when(k == 0)
    def _():
        acc_ref[...] = jnp.zeros_like(acc_ref)

    acc_ref[...] += jnp.dot(a_ref[...], b_ref[...],
                            preferred_element_type=jnp.float32)

    @pl.when(k == pl.num_programs(2) - 1)
    def _():
        y = acc_ref[...] * s_ref[...] + c_ref[...]
        if relu:
            y = jnp.maximum(y, 0.0)
        o_ref[...] = y.astype(o_ref.dtype)


def _mm_bn_res_relu_kernel(a_ref, b_ref, s_ref, c_ref, r_ref, o_ref, acc_ref):
    k = pl.program_id(2)

    @pl.when(k == 0)
    def _():
        acc_ref[...] = jnp.zeros_like(acc_ref)

    acc_ref[...] += jnp.dot(a_ref[...], b_ref[...],
                            preferred_element_type=jnp.float32)

    @pl.when(k == pl.num_programs(2) - 1)
    def _():
        y = acc_ref[...] * s_ref[...] + c_ref[...] + r_ref[...]
        o_ref[...] = jnp.maximum(y, 0.0).astype(o_ref.dtype)


def fused_conv_bn(x_nhwc, w_oihw, scale, bias, *, stride, pad, relu=True,
                  residual=None):
    """conv(no bias) + folded-BN scale/bias (+ReLU, +residual add), NHWC."""
    N, H, W, Cin = x_nhwc.shape
    Cout, Cin2, KH, KW = w_oihw.shape
    assert Cin == Cin2
    xp = jnp.pad(x_nhwc, ((0, 0), (pad, pad), (pad, pad), (0, 0)))
    OH = (H + 2 * pad - KH) // stride + 1
    OW = (W + 2 * pad - KW) // stride + 1

    # im2col (plain-JAX glue).
    cols = [xp[:, i:i + stride * OH:stride, j:j + stride * OW:stride, :]
            for i in range(KH) for j in range(KW)]
    patches = jnp.concatenate(cols, axis=-1).reshape(N * OH * OW, KH * KW * Cin)
    wmat = jnp.transpose(w_oihw, (2, 3, 1, 0)).reshape(KH * KW * Cin, Cout)

    M, K = patches.shape

    # Pad to (8,128)-aligned tiles; zero padding is exact for the matmul.
    Kp = _round_up(K, 128)
    Np = _round_up(Cout, 128)
    tk = _pick_tile(Kp, (512, 256, 128))
    tn = _pick_tile(Np, (256, 128))
    if M <= 256:
        Mp = _round_up(M, 8)
        tm = Mp
    else:
        tm = 256
        Mp = _round_up(M, tm)

    a = jnp.pad(patches, ((0, Mp - M), (0, Kp - K))).astype(jnp.bfloat16)
    b = jnp.pad(wmat, ((0, Kp - K), (0, Np - Cout))).astype(jnp.bfloat16)
    s = jnp.pad(scale.astype(jnp.float32), (0, Np - Cout)).reshape(1, Np)
    c = jnp.pad(bias.astype(jnp.float32), (0, Np - Cout)).reshape(1, Np)

    args = [a, b, s, c]
    in_specs = [
        pl.BlockSpec((tm, tk), lambda i, j, k: (i, k)),
        pl.BlockSpec((tk, tn), lambda i, j, k: (k, j)),
        pl.BlockSpec((1, tn), lambda i, j, k: (0, j)),
        pl.BlockSpec((1, tn), lambda i, j, k: (0, j)),
    ]
    if residual is not None:
        r = residual.reshape(M, Cout).astype(jnp.float32)
        r = jnp.pad(r, ((0, Mp - M), (0, Np - Cout)))
        args.append(r)
        in_specs.append(pl.BlockSpec((tm, tn), lambda i, j, k: (i, j)))
        kernel = _mm_bn_res_relu_kernel
    else:
        kernel = functools.partial(_mm_bn_kernel, relu=relu)

    out = pl.pallas_call(
        kernel,
        out_shape=jax.ShapeDtypeStruct((Mp, Np), jnp.float32),
        grid=(Mp // tm, Np // tn, Kp // tk),
        in_specs=in_specs,
        out_specs=pl.BlockSpec((tm, tn), lambda i, j, k: (i, j)),
        scratch_shapes=[pltpu.VMEM((tm, tn), jnp.float32)],
        compiler_params=_COMPILER_PARAMS_3D,
    )(*args)
    return out[:M, :Cout].reshape(N, OH, OW, Cout)


# ------------------------------- maxpool ------------------------------------

def _max9_kernel(*refs):
    *in_refs, o_ref = refs
    m = in_refs[0][...]
    for r in in_refs[1:]:
        m = jnp.maximum(m, r[...])
    o_ref[...] = m


def maxpool3x3s2(x_nhwc):
    N, H, W, C = x_nhwc.shape
    k, s, pad = 3, 2, 1
    xp = jnp.pad(x_nhwc, ((0, 0), (pad, pad), (pad, pad), (0, 0)),
                 constant_values=-jnp.inf)
    OH = (H + 2 * pad - k) // s + 1
    OW = (W + 2 * pad - k) // s + 1

    total = N * OH * OW * C
    if total % 128 == 0:           # lane-dense output (128 lanes), C=64 friendly
        rows, lanes = total // 128, 128
    else:
        rows, lanes = N * OH * OW, C

    views = [xp[:, i:i + s * OH:s, j:j + s * OW:s, :].reshape(rows, lanes)
             for i in range(k) for j in range(k)]

    if rows <= 2048:
        rb = _round_up(rows, 8)
    else:
        rb = 1024
    rows_p = _round_up(rows, rb)
    if rows_p != rows:
        views = [jnp.pad(v, ((0, rows_p - rows), (0, 0)),
                         constant_values=-jnp.inf) for v in views]

    out = pl.pallas_call(
        _max9_kernel,
        out_shape=jax.ShapeDtypeStruct((rows_p, lanes), x_nhwc.dtype),
        grid=(rows_p // rb,),
        in_specs=[pl.BlockSpec((rb, lanes), lambda i: (i, 0))
                  for _ in range(k * k)],
        out_specs=pl.BlockSpec((rb, lanes), lambda i: (i, 0)),
        compiler_params=_COMPILER_PARAMS_1D,
    )(*views)
    return out[:rows].reshape(N, OH, OW, C)


# --------------------------------- style -------------------------------------

def _style_kernel(e_ref, o_ref):
    e = e_ref[0]                                   # [HW, C] (C on lanes)
    hw = e.shape[0]
    mean = jnp.mean(e, axis=0, keepdims=True)
    c = e - mean
    # torch.std defaults to unbiased (divide by N-1)
    var = jnp.sum(c * c, axis=0, keepdims=True) * (1.0 / max(hw - 1, 1))
    std = jnp.sqrt(var) + 0.01
    en = c * pl.reciprocal(std, approx=True)
    # gram = Eᵀ E (contract over HW on both operands) -> [C, C]
    g = jax.lax.dot_general(en, en, (((0,), (0,)), ((), ())),
                            preferred_element_type=jnp.float32)
    o_ref[0] = g * (1.0 / hw)


def pallas_style(emb_bhw_c):
    B, HW, C = emb_bhw_c.shape
    return pl.pallas_call(
        _style_kernel,
        out_shape=jax.ShapeDtypeStruct((B, C, C), jnp.float32),
        grid=(B,),
        in_specs=[pl.BlockSpec((1, HW, C), lambda b: (b, 0, 0))],
        out_specs=pl.BlockSpec((1, C, C), lambda b: (b, 0, 0)),
        compiler_params=_COMPILER_PARAMS_1D,
    )(emb_bhw_c)


# ------------------------------- parameters ----------------------------------

def init_conv(key, cout, cin, kh, kw):
    fan_in = cin * kh * kw
    w = jax.random.normal(key, (cout, cin, kh, kw), jnp.float32)
    return w * (1.0 / math.sqrt(fan_in))


def init_bn(key, c, eps=1e-5):
    k1, k2, k3, k4 = jax.random.split(key, 4)
    gamma = 1.0 + 0.1 * jax.random.normal(k1, (c,), jnp.float32)
    beta = 0.1 * jax.random.normal(k2, (c,), jnp.float32)
    running_mean = 0.1 * jax.random.normal(k3, (c,), jnp.float32)
    running_var = 1.0 + 0.5 * jax.random.uniform(k4, (c,), jnp.float32)
    scale = gamma / jnp.sqrt(running_var + eps)
    bias = beta - running_mean * scale
    return (scale, bias)


def init_basic_block(key, cin, cout, stride):
    ks = jax.random.split(key, 6)
    p = {
        'conv1_w': init_conv(ks[0], cout, cin, 3, 3),
        'bn1': init_bn(ks[1], cout),
        'conv2_w': init_conv(ks[2], cout, cout, 3, 3),
        'bn2': init_bn(ks[3], cout),
    }
    if stride != 1 or cin != cout:
        p['ds_conv_w'] = init_conv(ks[4], cout, cin, 1, 1)
        p['ds_bn'] = init_bn(ks[5], cout)
    return p


def init_params(key):
    ks = jax.random.split(key, 6)
    return {
        'conv1_w': init_conv(ks[0], 64, 3, 7, 7),
        'bn1': init_bn(ks[1], 64),
        'layer1_0': init_basic_block(ks[2], 64, 64, 1),
        'layer1_1': init_basic_block(ks[3], 64, 64, 1),
        'layer2_0': init_basic_block(ks[4], 64, 128, 2),
        'layer2_1': init_basic_block(ks[5], 128, 128, 1),
    }


# -------------------------------- forward ------------------------------------

def basic_block(x, p, stride):
    identity = x
    out = fused_conv_bn(x, p['conv1_w'], *p['bn1'],
                        stride=stride, pad=1, relu=True)
    if 'ds_conv_w' in p:
        identity = fused_conv_bn(x, p['ds_conv_w'], *p['ds_bn'],
                                 stride=stride, pad=0, relu=False)
    # conv2 + bn2 + residual add + relu fused in one kernel epilogue
    return fused_conv_bn(out, p['conv2_w'], *p['bn2'],
                         stride=1, pad=1, relu=True, residual=identity)


def style_extractor_forward(x_nchw, params):
    # x: [N, 1, H, W] grayscale -> torch.cat([x, x, x], 1)
    x = jnp.concatenate([x_nchw, x_nchw, x_nchw], axis=1)
    x = (x - 0.456) / 0.225
    x = jnp.transpose(x, (0, 2, 3, 1))              # NCHW -> NHWC
    x = fused_conv_bn(x, params['conv1_w'], *params['bn1'],
                      stride=2, pad=3, relu=True)
    x = maxpool3x3s2(x)
    x = basic_block(x, params['layer1_0'], 1)
    x = basic_block(x, params['layer1_1'], 1)
    x = basic_block(x, params['layer2_0'], 2)
    x = basic_block(x, params['layer2_1'], 1)
    N, H, W, C = x.shape
    # [B, HW, C] gram over HW == torch's view(B, C, -1) gram over spatial dim.
    emb = x.reshape(N, H * W, C)
    return pallas_style(emb)                        # [B, C, C]


if __name__ == "__main__":
    key = jax.random.PRNGKey(0)
    kx, kp = jax.random.split(key)
    x = jax.random.normal(kx, (2, 1, 32, 32), jnp.float32)  # NCHW grayscale
    params = init_params(kp)
    out = jax.jit(style_extractor_forward)(x, params)
    out = jax.block_until_ready(out)
    assert out.shape == (2, 128, 128) and out.dtype == jnp.float32
    print("KERNEL_OK")
</pallas_src>

<mosaic_0001>
module attributes {stable_mosaic.version = 11 : i64} {
  func.func @_mm_bn_kernel(%arg0: i32, %arg1: i32, %arg2: i32, %arg3: memref<256x256xbf16, #tpu.memory_space<vmem>>, %arg4: memref<256x128xbf16, #tpu.memory_space<vmem>>, %arg5: memref<1x128xf32, #tpu.memory_space<vmem>>, %arg6: memref<1x128xf32, #tpu.memory_space<vmem>>, %arg7: memref<256x128xf32, #tpu.memory_space<vmem>>, %arg8: memref<256x128xf32, #tpu.memory_space<vmem>>) attributes {dimension_semantics = [#tpu.dimension_semantics<parallel>, #tpu.dimension_semantics<parallel>, #tpu.dimension_semantics<arbitrary>], iteration_bounds = array<i64: 2, 1, 1>, scalar_prefetch = 0 : i64, scratch_operands = 1 : i64, tpu.core_type = #tpu.core_type<tc>, window_params = [{transform_indices = @transform_0, window_bounds = array<i64: 256, 256>}, {transform_indices = @transform_1, window_bounds = array<i64: 256, 128>}, {transform_indices = @transform_2, window_bounds = array<i64: 1, 128>}, {transform_indices = @transform_3, window_bounds = array<i64: 1, 128>}, {transform_indices = @transform_4, window_bounds = array<i64: 256, 128>}]} {
    %c0_i32 = arith.constant 0 : i32
    %0 = arith.cmpi eq, %arg2, %c0_i32 : i32
    %1 = arith.extui %0 : i1 to i32
    %c0_i32_0 = arith.constant 0 : i32
    %2 = arith.cmpi ne, %1, %c0_i32_0 : i32
    scf.if %2 {
      %cst_10 = arith.constant 0.000000e+00 : f32
      %12 = vector.broadcast %cst_10 : f32 to vector<256x128xf32>
      %c0_11 = arith.constant 0 : index
      %c0_12 = arith.constant 0 : index
      %13 = vector.load %arg8[%c0_11, %c0_12] : memref<256x128xf32, #tpu.memory_space<vmem>>, vector<256x128xf32>
      tpu.vector_store %arg8[%c0_11, %c0_12], %12 {strides = array<i32>} : memref<256x128xf32, #tpu.memory_space<vmem>>, vector<256x128xf32>,
    } else {
    }
    %c0 = arith.constant 0 : index
    %c0_1 = arith.constant 0 : index
    %3 = vector.load %arg8[%c0, %c0_1] : memref<256x128xf32, #tpu.memory_space<vmem>>, vector<256x128xf32>
    %c0_2 = arith.constant 0 : index
    %c0_3 = arith.constant 0 : index
    %4 = vector.load %arg3[%c0_2, %c0_3] : memref<256x256xbf16, #tpu.memory_space<vmem>>, vector<256x256xbf16>
    %c0_4 = arith.constant 0 : index
    %c0_5 = arith.constant 0 : index
    %5 = vector.load %arg4[%c0_4, %c0_5] : memref<256x128xbf16, #tpu.memory_space<vmem>>, vector<256x128xbf16>
    %cst = arith.constant dense<0.000000e+00> : vector<256x128xf32>
    %6 = tpu.matmul %4, %5, %cst {dimension_numbers = #tpu.dot_dimension_numbers<[1], [0], [0], [1], [0, 0, 1, 1], [], []>} : vector<256x256xbf16>, vector<256x128xbf16>, vector<256x128xf32> -> vector<256x128xf32>
    %7 = arith.addf %3, %6 : vector<256x128xf32>
    %c0_6 = arith.constant 0 : index
    %c0_7 = arith.constant 0 : index
    %8 = vector.load %arg8[%c0_6, %c0_7] : memref<256x128xf32, #tpu.memory_space<vmem>>, vector<256x128xf32>
    tpu.vector_store %arg8[%c0_6, %c0_7], %7 {strides = array<i32>} : memref<256x128xf32, #tpu.memory_space<vmem>>, vector<256x128xf32>,
    %c0_i32_8 = arith.constant 0 : i32
    %9 = arith.cmpi eq, %arg2, %c0_i32_8 : i32
    %10 = arith.extui %9 : i1 to i32
    %c0_i32_9 = arith.constant 0 : i32
    %11 = arith.cmpi ne, %10, %c0_i32_9 : i32
    scf.if %11 {
      %c0_10 = arith.constant 0 : index
      %c0_11 = arith.constant 0 : index
      %12 = vector.load %arg8[%c0_10, %c0_11] : memref<256x128xf32, #tpu.memory_space<vmem>>, vector<256x128xf32>
      %c0_12 = arith.constant 0 : index
      %c0_13 = arith.constant 0 : index
      %13 = vector.load %arg5[%c0_12, %c0_13] : memref<1x128xf32, #tpu.memory_space<vmem>>, vector<1x128xf32>
      %14 = vector.broadcast %13 : vector<1x128xf32> to vector<256x128xf32>
      %15 = arith.mulf %12, %14 : vector<256x128xf32>
      %c0_14 = arith.constant 0 : index
      %c0_15 = arith.constant 0 : index
      %16 = vector.load %arg6[%c0_14, %c0_15] : memref<1x128xf32, #tpu.memory_space<vmem>>, vector<1x128xf32>
      %17 = vector.broadcast %16 : vector<1x128xf32> to vector<256x128xf32>
      %18 = arith.addf %15, %17 : vector<256x128xf32>
      %cst_16 = arith.constant 0.000000e+00 : f32
      %19 = vector.broadcast %cst_16 : f32 to vector<256x128xf32>
      %20 = arith.maximumf %18, %19 : vector<256x128xf32>
      %c0_17 = arith.constant 0 : index
      %c0_18 = arith.constant 0 : index
      %21 = vector.load %arg7[%c0_17, %c0_18] : memref<256x128xf32, #tpu.memory_space<vmem>>, vector<256x128xf32>
      tpu.vector_store %arg7[%c0_17, %c0_18], %20 {strides = array<i32>} : memref<256x128xf32, #tpu.memory_space<vmem>>, vector<256x128xf32>,
    } else {
    }
    return
  }
  func.func @transform_0(%arg0: i32, %arg1: i32, %arg2: i32) -> (i32, i32) {
    %c0_i32 = arith.constant 0 : i32
    return %arg0, %arg2 : i32, i32
  }
  func.func @transform_1(%arg0: i32, %arg1: i32, %arg2: i32) -> (i32, i32) {
    %c0_i32 = arith.constant 0 : i32
    return %arg2, %arg1 : i32, i32
  }
  func.func @transform_2(%arg0: i32, %arg1: i32, %arg2: i32) -> (i32, i32) {
    %c0_i32 = arith.constant 0 : i32
    %c0_i32_0 = arith.constant 0 : i32
    return %c0_i32, %arg1 : i32, i32
  }
  func.func @transform_3(%arg0: i32, %arg1: i32, %arg2: i32) -> (i32, i32) {
    %c0_i32 = arith.constant 0 : i32
    %c0_i32_0 = arith.constant 0 : i32
    return %c0_i32, %arg1 : i32, i32
  }
  func.func @transform_4(%arg0: i32, %arg1: i32, %arg2: i32) -> (i32, i32) {
    %c0_i32 = arith.constant 0 : i32
    return %arg0, %arg1 : i32, i32
  }
}

module attributes {stable_mosaic.version = 11 : i64} {
  func.func @_max9_kernel(%arg0: i32, %arg1: memref<64x128xf32, #tpu.memory_space<vmem>>, %arg2: memref<64x128xf32, #tpu.memory_space<vmem>>, %arg3: memref<64x128xf32, #tpu.memory_space<vmem>>, %arg4: memref<64x128xf32, #tpu.memory_space<vmem>>, %arg5: memref<64x128xf32, #tpu.memory_space<vmem>>, %arg6: memref<64x128xf32, #tpu.memory_space<vmem>>, %arg7: memref<64x128xf32, #tpu.memory_space<vmem>>, %arg8: memref<64x128xf32, #tpu.memory_space<vmem>>, %arg9: memref<64x128xf32, #tpu.memory_space<vmem>>, %arg10: memref<64x128xf32, #tpu.memory_space<vmem>>) attributes {dimension_semantics = [#tpu.dimension_semantics<parallel>], iteration_bounds = array<i64: 1>, scalar_prefetch = 0 : i64, scratch_operands = 0 : i64, tpu.core_type = #tpu.core_type<tc>, window_params = [{transform_indices = @transform_0, window_bounds = array<i64: 64, 128>}, {transform_indices = @transform_1, window_bounds = array<i64: 64, 128>}, {transform_indices = @transform_2, window_bounds = array<i64: 64, 128>}, {transform_indices = @transform_3, window_bounds = array<i64: 64, 128>}, {transform_indices = @transform_4, window_bounds = array<i64: 64, 128>}, {transform_indices = @transform_5, window_bounds = array<i64: 64, 128>}, {transform_indices = @transform_6, window_bounds = array<i64: 64, 128>}, {transform_indices = @transform_7, window_bounds = array<i64: 64, 128>}, {transform_indices = @transform_8, window_bounds = array<i64: 64, 128>}, {transform_indices = @transform_9, window_bounds = array<i64: 64, 128>}]} {
    %c0 = arith.constant 0 : index
    %c0_0 = arith.constant 0 : index
    %0 = vector.load %arg1[%c0, %c0_0] : memref<64x128xf32, #tpu.memory_space<vmem>>, vector<64x128xf32>
    %c0_1 = arith.constant 0 : index
    %c0_2 = arith.constant 0 : index
    %1 = vector.load %arg2[%c0_1, %c0_2] : memref<64x128xf32, #tpu.memory_space<vmem>>, vector<64x128xf32>
    %2 = arith.maximumf %0, %1 : vector<64x128xf32>
    %c0_3 = arith.constant 0 : index
    %c0_4 = arith.constant 0 : index
    %3 = vector.load %arg3[%c0_3, %c0_4] : memref<64x128xf32, #tpu.memory_space<vmem>>, vector<64x128xf32>
    %4 = arith.maximumf %2, %3 : vector<64x128xf32>
    %c0_5 = arith.constant 0 : index
    %c0_6 = arith.constant 0 : index
    %5 = vector.load %arg4[%c0_5, %c0_6] : memref<64x128xf32, #tpu.memory_space<vmem>>, vector<64x128xf32>
    %6 = arith.maximumf %4, %5 : vector<64x128xf32>
    %c0_7 = arith.constant 0 : index
    %c0_8 = arith.constant 0 : index
    %7 = vector.load %arg5[%c0_7, %c0_8] : memref<64x128xf32, #tpu.memory_space<vmem>>, vector<64x128xf32>
    %8 = arith.maximumf %6, %7 : vector<64x128xf32>
    %c0_9 = arith.constant 0 : index
    %c0_10 = arith.constant 0 : index
    %9 = vector.load %arg6[%c0_9, %c0_10] : memref<64x128xf32, #tpu.memory_space<vmem>>, vector<64x128xf32>
    %10 = arith.maximumf %8, %9 : vector<64x128xf32>
    %c0_11 = arith.constant 0 : index
    %c0_12 = arith.constant 0 : index
    %11 = vector.load %arg7[%c0_11, %c0_12] : memref<64x128xf32, #tpu.memory_space<vmem>>, vector<64x128xf32>
    %12 = arith.maximumf %10, %11 : vector<64x128xf32>
    %c0_13 = arith.constant 0 : index
    %c0_14 = arith.constant 0 : index
    %13 = vector.load %arg8[%c0_13, %c0_14] : memref<64x128xf32, #tpu.memory_space<vmem>>, vector<64x128xf32>
    %14 = arith.maximumf %12, %13 : vector<64x128xf32>
    %c0_15 = arith.constant 0 : index
    %c0_16 = arith.constant 0 : index
    %15 = vector.load %arg9[%c0_15, %c0_16] : memref<64x128xf32, #tpu.memory_space<vmem>>, vector<64x128xf32>
    %16 = arith.maximumf %14, %15 : vector<64x128xf32>
    %c0_17 = arith.constant 0 : index
    %c0_18 = arith.constant 0 : index
    %17 = vector.load %arg10[%c0_17, %c0_18] : memref<64x128xf32, #tpu.memory_space<vmem>>, vector<64x128xf32>
    tpu.vector_store %arg10[%c0_17, %c0_18], %16 {strides = array<i32>} : memref<64x128xf32, #tpu.memory_space<vmem>>, vector<64x128xf32>,
    return
  }
  func.func @transform_0(%arg0: i32) -> (i32, i32) {
    %c0_i32 = arith.constant 0 : i32
    %c0_i32_0 = arith.constant 0 : i32
    return %arg0, %c0_i32 : i32, i32
  }
  func.func @transform_1(%arg0: i32) -> (i32, i32) {
    %c0_i32 = arith.constant 0 : i32
    %c0_i32_0 = arith.constant 0 : i32
    return %arg0, %c0_i32 : i32, i32
  }
  func.func @transform_2(%arg0: i32) -> (i32, i32) {
    %c0_i32 = arith.constant 0 : i32
    %c0_i32_0 = arith.constant 0 : i32
    return %arg0, %c0_i32 : i32, i32
  }
  func.func @transform_3(%arg0: i32) -> (i32, i32) {
    %c0_i32 = arith.constant 0 : i32
    %c0_i32_0 = arith.constant 0 : i32
    return %arg0, %c0_i32 : i32, i32
  }
  func.func @transform_4(%arg0: i32) -> (i32, i32) {
    %c0_i32 = arith.constant 0 : i32
    %c0_i32_0 = arith.constant 0 : i32
    return %arg0, %c0_i32 : i32, i32
  }
  func.func @transform_5(%arg0: i32) -> (i32, i32) {
    %c0_i32 = arith.constant 0 : i32
    %c0_i32_0 = arith.constant 0 : i32
    return %arg0, %c0_i32 : i32, i32
  }
  func.func @transform_6(%arg0: i32) -> (i32, i32) {
    %c0_i32 = arith.constant 0 : i32
    %c0_i32_0 = arith.constant 0 : i32
    return %arg0, %c0_i32 : i32, i32
  }
  func.func @transform_7(%arg0: i32) -> (i32, i32) {
    %c0_i32 = arith.constant 0 : i32
    %c0_i32_0 = arith.constant 0 : i32
    return %arg0, %c0_i32 : i32, i32
  }
  func.func @transform_8(%arg0: i32) -> (i32, i32) {
    %c0_i32 = arith.constant 0 : i32
    %c0_i32_0 = arith.constant 0 : i32
    return %arg0, %c0_i32 : i32, i32
  }
  func.func @transform_9(%arg0: i32) -> (i32, i32) {
    %c0_i32 = arith.constant 0 : i32
    %c0_i32_0 = arith.constant 0 : i32
    return %arg0, %c0_i32 : i32, i32
  }
}

module attributes {stable_mosaic.version = 11 : i64} {
  func.func @_mm_bn_kernel(%arg0: i32, %arg1: i32, %arg2: i32, %arg3: memref<128x128xbf16, #tpu.memory_space<vmem>>, %arg4: memref<128x128xbf16, #tpu.memory_space<vmem>>, %arg5: memref<1x128xf32, #tpu.memory_space<vmem>>, %arg6: memref<1x128xf32, #tpu.memory_space<vmem>>, %arg7: memref<128x128xf32, #tpu.memory_space<vmem>>, %arg8: memref<128x128xf32, #tpu.memory_space<vmem>>) attributes {dimension_semantics = [#tpu.dimension_semantics<parallel>, #tpu.dimension_semantics<parallel>, #tpu.dimension_semantics<arbitrary>], iteration_bounds = array<i64: 1, 1, 5>, scalar_prefetch = 0 : i64, scratch_operands = 1 : i64, tpu.core_type = #tpu.core_type<tc>, window_params = [{transform_indices = @transform_0, window_bounds = array<i64: 128, 128>}, {transform_indices = @transform_1, window_bounds = array<i64: 128, 128>}, {transform_indices = @transform_2, window_bounds = array<i64: 1, 128>}, {transform_indices = @transform_3, window_bounds = array<i64: 1, 128>}, {transform_indices = @transform_4, window_bounds = array<i64: 128, 128>}]} {
    %c0_i32 = arith.constant 0 : i32
    %0 = arith.cmpi eq, %arg2, %c0_i32 : i32
    %1 = arith.extui %0 : i1 to i32
    %c0_i32_0 = arith.constant 0 : i32
    %2 = arith.cmpi ne, %1, %c0_i32_0 : i32
    scf.if %2 {
      %cst_9 = arith.constant 0.000000e+00 : f32
      %12 = vector.broadcast %cst_9 : f32 to vector<128x128xf32>
      %c0_10 = arith.constant 0 : index
      %c0_11 = arith.constant 0 : index
      %13 = vector.load %arg8[%c0_10, %c0_11] : memref<128x128xf32, #tpu.memory_space<vmem>>, vector<128x128xf32>
      tpu.vector_store %arg8[%c0_10, %c0_11], %12 {strides = array<i32>} : memref<128x128xf32, #tpu.memory_space<vmem>>, vector<128x128xf32>,
    } else {
    }
    %c0 = arith.constant 0 : index
    %c0_1 = arith.constant 0 : index
    %3 = vector.load %arg8[%c0, %c0_1] : memref<128x128xf32, #tpu.memory_space<vmem>>, vector<128x128xf32>
    %c0_2 = arith.constant 0 : index
    %c0_3 = arith.constant 0 : index
    %4 = vector.load %arg3[%c0_2, %c0_3] : memref<128x128xbf16, #tpu.memory_space<vmem>>, vector<128x128xbf16>
    %c0_4 = arith.constant 0 : index
    %c0_5 = arith.constant 0 : index
    %5 = vector.load %arg4[%c0_4, %c0_5] : memref<128x128xbf16, #tpu.memory_space<vmem>>, vector<128x128xbf16>
    %cst = arith.constant dense<0.000000e+00> : vector<128x128xf32>
    %6 = tpu.matmul %4, %5, %cst {dimension_numbers = #tpu.dot_dimension_numbers<[1], [0], [0], [1], [0, 0, 1, 1], [], []>} : vector<128x128xbf16>, vector<128x128xbf16>, vector<128x128xf32> -> vector<128x128xf32>
    %7 = arith.addf %3, %6 : vector<128x128xf32>
    %c0_6 = arith.constant 0 : index
    %c0_7 = arith.constant 0 : index
    %8 = vector.load %arg8[%c0_6, %c0_7] : memref<128x128xf32, #tpu.memory_space<vmem>>, vector<128x128xf32>
    tpu.vector_store %arg8[%c0_6, %c0_7], %7 {strides = array<i32>} : memref<128x128xf32, #tpu.memory_space<vmem>>, vector<128x128xf32>,
    %c4_i32 = arith.constant 4 : i32
    %9 = arith.cmpi eq, %arg2, %c4_i32 : i32
    %10 = arith.extui %9 : i1 to i32
    %c0_i32_8 = arith.constant 0 : i32
    %11 = arith.cmpi ne, %10, %c0_i32_8 : i32
    scf.if %11 {
      %c0_9 = arith.constant 0 : index
      %c0_10 = arith.constant 0 : index
      %12 = vector.load %arg8[%c0_9, %c0_10] : memref<128x128xf32, #tpu.memory_space<vmem>>, vector<128x128xf32>
      %c0_11 = arith.constant 0 : index
      %c0_12 = arith.constant 0 : index
      %13 = vector.load %arg5[%c0_11, %c0_12] : memref<1x128xf32, #tpu.memory_space<vmem>>, vector<1x128xf32>
      %14 = vector.broadcast %13 : vector<1x128xf32> to vector<128x128xf32>
      %15 = arith.mulf %12, %14 : vector<128x128xf32>
      %c0_13 = arith.constant 0 : index
      %c0_14 = arith.constant 0 : index
      %16 = vector.load %arg6[%c0_13, %c0_14] : memref<1x128xf32, #tpu.memory_space<vmem>>, vector<1x128xf32>
      %17 = vector.broadcast %16 : vector<1x128xf32> to vector<128x128xf32>
      %18 = arith.addf %15, %17 : vector<128x128xf32>
      %cst_15 = arith.constant 0.000000e+00 : f32
      %19 = vector.broadcast %cst_15 : f32 to vector<128x128xf32>
      %20 = arith.maximumf %18, %19 : vector<128x128xf32>
      %c0_16 = arith.constant 0 : index
      %c0_17 = arith.constant 0 : index
      %21 = vector.load %arg7[%c0_16, %c0_17] : memref<128x128xf32, #tpu.memory_space<vmem>>, vector<128x128xf32>
      tpu.vector_store %arg7[%c0_16, %c0_17], %20 {strides = array<i32>} : memref<128x128xf32, #tpu.memory_space<vmem>>, vector<128x128xf32>,
    } else {
    }
    return
  }
  func.func @transform_0(%arg0: i32, %arg1: i32, %arg2: i32) -> (i32, i32) {
    %c0_i32 = arith.constant 0 : i32
    return %arg0, %arg2 : i32, i32
  }
  func.func @transform_1(%arg0: i32, %arg1: i32, %arg2: i32) -> (i32, i32) {
    %c0_i32 = arith.constant 0 : i32
    return %arg2, %arg1 : i32, i32
  }
  func.func @transform_2(%arg0: i32, %arg1: i32, %arg2: i32) -> (i32, i32) {
    %c0_i32 = arith.constant 0 : i32
    %c0_i32_0 = arith.constant 0 : i32
    return %c0_i32, %arg1 : i32, i32
  }
  func.func @transform_3(%arg0: i32, %arg1: i32, %arg2: i32) -> (i32, i32) {
    %c0_i32 = arith.constant 0 : i32
    %c0_i32_0 = arith.constant 0 : i32
    return %c0_i32, %arg1 : i32, i32
  }
  func.func @transform_4(%arg0: i32, %arg1: i32, %arg2: i32) -> (i32, i32) {
    %c0_i32 = arith.constant 0 : i32
    return %arg0, %arg1 : i32, i32
  }
}

module attributes {stable_mosaic.version = 11 : i64} {
  func.func @_mm_bn_res_relu_kernel(%arg0: i32, %arg1: i32, %arg2: i32, %arg3: memref<128x128xbf16, #tpu.memory_space<vmem>>, %arg4: memref<128x128xbf16, #tpu.memory_space<vmem>>, %arg5: memref<1x128xf32, #tpu.memory_space<vmem>>, %arg6: memref<1x128xf32, #tpu.memory_space<vmem>>, %arg7: memref<128x128xf32, #tpu.memory_space<vmem>>, %arg8: memref<128x128xf32, #tpu.memory_space<vmem>>, %arg9: memref<128x128xf32, #tpu.memory_space<vmem>>) attributes {dimension_semantics = [#tpu.dimension_semantics<parallel>, #tpu.dimension_semantics<parallel>, #tpu.dimension_semantics<arbitrary>], iteration_bounds = array<i64: 1, 1, 5>, scalar_prefetch = 0 : i64, scratch_operands = 1 : i64, tpu.core_type = #tpu.core_type<tc>, window_params = [{transform_indices = @transform_0, window_bounds = array<i64: 128, 128>}, {transform_indices = @transform_1, window_bounds = array<i64: 128, 128>}, {transform_indices = @transform_2, window_bounds = array<i64: 1, 128>}, {transform_indices = @transform_3, window_bounds = array<i64: 1, 128>}, {transform_indices = @transform_4, window_bounds = array<i64: 128, 128>}, {transform_indices = @transform_5, window_bounds = array<i64: 128, 128>}]} {
    %c0_i32 = arith.constant 0 : i32
    %0 = arith.cmpi eq, %arg2, %c0_i32 : i32
    %1 = arith.extui %0 : i1 to i32
    %c0_i32_0 = arith.constant 0 : i32
    %2 = arith.cmpi ne, %1, %c0_i32_0 : i32
    scf.if %2 {
      %cst_9 = arith.constant 0.000000e+00 : f32
      %12 = vector.broadcast %cst_9 : f32 to vector<128x128xf32>
      %c0_10 = arith.constant 0 : index
      %c0_11 = arith.constant 0 : index
      %13 = vector.load %arg9[%c0_10, %c0_11] : memref<128x128xf32, #tpu.memory_space<vmem>>, vector<128x128xf32>
      tpu.vector_store %arg9[%c0_10, %c0_11], %12 {strides = array<i32>} : memref<128x128xf32, #tpu.memory_space<vmem>>, vector<128x128xf32>,
    } else {
    }
    %c0 = arith.constant 0 : index
    %c0_1 = arith.constant 0 : index
    %3 = vector.load %arg9[%c0, %c0_1] : memref<128x128xf32, #tpu.memory_space<vmem>>, vector<128x128xf32>
    %c0_2 = arith.constant 0 : index
    %c0_3 = arith.constant 0 : index
    %4 = vector.load %arg3[%c0_2, %c0_3] : memref<128x128xbf16, #tpu.memory_space<vmem>>, vector<128x128xbf16>
    %c0_4 = arith.constant 0 : index
    %c0_5 = arith.constant 0 : index
    %5 = vector.load %arg4[%c0_4, %c0_5] : memref<128x128xbf16, #tpu.memory_space<vmem>>, vector<128x128xbf16>
    %cst = arith.constant dense<0.000000e+00> : vector<128x128xf32>
    %6 = tpu.matmul %4, %5, %cst {dimension_numbers = #tpu.dot_dimension_numbers<[1], [0], [0], [1], [0, 0, 1, 1], [], []>} : vector<128x128xbf16>, vector<128x128xbf16>, vector<128x128xf32> -> vector<128x128xf32>
    %7 = arith.addf %3, %6 : vector<128x128xf32>
    %c0_6 = arith.constant 0 : index
    %c0_7 = arith.constant 0 : index
    %8 = vector.load %arg9[%c0_6, %c0_7] : memref<128x128xf32, #tpu.memory_space<vmem>>, vector<128x128xf32>
    tpu.vector_store %arg9[%c0_6, %c0_7], %7 {strides = array<i32>} : memref<128x128xf32, #tpu.memory_space<vmem>>, vector<128x128xf32>,
    %c4_i32 = arith.constant 4 : i32
    %9 = arith.cmpi eq, %arg2, %c4_i32 : i32
    %10 = arith.extui %9 : i1 to i32
    %c0_i32_8 = arith.constant 0 : i32
    %11 = arith.cmpi ne, %10, %c0_i32_8 : i32
    scf.if %11 {
      %c0_9 = arith.constant 0 : index
      %c0_10 = arith.constant 0 : index
      %12 = vector.load %arg9[%c0_9, %c0_10] : memref<128x128xf32, #tpu.memory_space<vmem>>, vector<128x128xf32>
      %c0_11 = arith.constant 0 : index
      %c0_12 = arith.constant 0 : index
      %13 = vector.load %arg5[%c0_11, %c0_12] : memref<1x128xf32, #tpu.memory_space<vmem>>, vector<1x128xf32>
      %14 = vector.broadcast %13 : vector<1x128xf32> to vector<128x128xf32>
      %15 = arith.mulf %12, %14 : vector<128x128xf32>
      %c0_13 = arith.constant 0 : index
      %c0_14 = arith.constant 0 : index
      %16 = vector.load %arg6[%c0_13, %c0_14] : memref<1x128xf32, #tpu.memory_space<vmem>>, vector<1x128xf32>
      %17 = vector.broadcast %16 : vector<1x128xf32> to vector<128x128xf32>
      %18 = arith.addf %15, %17 : vector<128x128xf32>
      %c0_15 = arith.constant 0 : index
      %c0_16 = arith.constant 0 : index
      %19 = vector.load %arg7[%c0_15, %c0_16] : memref<128x128xf32, #tpu.memory_space<vmem>>, vector<128x128xf32>
      %20 = arith.addf %18, %19 : vector<128x128xf32>
      %cst_17 = arith.constant 0.000000e+00 : f32
      %21 = vector.broadcast %cst_17 : f32 to vector<128x128xf32>
      %22 = arith.maximumf %20, %21 : vector<128x128xf32>
      %c0_18 = arith.constant 0 : index
      %c0_19 = arith.constant 0 : index
      %23 = vector.load %arg8[%c0_18, %c0_19] : memref<128x128xf32, #tpu.memory_space<vmem>>, vector<128x128xf32>
      tpu.vector_store %arg8[%c0_18, %c0_19], %22 {strides = array<i32>} : memref<128x128xf32, #tpu.memory_space<vmem>>, vector<128x128xf32>,
    } else {
    }
    return
  }
  func.func @transform_0(%arg0: i32, %arg1: i32, %arg2: i32) -> (i32, i32) {
    %c0_i32 = arith.constant 0 : i32
    return %arg0, %arg2 : i32, i32
  }
  func.func @transform_1(%arg0: i32, %arg1: i32, %arg2: i32) -> (i32, i32) {
    %c0_i32 = arith.constant 0 : i32
    return %arg2, %arg1 : i32, i32
  }
  func.func @transform_2(%arg0: i32, %arg1: i32, %arg2: i32) -> (i32, i32) {
    %c0_i32 = arith.constant 0 : i32
    %c0_i32_0 = arith.constant 0 : i32
    return %c0_i32, %arg1 : i32, i32
  }
  func.func @transform_3(%arg0: i32, %arg1: i32, %arg2: i32) -> (i32, i32) {
    %c0_i32 = arith.constant 0 : i32
    %c0_i32_0 = arith.constant 0 : i32
    return %c0_i32, %arg1 : i32, i32
  }
  func.func @transform_4(%arg0: i32, %arg1: i32, %arg2: i32) -> (i32, i32) {
    %c0_i32 = arith.constant 0 : i32
    return %arg0, %arg1 : i32, i32
  }
  func.func @transform_5(%arg0: i32, %arg1: i32, %arg2: i32) -> (i32, i32) {
    %c0_i32 = arith.constant 0 : i32
    return %arg0, %arg1 : i32, i32
  }
}

module attributes {stable_mosaic.version = 11 : i64} {
  func.func @_mm_bn_kernel(%arg0: i32, %arg1: i32, %arg2: i32, %arg3: memref<32x128xbf16, #tpu.memory_space<vmem>>, %arg4: memref<128x128xbf16, #tpu.memory_space<vmem>>, %arg5: memref<1x128xf32, #tpu.memory_space<vmem>>, %arg6: memref<1x128xf32, #tpu.memory_space<vmem>>, %arg7: memref<32x128xf32, #tpu.memory_space<vmem>>, %arg8: memref<32x128xf32, #tpu.memory_space<vmem>>) attributes {dimension_semantics = [#tpu.dimension_semantics<parallel>, #tpu.dimension_semantics<parallel>, #tpu.dimension_semantics<arbitrary>], iteration_bounds = array<i64: 1, 1, 5>, scalar_prefetch = 0 : i64, scratch_operands = 1 : i64, tpu.core_type = #tpu.core_type<tc>, window_params = [{transform_indices = @transform_0, window_bounds = array<i64: 32, 128>}, {transform_indices = @transform_1, window_bounds = array<i64: 128, 128>}, {transform_indices = @transform_2, window_bounds = array<i64: 1, 128>}, {transform_indices = @transform_3, window_bounds = array<i64: 1, 128>}, {transform_indices = @transform_4, window_bounds = array<i64: 32, 128>}]} {
    %c0_i32 = arith.constant 0 : i32
    %0 = arith.cmpi eq, %arg2, %c0_i32 : i32
    %1 = arith.extui %0 : i1 to i32
    %c0_i32_0 = arith.constant 0 : i32
    %2 = arith.cmpi ne, %1, %c0_i32_0 : i32
    scf.if %2 {
      %cst_9 = arith.constant 0.000000e+00 : f32
      %12 = vector.broadcast %cst_9 : f32 to vector<32x128xf32>
      %c0_10 = arith.constant 0 : index
      %c0_11 = arith.constant 0 : index
      %13 = vector.load %arg8[%c0_10, %c0_11] : memref<32x128xf32, #tpu.memory_space<vmem>>, vector<32x128xf32>
      tpu.vector_store %arg8[%c0_10, %c0_11], %12 {strides = array<i32>} : memref<32x128xf32, #tpu.memory_space<vmem>>, vector<32x128xf32>,
    } else {
    }
    %c0 = arith.constant 0 : index
    %c0_1 = arith.constant 0 : index
    %3 = vector.load %arg8[%c0, %c0_1] : memref<32x128xf32, #tpu.memory_space<vmem>>, vector<32x128xf32>
    %c0_2 = arith.constant 0 : index
    %c0_3 = arith.constant 0 : index
    %4 = vector.load %arg3[%c0_2, %c0_3] : memref<32x128xbf16, #tpu.memory_space<vmem>>, vector<32x128xbf16>
    %c0_4 = arith.constant 0 : index
    %c0_5 = arith.constant 0 : index
    %5 = vector.load %arg4[%c0_4, %c0_5] : memref<128x128xbf16, #tpu.memory_space<vmem>>, vector<128x128xbf16>
    %cst = arith.constant dense<0.000000e+00> : vector<32x128xf32>
    %6 = tpu.matmul %4, %5, %cst {dimension_numbers = #tpu.dot_dimension_numbers<[1], [0], [0], [1], [0, 0, 1, 1], [], []>} : vector<32x128xbf16>, vector<128x128xbf16>, vector<32x128xf32> -> vector<32x128xf32>
    %7 = arith.addf %3, %6 : vector<32x128xf32>
    %c0_6 = arith.constant 0 : index
    %c0_7 = arith.constant 0 : index
    %8 = vector.load %arg8[%c0_6, %c0_7] : memref<32x128xf32, #tpu.memory_space<vmem>>, vector<32x128xf32>
    tpu.vector_store %arg8[%c0_6, %c0_7], %7 {strides = array<i32>} : memref<32x128xf32, #tpu.memory_space<vmem>>, vector<32x128xf32>,
    %c4_i32 = arith.constant 4 : i32
    %9 = arith.cmpi eq, %arg2, %c4_i32 : i32
    %10 = arith.extui %9 : i1 to i32
    %c0_i32_8 = arith.constant 0 : i32
    %11 = arith.cmpi ne, %10, %c0_i32_8 : i32
    scf.if %11 {
      %c0_9 = arith.constant 0 : index
      %c0_10 = arith.constant 0 : index
      %12 = vector.load %arg8[%c0_9, %c0_10] : memref<32x128xf32, #tpu.memory_space<vmem>>, vector<32x128xf32>
      %c0_11 = arith.constant 0 : index
      %c0_12 = arith.constant 0 : index
      %13 = vector.load %arg5[%c0_11, %c0_12] : memref<1x128xf32, #tpu.memory_space<vmem>>, vector<1x128xf32>
      %14 = vector.broadcast %13 : vector<1x128xf32> to vector<32x128xf32>
      %15 = arith.mulf %12, %14 : vector<32x128xf32>
      %c0_13 = arith.constant 0 : index
      %c0_14 = arith.constant 0 : index
      %16 = vector.load %arg6[%c0_13, %c0_14] : memref<1x128xf32, #tpu.memory_space<vmem>>, vector<1x128xf32>
      %17 = vector.broadcast %16 : vector<1x128xf32> to vector<32x128xf32>
      %18 = arith.addf %15, %17 : vector<32x128xf32>
      %cst_15 = arith.constant 0.000000e+00 : f32
      %19 = vector.broadcast %cst_15 : f32 to vector<32x128xf32>
      %20 = arith.maximumf %18, %19 : vector<32x128xf32>
      %c0_16 = arith.constant 0 : index
      %c0_17 = arith.constant 0 : index
      %21 = vector.load %arg7[%c0_16, %c0_17] : memref<32x128xf32, #tpu.memory_space<vmem>>, vector<32x128xf32>
      tpu.vector_store %arg7[%c0_16, %c0_17], %20 {strides = array<i32>} : memref<32x128xf32, #tpu.memory_space<vmem>>, vector<32x128xf32>,
    } else {
    }
    return
  }
  func.func @transform_0(%arg0: i32, %arg1: i32, %arg2: i32) -> (i32, i32) {
    %c0_i32 = arith.constant 0 : i32
    return %arg0, %arg2 : i32, i32
  }
  func.func @transform_1(%arg0: i32, %arg1: i32, %arg2: i32) -> (i32, i32) {
    %c0_i32 = arith.constant 0 : i32
    return %arg2, %arg1 : i32, i32
  }
  func.func @transform_2(%arg0: i32, %arg1: i32, %arg2: i32) -> (i32, i32) {
    %c0_i32 = arith.constant 0 : i32
    %c0_i32_0 = arith.constant 0 : i32
    return %c0_i32, %arg1 : i32, i32
  }
  func.func @transform_3(%arg0: i32, %arg1: i32, %arg2: i32) -> (i32, i32) {
    %c0_i32 = arith.constant 0 : i32
    %c0_i32_0 = arith.constant 0 : i32
    return %c0_i32, %arg1 : i32, i32
  }
  func.func @transform_4(%arg0: i32, %arg1: i32, %arg2: i32) -> (i32, i32) {
    %c0_i32 = arith.constant 0 : i32
    return %arg0, %arg1 : i32, i32
  }
}

module attributes {stable_mosaic.version = 11 : i64} {
  func.func @_mm_bn_kernel(%arg0: i32, %arg1: i32, %arg2: i32, %arg3: memref<32x128xbf16, #tpu.memory_space<vmem>>, %arg4: memref<128x128xbf16, #tpu.memory_space<vmem>>, %arg5: memref<1x128xf32, #tpu.memory_space<vmem>>, %arg6: memref<1x128xf32, #tpu.memory_space<vmem>>, %arg7: memref<32x128xf32, #tpu.memory_space<vmem>>, %arg8: memref<32x128xf32, #tpu.memory_space<vmem>>) attributes {dimension_semantics = [#tpu.dimension_semantics<parallel>, #tpu.dimension_semantics<parallel>, #tpu.dimension_semantics<arbitrary>], iteration_bounds = array<i64: 1, 1, 1>, scalar_prefetch = 0 : i64, scratch_operands = 1 : i64, tpu.core_type = #tpu.core_type<tc>, window_params = [{transform_indices = @transform_0, window_bounds = array<i64: 32, 128>}, {transform_indices = @transform_1, window_bounds = array<i64: 128, 128>}, {transform_indices = @transform_2, window_bounds = array<i64: 1, 128>}, {transform_indices = @transform_3, window_bounds = array<i64: 1, 128>}, {transform_indices = @transform_4, window_bounds = array<i64: 32, 128>}]} {
    %c0_i32 = arith.constant 0 : i32
    %0 = arith.cmpi eq, %arg2, %c0_i32 : i32
    %1 = arith.extui %0 : i1 to i32
    %c0_i32_0 = arith.constant 0 : i32
    %2 = arith.cmpi ne, %1, %c0_i32_0 : i32
    scf.if %2 {
      %cst_10 = arith.constant 0.000000e+00 : f32
      %12 = vector.broadcast %cst_10 : f32 to vector<32x128xf32>
      %c0_11 = arith.constant 0 : index
      %c0_12 = arith.constant 0 : index
      %13 = vector.load %arg8[%c0_11, %c0_12] : memref<32x128xf32, #tpu.memory_space<vmem>>, vector<32x128xf32>
      tpu.vector_store %arg8[%c0_11, %c0_12], %12 {strides = array<i32>} : memref<32x128xf32, #tpu.memory_space<vmem>>, vector<32x128xf32>,
    } else {
    }
    %c0 = arith.constant 0 : index
    %c0_1 = arith.constant 0 : index
    %3 = vector.load %arg8[%c0, %c0_1] : memref<32x128xf32, #tpu.memory_space<vmem>>, vector<32x128xf32>
    %c0_2 = arith.constant 0 : index
    %c0_3 = arith.constant 0 : index
    %4 = vector.load %arg3[%c0_2, %c0_3] : memref<32x128xbf16, #tpu.memory_space<vmem>>, vector<32x128xbf16>
    %c0_4 = arith.constant 0 : index
    %c0_5 = arith.constant 0 : index
    %5 = vector.load %arg4[%c0_4, %c0_5] : memref<128x128xbf16, #tpu.memory_space<vmem>>, vector<128x128xbf16>
    %cst = arith.constant dense<0.000000e+00> : vector<32x128xf32>
    %6 = tpu.matmul %4, %5, %cst {dimension_numbers = #tpu.dot_dimension_numbers<[1], [0], [0], [1], [0, 0, 1, 1], [], []>} : vector<32x128xbf16>, vector<128x128xbf16>, vector<32x128xf32> -> vector<32x128xf32>
    %7 = arith.addf %3, %6 : vector<32x128xf32>
    %c0_6 = arith.constant 0 : index
    %c0_7 = arith.constant 0 : index
    %8 = vector.load %arg8[%c0_6, %c0_7] : memref<32x128xf32, #tpu.memory_space<vmem>>, vector<32x128xf32>
    tpu.vector_store %arg8[%c0_6, %c0_7], %7 {strides = array<i32>} : memref<32x128xf32, #tpu.memory_space<vmem>>, vector<32x128xf32>,
    %c0_i32_8 = arith.constant 0 : i32
    %9 = arith.cmpi eq, %arg2, %c0_i32_8 : i32
    %10 = arith.extui %9 : i1 to i32
    %c0_i32_9 = arith.constant 0 : i32
    %11 = arith.cmpi ne, %10, %c0_i32_9 : i32
    scf.if %11 {
      %c0_10 = arith.constant 0 : index
      %c0_11 = arith.constant 0 : index
      %12 = vector.load %arg8[%c0_10, %c0_11] : memref<32x128xf32, #tpu.memory_space<vmem>>, vector<32x128xf32>
      %c0_12 = arith.constant 0 : index
      %c0_13 = arith.constant 0 : index
      %13 = vector.load %arg5[%c0_12, %c0_13] : memref<1x128xf32, #tpu.memory_space<vmem>>, vector<1x128xf32>
      %14 = vector.broadcast %13 : vector<1x128xf32> to vector<32x128xf32>
      %15 = arith.mulf %12, %14 : vector<32x128xf32>
      %c0_14 = arith.constant 0 : index
      %c0_15 = arith.constant 0 : index
      %16 = vector.load %arg6[%c0_14, %c0_15] : memref<1x128xf32, #tpu.memory_space<vmem>>, vector<1x128xf32>
      %17 = vector.broadcast %16 : vector<1x128xf32> to vector<32x128xf32>
      %18 = arith.addf %15, %17 : vector<32x128xf32>
      %c0_16 = arith.constant 0 : index
      %c0_17 = arith.constant 0 : index
      %19 = vector.load %arg7[%c0_16, %c0_17] : memref<32x128xf32, #tpu.memory_space<vmem>>, vector<32x128xf32>
      tpu.vector_store %arg7[%c0_16, %c0_17], %18 {strides = array<i32>} : memref<32x128xf32, #tpu.memory_space<vmem>>, vector<32x128xf32>,
    } else {
    }
    return
  }
  func.func @transform_0(%arg0: i32, %arg1: i32, %arg2: i32) -> (i32, i32) {
    %c0_i32 = arith.constant 0 : i32
    return %arg0, %arg2 : i32, i32
  }
  func.func @transform_1(%arg0: i32, %arg1: i32, %arg2: i32) -> (i32, i32) {
    %c0_i32 = arith.constant 0 : i32
    return %arg2, %arg1 : i32, i32
  }
  func.func @transform_2(%arg0: i32, %arg1: i32, %arg2: i32) -> (i32, i32) {
    %c0_i32 = arith.constant 0 : i32
    %c0_i32_0 = arith.constant 0 : i32
    return %c0_i32, %arg1 : i32, i32
  }
  func.func @transform_3(%arg0: i32, %arg1: i32, %arg2: i32) -> (i32, i32) {
    %c0_i32 = arith.constant 0 : i32
    %c0_i32_0 = arith.constant 0 : i32
    return %c0_i32, %arg1 : i32, i32
  }
  func.func @transform_4(%arg0: i32, %arg1: i32, %arg2: i32) -> (i32, i32) {
    %c0_i32 = arith.constant 0 : i32
    return %arg0, %arg1 : i32, i32
  }
}

module attributes {stable_mosaic.version = 11 : i64} {
  func.func @_mm_bn_res_relu_kernel(%arg0: i32, %arg1: i32, %arg2: i32, %arg3: memref<32x128xbf16, #tpu.memory_space<vmem>>, %arg4: memref<128x128xbf16, #tpu.memory_space<vmem>>, %arg5: memref<1x128xf32, #tpu.memory_space<vmem>>, %arg6: memref<1x128xf32, #tpu.memory_space<vmem>>, %arg7: memref<32x128xf32, #tpu.memory_space<vmem>>, %arg8: memref<32x128xf32, #tpu.memory_space<vmem>>, %arg9: memref<32x128xf32, #tpu.memory_space<vmem>>) attributes {dimension_semantics = [#tpu.dimension_semantics<parallel>, #tpu.dimension_semantics<parallel>, #tpu.dimension_semantics<arbitrary>], iteration_bounds = array<i64: 1, 1, 9>, scalar_prefetch = 0 : i64, scratch_operands = 1 : i64, tpu.core_type = #tpu.core_type<tc>, window_params = [{transform_indices = @transform_0, window_bounds = array<i64: 32, 128>}, {transform_indices = @transform_1, window_bounds = array<i64: 128, 128>}, {transform_indices = @transform_2, window_bounds = array<i64: 1, 128>}, {transform_indices = @transform_3, window_bounds = array<i64: 1, 128>}, {transform_indices = @transform_4, window_bounds = array<i64: 32, 128>}, {transform_indices = @transform_5, window_bounds = array<i64: 32, 128>}]} {
    %c0_i32 = arith.constant 0 : i32
    %0 = arith.cmpi eq, %arg2, %c0_i32 : i32
    %1 = arith.extui %0 : i1 to i32
    %c0_i32_0 = arith.constant 0 : i32
    %2 = arith.cmpi ne, %1, %c0_i32_0 : i32
    scf.if %2 {
      %cst_9 = arith.constant 0.000000e+00 : f32
      %12 = vector.broadcast %cst_9 : f32 to vector<32x128xf32>
      %c0_10 = arith.constant 0 : index
      %c0_11 = arith.constant 0 : index
      %13 = vector.load %arg9[%c0_10, %c0_11] : memref<32x128xf32, #tpu.memory_space<vmem>>, vector<32x128xf32>
      tpu.vector_store %arg9[%c0_10, %c0_11], %12 {strides = array<i32>} : memref<32x128xf32, #tpu.memory_space<vmem>>, vector<32x128xf32>,
    } else {
    }
    %c0 = arith.constant 0 : index
    %c0_1 = arith.constant 0 : index
    %3 = vector.load %arg9[%c0, %c0_1] : memref<32x128xf32, #tpu.memory_space<vmem>>, vector<32x128xf32>
    %c0_2 = arith.constant 0 : index
    %c0_3 = arith.constant 0 : index
    %4 = vector.load %arg3[%c0_2, %c0_3] : memref<32x128xbf16, #tpu.memory_space<vmem>>, vector<32x128xbf16>
    %c0_4 = arith.constant 0 : index
    %c0_5 = arith.constant 0 : index
    %5 = vector.load %arg4[%c0_4, %c0_5] : memref<128x128xbf16, #tpu.memory_space<vmem>>, vector<128x128xbf16>
    %cst = arith.constant dense<0.000000e+00> : vector<32x128xf32>
    %6 = tpu.matmul %4, %5, %cst {dimension_numbers = #tpu.dot_dimension_numbers<[1], [0], [0], [1], [0, 0, 1, 1], [], []>} : vector<32x128xbf16>, vector<128x128xbf16>, vector<32x128xf32> -> vector<32x128xf32>
    %7 = arith.addf %3, %6 : vector<32x128xf32>
    %c0_6 = arith.constant 0 : index
    %c0_7 = arith.constant 0 : index
    %8 = vector.load %arg9[%c0_6, %c0_7] : memref<32x128xf32, #tpu.memory_space<vmem>>, vector<32x128xf32>
    tpu.vector_store %arg9[%c0_6, %c0_7], %7 {strides = array<i32>} : memref<32x128xf32, #tpu.memory_space<vmem>>, vector<32x128xf32>,
    %c8_i32 = arith.constant 8 : i32
    %9 = arith.cmpi eq, %arg2, %c8_i32 : i32
    %10 = arith.extui %9 : i1 to i32
    %c0_i32_8 = arith.constant 0 : i32
    %11 = arith.cmpi ne, %10, %c0_i32_8 : i32
    scf.if %11 {
      %c0_9 = arith.constant 0 : index
      %c0_10 = arith.constant 0 : index
      %12 = vector.load %arg9[%c0_9, %c0_10] : memref<32x128xf32, #tpu.memory_space<vmem>>, vector<32x128xf32>
      %c0_11 = arith.constant 0 : index
      %c0_12 = arith.constant 0 : index
      %13 = vector.load %arg5[%c0_11, %c0_12] : memref<1x128xf32, #tpu.memory_space<vmem>>, vector<1x128xf32>
      %14 = vector.broadcast %13 : vector<1x128xf32> to vector<32x128xf32>
      %15 = arith.mulf %12, %14 : vector<32x128xf32>
      %c0_13 = arith.constant 0 : index
      %c0_14 = arith.constant 0 : index
      %16 = vector.load %arg6[%c0_13, %c0_14] : memref<1x128xf32, #tpu.memory_space<vmem>>, vector<1x128xf32>
      %17 = vector.broadcast %16 : vector<1x128xf32> to vector<32x128xf32>
      %18 = arith.addf %15, %17 : vector<32x128xf32>
      %c0_15 = arith.constant 0 : index
      %c0_16 = arith.constant 0 : index
      %19 = vector.load %arg7[%c0_15, %c0_16] : memref<32x128xf32, #tpu.memory_space<vmem>>, vector<32x128xf32>
      %20 = arith.addf %18, %19 : vector<32x128xf32>
      %cst_17 = arith.constant 0.000000e+00 : f32
      %21 = vector.broadcast %cst_17 : f32 to vector<32x128xf32>
      %22 = arith.maximumf %20, %21 : vector<32x128xf32>
      %c0_18 = arith.constant 0 : index
      %c0_19 = arith.constant 0 : index
      %23 = vector.load %arg8[%c0_18, %c0_19] : memref<32x128xf32, #tpu.memory_space<vmem>>, vector<32x128xf32>
      tpu.vector_store %arg8[%c0_18, %c0_19], %22 {strides = array<i32>} : memref<32x128xf32, #tpu.memory_space<vmem>>, vector<32x128xf32>,
    } else {
    }
    return
  }
  func.func @transform_0(%arg0: i32, %arg1: i32, %arg2: i32) -> (i32, i32) {
    %c0_i32 = arith.constant 0 : i32
    return %arg0, %arg2 : i32, i32
  }
  func.func @transform_1(%arg0: i32, %arg1: i32, %arg2: i32) -> (i32, i32) {
    %c0_i32 = arith.constant 0 : i32
    return %arg2, %arg1 : i32, i32
  }
  func.func @transform_2(%arg0: i32, %arg1: i32, %arg2: i32) -> (i32, i32) {
    %c0_i32 = arith.constant 0 : i32
    %c0_i32_0 = arith.constant 0 : i32
    return %c0_i32, %arg1 : i32, i32
  }
  func.func @transform_3(%arg0: i32, %arg1: i32, %arg2: i32) -> (i32, i32) {
    %c0_i32 = arith.constant 0 : i32
    %c0_i32_0 = arith.constant 0 : i32
    return %c0_i32, %arg1 : i32, i32
  }
  func.func @transform_4(%arg0: i32, %arg1: i32, %arg2: i32) -> (i32, i32) {
    %c0_i32 = arith.constant 0 : i32
    return %arg0, %arg1 : i32, i32
  }
  func.func @transform_5(%arg0: i32, %arg1: i32, %arg2: i32) -> (i32, i32) {
    %c0_i32 = arith.constant 0 : i32
    return %arg0, %arg1 : i32, i32
  }
}

module attributes {stable_mosaic.version = 11 : i64} {
  func.func @_style_kernel(%arg0: i32, %arg1: memref<1x16x128xf32, #tpu.memory_space<vmem>>, %arg2: memref<1x128x128xf32, #tpu.memory_space<vmem>>) attributes {dimension_semantics = [#tpu.dimension_semantics<parallel>], iteration_bounds = array<i64: 2>, scalar_prefetch = 0 : i64, scratch_operands = 0 : i64, tpu.core_type = #tpu.core_type<tc>, window_params = [{transform_indices = @transform_0, window_bounds = array<i64: 1, 16, 128>}, {transform_indices = @transform_1, window_bounds = array<i64: 1, 128, 128>}]} {
    %c0 = arith.constant 0 : index
    %c0_0 = arith.constant 0 : index
    %c0_1 = arith.constant 0 : index
    %0 = vector.load %arg1[%c0, %c0_0, %c0_1] : memref<1x16x128xf32, #tpu.memory_space<vmem>>, vector<1x16x128xf32>
    %1 = vector.shape_cast %0 : vector<1x16x128xf32> to vector<16x128xf32>
    %cst = arith.constant dense<0.000000e+00> : vector<128xf32>
    %2 = vector.multi_reduction <add>, %1, %cst [0] : vector<16x128xf32> to vector<128xf32>
    %3 = vector.shape_cast %2 : vector<128xf32> to vector<1x128xf32>
    %cst_2 = arith.constant 1.600000e+01 : f32
    %4 = vector.broadcast %cst_2 : f32 to vector<1x128xf32>
    %5 = arith.divf %3, %4 : vector<1x128xf32>
    %6 = vector.broadcast %5 : vector<1x128xf32> to vector<16x128xf32>
    %7 = arith.subf %1, %6 : vector<16x128xf32>
    %8 = arith.mulf %7, %7 : vector<16x128xf32>
    %cst_3 = arith.constant dense<0.000000e+00> : vector<128xf32>
    %9 = vector.multi_reduction <add>, %8, %cst_3 [0] : vector<16x128xf32> to vector<128xf32>
    %10 = vector.shape_cast %9 : vector<128xf32> to vector<1x128xf32>
    %cst_4 = arith.constant 0.0666666701 : f32
    %11 = vector.broadcast %cst_4 : f32 to vector<1x128xf32>
    %12 = arith.mulf %10, %11 : vector<1x128xf32>
    %13 = math.sqrt %12 : vector<1x128xf32>
    %cst_5 = arith.constant 0.00999999977 : f32
    %14 = vector.broadcast %cst_5 : f32 to vector<1x128xf32>
    %15 = arith.addf %13, %14 : vector<1x128xf32>
    %16 = tpu.reciprocal %15 {approx = true} : vector<1x128xf32> -> vector<1x128xf32>
    %17 = vector.broadcast %16 : vector<1x128xf32> to vector<16x128xf32>
    %18 = arith.mulf %7, %17 : vector<16x128xf32>
    %cst_6 = arith.constant dense<0.000000e+00> : vector<128x128xf32>
    %19 = tpu.matmul %18, %18, %cst_6 {dimension_numbers = #tpu.dot_dimension_numbers<[0], [0], [1], [1], [0, 1, 1, 1], [], []>} : vector<16x128xf32>, vector<16x128xf32>, vector<128x128xf32> -> vector<128x128xf32>
    %cst_7 = arith.constant 6.250000e-02 : f32
    %20 = vector.broadcast %cst_7 : f32 to vector<128x128xf32>
    %21 = arith.mulf %19, %20 : vector<128x128xf32>
    %c0_8 = arith.constant 0 : index
    %c0_9 = arith.constant 0 : index
    %c0_10 = arith.constant 0 : index
    %22 = vector.load %arg2[%c0_8, %c0_9, %c0_10] : memref<1x128x128xf32, #tpu.memory_space<vmem>>, vector<1x128x128xf32>
    %23 = vector.shape_cast %22 : vector<1x128x128xf32> to vector<128x128xf32>
    %24 = vector.shape_cast %21 : vector<128x128xf32> to vector<1x128x128xf32>
    tpu.vector_store %arg2[%c0_8, %c0_9, %c0_10], %24 {strides = array<i32>} : memref<1x128x128xf32, #tpu.memory_space<vmem>>, vector<1x128x128xf32>,
    return
  }
  func.func @transform_0(%arg0: i32) -> (i32, i32, i32) {
    %c0_i32 = arith.constant 0 : i32
    %c0_i32_0 = arith.constant 0 : i32
    %c0_i32_1 = arith.constant 0 : i32
    return %arg0, %c0_i32, %c0_i32_0 : i32, i32, i32
  }
  func.func @transform_1(%arg0: i32) -> (i32, i32, i32) {
    %c0_i32 = arith.constant 0 : i32
    %c0_i32_0 = arith.constant 0 : i32
    %c0_i32_1 = arith.constant 0 : i32
    return %arg0, %c0_i32, %c0_i32_0 : i32, i32, i32
  }
}

module attributes {stable_mosaic.version = 11 : i64} {
  func.func @_mm_bn_kernel(%arg0: i32, %arg1: i32, %arg2: i32, %arg3: memref<32x128xbf16, #tpu.memory_space<vmem>>, %arg4: memref<128x128xbf16, #tpu.memory_space<vmem>>, %arg5: memref<1x128xf32, #tpu.memory_space<vmem>>, %arg6: memref<1x128xf32, #tpu.memory_space<vmem>>, %arg7: memref<32x128xf32, #tpu.memory_space<vmem>>, %arg8: memref<32x128xf32, #tpu.memory_space<vmem>>) attributes {dimension_semantics = [#tpu.dimension_semantics<parallel>, #tpu.dimension_semantics<parallel>, #tpu.dimension_semantics<arbitrary>], iteration_bounds = array<i64: 1, 1, 9>, scalar_prefetch = 0 : i64, scratch_operands = 1 : i64, tpu.core_type = #tpu.core_type<tc>, window_params = [{transform_indices = @transform_0, window_bounds = array<i64: 32, 128>}, {transform_indices = @transform_1, window_bounds = array<i64: 128, 128>}, {transform_indices = @transform_2, window_bounds = array<i64: 1, 128>}, {transform_indices = @transform_3, window_bounds = array<i64: 1, 128>}, {transform_indices = @transform_4, window_bounds = array<i64: 32, 128>}]} {
    %c0_i32 = arith.constant 0 : i32
    %0 = arith.cmpi eq, %arg2, %c0_i32 : i32
    %1 = arith.extui %0 : i1 to i32
    %c0_i32_0 = arith.constant 0 : i32
    %2 = arith.cmpi ne, %1, %c0_i32_0 : i32
    scf.if %2 {
      %cst_9 = arith.constant 0.000000e+00 : f32
      %12 = vector.broadcast %cst_9 : f32 to vector<32x128xf32>
      %c0_10 = arith.constant 0 : index
      %c0_11 = arith.constant 0 : index
      %13 = vector.load %arg8[%c0_10, %c0_11] : memref<32x128xf32, #tpu.memory_space<vmem>>, vector<32x128xf32>
      tpu.vector_store %arg8[%c0_10, %c0_11], %12 {strides = array<i32>} : memref<32x128xf32, #tpu.memory_space<vmem>>, vector<32x128xf32>,
    } else {
    }
    %c0 = arith.constant 0 : index
    %c0_1 = arith.constant 0 : index
    %3 = vector.load %arg8[%c0, %c0_1] : memref<32x128xf32, #tpu.memory_space<vmem>>, vector<32x128xf32>
    %c0_2 = arith.constant 0 : index
    %c0_3 = arith.constant 0 : index
    %4 = vector.load %arg3[%c0_2, %c0_3] : memref<32x128xbf16, #tpu.memory_space<vmem>>, vector<32x128xbf16>
    %c0_4 = arith.constant 0 : index
    %c0_5 = arith.constant 0 : index
    %5 = vector.load %arg4[%c0_4, %c0_5] : memref<128x128xbf16, #tpu.memory_space<vmem>>, vector<128x128xbf16>
    %cst = arith.constant dense<0.000000e+00> : vector<32x128xf32>
    %6 = tpu.matmul %4, %5, %cst {dimension_numbers = #tpu.dot_dimension_numbers<[1], [0], [0], [1], [0, 0, 1, 1], [], []>} : vector<32x128xbf16>, vector<128x128xbf16>, vector<32x128xf32> -> vector<32x128xf32>
    %7 = arith.addf %3, %6 : vector<32x128xf32>
    %c0_6 = arith.constant 0 : index
    %c0_7 = arith.constant 0 : index
    %8 = vector.load %arg8[%c0_6, %c0_7] : memref<32x128xf32, #tpu.memory_space<vmem>>, vector<32x128xf32>
    tpu.vector_store %arg8[%c0_6, %c0_7], %7 {strides = array<i32>} : memref<32x128xf32, #tpu.memory_space<vmem>>, vector<32x128xf32>,
    %c8_i32 = arith.constant 8 : i32
    %9 = arith.cmpi eq, %arg2, %c8_i32 : i32
    %10 = arith.extui %9 : i1 to i32
    %c0_i32_8 = arith.constant 0 : i32
    %11 = arith.cmpi ne, %10, %c0_i32_8 : i32
    scf.if %11 {
      %c0_9 = arith.constant 0 : index
      %c0_10 = arith.constant 0 : index
      %12 = vector.load %arg8[%c0_9, %c0_10] : memref<32x128xf32, #tpu.memory_space<vmem>>, vector<32x128xf32>
      %c0_11 = arith.constant 0 : index
      %c0_12 = arith.constant 0 : index
      %13 = vector.load %arg5[%c0_11, %c0_12] : memref<1x128xf32, #tpu.memory_space<vmem>>, vector<1x128xf32>
      %14 = vector.broadcast %13 : vector<1x128xf32> to vector<32x128xf32>
      %15 = arith.mulf %12, %14 : vector<32x128xf32>
      %c0_13 = arith.constant 0 : index
      %c0_14 = arith.constant 0 : index
      %16 = vector.load %arg6[%c0_13, %c0_14] : memref<1x128xf32, #tpu.memory_space<vmem>>, vector<1x128xf32>
      %17 = vector.broadcast %16 : vector<1x128xf32> to vector<32x128xf32>
      %18 = arith.addf %15, %17 : vector<32x128xf32>
      %cst_15 = arith.constant 0.000000e+00 : f32
      %19 = vector.broadcast %cst_15 : f32 to vector<32x128xf32>
      %20 = arith.maximumf %18, %19 : vector<32x128xf32>
      %c0_16 = arith.constant 0 : index
      %c0_17 = arith.constant 0 : index
      %21 = vector.load %arg7[%c0_16, %c0_17] : memref<32x128xf32, #tpu.memory_space<vmem>>, vector<32x128xf32>
      tpu.vector_store %arg7[%c0_16, %c0_17], %20 {strides = array<i32>} : memref<32x128xf32, #tpu.memory_space<vmem>>, vector<32x128xf32>,
    } else {
    }
    return
  }
  func.func @transform_0(%arg0: i32, %arg1: i32, %arg2: i32) -> (i32, i32) {
    %c0_i32 = arith.constant 0 : i32
    return %arg0, %arg2 : i32, i32
  }
  func.func @transform_1(%arg0: i32, %arg1: i32, %arg2: i32) -> (i32, i32) {
    %c0_i32 = arith.constant 0 : i32
    return %arg2, %arg1 : i32, i32
  }
  func.func @transform_2(%arg0: i32, %arg1: i32, %arg2: i32) -> (i32, i32) {
    %c0_i32 = arith.constant 0 : i32
    %c0_i32_0 = arith.constant 0 : i32
    return %c0_i32, %arg1 : i32, i32
  }
  func.func @transform_3(%arg0: i32, %arg1: i32, %arg2: i32) -> (i32, i32) {
    %c0_i32 = arith.constant 0 : i32
    %c0_i32_0 = arith.constant 0 : i32
    return %c0_i32, %arg1 : i32, i32
  }
  func.func @transform_4(%arg0: i32, %arg1: i32, %arg2: i32) -> (i32, i32) {
    %c0_i32 = arith.constant 0 : i32
    return %arg0, %arg1 : i32, i32
  }
}

</mosaic_0001>

<llo_original>
// kernel: style_extractor_forward.13
$region0: #{style_extractor_forward.13}
  #allocation0 [shape = 'u32[]', space=smem, size = 0x4, offset = 0x4, fixed_abs, tag = 'smem constant byte address 0x4 - core index']
  #allocation1 [shape = 'u32[144,128]{1,0:T(1,128)}', space=vmem, size = 0x12000, scoped, tag = 'internal scratch']
  %s0 = inlined_call_operand.vmem [shape: f32[64,128], index: 0, kind: input, shape index: {}]
  %s1 = inlined_call_operand.vmem [shape: f32[64,128], index: 1, kind: input, shape index: {}]
  %s2 = inlined_call_operand.vmem [shape: f32[64,128], index: 2, kind: input, shape index: {}]
  %s3 = inlined_call_operand.vmem [shape: f32[64,128], index: 3, kind: input, shape index: {}]
  %s4 = inlined_call_operand.vmem [shape: f32[64,128], index: 4, kind: input, shape index: {}]
  %s5 = inlined_call_operand.vmem [shape: f32[64,128], index: 5, kind: input, shape index: {}]
  %s6 = inlined_call_operand.vmem [shape: f32[64,128], index: 6, kind: input, shape index: {}]
  %s7 = inlined_call_operand.vmem [shape: f32[64,128], index: 7, kind: input, shape index: {}]
  %s8 = inlined_call_operand.vmem [shape: f32[64,128], index: 8, kind: input, shape index: {}]
  %s9 = inlined_call_operand.vmem [shape: f32[64,128], index: 9, kind: output, shape index: {}]
  %s10 = sld [smem:[#allocation0]]
  $region46: #{style_extractor_forward.13} parent=0
    _
  %s12 = ssub.s32 1, %s10
  %s13 = scalar_select 0, %s12, %s10
  // Predicated region
  $region2: #{style_extractor_forward.13} parent=0 // pred_check
    _
  $region3: #{style_extractor_forward.13} parent=0 // pred_check_branch
    %15 = sbr.rel (0) target = $region5
  $region4: #{style_extractor_forward.13} parent=0 // pred_region
    _
  $region5: #{style_extractor_forward.13} parent=0 // pred_fallthru
    _
  // Predicated region
  $region6: #{style_extractor_forward.13} parent=0 // pred_check
    _
  $region7: #{style_extractor_forward.13} parent=0 // pred_check_branch
    %17 = sbr.rel (0) target = $region9
  $region8: #{style_extractor_forward.13} parent=0 // pred_region
    _
  $region9: #{style_extractor_forward.13} parent=0 // pred_fallthru
    _
  // Predicated region
  $region10: #{style_extractor_forward.13} parent=0 // pred_check
    _
  $region11: #{style_extractor_forward.13} parent=0 // pred_check_branch
    %19 = sbr.rel (0) target = $region13
  $region12: #{style_extractor_forward.13} parent=0 // pred_region
    _
  $region13: #{style_extractor_forward.13} parent=0 // pred_fallthru
    _
  // Predicated region
  $region14: #{style_extractor_forward.13} parent=0 // pred_check
    _
  $region15: #{style_extractor_forward.13} parent=0 // pred_check_branch
    %21 = sbr.rel (0) target = $region17
  $region16: #{style_extractor_forward.13} parent=0 // pred_region
    _
  $region17: #{style_extractor_forward.13} parent=0 // pred_fallthru
    _
  // Predicated region
  $region18: #{style_extractor_forward.13} parent=0 // pred_check
    _
  $region19: #{style_extractor_forward.13} parent=0 // pred_check_branch
    %23 = sbr.rel (0) target = $region21
  $region20: #{style_extractor_forward.13} parent=0 // pred_region
    _
  $region21: #{style_extractor_forward.13} parent=0 // pred_fallthru
    _
  // Predicated region
  $region22: #{style_extractor_forward.13} parent=0 // pred_check
    _
  $region23: #{style_extractor_forward.13} parent=0 // pred_check_branch
    %25 = sbr.rel (0) target = $region25
  $region24: #{style_extractor_forward.13} parent=0 // pred_region
    _
  $region25: #{style_extractor_forward.13} parent=0 // pred_fallthru
    _
  // Predicated region
  $region26: #{style_extractor_forward.13} parent=0 // pred_check
    _
  $region27: #{style_extractor_forward.13} parent=0 // pred_check_branch
    %27 = sbr.rel (0) target = $region29
  $region28: #{style_extractor_forward.13} parent=0 // pred_region
    _
  $region29: #{style_extractor_forward.13} parent=0 // pred_fallthru
    _
  // Predicated region
  $region30: #{style_extractor_forward.13} parent=0 // pred_check
    _
  $region31: #{style_extractor_forward.13} parent=0 // pred_check_branch
    %29 = sbr.rel (0) target = $region33
  $region32: #{style_extractor_forward.13} parent=0 // pred_region
    _
  $region33: #{style_extractor_forward.13} parent=0 // pred_fallthru
    _
  // Predicated region
  $region34: #{style_extractor_forward.13} parent=0 // pred_check
    _
  $region35: #{style_extractor_forward.13} parent=0 // pred_check_branch
    %31 = sbr.rel (0) target = $region37
  $region36: #{style_extractor_forward.13} parent=0 // pred_region
    _
  $region37: #{style_extractor_forward.13} parent=0 // pred_fallthru
    _
  %v32 = vld [vmem:[%s0] sm:$0xff]
  %v33 = vld [vmem:[%s0 + $0x8] sm:$0xff]
  %v34 = vld [vmem:[%s0 + $0x10] sm:$0xff]
  %v35 = vld [vmem:[%s0 + $0x18] sm:$0xff]
  %v36 = vld [vmem:[%s0 + $0x20] sm:$0xff]
  %v37 = vld [vmem:[%s0 + $0x28] sm:$0xff]
  %v38 = vld [vmem:[%s0 + $0x30] sm:$0xff]
  %v39 = vld [vmem:[%s0 + $0x38] sm:$0xff]
  %v40 = vld [vmem:[%s1] sm:$0xff]
  %v41 = vld [vmem:[%s1 + $0x8] sm:$0xff]
  %v42 = vld [vmem:[%s1 + $0x10] sm:$0xff]
  %v43 = vld [vmem:[%s1 + $0x18] sm:$0xff]
  %v44 = vld [vmem:[%s1 + $0x20] sm:$0xff]
  %v45 = vld [vmem:[%s1 + $0x28] sm:$0xff]
  %v46 = vld [vmem:[%s1 + $0x30] sm:$0xff]
  %v47 = vld [vmem:[%s1 + $0x38] sm:$0xff]
  %v48 = vmax.f32 %v32, %v40
  %v49 = vmax.f32 %v33, %v41
  %v50 = vmax.f32 %v34, %v42
  %v51 = vmax.f32 %v35, %v43
  %v52 = vmax.f32 %v36, %v44
  %v53 = vmax.f32 %v37, %v45
  %v54 = vmax.f32 %v38, %v46
  %v55 = vmax.f32 %v39, %v47
  %v56 = vld [vmem:[%s2] sm:$0xff]
  %v57 = vld [vmem:[%s2 + $0x8] sm:$0xff]
  %v58 = vld [vmem:[%s2 + $0x10] sm:$0xff]
  %v59 = vld [vmem:[%s2 + $0x18] sm:$0xff]
  %v60 = vld [vmem:[%s2 + $0x20] sm:$0xff]
  %v61 = vld [vmem:[%s2 + $0x28] sm:$0xff]
  %v62 = vld [vmem:[%s2 + $0x30] sm:$0xff]
  %v63 = vld [vmem:[%s2 + $0x38] sm:$0xff]
  %v64 = vmax.f32 %v48, %v56
  %v65 = vmax.f32 %v49, %v57
  %v66 = vmax.f32 %v50, %v58
  %v67 = vmax.f32 %v51, %v59
  %v68 = vmax.f32 %v52, %v60
  %v69 = vmax.f32 %v53, %v61
  %v70 = vmax.f32 %v54, %v62
  %v71 = vmax.f32 %v55, %v63
  %v72 = vld [vmem:[%s3] sm:$0xff]
  %v73 = vld [vmem:[%s3 + $0x8] sm:$0xff]
  %v74 = vld [vmem:[%s3 + $0x10] sm:$0xff]
  %v75 = vld [vmem:[%s3 + $0x18] sm:$0xff]
  %v76 = vld [vmem:[%s3 + $0x20] sm:$0xff]
  %v77 = vld [vmem:[%s3 + $0x28] sm:$0xff]
  %v78 = vld [vmem:[%s3 + $0x30] sm:$0xff]
  %v79 = vld [vmem:[%s3 + $0x38] sm:$0xff]
  %v80 = vmax.f32 %v64, %v72
  %v81 = vmax.f32 %v65, %v73
  %v82 = vmax.f32 %v66, %v74
  %v83 = vmax.f32 %v67, %v75
  %v84 = vmax.f32 %v68, %v76
  %v85 = vmax.f32 %v69, %v77
  %v86 = vmax.f32 %v70, %v78
  %v87 = vmax.f32 %v71, %v79
  %v88 = vld [vmem:[%s4] sm:$0xff]
  %v89 = vld [vmem:[%s4 + $0x8] sm:$0xff]
  %v90 = vld [vmem:[%s4 + $0x10] sm:$0xff]
  %v91 = vld [vmem:[%s4 + $0x18] sm:$0xff]
  %v92 = vld [vmem:[%s4 + $0x20] sm:$0xff]
  %v93 = vld [vmem:[%s4 + $0x28] sm:$0xff]
  %v94 = vld [vmem:[%s4 + $0x30] sm:$0xff]
  %v95 = vld [vmem:[%s4 + $0x38] sm:$0xff]
  %v96 = vmax.f32 %v80, %v88
  %v97 = vmax.f32 %v81, %v89
  %v98 = vmax.f32 %v82, %v90
  %v99 = vmax.f32 %v83, %v91
  %v100 = vmax.f32 %v84, %v92
  %v101 = vmax.f32 %v85, %v93
  %v102 = vmax.f32 %v86, %v94
  %v103 = vmax.f32 %v87, %v95
  %v104 = vld [vmem:[%s5] sm:$0xff]
  %v105 = vld [vmem:[%s5 + $0x8] sm:$0xff]
  %v106 = vld [vmem:[%s5 + $0x10] sm:$0xff]
  %v107 = vld [vmem:[%s5 + $0x18] sm:$0xff]
  %v108 = vld [vmem:[%s5 + $0x20] sm:$0xff]
  %v109 = vld [vmem:[%s5 + $0x28] sm:$0xff]
  %v110 = vld [vmem:[%s5 + $0x30] sm:$0xff]
  %v111 = vld [vmem:[%s5 + $0x38] sm:$0xff]
  %v112 = vmax.f32 %v96, %v104
  %v113 = vmax.f32 %v97, %v105
  %v114 = vmax.f32 %v98, %v106
  %v115 = vmax.f32 %v99, %v107
  %v116 = vmax.f32 %v100, %v108
  %v117 = vmax.f32 %v101, %v109
  %v118 = vmax.f32 %v102, %v110
  %v119 = vmax.f32 %v103, %v111
  %v120 = vld [vmem:[%s6] sm:$0xff]
  %v121 = vld [vmem:[%s6 + $0x8] sm:$0xff]
  %v122 = vld [vmem:[%s6 + $0x10] sm:$0xff]
  %v123 = vld [vmem:[%s6 + $0x18] sm:$0xff]
  %v124 = vld [vmem:[%s6 + $0x20] sm:$0xff]
  %v125 = vld [vmem:[%s6 + $0x28] sm:$0xff]
  %v126 = vld [vmem:[%s6 + $0x30] sm:$0xff]
  %v127 = vld [vmem:[%s6 + $0x38] sm:$0xff]
  %v128 = vmax.f32 %v112, %v120
  %v129 = vmax.f32 %v113, %v121
  %v130 = vmax.f32 %v114, %v122
  %v131 = vmax.f32 %v115, %v123
  %v132 = vmax.f32 %v116, %v124
  %v133 = vmax.f32 %v117, %v125
  %v134 = vmax.f32 %v118, %v126
  %v135 = vmax.f32 %v119, %v127
  %v136 = vld [vmem:[%s7] sm:$0xff]
  %v137 = vld [vmem:[%s7 + $0x8] sm:$0xff]
  %v138 = vld [vmem:[%s7 + $0x10] sm:$0xff]
  %v139 = vld [vmem:[%s7 + $0x18] sm:$0xff]
  %v140 = vld [vmem:[%s7 + $0x20] sm:$0xff]
  %v141 = vld [vmem:[%s7 + $0x28] sm:$0xff]
  %v142 = vld [vmem:[%s7 + $0x30] sm:$0xff]
  %v143 = vld [vmem:[%s7 + $0x38] sm:$0xff]
  %v144 = vmax.f32 %v128, %v136
  %v145 = vmax.f32 %v129, %v137
  %v146 = vmax.f32 %v130, %v138
  %v147 = vmax.f32 %v131, %v139
  %v148 = vmax.f32 %v132, %v140
  %v149 = vmax.f32 %v133, %v141
  %v150 = vmax.f32 %v134, %v142
  %v151 = vmax.f32 %v135, %v143
  %v152 = vld [vmem:[%s8] sm:$0xff]
  %v153 = vld [vmem:[%s8 + $0x8] sm:$0xff]
  %v154 = vld [vmem:[%s8 + $0x10] sm:$0xff]
  %v155 = vld [vmem:[%s8 + $0x18] sm:$0xff]
  %v156 = vld [vmem:[%s8 + $0x20] sm:$0xff]
  %v157 = vld [vmem:[%s8 + $0x28] sm:$0xff]
  %v158 = vld [vmem:[%s8 + $0x30] sm:$0xff]
  %v159 = vld [vmem:[%s8 + $0x38] sm:$0xff]
  %v160 = vmax.f32 %v144, %v152
  %v161 = vmax.f32 %v145, %v153
  %v162 = vmax.f32 %v146, %v154
  %v163 = vmax.f32 %v147, %v155
  %v164 = vmax.f32 %v148, %v156
  %v165 = vmax.f32 %v149, %v157
  %v166 = vmax.f32 %v150, %v158
  %v167 = vmax.f32 %v151, %v159
  %168 = vst [vmem:[%s9] sm:$0xff] %v160
  %169 = vst [vmem:[%s9 + $0x8] sm:$0xff] %v161
  %170 = vst [vmem:[%s9 + $0x10] sm:$0xff] %v162
  %171 = vst [vmem:[%s9 + $0x18] sm:$0xff] %v163
  %172 = vst [vmem:[%s9 + $0x20] sm:$0xff] %v164
  %173 = vst [vmem:[%s9 + $0x28] sm:$0xff] %v165
  %174 = vst [vmem:[%s9 + $0x30] sm:$0xff] %v166
  %175 = vst [vmem:[%s9 + $0x38] sm:$0xff] %v167
  // Predicated region
  $region38: #{style_extractor_forward.13} parent=0 // pred_check
    _
  $region39: #{style_extractor_forward.13} parent=0 // pred_check_branch
    %177 = sbr.rel (0) target = $region41
  $region40: #{style_extractor_forward.13} parent=0 // pred_region
    _
  $region41: #{style_extractor_forward.13} parent=0 // pred_fallthru
    _
  // Predicated region
  $region42: #{style_extractor_forward.13} parent=0 // pred_check
    _
  $region43: #{style_extractor_forward.13} parent=0 // pred_check_branch
    %179 = sbr.rel (0) target = $region45
  $region44: #{style_extractor_forward.13} parent=0 // pred_region
    _
  $region45: #{style_extractor_forward.13} parent=0 // pred_fallthru
    _

// kernel: style_extractor_forward.12
$region0: #{style_extractor_forward.12}
  #allocation0 [shape = 'u32[]', space=smem, size = 0x4, offset = 0x4, fixed_abs, tag = 'smem constant byte address 0x4 - core index']
  #allocation1 [shape = 'u32[144,128]{1,0:T(1,128)}', space=vmem, size = 0x12000, scoped, tag = 'internal scratch']
  #allocation2 [shape = 'f32[256,128]{1,0:T(8,128)}', space=vmem, size = 0x20000, scoped, tag = 'scratch operand']
  %s0 = inlined_call_operand.vmem [shape: bf16[512,256], index: 0, kind: input, shape index: {}]
  %s1 = inlined_call_operand.vmem [shape: bf16[256,128], index: 1, kind: input, shape index: {}]
  %s2 = inlined_call_operand.vmem [shape: f32[1,128], index: 2, kind: input, shape index: {}]
  %s3 = inlined_call_operand.vmem [shape: f32[1,128], index: 3, kind: input, shape index: {}]
  %s4 = inlined_call_operand.vmem [shape: f32[512,128], index: 4, kind: output, shape index: {}]
  %s5 = sld [smem:[#allocation0]]
  $region57: #{style_extractor_forward.12} parent=0
    _
  %s7 = ssub.s32 1, %s5
  %s8 = scalar_select 0, %s7, %s5
  loop: start=0, step=1, limit=4
  $region2: #{style_extractor_forward.12} parent=0 // loop_pre_header
    _
  $region3: #{style_extractor_forward.12} parent=0 // loop_header
    %s10 = sphi 0, %s14
    %p11 = scmp.ge.s32.totalorder %s10, 4
    %s17 = sphi 0, %s36
    %s18 = sphi 0, %s32
    %s19 = sphi 0, %s28
    %s20 = sphi 0, %s17
    %s21 = sphi 0, %s18
    %s22 = sphi 0, %s19
    %s23 = sphi 0, %s20
    %s24 = sphi 0, %s21
    %s25 = sphi 0, %s22
    %s41 = sphi 0, %s43
    %s44 = sphi 0, %s41
    %s45 = sphi 0, %s44
    %s61 = sphi 0, %s45
    %s69 = sphi 0, %s71
    %s72 = sphi 0, %s69
    %s73 = sphi 0, %s72
    %s89 = sphi 0, %s73
    %s95 = sphi 0, %s97
    %s98 = sphi 0, %s95
    %s99 = sphi 0, %s98
    %s115 = sphi 0, %s99
    %s121 = sphi 0, %s123
    %s124 = sphi 0, %s121
    %s125 = sphi 0, %s124
    %s141 = sphi 0, %s125
    %s149 = sphi 0, %s151
    %s152 = sphi 0, %s149
    %s153 = sphi 0, %s152
    %s169 = sphi 0, %s153
  $region4: #{style_extractor_forward.12} parent=0 // loop_header_branch
    %13 = sbr.rel (%p11) target = $region8
  $region5: #{style_extractor_forward.12} parent=0 // loop_body
    %s15 = ssub.s32 %s10, 1
    %s16 = ssub.s32 %s10, 2
    %s26 = sadd.s32 1, %s19
    %p27 = scmp.ge.s32.totalorder %s26, 1
    %s28 = scalar_select %p27, 0, %s26
    %s29 = sadd.s32 1, %s18
    %s30 = scalar_select %p27, %s29, %s18
    %p31 = scmp.ge.s32.totalorder %s30, 1
    %s32 = scalar_select %p31, 0, %s30
    %s33 = sadd.s32 1, %s17
    %s34 = scalar_select %p31, %s33, %s17
    %p35 = scmp.ge.s32.totalorder %s34, 2
    %s36 = scalar_select %p35, 0, %s34
    %s37 = ssub.s32 %s17, %s36
    %s38 = ssub.s32 %s19, %s28
    %s39 = sor.u32 %s37, %s38
    %p40 = scmp.eq.s32.totalorder %s39, 0
    %s42 = sadd.s32 %s41, 1
    %s43 = scalar_select %p40, %s41, %s42
    %p46 = pneg %p40
    %p47 = scmp.eq.s32.totalorder %s10, 1
    %p48 = por %p46, %p47
    %p49 = scmp.ne.s32.totalorder %s41, %s44
    %p50 = scmp.eq.s32.totalorder %s10, 0
    %p51 = por %p49, %p50
    %p52 = scmp.ne.s32.totalorder %s41, %s44
    %p53 = scmp.eq.s32.totalorder %s15, 1
    %p54 = por %p52, %p53
    %p55 = scmp.ne.s32.totalorder %s44, %s45
    %p56 = scmp.eq.s32.totalorder %s15, 0
    %p57 = por %p55, %p56
    %p58 = scmp.ne.s32.totalorder %s44, %s45
    %p59 = scmp.eq.s32.totalorder %s16, 1
    %p60 = por %p58, %p59
    %p62 = scmp.ne.s32.totalorder %s45, %s61
    %p63 = scmp.eq.s32.totalorder %s16, 0
    %p64 = por %p62, %p63
    %s65 = ssub.s32 %s19, %s28
    %s66 = ssub.s32 %s18, %s32
    %s67 = sor.u32 %s65, %s66
    %p68 = scmp.eq.s32.totalorder %s67, 0
    %s70 = sadd.s32 %s69, 1
    %s71 = scalar_select %p68, %s69, %s70
    %p74 = pneg %p68
    %p75 = scmp.eq.s32.totalorder %s10, 1
    %p76 = por %p74, %p75
    %p77 = scmp.ne.s32.totalorder %s69, %s72
    %p78 = scmp.eq.s32.totalorder %s10, 0
    %p79 = por %p77, %p78
    %p80 = scmp.ne.s32.totalorder %s69, %s72
    %p81 = scmp.eq.s32.totalorder %s15, 1
    %p82 = por %p80, %p81
    %p83 = scmp.ne.s32.totalorder %s72, %s73
    %p84 = scmp.eq.s32.totalorder %s15, 0
    %p85 = por %p83, %p84
    %p86 = scmp.ne.s32.totalorder %s72, %s73
    %p87 = scmp.eq.s32.totalorder %s16, 1
    %p88 = por %p86, %p87
    %p90 = scmp.ne.s32.totalorder %s73, %s89
    %p91 = scmp.eq.s32.totalorder %s16, 0
    %p92 = por %p90, %p91
    %s93 = ssub.s32 %s18, %s32
    %p94 = scmp.eq.s32.totalorder %s93, 0
    %s96 = sadd.s32 %s95, 1
    %s97 = scalar_select %p94, %s95, %s96
    %p100 = pneg %p94
    %p101 = scmp.eq.s32.totalorder %s10, 1
    %p102 = por %p100, %p101
    %p103 = scmp.ne.s32.totalorder %s95, %s98
    %p104 = scmp.eq.s32.totalorder %s10, 0
    %p105 = por %p103, %p104
    %p106 = scmp.ne.s32.totalorder %s95, %s98
    %p107 = scmp.eq.s32.totalorder %s15, 1
    %p108 = por %p106, %p107
    %p109 = scmp.ne.s32.totalorder %s98, %s99
    %p110 = scmp.eq.s32.totalorder %s15, 0
    %p111 = por %p109, %p110
    %p112 = scmp.ne.s32.totalorder %s98, %s99
    %p113 = scmp.eq.s32.totalorder %s16, 1
    %p114 = por %p112, %p113
    %p116 = scmp.ne.s32.totalorder %s99, %s115
    %p117 = scmp.eq.s32.totalorder %s16, 0
    %p118 = por %p116, %p117
    %s119 = ssub.s32 %s18, %s32
    %p120 = scmp.eq.s32.totalorder %s119, 0
    %s122 = sadd.s32 %s121, 1
    %s123 = scalar_select %p120, %s121, %s122
    %p126 = pneg %p120
    %p127 = scmp.eq.s32.totalorder %s10, 1
    %p128 = por %p126, %p127
    %p129 = scmp.ne.s32.totalorder %s121, %s124
    %p130 = scmp.eq.s32.totalorder %s10, 0
    %p131 = por %p129, %p130
    %p132 = scmp.ne.s32.totalorder %s121, %s124
    %p133 = scmp.eq.s32.totalorder %s15, 1
    %p134 = por %p132, %p133
    %p135 = scmp.ne.s32.totalorder %s124, %s125
    %p136 = scmp.eq.s32.totalorder %s15, 0
    %p137 = por %p135, %p136
    %p138 = scmp.ne.s32.totalorder %s124, %s125
    %p139 = scmp.eq.s32.totalorder %s16, 1
    %p140 = por %p138, %p139
    %p142 = scmp.ne.s32.totalorder %s125, %s141
    %p143 = scmp.eq.s32.totalorder %s16, 0
    %p144 = por %p142, %p143
    %s145 = ssub.s32 %s17, %s36
    %s146 = ssub.s32 %s18, %s32
    %s147 = sor.u32 %s145, %s146
    %p148 = scmp.eq.s32.totalorder %s147, 0
    %s150 = sadd.s32 %s149, 1
    %s151 = scalar_select %p148, %s149, %s150
    %p154 = pneg %p148
    %p155 = scmp.eq.s32.totalorder %s10, 1
    %p156 = por %p154, %p155
    %p157 = scmp.ne.s32.totalorder %s149, %s152
    %p158 = scmp.eq.s32.totalorder %s10, 0
    %p159 = por %p157, %p158
    %p160 = scmp.ne.s32.totalorder %s149, %s152
    %p161 = scmp.eq.s32.totalorder %s15, 1
    %p162 = por %p160, %p161
    %p163 = scmp.ne.s32.totalorder %s152, %s153
    %p164 = scmp.eq.s32.totalorder %s15, 0
    %p165 = por %p163, %p164
    %p166 = scmp.ne.s32.totalorder %s152, %s153
    %p167 = scmp.eq.s32.totalorder %s16, 1
    %p168 = por %p166, %p167
    %p170 = scmp.ne.s32.totalorder %s153, %s169
    %p171 = scmp.eq.s32.totalorder %s16, 0
    %p172 = por %p170, %p171
    %p173 = scmp.le.s32.totalorder 1, %s10
    %p174 = scmp.lt.s32.totalorder %s10, 3
    %p175 = pnand %p173, %p174
    %p176 = pneg %p175
    // Predicated region
    $region9: #{style_extractor_forward.12} parent=5 // pred_check
      _
    $region10: #{style_extractor_forward.12} parent=5 // pred_check_branch
      %178 = sbr.rel (%p175) target = $region12
    $region11: #{style_extractor_forward.12} parent=5 // pred_region
      %s179 = ssub.s32 %s10, 1
      // Predicated region
      $region13: #{style_extractor_forward.12} parent=11 // pred_check
        %p180 = pneg %p85
      $region14: #{style_extractor_forward.12} parent=11 // pred_check_branch
        %182 = sbr.rel (%p180) target = $region16
      $region15: #{style_extractor_forward.12} parent=11 // pred_region
        %s183 = smul.u32 32, %s22
        %p184 = scmp.lt.s32.totalorder %s183, 31
        %s185 = scalar_select %p184, %s183, 31
        %p186 = scmp.lt.s32.totalorder %s21, 0
        %s187 = scalar_select %p186, %s21, 0
        %s188 = sadd.s32 %s187, %s185
        %s189 = smul.addr %s188, 4
        %s190 = scalar_lea.vmem %s1, %s189
        %s191 = smul.u32 32, %s22
      $region16: #{style_extractor_forward.12} parent=11 // pred_fallthru
        _
      // Predicated region
      $region17: #{style_extractor_forward.12} parent=11 // pred_check
        %p192 = pneg %p111
      $region18: #{style_extractor_forward.12} parent=11 // pred_check_branch
        %194 = sbr.rel (%p192) target = $region20
      $region19: #{style_extractor_forward.12} parent=11 // pred_region
        %p195 = scmp.lt.s32.totalorder %s21, 0
        %s196 = scalar_select %p195, %s21, 0
        %s197 = scalar_lea.vmem %s2, %s196
      $region20: #{style_extractor_forward.12} parent=11 // pred_fallthru
        _
      // Predicated region
      $region21: #{style_extractor_forward.12} parent=11 // pred_check
        %p198 = pneg %p137
      $region22: #{style_extractor_forward.12} parent=11 // pred_check_branch
        %200 = sbr.rel (%p198) target = $region24
      $region23: #{style_extractor_forward.12} parent=11 // pred_region
        %p201 = scmp.lt.s32.totalorder %s21, 0
        %s202 = scalar_select %p201, %s21, 0
        %s203 = scalar_lea.vmem %s3, %s202
      $region24: #{style_extractor_forward.12} parent=11 // pred_fallthru
        _
    $region12: #{style_extractor_forward.12} parent=5 // pred_fallthru
      _
    %p204 = scmp.lt.s32.totalorder %s10, 2
    // Predicated region
    $region25: #{style_extractor_forward.12} parent=5 // pred_check
      %p205 = pneg %p204
    $region26: #{style_extractor_forward.12} parent=5 // pred_check_branch
      %207 = sbr.rel (%p205) target = $region28
    $region27: #{style_extractor_forward.12} parent=5 // pred_region
      // Predicated region
      $region29: #{style_extractor_forward.12} parent=27 // pred_check
        %p208 = pneg %p51
      $region30: #{style_extractor_forward.12} parent=27 // pred_check_branch
        %210 = sbr.rel (%p208) target = $region32
      $region31: #{style_extractor_forward.12} parent=27 // pred_region
        %s211 = smul.u32 32, %s17
        %s212 = smul.u32 2, %s19
        %p213 = scmp.lt.s32.totalorder %s211, 63
        %s214 = scalar_select %p213, %s211, 63
        %p215 = scmp.lt.s32.totalorder %s212, 1
        %s216 = scalar_select %p215, %s212, 1
        %s217 = smul.addr %s214, 2
        %s218 = sadd.s32 %s216, %s217
        %s219 = smul.addr %s218, 4
        %s220 = scalar_lea.vmem %s0, %s219
        %s221 = smul.u32 32, %s17
        %s222 = smul.u32 2, %s19
      $region32: #{style_extractor_forward.12} parent=27 // pred_fallthru
        _
    $region28: #{style_extractor_forward.12} parent=5 // pred_fallthru
      _
    %p223 = scmp.le.s32.totalorder 1, %s10
    %p224 = scmp.lt.s32.totalorder %s10, 3
    %p225 = pnand %p223, %p224
    %p226 = pneg %p225
    // Predicated region
    $region33: #{style_extractor_forward.12} parent=5 // pred_check
      _
    $region34: #{style_extractor_forward.12} parent=5 // pred_check_branch
      %228 = sbr.rel (%p225) target = $region36
    $region35: #{style_extractor_forward.12} parent=5 // pred_region
      %s229 = ssub.s32 %s10, 1
      %s230 = smul.u32 32, %s20
      %s231 = smul.u32 2, %s22
      %p232 = scmp.lt.s32.totalorder %s230, 63
      %s233 = scalar_select %p232, %s230, 63
      %p234 = scmp.lt.s32.totalorder %s231, 1
      %s235 = scalar_select %p234, %s231, 1
      %s236 = smul.addr %s233, 2
      %s237 = sadd.s32 %s235, %s236
      %s238 = smul.addr %s237, 4
      %s239 = scalar_lea.vmem %s0, %s238
      %p240 = pneg %p57
      %p241 = pneg %p54
      %s242 = smul.u32 32, %s22
      %p243 = scmp.lt.s32.totalorder %s242, 31
      %s244 = scalar_select %p243, %s242, 31
      %p245 = scmp.lt.s32.totalorder %s21, 0
      %s246 = scalar_select %p245, %s21, 0
      %s247 = sadd.s32 %s246, %s244
      %s248 = smul.addr %s247, 4
      %s249 = scalar_lea.vmem %s1, %s248
      %p250 = pneg %p85
      %p251 = pneg %p82
      %p252 = scmp.lt.s32.totalorder %s21, 0
      %s253 = scalar_select %p252, %s21, 0
      %s254 = scalar_lea.vmem %s2, %s253
      %p255 = pneg %p111
      %p256 = pneg %p108
      %p257 = scmp.lt.s32.totalorder %s21, 0
      %s258 = scalar_select %p257, %s21, 0
      %s259 = scalar_lea.vmem %s3, %s258
      %p260 = pneg %p137
      %p261 = pneg %p134
      %p262 = pneg %p165
      %p263 = pneg %p162
      %s264 = smul.u32 32, %s20
      %p265 = scmp.lt.s32.totalorder %s264, 63
      %s266 = scalar_select %p265, %s264, 63
      %p267 = scmp.lt.s32.totalorder %s21, 0
      %s268 = scalar_select %p267, %s21, 0
      %s269 = sadd.s32 %s268, %s266
      %s270 = smul.addr %s269, 8
      %s271 = scalar_lea.vmem %s4, %s270
      %s272 = smul.u32 32, %s20
      %s273 = smul.u32 2, %s22
      %p274 = scmp.lt.s32.totalorder %s272, 63
      %s275 = scalar_select %p274, %s272, 63
      %p276 = scmp.lt.s32.totalorder %s273, 1
      %s277 = scalar_select %p276, %s273, 1
      %s278 = smul.addr %s275, 2
      %s279 = sadd.s32 %s277, %s278
      %s280 = smul.addr %s279, 4
      %s281 = scalar_lea.vmem %s0, %s280
      %s282 = smul.u32 32, %s20
      %s283 = smul.u32 2, %s22
      %s284 = smul.u32 32, %s22
      %p285 = scmp.lt.s32.totalorder %s284, 31
      %s286 = scalar_select %p285, %s284, 31
      %p287 = scmp.lt.s32.totalorder %s21, 0
      %s288 = scalar_select %p287, %s21, 0
      %s289 = sadd.s32 %s288, %s286
      %s290 = smul.addr %s289, 4
      %s291 = scalar_lea.vmem %s1, %s290
      %s292 = smul.u32 32, %s22
      %p293 = scmp.lt.s32.totalorder %s21, 0
      %s294 = scalar_select %p293, %s21, 0
      %s295 = scalar_lea.vmem %s2, %s294
      %p296 = scmp.lt.s32.totalorder %s21, 0
      %s297 = scalar_select %p296, %s21, 0
      %s298 = scalar_lea.vmem %s3, %s297
      %s299 = smul.u32 32, %s20
      %p300 = scmp.lt.s32.totalorder %s299, 63
      %s301 = scalar_select %p300, %s299, 63
      %p302 = scmp.lt.s32.totalorder %s21, 0
      %s303 = scalar_select %p302, %s21, 0
      %s304 = sadd.s32 %s303, %s301
      %s305 = smul.addr %s304, 8
      %s306 = scalar_lea.vmem %s4, %s305
      %s307 = smul.u32 32, %s20
      %p309 = scmp.eq.s32.totalorder %s22, 0
      // Predicated region
      $region37: #{style_extractor_forward.12} parent=35 // pred_check
        %p310 = pneg %p309
      $region38: #{style_extractor_forward.12} parent=35 // pred_check_branch
        %312 = sbr.rel (%p310) target = $region40
      $region39: #{style_extractor_forward.12} parent=35 // pred_region
        %313 = vst [vmem:[#allocation2] sm:$0xff] 0.0
        %314 = vst [vmem:[#allocation2 + $0x8] sm:$0xff] 0.0
        %315 = vst [vmem:[#allocation2 + $0x10] sm:$0xff] 0.0
        %316 = vst [vmem:[#allocation2 + $0x18] sm:$0xff] 0.0
        %317 = vst [vmem:[#allocation2 + $0x20] sm:$0xff] 0.0
        %318 = vst [vmem:[#allocation2 + $0x28] sm:$0xff] 0.0
        %319 = vst [vmem:[#allocation2 + $0x30] sm:$0xff] 0.0
        %320 = vst [vmem:[#allocation2 + $0x38] sm:$0xff] 0.0
        %321 = vst [vmem:[#allocation2 + $0x40] sm:$0xff] 0.0
        %322 = vst [vmem:[#allocation2 + $0x48] sm:$0xff] 0.0
        %323 = vst [vmem:[#allocation2 + $0x50] sm:$0xff] 0.0
        %324 = vst [vmem:[#allocation2 + $0x58] sm:$0xff] 0.0
        %325 = vst [vmem:[#allocation2 + $0x60] sm:$0xff] 0.0
        %326 = vst [vmem:[#allocation2 + $0x68] sm:$0xff] 0.0
        %327 = vst [vmem:[#allocation2 + $0x70] sm:$0xff] 0.0
        %328 = vst [vmem:[#allocation2 + $0x78] sm:$0xff] 0.0
        %329 = vst [vmem:[#allocation2 + $0x80] sm:$0xff] 0.0
        %330 = vst [vmem:[#allocation2 + $0x88] sm:$0xff] 0.0
        %331 = vst [vmem:[#allocation2 + $0x90] sm:$0xff] 0.0
        %332 = vst [vmem:[#allocation2 + $0x98] sm:$0xff] 0.0
        %333 = vst [vmem:[#allocation2 + $0xa0] sm:$0xff] 0.0
        %334 = vst [vmem:[#allocation2 + $0xa8] sm:$0xff] 0.0
        %335 = vst [vmem:[#allocation2 + $0xb0] sm:$0xff] 0.0
        %336 = vst [vmem:[#allocation2 + $0xb8] sm:$0xff] 0.0
        %337 = vst [vmem:[#allocation2 + $0xc0] sm:$0xff] 0.0
        %338 = vst [vmem:[#allocation2 + $0xc8] sm:$0xff] 0.0
        %339 = vst [vmem:[#allocation2 + $0xd0] sm:$0xff] 0.0
        %340 = vst [vmem:[#allocation2 + $0xd8] sm:$0xff] 0.0
        %341 = vst [vmem:[#allocation2 + $0xe0] sm:$0xff] 0.0
        %342 = vst [vmem:[#allocation2 + $0xe8] sm:$0xff] 0.0
        %343 = vst [vmem:[#allocation2 + $0xf0] sm:$0xff] 0.0
        %344 = vst [vmem:[#allocation2 + $0xf8] sm:$0xff] 0.0
      $region40: #{style_extractor_forward.12} parent=35 // pred_fallthru
        _
      %v345 = vld [vmem:[#allocation2] sm:$0xff]
      %v346 = vld [vmem:[#allocation2 + $0x8] sm:$0xff]
      %v347 = vld [vmem:[#allocation2 + $0x10] sm:$0xff]
      %v348 = vld [vmem:[#allocation2 + $0x18] sm:$0xff]
      %v349 = vld [vmem:[#allocation2 + $0x20] sm:$0xff]
      %v350 = vld [vmem:[#allocation2 + $0x28] sm:$0xff]
      %v351 = vld [vmem:[#allocation2 + $0x30] sm:$0xff]
      %v352 = vld [vmem:[#allocation2 + $0x38] sm:$0xff]
      %v353 = vld [vmem:[#allocation2 + $0x40] sm:$0xff]
      %v354 = vld [vmem:[#allocation2 + $0x48] sm:$0xff]
      %v355 = vld [vmem:[#allocation2 + $0x50] sm:$0xff]
      %v356 = vld [vmem:[#allocation2 + $0x58] sm:$0xff]
      %v357 = vld [vmem:[#allocation2 + $0x60] sm:$0xff]
      %v358 = vld [vmem:[#allocation2 + $0x68] sm:$0xff]
      %v359 = vld [vmem:[#allocation2 + $0x70] sm:$0xff]
      %v360 = vld [vmem:[#allocation2 + $0x78] sm:$0xff]
      %v361 = vld [vmem:[#allocation2 + $0x80] sm:$0xff]
      %v362 = vld [vmem:[#allocation2 + $0x88] sm:$0xff]
      %v363 = vld [vmem:[#allocation2 + $0x90] sm:$0xff]
      %v364 = vld [vmem:[#allocation2 + $0x98] sm:$0xff]
      %v365 = vld [vmem:[#allocation2 + $0xa0] sm:$0xff]
      %v366 = vld [vmem:[#allocation2 + $0xa8] sm:$0xff]
      %v367 = vld [vmem:[#allocation2 + $0xb0] sm:$0xff]
      %v368 = vld [vmem:[#allocation2 + $0xb8] sm:$0xff]
      %v369 = vld [vmem:[#allocation2 + $0xc0] sm:$0xff]
      %v370 = vld [vmem:[#allocation2 + $0xc8] sm:$0xff]
      %v371 = vld [vmem:[#allocation2 + $0xd0] sm:$0xff]
      %v372 = vld [vmem:[#allocation2 + $0xd8] sm:$0xff]
      %v373 = vld [vmem:[#allocation2 + $0xe0] sm:$0xff]
      %v374 = vld [vmem:[#allocation2 + $0xe8] sm:$0xff]
      %v375 = vld [vmem:[#allocation2 + $0xf0] sm:$0xff]
      %v376 = vld [vmem:[#allocation2 + $0xf8] sm:$0xff]
      %v377 = vld [vmem:[%s281] sm:$0xff]
      %v378 = vld [vmem:[%s281 + $0x8] sm:$0xff]
      %v379 = vld [vmem:[%s281 + $0x10] sm:$0xff]
      %v380 = vld [vmem:[%s281 + $0x18] sm:$0xff]
      %v381 = vld [vmem:[%s281 + $0x20] sm:$0xff]
      %v382 = vld [vmem:[%s281 + $0x28] sm:$0xff]
      %v383 = vld [vmem:[%s281 + $0x30] sm:$0xff]
      %v384 = vld [vmem:[%s281 + $0x38] sm:$0xff]
      %v385 = vld [vmem:[%s281 + $0x40] sm:$0xff]
      %v386 = vld [vmem:[%s281 + $0x48] sm:$0xff]
      %v387 = vld [vmem:[%s281 + $0x50] sm:$0xff]
      %v388 = vld [vmem:[%s281 + $0x58] sm:$0xff]
      %v389 = vld [vmem:[%s281 + $0x60] sm:$0xff]
      %v390 = vld [vmem:[%s281 + $0x68] sm:$0xff]
      %v391 = vld [vmem:[%s281 + $0x70] sm:$0xff]
      %v392 = vld [vmem:[%s281 + $0x78] sm:$0xff]
      %v393 = vld [vmem:[%s281 + $0x80] sm:$0xff]
      %v394 = vld [vmem:[%s281 + $0x88] sm:$0xff]
      %v395 = vld [vmem:[%s281 + $0x90] sm:$0xff]
      %v396 = vld [vmem:[%s281 + $0x98] sm:$0xff]
      %v397 = vld [vmem:[%s281 + $0xa0] sm:$0xff]
      %v398 = vld [vmem:[%s281 + $0xa8] sm:$0xff]
      %v399 = vld [vmem:[%s281 + $0xb0] sm:$0xff]
      %v400 = vld [vmem:[%s281 + $0xb8] sm:$0xff]
      %v401 = vld [vmem:[%s281 + $0xc0] sm:$0xff]
      %v402 = vld [vmem:[%s281 + $0xc8] sm:$0xff]
      %v403 = vld [vmem:[%s281 + $0xd0] sm:$0xff]
      %v404 = vld [vmem:[%s281 + $0xd8] sm:$0xff]
      %v405 = vld [vmem:[%s281 + $0xe0] sm:$0xff]
      %v406 = vld [vmem:[%s281 + $0xe8] sm:$0xff]
      %v407 = vld [vmem:[%s281 + $0xf0] sm:$0xff]
      %v408 = vld [vmem:[%s281 + $0xf8] sm:$0xff]
      %v409 = vld [vmem:[%s291] sm:$0xf]
      %v410 = vld [vmem:[%s291 + $0x4] sm:$0xf]
      %v411 = vld [vmem:[%s291 + $0x8] sm:$0xf]
      %v412 = vld [vmem:[%s291 + $0xc] sm:$0xf]
      %v413 = vld [vmem:[%s291 + $0x10] sm:$0xf]
      %v414 = vld [vmem:[%s291 + $0x14] sm:$0xf]
      %v415 = vld [vmem:[%s291 + $0x18] sm:$0xf]
      %v416 = vld [vmem:[%s291 + $0x1c] sm:$0xf]
      %v417 = vld [vmem:[%s291 + $0x20] sm:$0xf]
      %v418 = vld [vmem:[%s291 + $0x24] sm:$0xf]
      %v419 = vld [vmem:[%s291 + $0x28] sm:$0xf]
      %v420 = vld [vmem:[%s291 + $0x2c] sm:$0xf]
      %v421 = vld [vmem:[%s291 + $0x30] sm:$0xf]
      %v422 = vld [vmem:[%s291 + $0x34] sm:$0xf]
      %v423 = vld [vmem:[%s291 + $0x38] sm:$0xf]
      %v424 = vld [vmem:[%s291 + $0x3c] sm:$0xf]
      %v425 = vld [vmem:[%s291 + $0x40] sm:$0xf]
      %v426 = vld [vmem:[%s291 + $0x44] sm:$0xf]
      %v427 = vld [vmem:[%s291 + $0x48] sm:$0xf]
      %v428 = vld [vmem:[%s291 + $0x4c] sm:$0xf]
      %v429 = vld [vmem:[%s291 + $0x50] sm:$0xf]
      %v430 = vld [vmem:[%s291 + $0x54] sm:$0xf]
      %v431 = vld [vmem:[%s291 + $0x58] sm:$0xf]
      %v432 = vld [vmem:[%s291 + $0x5c] sm:$0xf]
      %v433 = vld [vmem:[%s291 + $0x60] sm:$0xf]
      %v434 = vld [vmem:[%s291 + $0x64] sm:$0xf]
      %v435 = vld [vmem:[%s291 + $0x68] sm:$0xf]
      %v436 = vld [vmem:[%s291 + $0x6c] sm:$0xf]
      %v437 = vld [vmem:[%s291 + $0x70] sm:$0xf]
      %v438 = vld [vmem:[%s291 + $0x74] sm:$0xf]
      %v439 = vld [vmem:[%s291 + $0x78] sm:$0xf]
      %v440 = vld [vmem:[%s291 + $0x7c] sm:$0xf]
      %v473 = vunpack.c.l.b16 %v377
      %v474 = vunpack.c.h.b16 %v377
      %v475 = vunpack.c.l.b16 %v378
      %v476 = vunpack.c.h.b16 %v378
      %v477 = vunpack.c.l.b16 %v379
      %v478 = vunpack.c.h.b16 %v379
      %v479 = vunpack.c.l.b16 %v380
      %v480 = vunpack.c.h.b16 %v380
      %v481 = vunpack.c.l.b16 %v381
      %v482 = vunpack.c.h.b16 %v381
      %v483 = vunpack.c.l.b16 %v382
      %v484 = vunpack.c.h.b16 %v382
      %v485 = vunpack.c.l.b16 %v383
      %v486 = vunpack.c.h.b16 %v383
      %v487 = vunpack.c.l.b16 %v384
      %v488 = vunpack.c.h.b16 %v384
      %v489 = vunpack.c.l.b16 %v385
      %v490 = vunpack.c.h.b16 %v385
      %v491 = vunpack.c.l.b16 %v386
      %v492 = vunpack.c.h.b16 %v386
      %v493 = vunpack.c.l.b16 %v387
      %v494 = vunpack.c.h.b16 %v387
      %v495 = vunpack.c.l.b16 %v388
      %v496 = vunpack.c.h.b16 %v388
      %v497 = vunpack.c.l.b16 %v389
      %v498 = vunpack.c.h.b16 %v389
      %v499 = vunpack.c.l.b16 %v390
      %v500 = vunpack.c.h.b16 %v390
      %v501 = vunpack.c.l.b16 %v391
      %v502 = vunpack.c.h.b16 %v391
      %v503 = vunpack.c.l.b16 %v392
      %v504 = vunpack.c.h.b16 %v392
      %v505 = vunpack.c.l.b16 %v393
      %v506 = vunpack.c.h.b16 %v393
      %v507 = vunpack.c.l.b16 %v394
      %v508 = vunpack.c.h.b16 %v394
      %v509 = vunpack.c.l.b16 %v395
      %v510 = vunpack.c.h.b16 %v395
      %v511 = vunpack.c.l.b16 %v396
      %v512 = vunpack.c.h.b16 %v396
      %v513 = vunpack.c.l.b16 %v397
      %v514 = vunpack.c.h.b16 %v397
      %v515 = vunpack.c.l.b16 %v398
      %v516 = vunpack.c.h.b16 %v398
      %v517 = vunpack.c.l.b16 %v399
      %v518 = vunpack.c.h.b16 %v399
      %v519 = vunpack.c.l.b16 %v400
      %v520 = vunpack.c.h.b16 %v400
      %v521 = vunpack.c.l.b16 %v401
      %v522 = vunpack.c.h.b16 %v401
      %v523 = vunpack.c.l.b16 %v402
      %v524 = vunpack.c.h.b16 %v402
      %v525 = vunpack.c.l.b16 %v403
      %v526 = vunpack.c.h.b16 %v403
      %v527 = vunpack.c.l.b16 %v404
      %v528 = vunpack.c.h.b16 %v404
      %v529 = vunpack.c.l.b16 %v405
      %v530 = vunpack.c.h.b16 %v405
      %v531 = vunpack.c.l.b16 %v406
      %v532 = vunpack.c.h.b16 %v406
      %v533 = vunpack.c.l.b16 %v407
      %v534 = vunpack.c.h.b16 %v407
      %v535 = vunpack.c.l.b16 %v408
      %v536 = vunpack.c.h.b16 %v408
      %v537 = vpack.c.b16 %v475, %v473
      %v538 = vpack.c.b16 %v476, %v474
      %v539 = vpack.c.b16 %v479, %v477
      %v540 = vpack.c.b16 %v480, %v478
      %v541 = vpack.c.b16 %v483, %v481
      %v542 = vpack.c.b16 %v484, %v482
      %v543 = vpack.c.b16 %v487, %v485
      %v544 = vpack.c.b16 %v488, %v486
      %v545 = vpack.c.b16 %v491, %v489
      %v546 = vpack.c.b16 %v492, %v490
      %v547 = vpack.c.b16 %v495, %v493
      %v548 = vpack.c.b16 %v496, %v494
      %v549 = vpack.c.b16 %v499, %v497
      %v550 = vpack.c.b16 %v500, %v498
      %v551 = vpack.c.b16 %v503, %v501
      %v552 = vpack.c.b16 %v504, %v502
      %v553 = vpack.c.b16 %v507, %v505
      %v554 = vpack.c.b16 %v508, %v506
      %v555 = vpack.c.b16 %v511, %v509
      %v556 = vpack.c.b16 %v512, %v510
      %v557 = vpack.c.b16 %v515, %v513
      %v558 = vpack.c.b16 %v516, %v514
      %v559 = vpack.c.b16 %v519, %v517
      %v560 = vpack.c.b16 %v520, %v518
      %v561 = vpack.c.b16 %v523, %v521
      %v562 = vpack.c.b16 %v524, %v522
      %v563 = vpack.c.b16 %v527, %v525
      %v564 = vpack.c.b16 %v528, %v526
      %v565 = vpack.c.b16 %v531, %v529
      %v566 = vpack.c.b16 %v532, %v530
      %v567 = vpack.c.b16 %v535, %v533
      %v568 = vpack.c.b16 %v536, %v534
      %v633 = vunpack.c.l.b16 %v409
      %v634 = vunpack.c.l.b16 %v410
      %v635 = vunpack.c.l.b16 %v411
      %v636 = vunpack.c.l.b16 %v412
      %v637 = vunpack.c.l.b16 %v413
      %v638 = vunpack.c.l.b16 %v414
      %v639 = vunpack.c.l.b16 %v415
      %v640 = vunpack.c.l.b16 %v416
      %v641 = vunpack.c.l.b16 %v417
      %v642 = vunpack.c.l.b16 %v418
      %v643 = vunpack.c.l.b16 %v419
      %v644 = vunpack.c.l.b16 %v420
      %v645 = vunpack.c.l.b16 %v421
      %v646 = vunpack.c.l.b16 %v422
      %v647 = vunpack.c.l.b16 %v423
      %v648 = vunpack.c.l.b16 %v424
      %v649 = vunpack.c.l.b16 %v425
      %v650 = vunpack.c.l.b16 %v426
      %v651 = vunpack.c.l.b16 %v427
      %v652 = vunpack.c.l.b16 %v428
      %v653 = vunpack.c.l.b16 %v429
      %v654 = vunpack.c.l.b16 %v430
      %v655 = vunpack.c.l.b16 %v431
      %v656 = vunpack.c.l.b16 %v432
      %v657 = vunpack.c.l.b16 %v433
      %v658 = vunpack.c.l.b16 %v434
      %v659 = vunpack.c.l.b16 %v435
      %v660 = vunpack.c.l.b16 %v436
      %v661 = vunpack.c.l.b16 %v437
      %v662 = vunpack.c.l.b16 %v438
      %v663 = vunpack.c.l.b16 %v439
      %v664 = vunpack.c.l.b16 %v440
      %v665 = vpack.c.b16 %v634, %v633
      %v666 = vpack.c.b16 %v636, %v635
      %v667 = vpack.c.b16 %v638, %v637
      %v668 = vpack.c.b16 %v640, %v639
      %v669 = vpack.c.b16 %v642, %v641
      %v670 = vpack.c.b16 %v644, %v643
      %v671 = vpack.c.b16 %v646, %v645
      %v672 = vpack.c.b16 %v648, %v647
      %v673 = vpack.c.b16 %v650, %v649
      %v674 = vpack.c.b16 %v652, %v651
      %v675 = vpack.c.b16 %v654, %v653
      %v676 = vpack.c.b16 %v656, %v655
      %v677 = vpack.c.b16 %v658, %v657
      %v678 = vpack.c.b16 %v660, %v659
      %v679 = vpack.c.b16 %v662, %v661
      %v680 = vpack.c.b16 %v664, %v663
      %697 = vmatprep.subr.bf16.mxu0 0
      %698 = vmatpush1.bf16.msra.mxu0 %v665
      %699 = vmatprep.subr.bf16.mxu0 0
      %700 = vmatpush1.bf16.msra.mxu0 %v666
      %701 = vmatprep.subr.bf16.mxu0 0
      %702 = vmatpush1.bf16.msra.mxu0 %v667
      %703 = vmatprep.subr.bf16.mxu0 0
      %704 = vmatpush1.bf16.msra.mxu0 %v668
      %705 = vmatprep.subr.bf16.mxu0 0
      %706 = vmatpush1.bf16.msra.mxu0 %v669
      %707 = vmatprep.subr.bf16.mxu0 0
      %708 = vmatpush1.bf16.msra.mxu0 %v670
      %709 = vmatprep.subr.bf16.mxu0 0
      %710 = vmatpush1.bf16.msra.mxu0 %v671
      %711 = vmatprep.subr.bf16.mxu0 0
      %712 = vmatpush1.bf16.msra.mxu0 %v672
      %713 = vmatprep.subr.bf16.mxu0 0
      %714 = vmatpush1.bf16.msra.mxu0 %v673
      %715 = vmatprep.subr.bf16.mxu0 0
      %716 = vmatpush1.bf16.msra.mxu0 %v674
      %717 = vmatprep.subr.bf16.mxu0 0
      %718 = vmatpush1.bf16.msra.mxu0 %v675
      %719 = vmatprep.subr.bf16.mxu0 0
      %720 = vmatpush1.bf16.msra.mxu0 %v676
      %721 = vmatprep.subr.bf16.mxu0 0
      %722 = vmatpush1.bf16.msra.mxu0 %v677
      %723 = vmatprep.subr.bf16.mxu0 0
      %724 = vmatpush1.bf16.msra.mxu0 %v678
      %725 = vmatprep.subr.bf16.mxu0 0
      %726 = vmatpush1.bf16.msra.mxu0 %v679
      %727 = vmatprep.subr.bf16.mxu0 0
      %728 = vmatpush1.bf16.msra.mxu0 %v680
      %729 = vmatprep.mubr.bf16.mxu0 %v538
      %730 = vmatmul.mubr.bf16.gmra.mrb[0].mxu0 %v537
      %v731 = vpop.f32.mrb[0].mxu0
      %v732 = vadd.f32 0.0, %v731
      %v733 = vpop.f32.mrb[0].mxu0
      %v734 = vpop.f32.mrb[0].mxu0
      %v735 = vadd.f32 0.0, %v734
      %v736 = vpop.f32.mrb[0].mxu0
      %737 = vmatprep.mubr.bf16.mxu0 %v540
      %738 = vmatmul.mubr.bf16.gmra.mrb[0].mxu0 %v539
      %v739 = vpop.f32.mrb[0].mxu0
      %v740 = vadd.f32 0.0, %v739
      %v741 = vpop.f32.mrb[0].mxu0
      %v742 = vpop.f32.mrb[0].mxu0
      %v743 = vadd.f32 0.0, %v742
      %v744 = vpop.f32.mrb[0].mxu0
      %745 = vmatprep.mubr.bf16.mxu0 %v542
      %746 = vmatmul.mubr.bf16.gmra.mrb[0].mxu0 %v541
      %v747 = vpop.f32.mrb[0].mxu0
      %v748 = vadd.f32 0.0, %v747
      %v749 = vpop.f32.mrb[0].mxu0
      %v750 = vpop.f32.mrb[0].mxu0
      %v751 = vadd.f32 0.0, %v750
      %v752 = vpop.f32.mrb[0].mxu0
      %753 = vmatprep.mubr.bf16.mxu0 %v544
      %754 = vmatmul.mubr.bf16.gmra.mrb[0].mxu0 %v543
      %v755 = vpop.f32.mrb[0].mxu0
      %v756 = vadd.f32 0.0, %v755
      %v757 = vpop.f32.mrb[0].mxu0
      %v758 = vpop.f32.mrb[0].mxu0
      %v759 = vadd.f32 0.0, %v758
      %v760 = vpop.f32.mrb[0].mxu0
      %761 = vmatprep.mubr.bf16.mxu0 %v546
      %762 = vmatmul.mubr.bf16.gmra.mrb[0].mxu0 %v545
      %v763 = vpop.f32.mrb[0].mxu0
      %v764 = vadd.f32 0.0, %v763
      %v765 = vpop.f32.mrb[0].mxu0
      %v766 = vpop.f32.mrb[0].mxu0
      %v767 = vadd.f32 0.0, %v766
      %v768 = vpop.f32.mrb[0].mxu0
      %769 = vmatprep.mubr.bf16.mxu0 %v548
      %770 = vmatmul.mubr.bf16.gmra.mrb[0].mxu0 %v547
      %v771 = vpop.f32.mrb[0].mxu0
      %v772 = vadd.f32 0.0, %v771
      %v773 = vpop.f32.mrb[0].mxu0
      %v774 = vpop.f32.mrb[0].mxu0
      %v775 = vadd.f32 0.0, %v774
      %v776 = vpop.f32.mrb[0].mxu0
      %777 = vmatprep.mubr.bf16.mxu0 %v550
      %778 = vmatmul.mubr.bf16.gmra.mrb[0].mxu0 %v549
      %v779 = vpop.f32.mrb[0].mxu0
      %v780 = vadd.f32 0.0, %v779
      %v781 = vpop.f32.mrb[0].mxu0
      %v782 = vpop.f32.mrb[0].mxu0
      %v783 = vadd.f32 0.0, %v782
      %v784 = vpop.f32.mrb[0].mxu0
      %785 = vmatprep.mubr.bf16.mxu0 %v552
      %786 = vmatmul.mubr.bf16.gmra.mrb[0].mxu0 %v551
      %v787 = vpop.f32.mrb[0].mxu0
      %v788 = vadd.f32 0.0, %v787
      %v789 = vpop.f32.mrb[0].mxu0
      %v790 = vpop.f32.mrb[0].mxu0
      %v791 = vadd.f32 0.0, %v790
      %v792 = vpop.f32.mrb[0].mxu0
      %793 = vmatprep.mubr.bf16.mxu0 %v554
      %794 = vmatmul.mubr.bf16.gmra.mrb[0].mxu0 %v553
      %v795 = vpop.f32.mrb[0].mxu0
      %v796 = vadd.f32 0.0, %v795
      %v797 = vpop.f32.mrb[0].mxu0
      %v798 = vpop.f32.mrb[0].mxu0
      %v799 = vadd.f32 0.0, %v798
      %v800 = vpop.f32.mrb[0].mxu0
      %801 = vmatprep.mubr.bf16.mxu0 %v556
      %802 = vmatmul.mubr.bf16.gmra.mrb[0].mxu0 %v555
      %v803 = vpop.f32.mrb[0].mxu0
      %v804 = vadd.f32 0.0, %v803
      %v805 = vpop.f32.mrb[0].mxu0
      %v806 = vpop.f32.mrb[0].mxu0
      %v807 = vadd.f32 0.0, %v806
      %v808 = vpop.f32.mrb[0].mxu0
      %809 = vmatprep.mubr.bf16.mxu0 %v558
      %810 = vmatmul.mubr.bf16.gmra.mrb[0].mxu0 %v557
      %v811 = vpop.f32.mrb[0].mxu0
      %v812 = vadd.f32 0.0, %v811
      %v813 = vpop.f32.mrb[0].mxu0
      %v814 = vpop.f32.mrb[0].mxu0
      %v815 = vadd.f32 0.0, %v814
      %v816 = vpop.f32.mrb[0].mxu0
      %817 = vmatprep.mubr.bf16.mxu0 %v560
      %818 = vmatmul.mubr.bf16.gmra.mrb[0].mxu0 %v559
      %v819 = vpop.f32.mrb[0].mxu0
      %v820 = vadd.f32 0.0, %v819
      %v821 = vpop.f32.mrb[0].mxu0
      %v822 = vpop.f32.mrb[0].mxu0
      %v823 = vadd.f32 0.0, %v822
      %v824 = vpop.f32.mrb[0].mxu0
      %825 = vmatprep.mubr.bf16.mxu0 %v562
      %826 = vmatmul.mubr.bf16.gmra.mrb[0].mxu0 %v561
      %v827 = vpop.f32.mrb[0].mxu0
      %v828 = vadd.f32 0.0, %v827
      %v829 = vpop.f32.mrb[0].mxu0
      %v830 = vpop.f32.mrb[0].mxu0
      %v831 = vadd.f32 0.0, %v830
      %v832 = vpop.f32.mrb[0].mxu0
      %833 = vmatprep.mubr.bf16.mxu0 %v564
      %834 = vmatmul.mubr.bf16.gmra.mrb[0].mxu0 %v563
      %v835 = vpop.f32.mrb[0].mxu0
      %v836 = vadd.f32 0.0, %v835
      %v837 = vpop.f32.mrb[0].mxu0
      %v838 = vpop.f32.mrb[0].mxu0
      %v839 = vadd.f32 0.0, %v838
      %v840 = vpop.f32.mrb[0].mxu0
      %841 = vmatprep.mubr.bf16.mxu0 %v566
      %842 = vmatmul.mubr.bf16.gmra.mrb[0].mxu0 %v565
      %v843 = vpop.f32.mrb[0].mxu0
      %v844 = vadd.f32 0.0, %v843
      %v845 = vpop.f32.mrb[0].mxu0
      %v846 = vpop.f32.mrb[0].mxu0
      %v847 = vadd.f32 0.0, %v846
      %v848 = vpop.f32.mrb[0].mxu0
      %849 = vmatprep.mubr.bf16.mxu0 %v568
      %850 = vmatmul.mubr.bf16.gmra.mrb[0].mxu0 %v567
      %v851 = vpop.f32.mrb[0].mxu0
      %v852 = vadd.f32 0.0, %v851
      %v853 = vpop.f32.mrb[0].mxu0
      %v854 = vpop.f32.mrb[0].mxu0
      %v855 = vadd.f32 0.0, %v854
      %v856 = vpop.f32.mrb[0].mxu0
      %857 = vdwg.mxu0
      %v858 = vadd.f32 %v345, %v732
      %v859 = vadd.f32 %v346, %v735
      %v860 = vadd.f32 %v347, %v740
      %v861 = vadd.f32 %v348, %v743
      %v862 = vadd.f32 %v349, %v748
      %v863 = vadd.f32 %v350, %v751
      %v864 = vadd.f32 %v351, %v756
      %v865 = vadd.f32 %v352, %v759
      %v866 = vadd.f32 %v353, %v764
      %v867 = vadd.f32 %v354, %v767
      %v868 = vadd.f32 %v355, %v772
      %v869 = vadd.f32 %v356, %v775
      %v870 = vadd.f32 %v357, %v780
      %v871 = vadd.f32 %v358, %v783
      %v872 = vadd.f32 %v359, %v788
      %v873 = vadd.f32 %v360, %v791
      %v874 = vadd.f32 %v361, %v796
      %v875 = vadd.f32 %v362, %v799
      %v876 = vadd.f32 %v363, %v804
      %v877 = vadd.f32 %v364, %v807
      %v878 = vadd.f32 %v365, %v812
      %v879 = vadd.f32 %v366, %v815
      %v880 = vadd.f32 %v367, %v820
      %v881 = vadd.f32 %v368, %v823
      %v882 = vadd.f32 %v369, %v828
      %v883 = vadd.f32 %v370, %v831
      %v884 = vadd.f32 %v371, %v836
      %v885 = vadd.f32 %v372, %v839
      %v886 = vadd.f32 %v373, %v844
      %v887 = vadd.f32 %v374, %v847
      %v888 = vadd.f32 %v375, %v852
      %v889 = vadd.f32 %v376, %v855
      %890 = vst [vmem:[#allocation2] sm:$0xff] %v858
      %891 = vst [vmem:[#allocation2 + $0x8] sm:$0xff] %v859
      %892 = vst [vmem:[#allocation2 + $0x10] sm:$0xff] %v860
      %893 = vst [vmem:[#allocation2 + $0x18] sm:$0xff] %v861
      %894 = vst [vmem:[#allocation2 + $0x20] sm:$0xff] %v862
      %895 = vst [vmem:[#allocation2 + $0x28] sm:$0xff] %v863
      %896 = vst [vmem:[#allocation2 + $0x30] sm:$0xff] %v864
      %897 = vst [vmem:[#allocation2 + $0x38] sm:$0xff] %v865
      %898 = vst [vmem:[#allocation2 + $0x40] sm:$0xff] %v866
      %899 = vst [vmem:[#allocation2 + $0x48] sm:$0xff] %v867
      %900 = vst [vmem:[#allocation2 + $0x50] sm:$0xff] %v868
      %901 = vst [vmem:[#allocation2 + $0x58] sm:$0xff] %v869
      %902 = vst [vmem:[#allocation2 + $0x60] sm:$0xff] %v870
      %903 = vst [vmem:[#allocation2 + $0x68] sm:$0xff] %v871
      %904 = vst [vmem:[#allocation2 + $0x70] sm:$0xff] %v872
      %905 = vst [vmem:[#allocation2 + $0x78] sm:$0xff] %v873
      %906 = vst [vmem:[#allocation2 + $0x80] sm:$0xff] %v874
      %907 = vst [vmem:[#allocation2 + $0x88] sm:$0xff] %v875
      %908 = vst [vmem:[#allocation2 + $0x90] sm:$0xff] %v876
      %909 = vst [vmem:[#allocation2 + $0x98] sm:$0xff] %v877
      %910 = vst [vmem:[#allocation2 + $0xa0] sm:$0xff] %v878
      %911 = vst [vmem:[#allocation2 + $0xa8] sm:$0xff] %v879
      %912 = vst [vmem:[#allocation2 + $0xb0] sm:$0xff] %v880
      %913 = vst [vmem:[#allocation2 + $0xb8] sm:$0xff] %v881
      %914 = vst [vmem:[#allocation2 + $0xc0] sm:$0xff] %v882
      %915 = vst [vmem:[#allocation2 + $0xc8] sm:$0xff] %v883
      %916 = vst [vmem:[#allocation2 + $0xd0] sm:$0xff] %v884
      %917 = vst [vmem:[#allocation2 + $0xd8] sm:$0xff] %v885
      %918 = vst [vmem:[#allocation2 + $0xe0] sm:$0xff] %v886
      %919 = vst [vmem:[#allocation2 + $0xe8] sm:$0xff] %v887
      %920 = vst [vmem:[#allocation2 + $0xf0] sm:$0xff] %v888
      %921 = vst [vmem:[#allocation2 + $0xf8] sm:$0xff] %v889
      // Predicated region
      $region41: #{style_extractor_forward.12} parent=35 // pred_check
        %p922 = pneg %p309
      $region42: #{style_extractor_forward.12} parent=35 // pred_check_branch
        %924 = sbr.rel (%p922) target = $region44
      $region43: #{style_extractor_forward.12} parent=35 // pred_region
        %v925 = vld [vmem:[#allocation2] sm:$0xff]
        %v926 = vld [vmem:[#allocation2 + $0x8] sm:$0xff]
        %v927 = vld [vmem:[#allocation2 + $0x10] sm:$0xff]
        %v928 = vld [vmem:[#allocation2 + $0x18] sm:$0xff]
        %v929 = vld [vmem:[#allocation2 + $0x20] sm:$0xff]
        %v930 = vld [vmem:[#allocation2 + $0x28] sm:$0xff]
        %v931 = vld [vmem:[#allocation2 + $0x30] sm:$0xff]
        %v932 = vld [vmem:[#allocation2 + $0x38] sm:$0xff]
        %v933 = vld [vmem:[#allocation2 + $0x40] sm:$0xff]
        %v934 = vld [vmem:[#allocation2 + $0x48] sm:$0xff]
        %v935 = vld [vmem:[#allocation2 + $0x50] sm:$0xff]
        %v936 = vld [vmem:[#allocation2 + $0x58] sm:$0xff]
        %v937 = vld [vmem:[#allocation2 + $0x60] sm:$0xff]
        %v938 = vld [vmem:[#allocation2 + $0x68] sm:$0xff]
        %v939 = vld [vmem:[#allocation2 + $0x70] sm:$0xff]
        %v940 = vld [vmem:[#allocation2 + $0x78] sm:$0xff]
        %v941 = vld [vmem:[#allocation2 + $0x80] sm:$0xff]
        %v942 = vld [vmem:[#allocation2 + $0x88] sm:$0xff]
        %v943 = vld [vmem:[#allocation2 + $0x90] sm:$0xff]
        %v944 = vld [vmem:[#allocation2 + $0x98] sm:$0xff]
        %v945 = vld [vmem:[#allocation2 + $0xa0] sm:$0xff]
        %v946 = vld [vmem:[#allocation2 + $0xa8] sm:$0xff]
        %v947 = vld [vmem:[#allocation2 + $0xb0] sm:$0xff]
        %v948 = vld [vmem:[#allocation2 + $0xb8] sm:$0xff]
        %v949 = vld [vmem:[#allocation2 + $0xc0] sm:$0xff]
        %v950 = vld [vmem:[#allocation2 + $0xc8] sm:$0xff]
        %v951 = vld [vmem:[#allocation2 + $0xd0] sm:$0xff]
        %v952 = vld [vmem:[#allocation2 + $0xd8] sm:$0xff]
        %v953 = vld [vmem:[#allocation2 + $0xe0] sm:$0xff]
        %v954 = vld [vmem:[#allocation2 + $0xe8] sm:$0xff]
        %v955 = vld [vmem:[#allocation2 + $0xf0] sm:$0xff]
        %v956 = vld [vmem:[#allocation2 + $0xf8] sm:$0xff]
        %v957 = vld [vmem:[%s295] sm:$0x1]
        %v959 = vlaneseq
        %v960 = vshrl.u32 %v959, 7
        %v961 = vsub.s32 0, %v960
        %v962 = vrot.slane %v957, %v961
        %v964 = vmul.f32 %v925, %v962
        %v965 = vmul.f32 %v926, %v962
        %v966 = vmul.f32 %v927, %v962
        %v967 = vmul.f32 %v928, %v962
        %v968 = vmul.f32 %v929, %v962
        %v969 = vmul.f32 %v930, %v962
        %v970 = vmul.f32 %v931, %v962
        %v971 = vmul.f32 %v932, %v962
        %v972 = vmul.f32 %v933, %v962
        %v973 = vmul.f32 %v934, %v962
        %v974 = vmul.f32 %v935, %v962
        %v975 = vmul.f32 %v936, %v962
        %v976 = vmul.f32 %v937, %v962
        %v977 = vmul.f32 %v938, %v962
        %v978 = vmul.f32 %v939, %v962
        %v979 = vmul.f32 %v940, %v962
        %v980 = vmul.f32 %v941, %v962
        %v981 = vmul.f32 %v942, %v962
        %v982 = vmul.f32 %v943, %v962
        %v983 = vmul.f32 %v944, %v962
        %v984 = vmul.f32 %v945, %v962
        %v985 = vmul.f32 %v946, %v962
        %v986 = vmul.f32 %v947, %v962
        %v987 = vmul.f32 %v948, %v962
        %v988 = vmul.f32 %v949, %v962
        %v989 = vmul.f32 %v950, %v962
        %v990 = vmul.f32 %v951, %v962
        %v991 = vmul.f32 %v952, %v962
        %v992 = vmul.f32 %v953, %v962
        %v993 = vmul.f32 %v954, %v962
        %v994 = vmul.f32 %v955, %v962
        %v995 = vmul.f32 %v956, %v962
        %v996 = vld [vmem:[%s298] sm:$0x1]
        %v998 = vlaneseq
        %v999 = vshrl.u32 %v998, 7
        %v1000 = vsub.s32 0, %v999
        %v1001 = vrot.slane %v996, %v1000
        %v1003 = vadd.f32 %v964, %v1001
        %v1004 = vadd.f32 %v965, %v1001
        %v1005 = vadd.f32 %v966, %v1001
        %v1006 = vadd.f32 %v967, %v1001
        %v1007 = vadd.f32 %v968, %v1001
        %v1008 = vadd.f32 %v969, %v1001
        %v1009 = vadd.f32 %v970, %v1001
        %v1010 = vadd.f32 %v971, %v1001
        %v1011 = vadd.f32 %v972, %v1001
        %v1012 = vadd.f32 %v973, %v1001
        %v1013 = vadd.f32 %v974, %v1001
        %v1014 = vadd.f32 %v975, %v1001
        %v1015 = vadd.f32 %v976, %v1001
        %v1016 = vadd.f32 %v977, %v1001
        %v1017 = vadd.f32 %v978, %v1001
        %v1018 = vadd.f32 %v979, %v1001
        %v1019 = vadd.f32 %v980, %v1001
        %v1020 = vadd.f32 %v981, %v1001
        %v1021 = vadd.f32 %v982, %v1001
        %v1022 = vadd.f32 %v983, %v1001
        %v1023 = vadd.f32 %v984, %v1001
        %v1024 = vadd.f32 %v985, %v1001
        %v1025 = vadd.f32 %v986, %v1001
        %v1026 = vadd.f32 %v987, %v1001
        %v1027 = vadd.f32 %v988, %v1001
        %v1028 = vadd.f32 %v989, %v1001
        %v1029 = vadd.f32 %v990, %v1001
        %v1030 = vadd.f32 %v991, %v1001
        %v1031 = vadd.f32 %v992, %v1001
        %v1032 = vadd.f32 %v993, %v1001
        %v1033 = vadd.f32 %v994, %v1001
        %v1034 = vadd.f32 %v995, %v1001
        %v1035 = vmax.f32 %v1003, 0.0
        %v1036 = vmax.f32 %v1004, 0.0
        %v1037 = vmax.f32 %v1005, 0.0
        %v1038 = vmax.f32 %v1006, 0.0
        %v1039 = vmax.f32 %v1007, 0.0
        %v1040 = vmax.f32 %v1008, 0.0
        %v1041 = vmax.f32 %v1009, 0.0
        %v1042 = vmax.f32 %v1010, 0.0
        %v1043 = vmax.f32 %v1011, 0.0
        %v1044 = vmax.f32 %v1012, 0.0
        %v1045 = vmax.f32 %v1013, 0.0
        %v1046 = vmax.f32 %v1014, 0.0
        %v1047 = vmax.f32 %v1015, 0.0
        %v1048 = vmax.f32 %v1016, 0.0
        %v1049 = vmax.f32 %v1017, 0.0
        %v1050 = vmax.f32 %v1018, 0.0
        %v1051 = vmax.f32 %v1019, 0.0
        %v1052 = vmax.f32 %v1020, 0.0
        %v1053 = vmax.f32 %v1021, 0.0
        %v1054 = vmax.f32 %v1022, 0.0
        %v1055 = vmax.f32 %v1023, 0.0
        %v1056 = vmax.f32 %v1024, 0.0
        %v1057 = vmax.f32 %v1025, 0.0
        %v1058 = vmax.f32 %v1026, 0.0
        %v1059 = vmax.f32 %v1027, 0.0
        %v1060 = vmax.f32 %v1028, 0.0
        %v1061 = vmax.f32 %v1029, 0.0
        %v1062 = vmax.f32 %v1030, 0.0
        %v1063 = vmax.f32 %v1031, 0.0
        %v1064 = vmax.f32 %v1032, 0.0
        %v1065 = vmax.f32 %v1033, 0.0
        %v1066 = vmax.f32 %v1034, 0.0
        %1067 = vst [vmem:[%s306] sm:$0xff] %v1035
        %1068 = vst [vmem:[%s306 + $0x8] sm:$0xff] %v1036
        %1069 = vst [vmem:[%s306 + $0x10] sm:$0xff] %v1037
        %1070 = vst [vmem:[%s306 + $0x18] sm:$0xff] %v1038
        %1071 = vst [vmem:[%s306 + $0x20] sm:$0xff] %v1039
        %1072 = vst [vmem:[%s306 + $0x28] sm:$0xff] %v1040
        %1073 = vst [vmem:[%s306 + $0x30] sm:$0xff] %v1041
        %1074 = vst [vmem:[%s306 + $0x38] sm:$0xff] %v1042
        %1075 = vst [vmem:[%s306 + $0x40] sm:$0xff] %v1043
        %1076 = vst [vmem:[%s306 + $0x48] sm:$0xff] %v1044
        %1077 = vst [vmem:[%s306 + $0x50] sm:$0xff] %v1045
        %1078 = vst [vmem:[%s306 + $0x58] sm:$0xff] %v1046
        %1079 = vst [vmem:[%s306 + $0x60] sm:$0xff] %v1047
        %1080 = vst [vmem:[%s306 + $0x68] sm:$0xff] %v1048
        %1081 = vst [vmem:[%s306 + $0x70] sm:$0xff] %v1049
        %1082 = vst [vmem:[%s306 + $0x78] sm:$0xff] %v1050
        %1083 = vst [vmem:[%s306 + $0x80] sm:$0xff] %v1051
        %1084 = vst [vmem:[%s306 + $0x88] sm:$0xff] %v1052
        %1085 = vst [vmem:[%s306 + $0x90] sm:$0xff] %v1053
        %1086 = vst [vmem:[%s306 + $0x98] sm:$0xff] %v1054
        %1087 = vst [vmem:[%s306 + $0xa0] sm:$0xff] %v1055
        %1088 = vst [vmem:[%s306 + $0xa8] sm:$0xff] %v1056
        %1089 = vst [vmem:[%s306 + $0xb0] sm:$0xff] %v1057
        %1090 = vst [vmem:[%s306 + $0xb8] sm:$0xff] %v1058
        %1091 = vst [vmem:[%s306 + $0xc0] sm:$0xff] %v1059
        %1092 = vst [vmem:[%s306 + $0xc8] sm:$0xff] %v1060
        %1093 = vst [vmem:[%s306 + $0xd0] sm:$0xff] %v1061
        %1094 = vst [vmem:[%s306 + $0xd8] sm:$0xff] %v1062
        %1095 = vst [vmem:[%s306 + $0xe0] sm:$0xff] %v1063
        %1096 = vst [vmem:[%s306 + $0xe8] sm:$0xff] %v1064
        %1097 = vst [vmem:[%s306 + $0xf0] sm:$0xff] %v1065
        %1098 = vst [vmem:[%s306 + $0xf8] sm:$0xff] %v1066
      $region44: #{style_extractor_forward.12} parent=35 // pred_fallthru
        _
      %s1099 = smul.u32 32, %s20
      %p1100 = scmp.lt.s32.totalorder %s1099, 63
      %s1101 = scalar_select %p1100, %s1099, 63
      %p1102 = scmp.lt.s32.totalorder %s21, 0
      %s1103 = scalar_select %p1102, %s21, 0
      %s1104 = sadd.s32 %s1103, %s1101
      %s1105 = smul.addr %s1104, 8
      %s1106 = scalar_lea.vmem %s4, %s1105
      // Predicated region
      $region45: #{style_extractor_forward.12} parent=35 // pred_check
        %p1107 = pneg %p162
      $region46: #{style_extractor_forward.12} parent=35 // pred_check_branch
        %1109 = sbr.rel (%p1107) target = $region48
      $region47: #{style_extractor_forward.12} parent=35 // pred_region
        %s1110 = smul.u32 32, %s20
      $region48: #{style_extractor_forward.12} parent=35 // pred_fallthru
        _
    $region36: #{style_extractor_forward.12} parent=5 // pred_fallthru
      _
    %p1111 = scmp.le.s32.totalorder 2, %s10
    // Predicated region
    $region49: #{style_extractor_forward.12} parent=5 // pred_check
      %p1112 = pneg %p1111
    $region50: #{style_extractor_forward.12} parent=5 // pred_check_branch
      %1114 = sbr.rel (%p1112) target = $region52
    $region51: #{style_extractor_forward.12} parent=5 // pred_region
      %s1115 = ssub.s32 %s10, 2
      // Predicated region
      $region53: #{style_extractor_forward.12} parent=51 // pred_check
        %p1116 = pneg %p168
      $region54: #{style_extractor_forward.12} parent=51 // pred_check_branch
        %1118 = sbr.rel (%p1116) target = $region56
      $region55: #{style_extractor_forward.12} parent=51 // pred_region
        %s1119 = smul.u32 32, %s23
        %p1120 = scmp.lt.s32.totalorder %s1119, 63
        %s1121 = scalar_select %p1120, %s1119, 63
        %p1122 = scmp.lt.s32.totalorder %s24, 0
        %s1123 = scalar_select %p1122, %s24, 0
        %s1124 = sadd.s32 %s1123, %s1121
        %s1125 = smul.addr %s1124, 8
        %s1126 = scalar_lea.vmem %s4, %s1125
      $region56: #{style_extractor_forward.12} parent=51 // pred_fallthru
        _
    $region52: #{style_extractor_forward.12} parent=5 // pred_fallthru
      _
  $region6: #{style_extractor_forward.12} parent=0 // loop_footer
    %s14 = sadd.s32 1, %s10
  $region7: #{style_extractor_forward.12} parent=0 // loop_footer_branch
    %9 = sbr.rel target = $region3
  $region8: #{style_extractor_forward.12} parent=0 // loop_exit
    _

// kernel: style_extractor_forward.14
$region0: #{style_extractor_forward.14}
  #allocation0 [shape = 'u32[]', space=smem, size = 0x4, offset = 0x4, fixed_abs, tag = 'smem constant byte address 0x4 - core index']
  #allocation1 [shape = 'u32[144,128]{1,0:T(1,128)}', space=vmem, size = 0x12000, scoped, tag = 'internal scratch']
  #allocation2 [shape = 'f32[128,128]{1,0:T(8,128)}', space=vmem, size = 0x10000, scoped, tag = 'scratch operand']
  %s0 = inlined_call_operand.vmem [shape: bf16[128,640], index: 0, kind: input, shape index: {}]
  %s1 = inlined_call_operand.vmem [shape: bf16[640,128], index: 1, kind: input, shape index: {}]
  %s2 = inlined_call_operand.vmem [shape: f32[1,128], index: 2, kind: input, shape index: {}]
  %s3 = inlined_call_operand.vmem [shape: f32[1,128], index: 3, kind: input, shape index: {}]
  %s4 = inlined_call_operand.vmem [shape: f32[128,128], index: 4, kind: output, shape index: {}]
  %s5 = sld [smem:[#allocation0]]
  $region98: #{style_extractor_forward.14} parent=0
    _
  %s7 = ssub.s32 1, %s5
  %s8 = scalar_select 0, %s7, %s5
  $region1: #{style_extractor_forward.14} parent=0
    #allocation3 [shape = 'u8[65536]{0}', space=vmem, size = 0x10000, scoped, tag = 'input window, operand 0']
    loop: start=0, step=1, limit=7
    $region2: #{style_extractor_forward.14} parent=1 // loop_pre_header
      _
    $region3: #{style_extractor_forward.14} parent=1 // loop_header
      %s10 = sphi 0, %s14
      %p11 = scmp.ge.s32.totalorder %s10, 7
      %s17 = sphi 0, %s36
      %s18 = sphi 0, %s32
      %s19 = sphi 0, %s28
      %s20 = sphi 0, %s17
      %s21 = sphi 0, %s18
      %s22 = sphi 0, %s19
      %s23 = sphi 0, %s20
      %s24 = sphi 0, %s21
      %s25 = sphi 0, %s22
      %s41 = sphi 0, %s43
      %s44 = sphi 0, %s41
      %s45 = sphi 0, %s44
      %s61 = sphi 0, %s45
      %s69 = sphi 0, %s71
      %s72 = sphi 0, %s69
      %s73 = sphi 0, %s72
      %s89 = sphi 0, %s73
      %s95 = sphi 0, %s97
      %s98 = sphi 0, %s95
      %s99 = sphi 0, %s98
      %s115 = sphi 0, %s99
      %s121 = sphi 0, %s123
      %s124 = sphi 0, %s121
      %s125 = sphi 0, %s124
      %s141 = sphi 0, %s125
      %s149 = sphi 0, %s151
      %s152 = sphi 0, %s149
      %s153 = sphi 0, %s152
      %s169 = sphi 0, %s153
    $region4: #{style_extractor_forward.14} parent=1 // loop_header_branch
      %13 = sbr.rel (%p11) target = $region8
    $region5: #{style_extractor_forward.14} parent=1 // loop_body
      %s15 = ssub.s32 %s10, 1
      %s16 = ssub.s32 %s10, 2
      %s26 = sadd.s32 1, %s19
      %p27 = scmp.ge.s32.totalorder %s26, 5
      %s28 = scalar_select %p27, 0, %s26
      %s29 = sadd.s32 1, %s18
      %s30 = scalar_select %p27, %s29, %s18
      %p31 = scmp.ge.s32.totalorder %s30, 1
      %s32 = scalar_select %p31, 0, %s30
      %s33 = sadd.s32 1, %s17
      %s34 = scalar_select %p31, %s33, %s17
      %p35 = scmp.ge.s32.totalorder %s34, 1
      %s36 = scalar_select %p35, 0, %s34
      %s37 = ssub.s32 %s17, %s36
      %s38 = ssub.s32 %s19, %s28
      %s39 = sor.u32 %s37, %s38
      %p40 = scmp.eq.s32.totalorder %s39, 0
      %s42 = sadd.s32 %s41, 1
      %s43 = scalar_select %p40, %s41, %s42
      %p46 = pneg %p40
      %p47 = scmp.eq.s32.totalorder %s10, 4
      %p48 = por %p46, %p47
      %p49 = scmp.ne.s32.totalorder %s41, %s44
      %p50 = scmp.eq.s32.totalorder %s10, 0
      %p51 = por %p49, %p50
      %p52 = scmp.ne.s32.totalorder %s41, %s44
      %p53 = scmp.eq.s32.totalorder %s15, 4
      %p54 = por %p52, %p53
      %p55 = scmp.ne.s32.totalorder %s44, %s45
      %p56 = scmp.eq.s32.totalorder %s15, 0
      %p57 = por %p55, %p56
      %p58 = scmp.ne.s32.totalorder %s44, %s45
      %p59 = scmp.eq.s32.totalorder %s16, 4
      %p60 = por %p58, %p59
      %p62 = scmp.ne.s32.totalorder %s45, %s61
      %p63 = scmp.eq.s32.totalorder %s16, 0
      %p64 = por %p62, %p63
      %s65 = ssub.s32 %s19, %s28
      %s66 = ssub.s32 %s18, %s32
      %s67 = sor.u32 %s65, %s66
      %p68 = scmp.eq.s32.totalorder %s67, 0
      %s70 = sadd.s32 %s69, 1
      %s71 = scalar_select %p68, %s69, %s70
      %p74 = pneg %p68
      %p75 = scmp.eq.s32.totalorder %s10, 4
      %p76 = por %p74, %p75
      %p77 = scmp.ne.s32.totalorder %s69, %s72
      %p78 = scmp.eq.s32.totalorder %s10, 0
      %p79 = por %p77, %p78
      %p80 = scmp.ne.s32.totalorder %s69, %s72
      %p81 = scmp.eq.s32.totalorder %s15, 4
      %p82 = por %p80, %p81
      %p83 = scmp.ne.s32.totalorder %s72, %s73
      %p84 = scmp.eq.s32.totalorder %s15, 0
      %p85 = por %p83, %p84
      %p86 = scmp.ne.s32.totalorder %s72, %s73
      %p87 = scmp.eq.s32.totalorder %s16, 4
      %p88 = por %p86, %p87
      %p90 = scmp.ne.s32.totalorder %s73, %s89
      %p91 = scmp.eq.s32.totalorder %s16, 0
      %p92 = por %p90, %p91
      %s93 = ssub.s32 %s18, %s32
      %p94 = scmp.eq.s32.totalorder %s93, 0
      %s96 = sadd.s32 %s95, 1
      %s97 = scalar_select %p94, %s95, %s96
      %p100 = pneg %p94
      %p101 = scmp.eq.s32.totalorder %s10, 4
      %p102 = por %p100, %p101
      %p103 = scmp.ne.s32.totalorder %s95, %s98
      %p104 = scmp.eq.s32.totalorder %s10, 0
      %p105 = por %p103, %p104
      %p106 = scmp.ne.s32.totalorder %s95, %s98
      %p107 = scmp.eq.s32.totalorder %s15, 4
      %p108 = por %p106, %p107
      %p109 = scmp.ne.s32.totalorder %s98, %s99
      %p110 = scmp.eq.s32.totalorder %s15, 0
      %p111 = por %p109, %p110
      %p112 = scmp.ne.s32.totalorder %s98, %s99
      %p113 = scmp.eq.s32.totalorder %s16, 4
      %p114 = por %p112, %p113
      %p116 = scmp.ne.s32.totalorder %s99, %s115
      %p117 = scmp.eq.s32.totalorder %s16, 0
      %p118 = por %p116, %p117
      %s119 = ssub.s32 %s18, %s32
      %p120 = scmp.eq.s32.totalorder %s119, 0
      %s122 = sadd.s32 %s121, 1
      %s123 = scalar_select %p120, %s121, %s122
      %p126 = pneg %p120
      %p127 = scmp.eq.s32.totalorder %s10, 4
      %p128 = por %p126, %p127
      %p129 = scmp.ne.s32.totalorder %s121, %s124
      %p130 = scmp.eq.s32.totalorder %s10, 0
      %p131 = por %p129, %p130
      %p132 = scmp.ne.s32.totalorder %s121, %s124
      %p133 = scmp.eq.s32.totalorder %s15, 4
      %p134 = por %p132, %p133
      %p135 = scmp.ne.s32.totalorder %s124, %s125
      %p136 = scmp.eq.s32.totalorder %s15, 0
      %p137 = por %p135, %p136
      %p138 = scmp.ne.s32.totalorder %s124, %s125
      %p139 = scmp.eq.s32.totalorder %s16, 4
      %p140 = por %p138, %p139
      %p142 = scmp.ne.s32.totalorder %s125, %s141
      %p143 = scmp.eq.s32.totalorder %s16, 0
      %p144 = por %p142, %p143
      %s145 = ssub.s32 %s17, %s36
      %s146 = ssub.s32 %s18, %s32
      %s147 = sor.u32 %s145, %s146
      %p148 = scmp.eq.s32.totalorder %s147, 0
      %s150 = sadd.s32 %s149, 1
      %s151 = scalar_select %p148, %s149, %s150
      %p154 = pneg %p148
      %p155 = scmp.eq.s32.totalorder %s10, 4
      %p156 = por %p154, %p155
      %p157 = scmp.ne.s32.totalorder %s149, %s152
      %p158 = scmp.eq.s32.totalorder %s10, 0
      %p159 = por %p157, %p158
      %p160 = scmp.ne.s32.totalorder %s149, %s152
      %p161 = scmp.eq.s32.totalorder %s15, 4
      %p162 = por %p160, %p161
      %p163 = scmp.ne.s32.totalorder %s152, %s153
      %p164 = scmp.eq.s32.totalorder %s15, 0
      %p165 = por %p163, %p164
      %p166 = scmp.ne.s32.totalorder %s152, %s153
      %p167 = scmp.eq.s32.totalorder %s16, 4
      %p168 = por %p166, %p167
      %p170 = scmp.ne.s32.totalorder %s153, %s169
      %p171 = scmp.eq.s32.totalorder %s16, 0
      %p172 = por %p170, %p171
      %p173 = scmp.le.s32.totalorder 1, %s10
      %p174 = scmp.lt.s32.totalorder %s10, 6
      %p175 = pnand %p173, %p174
      %p176 = pneg %p175
      // Predicated region
      $region9: #{style_extractor_forward.14} parent=5 // pred_check
        _
      $region10: #{style_extractor_forward.14} parent=5 // pred_check_branch
        %178 = sbr.rel (%p175) target = $region12
      $region11: #{style_extractor_forward.14} parent=5 // pred_region
        %s179 = ssub.s32 %s10, 1
        // Predicated region
        $region13: #{style_extractor_forward.14} parent=11 // pred_check
          %p180 = pneg %p111
        $region14: #{style_extractor_forward.14} parent=11 // pred_check_branch
          %182 = sbr.rel (%p180) target = $region16
        $region15: #{style_extractor_forward.14} parent=11 // pred_region
          %p183 = scmp.lt.s32.totalorder %s21, 0
          %s184 = scalar_select %p183, %s21, 0
          %s185 = scalar_lea.vmem %s2, %s184
        $region16: #{style_extractor_forward.14} parent=11 // pred_fallthru
          _
        // Predicated region
        $region17: #{style_extractor_forward.14} parent=11 // pred_check
          %p186 = pneg %p137
        $region18: #{style_extractor_forward.14} parent=11 // pred_check_branch
          %188 = sbr.rel (%p186) target = $region20
        $region19: #{style_extractor_forward.14} parent=11 // pred_region
          %p189 = scmp.lt.s32.totalorder %s21, 0
          %s190 = scalar_select %p189, %s21, 0
          %s191 = scalar_lea.vmem %s3, %s190
        $region20: #{style_extractor_forward.14} parent=11 // pred_fallthru
          _
      $region12: #{style_extractor_forward.14} parent=5 // pred_fallthru
        _
      %p192 = scmp.lt.s32.totalorder %s10, 5
      // Predicated region
      $region21: #{style_extractor_forward.14} parent=5 // pred_check
        %p193 = pneg %p192
      $region22: #{style_extractor_forward.14} parent=5 // pred_check_branch
        %195 = sbr.rel (%p193) target = $region24
      $region23: #{style_extractor_forward.14} parent=5 // pred_region
        // Predicated region
        $region25: #{style_extractor_forward.14} parent=23 // pred_check
          %p196 = pneg %p51
        $region26: #{style_extractor_forward.14} parent=23 // pred_check_branch
          %198 = sbr.rel (%p196) target = $region28
        $region27: #{style_extractor_forward.14} parent=23 // pred_region
          %s199 = sand.u32 %s41, 1
          %s200 = sand.u32 %s41, 1
          %s201 = smul.addr %s200, 64
          %s202 = scalar_lea.vmem [#allocation3], %s201
          %s203 = smul.u32 16, %s17
          %s204 = smul.addr %s203, 5
          %s205 = sadd.s32 %s19, %s204
          %s206 = smul.addr %s205, 4
          %s207 = scalar_lea.vmem %s0, %s206
          // Predicated region
          $region29: #{style_extractor_forward.14} parent=27 // pred_check
            _
          $region30: #{style_extractor_forward.14} parent=27 // pred_check_branch
            %209 = sbr.rel (0) target = $region32
          $region31: #{style_extractor_forward.14} parent=27 // pred_region
            // Predicated region
            $region33: #{style_extractor_forward.14} parent=31 // pred_check
              _
            $region34: #{style_extractor_forward.14} parent=31 // pred_check_branch
              %211 = sbr.rel target = $region36
            $region35: #{style_extractor_forward.14} parent=31 // pred_region
              // Predicated region
              $region48: #{style_extractor_forward.14} parent=35 // pred_check
                _
              $region49: #{style_extractor_forward.14} parent=35 // pred_check_branch
                %256 = sbr.rel (0) target = $region51
              $region50: #{style_extractor_forward.14} parent=35 // pred_region
                loop: start=0, step=1, limit=1
                $region52: #{style_extractor_forward.14} parent=50 // loop_pre_header
                  _
                $region53: #{style_extractor_forward.14} parent=50 // loop_header
                  %s258 = sphi 0, %s262
                  %p259 = scmp.ge.s32.totalorder %s258, 1
                  %s263 = sphi %s207, %s207
                  %s264 = sphi %s202, %s202
                $region54: #{style_extractor_forward.14} parent=50 // loop_header_branch
                  %261 = sbr.rel (%p259) target = $region58
                $region55: #{style_extractor_forward.14} parent=50 // loop_body
                  _
                $region56: #{style_extractor_forward.14} parent=50 // loop_footer
                  %s262 = sadd.s32 1, %s258
                $region57: #{style_extractor_forward.14} parent=50 // loop_footer_branch
                  %257 = sbr.rel target = $region53
                $region58: #{style_extractor_forward.14} parent=50 // loop_exit
                  _
                loop: start=0, step=1, limit=1
                $region59: #{style_extractor_forward.14} parent=50 // loop_pre_header
                  _
                $region60: #{style_extractor_forward.14} parent=50 // loop_header
                  %s267 = sphi 0, %s271
                  %p268 = scmp.ge.s32.totalorder %s267, 1
                  %s272 = sphi %s207, %s207
                  %s273 = sphi %s202, %s202
                $region61: #{style_extractor_forward.14} parent=50 // loop_header_branch
                  %270 = sbr.rel (%p268) target = $region65
                $region62: #{style_extractor_forward.14} parent=50 // loop_body
                  %v274 = vld [vmem:[%s272] sm:$0xf]
                  %275 = vst [vmem:[%s273] sm:$0xf] %v274
                  %v276 = vld [vmem:[%s272 + $0x14] sm:$0xf]
                  %277 = vst [vmem:[%s273 + $0x4] sm:$0xf] %v276
                  %v278 = vld [vmem:[%s272 + $0x28] sm:$0xf]
                  %279 = vst [vmem:[%s273 + $0x8] sm:$0xf] %v278
                  %v280 = vld [vmem:[%s272 + $0x3c] sm:$0xf]
                  %281 = vst [vmem:[%s273 + $0xc] sm:$0xf] %v280
                  %v282 = vld [vmem:[%s272 + $0x50] sm:$0xf]
                  %283 = vst [vmem:[%s273 + $0x10] sm:$0xf] %v282
                  %v284 = vld [vmem:[%s272 + $0x64] sm:$0xf]
                  %285 = vst [vmem:[%s273 + $0x14] sm:$0xf] %v284
                  %v286 = vld [vmem:[%s272 + $0x78] sm:$0xf]
                  %287 = vst [vmem:[%s273 + $0x18] sm:$0xf] %v286
                  %v288 = vld [vmem:[%s272 + $0x8c] sm:$0xf]
                  %289 = vst [vmem:[%s273 + $0x1c] sm:$0xf] %v288
                  %v290 = vld [vmem:[%s272 + $0xa0] sm:$0xf]
                  %291 = vst [vmem:[%s273 + $0x20] sm:$0xf] %v290
                  %v292 = vld [vmem:[%s272 + $0xb4] sm:$0xf]
                  %293 = vst [vmem:[%s273 + $0x24] sm:$0xf] %v292
                  %v294 = vld [vmem:[%s272 + $0xc8] sm:$0xf]
                  %295 = vst [vmem:[%s273 + $0x28] sm:$0xf] %v294
                  %v296 = vld [vmem:[%s272 + $0xdc] sm:$0xf]
                  %297 = vst [vmem:[%s273 + $0x2c] sm:$0xf] %v296
                  %v298 = vld [vmem:[%s272 + $0xf0] sm:$0xf]
                  %299 = vst [vmem:[%s273 + $0x30] sm:$0xf] %v298
                  %v300 = vld [vmem:[%s272 + $0x104] sm:$0xf]
                  %301 = vst [vmem:[%s273 + $0x34] sm:$0xf] %v300
                  %v302 = vld [vmem:[%s272 + $0x118] sm:$0xf]
                  %303 = vst [vmem:[%s273 + $0x38] sm:$0xf] %v302
                  %v304 = vld [vmem:[%s272 + $0x12c] sm:$0xf]
                  %305 = vst [vmem:[%s273 + $0x3c] sm:$0xf] %v304
                $region63: #{style_extractor_forward.14} parent=50 // loop_footer
                  %s271 = sadd.s32 1, %s267
                $region64: #{style_extractor_forward.14} parent=50 // loop_footer_branch
                  %266 = sbr.rel target = $region60
                $region65: #{style_extractor_forward.14} parent=50 // loop_exit
                  _
              $region51: #{style_extractor_forward.14} parent=35 // pred_fallthru
                _
            $region36: #{style_extractor_forward.14} parent=31 // pred_fallthru
              _
            // Predicated region
            $region37: #{style_extractor_forward.14} parent=31 // pred_check
              _
            $region38: #{style_extractor_forward.14} parent=31 // pred_check_branch
              %213 = sbr.rel (0) target = $region40
            $region39: #{style_extractor_forward.14} parent=31 // pred_region
              loop: start=0, step=1, limit=1
              $region41: #{style_extractor_forward.14} parent=39 // loop_pre_header
                _
              $region42: #{style_extractor_forward.14} parent=39 // loop_header
                %s216 = sphi 0, %s220
                %p217 = scmp.ge.s32.totalorder %s216, 1
                %s221 = sphi %s207, %s207
                %s222 = sphi %s202, %s202
              $region43: #{style_extractor_forward.14} parent=39 // loop_header_branch
                %219 = sbr.rel (%p217) target = $region47
              $region44: #{style_extractor_forward.14} parent=39 // loop_body
                %v223 = vld [vmem:[%s221] sm:$0xf]
                %224 = vst [vmem:[%s222] sm:$0xf] %v223
                %v225 = vld [vmem:[%s221 + $0x14] sm:$0xf]
                %226 = vst [vmem:[%s222 + $0x4] sm:$0xf] %v225
                %v227 = vld [vmem:[%s221 + $0x28] sm:$0xf]
                %228 = vst [vmem:[%s222 + $0x8] sm:$0xf] %v227
                %v229 = vld [vmem:[%s221 + $0x3c] sm:$0xf]
                %230 = vst [vmem:[%s222 + $0xc] sm:$0xf] %v229
                %v231 = vld [vmem:[%s221 + $0x50] sm:$0xf]
                %232 = vst [vmem:[%s222 + $0x10] sm:$0xf] %v231
                %v233 = vld [vmem:[%s221 + $0x64] sm:$0xf]
                %234 = vst [vmem:[%s222 + $0x14] sm:$0xf] %v233
                %v235 = vld [vmem:[%s221 + $0x78] sm:$0xf]
                %236 = vst [vmem:[%s222 + $0x18] sm:$0xf] %v235
                %v237 = vld [vmem:[%s221 + $0x8c] sm:$0xf]
                %238 = vst [vmem:[%s222 + $0x1c] sm:$0xf] %v237
                %v239 = vld [vmem:[%s221 + $0xa0] sm:$0xf]
                %240 = vst [vmem:[%s222 + $0x20] sm:$0xf] %v239
                %v241 = vld [vmem:[%s221 + $0xb4] sm:$0xf]
                %242 = vst [vmem:[%s222 + $0x24] sm:$0xf] %v241
                %v243 = vld [vmem:[%s221 + $0xc8] sm:$0xf]
                %244 = vst [vmem:[%s222 + $0x28] sm:$0xf] %v243
                %v245 = vld [vmem:[%s221 + $0xdc] sm:$0xf]
                %246 = vst [vmem:[%s222 + $0x2c] sm:$0xf] %v245
                %v247 = vld [vmem:[%s221 + $0xf0] sm:$0xf]
                %248 = vst [vmem:[%s222 + $0x30] sm:$0xf] %v247
                %v249 = vld [vmem:[%s221 + $0x104] sm:$0xf]
                %250 = vst [vmem:[%s222 + $0x34] sm:$0xf] %v249
                %v251 = vld [vmem:[%s221 + $0x118] sm:$0xf]
                %252 = vst [vmem:[%s222 + $0x38] sm:$0xf] %v251
                %v253 = vld [vmem:[%s221 + $0x12c] sm:$0xf]
                %254 = vst [vmem:[%s222 + $0x3c] sm:$0xf] %v253
              $region45: #{style_extractor_forward.14} parent=39 // loop_footer
                %s220 = sadd.s32 1, %s216
              $region46: #{style_extractor_forward.14} parent=39 // loop_footer_branch
                %215 = sbr.rel target = $region42
              $region47: #{style_extractor_forward.14} parent=39 // loop_exit
                _
            $region40: #{style_extractor_forward.14} parent=31 // pred_fallthru
              _
          $region32: #{style_extractor_forward.14} parent=27 // pred_fallthru
            _
          %306 = vnop
        $region28: #{style_extractor_forward.14} parent=23 // pred_fallthru
          _
        // Predicated region
        $region66: #{style_extractor_forward.14} parent=23 // pred_check
          %p307 = pneg %p79
        $region67: #{style_extractor_forward.14} parent=23 // pred_check_branch
          %309 = sbr.rel (%p307) target = $region69
        $region68: #{style_extractor_forward.14} parent=23 // pred_region
          %s310 = smul.u32 16, %s19
          %p311 = scmp.lt.s32.totalorder %s310, 79
          %s312 = scalar_select %p311, %s310, 79
          %p313 = scmp.lt.s32.totalorder %s18, 0
          %s314 = scalar_select %p313, %s18, 0
          %s315 = sadd.s32 %s314, %s312
          %s316 = smul.addr %s315, 4
          %s317 = scalar_lea.vmem %s1, %s316
          %s318 = smul.u32 16, %s19
        $region69: #{style_extractor_forward.14} parent=23 // pred_fallthru
          _
      $region24: #{style_extractor_forward.14} parent=5 // pred_fallthru
        _
      %p319 = scmp.le.s32.totalorder 1, %s10
      %p320 = scmp.lt.s32.totalorder %s10, 6
      %p321 = pnand %p319, %p320
      %p322 = pneg %p321
      // Predicated region
      $region70: #{style_extractor_forward.14} parent=5 // pred_check
        _
      $region71: #{style_extractor_forward.14} parent=5 // pred_check_branch
        %324 = sbr.rel (%p321) target = $region73
      $region72: #{style_extractor_forward.14} parent=5 // pred_region
        %s325 = ssub.s32 %s10, 1
        %s326 = sand.u32 %s44, 1
        %s327 = sand.u32 %s44, 1
        %s328 = smul.addr %s327, 64
        %s329 = scalar_lea.vmem [#allocation3], %s328
        // Predicated region
        $region74: #{style_extractor_forward.14} parent=72 // pred_check
          %p330 = pneg %p57
        $region75: #{style_extractor_forward.14} parent=72 // pred_check_branch
          %332 = sbr.rel (%p330) target = $region77
        $region76: #{style_extractor_forward.14} parent=72 // pred_region
          _
        $region77: #{style_extractor_forward.14} parent=72 // pred_fallthru
          _
        %s333 = sand.u32 %s44, 1
        %s334 = sand.u32 %s44, 1
        %s335 = smul.addr %s334, 64
        %s336 = scalar_lea.vmem [#allocation3], %s335
        %p337 = pneg %p57
        %p338 = pneg %p54
        %s339 = smul.u32 16, %s22
        %p340 = scmp.lt.s32.totalorder %s339, 79
        %s341 = scalar_select %p340, %s339, 79
        %p342 = scmp.lt.s32.totalorder %s21, 0
        %s343 = scalar_select %p342, %s21, 0
        %s344 = sadd.s32 %s343, %s341
        %s345 = smul.addr %s344, 4
        %s346 = scalar_lea.vmem %s1, %s345
        %p347 = pneg %p85
        %p348 = pneg %p82
        %p349 = scmp.lt.s32.totalorder %s21, 0
        %s350 = scalar_select %p349, %s21, 0
        %s351 = scalar_lea.vmem %s2, %s350
        %p352 = pneg %p111
        %p353 = pneg %p108
        %p354 = scmp.lt.s32.totalorder %s21, 0
        %s355 = scalar_select %p354, %s21, 0
        %s356 = scalar_lea.vmem %s3, %s355
        %p357 = pneg %p137
        %p358 = pneg %p134
        %p359 = pneg %p165
        %p360 = pneg %p162
        %s361 = smul.u32 16, %s20
        %p362 = scmp.lt.s32.totalorder %s361, 15
        %s363 = scalar_select %p362, %s361, 15
        %p364 = scmp.lt.s32.totalorder %s21, 0
        %s365 = scalar_select %p364, %s21, 0
        %s366 = sadd.s32 %s365, %s363
        %s367 = smul.addr %s366, 8
        %s368 = scalar_lea.vmem %s4, %s367
        %s369 = smul.u32 16, %s20
        %s370 = smul.u32 16, %s22
        %p371 = scmp.lt.s32.totalorder %s370, 79
        %s372 = scalar_select %p371, %s370, 79
        %p373 = scmp.lt.s32.totalorder %s21, 0
        %s374 = scalar_select %p373, %s21, 0
        %s375 = sadd.s32 %s374, %s372
        %s376 = smul.addr %s375, 4
        %s377 = scalar_lea.vmem %s1, %s376
        %s378 = smul.u32 16, %s22
        %p379 = scmp.lt.s32.totalorder %s21, 0
        %s380 = scalar_select %p379, %s21, 0
        %s381 = scalar_lea.vmem %s2, %s380
        %p382 = scmp.lt.s32.totalorder %s21, 0
        %s383 = scalar_select %p382, %s21, 0
        %s384 = scalar_lea.vmem %s3, %s383
        %s385 = smul.u32 16, %s20
        %p386 = scmp.lt.s32.totalorder %s385, 15
        %s387 = scalar_select %p386, %s385, 15
        %p388 = scmp.lt.s32.totalorder %s21, 0
        %s389 = scalar_select %p388, %s21, 0
        %s390 = sadd.s32 %s389, %s387
        %s391 = smul.addr %s390, 8
        %s392 = scalar_lea.vmem %s4, %s391
        %s393 = smul.u32 16, %s20
        %p395 = scmp.eq.s32.totalorder %s22, 0
        // Predicated region
        $region78: #{style_extractor_forward.14} parent=72 // pred_check
          %p396 = pneg %p395
        $region79: #{style_extractor_forward.14} parent=72 // pred_check_branch
          %398 = sbr.rel (%p396) target = $region81
        $region80: #{style_extractor_forward.14} parent=72 // pred_region
          %399 = vst [vmem:[#allocation2] sm:$0xff] 0.0
          %400 = vst [vmem:[#allocation2 + $0x8] sm:$0xff] 0.0
          %401 = vst [vmem:[#allocation2 + $0x10] sm:$0xff] 0.0
          %402 = vst [vmem:[#allocation2 + $0x18] sm:$0xff] 0.0
          %403 = vst [vmem:[#allocation2 + $0x20] sm:$0xff] 0.0
          %404 = vst [vmem:[#allocation2 + $0x28] sm:$0xff] 0.0
          %405 = vst [vmem:[#allocation2 + $0x30] sm:$0xff] 0.0
          %406 = vst [vmem:[#allocation2 + $0x38] sm:$0xff] 0.0
          %407 = vst [vmem:[#allocation2 + $0x40] sm:$0xff] 0.0
          %408 = vst [vmem:[#allocation2 + $0x48] sm:$0xff] 0.0
          %409 = vst [vmem:[#allocation2 + $0x50] sm:$0xff] 0.0
          %410 = vst [vmem:[#allocation2 + $0x58] sm:$0xff] 0.0
          %411 = vst [vmem:[#allocation2 + $0x60] sm:$0xff] 0.0
          %412 = vst [vmem:[#allocation2 + $0x68] sm:$0xff] 0.0
          %413 = vst [vmem:[#allocation2 + $0x70] sm:$0xff] 0.0
          %414 = vst [vmem:[#allocation2 + $0x78] sm:$0xff] 0.0
        $region81: #{style_extractor_forward.14} parent=72 // pred_fallthru
          _
        %v415 = vld [vmem:[#allocation2] sm:$0xff]
        %v416 = vld [vmem:[#allocation2 + $0x8] sm:$0xff]
        %v417 = vld [vmem:[#allocation2 + $0x10] sm:$0xff]
        %v418 = vld [vmem:[#allocation2 + $0x18] sm:$0xff]
        %v419 = vld [vmem:[#allocation2 + $0x20] sm:$0xff]
        %v420 = vld [vmem:[#allocation2 + $0x28] sm:$0xff]
        %v421 = vld [vmem:[#allocation2 + $0x30] sm:$0xff]
        %v422 = vld [vmem:[#allocation2 + $0x38] sm:$0xff]
        %v423 = vld [vmem:[#allocation2 + $0x40] sm:$0xff]
        %v424 = vld [vmem:[#allocation2 + $0x48] sm:$0xff]
        %v425 = vld [vmem:[#allocation2 + $0x50] sm:$0xff]
        %v426 = vld [vmem:[#allocation2 + $0x58] sm:$0xff]
        %v427 = vld [vmem:[#allocation2 + $0x60] sm:$0xff]
        %v428 = vld [vmem:[#allocation2 + $0x68] sm:$0xff]
        %v429 = vld [vmem:[#allocation2 + $0x70] sm:$0xff]
        %v430 = vld [vmem:[#allocation2 + $0x78] sm:$0xff]
        %v431 = vld [vmem:[%s329] sm:$0xf]
        %v432 = vld [vmem:[%s329 + $0x4] sm:$0xf]
        %v433 = vld [vmem:[%s329 + $0x8] sm:$0xf]
        %v434 = vld [vmem:[%s329 + $0xc] sm:$0xf]
        %v435 = vld [vmem:[%s329 + $0x10] sm:$0xf]
        %v436 = vld [vmem:[%s329 + $0x14] sm:$0xf]
        %v437 = vld [vmem:[%s329 + $0x18] sm:$0xf]
        %v438 = vld [vmem:[%s329 + $0x1c] sm:$0xf]
        %v439 = vld [vmem:[%s329 + $0x20] sm:$0xf]
        %v440 = vld [vmem:[%s329 + $0x24] sm:$0xf]
        %v441 = vld [vmem:[%s329 + $0x28] sm:$0xf]
        %v442 = vld [vmem:[%s329 + $0x2c] sm:$0xf]
        %v443 = vld [vmem:[%s329 + $0x30] sm:$0xf]
        %v444 = vld [vmem:[%s329 + $0x34] sm:$0xf]
        %v445 = vld [vmem:[%s329 + $0x38] sm:$0xf]
        %v446 = vld [vmem:[%s329 + $0x3c] sm:$0xf]
        %v447 = vld [vmem:[%s377] sm:$0xf]
        %v448 = vld [vmem:[%s377 + $0x4] sm:$0xf]
        %v449 = vld [vmem:[%s377 + $0x8] sm:$0xf]
        %v450 = vld [vmem:[%s377 + $0xc] sm:$0xf]
        %v451 = vld [vmem:[%s377 + $0x10] sm:$0xf]
        %v452 = vld [vmem:[%s377 + $0x14] sm:$0xf]
        %v453 = vld [vmem:[%s377 + $0x18] sm:$0xf]
        %v454 = vld [vmem:[%s377 + $0x1c] sm:$0xf]
        %v455 = vld [vmem:[%s377 + $0x20] sm:$0xf]
        %v456 = vld [vmem:[%s377 + $0x24] sm:$0xf]
        %v457 = vld [vmem:[%s377 + $0x28] sm:$0xf]
        %v458 = vld [vmem:[%s377 + $0x2c] sm:$0xf]
        %v459 = vld [vmem:[%s377 + $0x30] sm:$0xf]
        %v460 = vld [vmem:[%s377 + $0x34] sm:$0xf]
        %v461 = vld [vmem:[%s377 + $0x38] sm:$0xf]
        %v462 = vld [vmem:[%s377 + $0x3c] sm:$0xf]
        %v479 = vunpack.c.l.b16 %v431
        %v480 = vunpack.c.l.b16 %v432
        %v481 = vunpack.c.l.b16 %v433
        %v482 = vunpack.c.l.b16 %v434
        %v483 = vunpack.c.l.b16 %v435
        %v484 = vunpack.c.l.b16 %v436
        %v485 = vunpack.c.l.b16 %v437
        %v486 = vunpack.c.l.b16 %v438
        %v487 = vunpack.c.l.b16 %v439
        %v488 = vunpack.c.l.b16 %v440
        %v489 = vunpack.c.l.b16 %v441
        %v490 = vunpack.c.l.b16 %v442
        %v491 = vunpack.c.l.b16 %v443
        %v492 = vunpack.c.l.b16 %v444
        %v493 = vunpack.c.l.b16 %v445
        %v494 = vunpack.c.l.b16 %v446
        %v495 = vpack.c.b16 %v480, %v479
        %v496 = vpack.c.b16 %v482, %v481
        %v497 = vpack.c.b16 %v484, %v483
        %v498 = vpack.c.b16 %v486, %v485
        %v499 = vpack.c.b16 %v488, %v487
        %v500 = vpack.c.b16 %v490, %v489
        %v501 = vpack.c.b16 %v492, %v491
        %v502 = vpack.c.b16 %v494, %v493
        %v527 = vunpack.c.l.b16 %v447
        %v528 = vunpack.c.l.b16 %v448
        %v529 = vunpack.c.l.b16 %v449
        %v530 = vunpack.c.l.b16 %v450
        %v531 = vunpack.c.l.b16 %v451
        %v532 = vunpack.c.l.b16 %v452
        %v533 = vunpack.c.l.b16 %v453
        %v534 = vunpack.c.l.b16 %v454
        %v535 = vunpack.c.l.b16 %v455
        %v536 = vunpack.c.l.b16 %v456
        %v537 = vunpack.c.l.b16 %v457
        %v538 = vunpack.c.l.b16 %v458
        %v539 = vunpack.c.l.b16 %v459
        %v540 = vunpack.c.l.b16 %v460
        %v541 = vunpack.c.l.b16 %v461
        %v542 = vunpack.c.l.b16 %v462
        %v543 = vpack.c.b16 %v528, %v527
        %v544 = vpack.c.b16 %v530, %v529
        %v545 = vpack.c.b16 %v532, %v531
        %v546 = vpack.c.b16 %v534, %v533
        %v547 = vpack.c.b16 %v536, %v535
        %v548 = vpack.c.b16 %v538, %v537
        %v549 = vpack.c.b16 %v540, %v539
        %v550 = vpack.c.b16 %v542, %v541
        %559 = vmatprep.subr.bf16.mxu0 0
        %560 = vmatpush1.bf16.msra.mxu0 %v543
        %561 = vmatprep.subr.bf16.mxu0 0
        %562 = vmatpush1.bf16.msra.mxu0 %v544
        %563 = vmatprep.subr.bf16.mxu0 0
        %564 = vmatpush1.bf16.msra.mxu0 %v545
        %565 = vmatprep.subr.bf16.mxu0 0
        %566 = vmatpush1.bf16.msra.mxu0 %v546
        %567 = vmatprep.subr.bf16.mxu0 0
        %568 = vmatpush1.bf16.msra.mxu0 %v547
        %569 = vmatprep.subr.bf16.mxu0 0
        %570 = vmatpush1.bf16.msra.mxu0 %v548
        %571 = vmatprep.subr.bf16.mxu0 0
        %572 = vmatpush1.bf16.msra.mxu0 %v549
        %573 = vmatprep.subr.bf16.mxu0 0
        %574 = vmatpush1.bf16.msra.mxu0 %v550
        %575 = vmatprep.subr.bf16.mxu0 0
        %576 = vmatpush1.bf16.msra.mxu0 0
        %577 = vmatprep.subr.bf16.mxu0 0
        %578 = vmatpush1.bf16.msra.mxu0 0
        %579 = vmatprep.subr.bf16.mxu0 0
        %580 = vmatpush1.bf16.msra.mxu0 0
        %581 = vmatprep.subr.bf16.mxu0 0
        %582 = vmatpush1.bf16.msra.mxu0 0
        %583 = vmatprep.subr.bf16.mxu0 0
        %584 = vmatpush1.bf16.msra.mxu0 0
        %585 = vmatprep.subr.bf16.mxu0 0
        %586 = vmatpush1.bf16.msra.mxu0 0
        %587 = vmatprep.subr.bf16.mxu0 0
        %588 = vmatpush1.bf16.msra.mxu0 0
        %589 = vmatprep.subr.bf16.mxu0 0
        %590 = vmatpush1.bf16.msra.mxu0 0
        %591 = vmatprep.mubr.bf16.mxu0 0
        %592 = vmatmul.mubr.bf16.gmra.mrb[0].mxu0 %v495
        %v593 = vpop.f32.mrb[0].mxu0
        %v594 = vadd.f32 0.0, %v593
        %v595 = vpop.f32.mrb[0].mxu0
        %v596 = vpop.f32.mrb[0].mxu0
        %v597 = vadd.f32 0.0, %v596
        %v598 = vpop.f32.mrb[0].mxu0
        %599 = vmatprep.mubr.bf16.mxu0 0
        %600 = vmatmul.mubr.bf16.gmra.mrb[0].mxu0 %v496
        %v601 = vpop.f32.mrb[0].mxu0
        %v602 = vadd.f32 0.0, %v601
        %v603 = vpop.f32.mrb[0].mxu0
        %v604 = vpop.f32.mrb[0].mxu0
        %v605 = vadd.f32 0.0, %v604
        %v606 = vpop.f32.mrb[0].mxu0
        %607 = vmatprep.mubr.bf16.mxu0 0
        %608 = vmatmul.mubr.bf16.gmra.mrb[0].mxu0 %v497
        %v609 = vpop.f32.mrb[0].mxu0
        %v610 = vadd.f32 0.0, %v609
        %v611 = vpop.f32.mrb[0].mxu0
        %v612 = vpop.f32.mrb[0].mxu0
        %v613 = vadd.f32 0.0, %v612
        %v614 = vpop.f32.mrb[0].mxu0
        %615 = vmatprep.mubr.bf16.mxu0 0
        %616 = vmatmul.mubr.bf16.gmra.mrb[0].mxu0 %v498
        %v617 = vpop.f32.mrb[0].mxu0
        %v618 = vadd.f32 0.0, %v617
        %v619 = vpop.f32.mrb[0].mxu0
        %v620 = vpop.f32.mrb[0].mxu0
        %v621 = vadd.f32 0.0, %v620
        %v622 = vpop.f32.mrb[0].mxu0
        %623 = vmatprep.mubr.bf16.mxu0 0
        %624 = vmatmul.mubr.bf16.gmra.mrb[0].mxu0 %v499
        %v625 = vpop.f32.mrb[0].mxu0
        %v626 = vadd.f32 0.0, %v625
        %v627 = vpop.f32.mrb[0].mxu0
        %v628 = vpop.f32.mrb[0].mxu0
        %v629 = vadd.f32 0.0, %v628
        %v630 = vpop.f32.mrb[0].mxu0
        %631 = vmatprep.mubr.bf16.mxu0 0
        %632 = vmatmul.mubr.bf16.gmra.mrb[0].mxu0 %v500
        %v633 = vpop.f32.mrb[0].mxu0
        %v634 = vadd.f32 0.0, %v633
        %v635 = vpop.f32.mrb[0].mxu0
        %v636 = vpop.f32.mrb[0].mxu0
        %v637 = vadd.f32 0.0, %v636
        %v638 = vpop.f32.mrb[0].mxu0
        %639 = vmatprep.mubr.bf16.mxu0 0
        %640 = vmatmul.mubr.bf16.gmra.mrb[0].mxu0 %v501
        %v641 = vpop.f32.mrb[0].mxu0
        %v642 = vadd.f32 0.0, %v641
        %v643 = vpop.f32.mrb[0].mxu0
        %v644 = vpop.f32.mrb[0].mxu0
        %v645 = vadd.f32 0.0, %v644
        %v646 = vpop.f32.mrb[0].mxu0
        %647 = vmatprep.mubr.bf16.mxu0 0
        %648 = vmatmul.mubr.bf16.gmra.mrb[0].mxu0 %v502
        %v649 = vpop.f32.mrb[0].mxu0
        %v650 = vadd.f32 0.0, %v649
        %v651 = vpop.f32.mrb[0].mxu0
        %v652 = vpop.f32.mrb[0].mxu0
        %v653 = vadd.f32 0.0, %v652
        %v654 = vpop.f32.mrb[0].mxu0
        %655 = vdwg.mxu0
        %v656 = vadd.f32 %v415, %v594
        %v657 = vadd.f32 %v416, %v597
        %v658 = vadd.f32 %v417, %v602
        %v659 = vadd.f32 %v418, %v605
        %v660 = vadd.f32 %v419, %v610
        %v661 = vadd.f32 %v420, %v613
        %v662 = vadd.f32 %v421, %v618
        %v663 = vadd.f32 %v422, %v621
        %v664 = vadd.f32 %v423, %v626
        %v665 = vadd.f32 %v424, %v629
        %v666 = vadd.f32 %v425, %v634
        %v667 = vadd.f32 %v426, %v637
        %v668 = vadd.f32 %v427, %v642
        %v669 = vadd.f32 %v428, %v645
        %v670 = vadd.f32 %v429, %v650
        %v671 = vadd.f32 %v430, %v653
        %672 = vst [vmem:[#allocation2] sm:$0xff] %v656
        %673 = vst [vmem:[#allocation2 + $0x8] sm:$0xff] %v657
        %674 = vst [vmem:[#allocation2 + $0x10] sm:$0xff] %v658
        %675 = vst [vmem:[#allocation2 + $0x18] sm:$0xff] %v659
        %676 = vst [vmem:[#allocation2 + $0x20] sm:$0xff] %v660
        %677 = vst [vmem:[#allocation2 + $0x28] sm:$0xff] %v661
        %678 = vst [vmem:[#allocation2 + $0x30] sm:$0xff] %v662
        %679 = vst [vmem:[#allocation2 + $0x38] sm:$0xff] %v663
        %680 = vst [vmem:[#allocation2 + $0x40] sm:$0xff] %v664
        %681 = vst [vmem:[#allocation2 + $0x48] sm:$0xff] %v665
        %682 = vst [vmem:[#allocation2 + $0x50] sm:$0xff] %v666
        %683 = vst [vmem:[#allocation2 + $0x58] sm:$0xff] %v667
        %684 = vst [vmem:[#allocation2 + $0x60] sm:$0xff] %v668
        %685 = vst [vmem:[#allocation2 + $0x68] sm:$0xff] %v669
        %686 = vst [vmem:[#allocation2 + $0x70] sm:$0xff] %v670
        %687 = vst [vmem:[#allocation2 + $0x78] sm:$0xff] %v671
        %p688 = scmp.eq.s32.totalorder %s22, 4
        // Predicated region
        $region82: #{style_extractor_forward.14} parent=72 // pred_check
          %p689 = pneg %p688
        $region83: #{style_extractor_forward.14} parent=72 // pred_check_branch
          %691 = sbr.rel (%p689) target = $region85
        $region84: #{style_extractor_forward.14} parent=72 // pred_region
          %v692 = vld [vmem:[#allocation2] sm:$0xff]
          %v693 = vld [vmem:[#allocation2 + $0x8] sm:$0xff]
          %v694 = vld [vmem:[#allocation2 + $0x10] sm:$0xff]
          %v695 = vld [vmem:[#allocation2 + $0x18] sm:$0xff]
          %v696 = vld [vmem:[#allocation2 + $0x20] sm:$0xff]
          %v697 = vld [vmem:[#allocation2 + $0x28] sm:$0xff]
          %v698 = vld [vmem:[#allocation2 + $0x30] sm:$0xff]
          %v699 = vld [vmem:[#allocation2 + $0x38] sm:$0xff]
          %v700 = vld [vmem:[#allocation2 + $0x40] sm:$0xff]
          %v701 = vld [vmem:[#allocation2 + $0x48] sm:$0xff]
          %v702 = vld [vmem:[#allocation2 + $0x50] sm:$0xff]
          %v703 = vld [vmem:[#allocation2 + $0x58] sm:$0xff]
          %v704 = vld [vmem:[#allocation2 + $0x60] sm:$0xff]
          %v705 = vld [vmem:[#allocation2 + $0x68] sm:$0xff]
          %v706 = vld [vmem:[#allocation2 + $0x70] sm:$0xff]
          %v707 = vld [vmem:[#allocation2 + $0x78] sm:$0xff]
          %v708 = vld [vmem:[%s381] sm:$0x1]
          %v710 = vlaneseq
          %v711 = vshrl.u32 %v710, 7
          %v712 = vsub.s32 0, %v711
          %v713 = vrot.slane %v708, %v712
          %v715 = vmul.f32 %v692, %v713
          %v716 = vmul.f32 %v693, %v713
          %v717 = vmul.f32 %v694, %v713
          %v718 = vmul.f32 %v695, %v713
          %v719 = vmul.f32 %v696, %v713
          %v720 = vmul.f32 %v697, %v713
          %v721 = vmul.f32 %v698, %v713
          %v722 = vmul.f32 %v699, %v713
          %v723 = vmul.f32 %v700, %v713
          %v724 = vmul.f32 %v701, %v713
          %v725 = vmul.f32 %v702, %v713
          %v726 = vmul.f32 %v703, %v713
          %v727 = vmul.f32 %v704, %v713
          %v728 = vmul.f32 %v705, %v713
          %v729 = vmul.f32 %v706, %v713
          %v730 = vmul.f32 %v707, %v713
          %v731 = vld [vmem:[%s384] sm:$0x1]
          %v733 = vlaneseq
          %v734 = vshrl.u32 %v733, 7
          %v735 = vsub.s32 0, %v734
          %v736 = vrot.slane %v731, %v735
          %v738 = vadd.f32 %v715, %v736
          %v739 = vadd.f32 %v716, %v736
          %v740 = vadd.f32 %v717, %v736
          %v741 = vadd.f32 %v718, %v736
          %v742 = vadd.f32 %v719, %v736
          %v743 = vadd.f32 %v720, %v736
          %v744 = vadd.f32 %v721, %v736
          %v745 = vadd.f32 %v722, %v736
          %v746 = vadd.f32 %v723, %v736
          %v747 = vadd.f32 %v724, %v736
          %v748 = vadd.f32 %v725, %v736
          %v749 = vadd.f32 %v726, %v736
          %v750 = vadd.f32 %v727, %v736
          %v751 = vadd.f32 %v728, %v736
          %v752 = vadd.f32 %v729, %v736
          %v753 = vadd.f32 %v730, %v736
          %v754 = vmax.f32 %v738, 0.0
          %v755 = vmax.f32 %v739, 0.0
          %v756 = vmax.f32 %v740, 0.0
          %v757 = vmax.f32 %v741, 0.0
          %v758 = vmax.f32 %v742, 0.0
          %v759 = vmax.f32 %v743, 0.0
          %v760 = vmax.f32 %v744, 0.0
          %v761 = vmax.f32 %v745, 0.0
          %v762 = vmax.f32 %v746, 0.0
          %v763 = vmax.f32 %v747, 0.0
          %v764 = vmax.f32 %v748, 0.0
          %v765 = vmax.f32 %v749, 0.0
          %v766 = vmax.f32 %v750, 0.0
          %v767 = vmax.f32 %v751, 0.0
          %v768 = vmax.f32 %v752, 0.0
          %v769 = vmax.f32 %v753, 0.0
          %770 = vst [vmem:[%s392] sm:$0xff] %v754
          %771 = vst [vmem:[%s392 + $0x8] sm:$0xff] %v755
          %772 = vst [vmem:[%s392 + $0x10] sm:$0xff] %v756
          %773 = vst [vmem:[%s392 + $0x18] sm:$0xff] %v757
          %774 = vst [vmem:[%s392 + $0x20] sm:$0xff] %v758
          %775 = vst [vmem:[%s392 + $0x28] sm:$0xff] %v759
          %776 = vst [vmem:[%s392 + $0x30] sm:$0xff] %v760
          %777 = vst [vmem:[%s392 + $0x38] sm:$0xff] %v761
          %778 = vst [vmem:[%s392 + $0x40] sm:$0xff] %v762
          %779 = vst [vmem:[%s392 + $0x48] sm:$0xff] %v763
          %780 = vst [vmem:[%s392 + $0x50] sm:$0xff] %v764
          %781 = vst [vmem:[%s392 + $0x58] sm:$0xff] %v765
          %782 = vst [vmem:[%s392 + $0x60] sm:$0xff] %v766
          %783 = vst [vmem:[%s392 + $0x68] sm:$0xff] %v767
          %784 = vst [vmem:[%s392 + $0x70] sm:$0xff] %v768
          %785 = vst [vmem:[%s392 + $0x78] sm:$0xff] %v769
        $region85: #{style_extractor_forward.14} parent=72 // pred_fallthru
          _
        %s786 = smul.u32 16, %s20
        %p787 = scmp.lt.s32.totalorder %s786, 15
        %s788 = scalar_select %p787, %s786, 15
        %p789 = scmp.lt.s32.totalorder %s21, 0
        %s790 = scalar_select %p789, %s21, 0
        %s791 = sadd.s32 %s790, %s788
        %s792 = smul.addr %s791, 8
        %s793 = scalar_lea.vmem %s4, %s792
        // Predicated region
        $region86: #{style_extractor_forward.14} parent=72 // pred_check
          %p794 = pneg %p162
        $region87: #{style_extractor_forward.14} parent=72 // pred_check_branch
          %796 = sbr.rel (%p794) target = $region89
        $region88: #{style_extractor_forward.14} parent=72 // pred_region
          %s797 = smul.u32 16, %s20
        $region89: #{style_extractor_forward.14} parent=72 // pred_fallthru
          _
        // Predicated region
        $region90: #{style_extractor_forward.14} parent=72 // pred_check
          %p798 = pneg %p162
        $region91: #{style_extractor_forward.14} parent=72 // pred_check_branch
          %800 = sbr.rel (%p798) target = $region93
        $region92: #{style_extractor_forward.14} parent=72 // pred_region
          %s801 = smul.u32 16, %s20
          %p802 = scmp.lt.s32.totalorder %s801, 15
          %s803 = scalar_select %p802, %s801, 15
          %p804 = scmp.lt.s32.totalorder %s21, 0
          %s805 = scalar_select %p804, %s21, 0
          %s806 = sadd.s32 %s805, %s803
          %s807 = smul.addr %s806, 8
          %s808 = scalar_lea.vmem %s4, %s807
        $region93: #{style_extractor_forward.14} parent=72 // pred_fallthru
          _
      $region73: #{style_extractor_forward.14} parent=5 // pred_fallthru
        _
      %p809 = scmp.le.s32.totalorder 2, %s10
      // Predicated region
      $region94: #{style_extractor_forward.14} parent=5 // pred_check
        %p810 = pneg %p809
      $region95: #{style_extractor_forward.14} parent=5 // pred_check_branch
        %812 = sbr.rel (%p810) target = $region97
      $region96: #{style_extractor_forward.14} parent=5 // pred_region
        %s813 = ssub.s32 %s10, 2
      $region97: #{style_extractor_forward.14} parent=5 // pred_fallthru
        _
    $region6: #{style_extractor_forward.14} parent=1 // loop_footer
      %s14 = sadd.s32 1, %s10
    $region7: #{style_extractor_forward.14} parent=1 // loop_footer_branch
      %9 = sbr.rel target = $region3
    $region8: #{style_extractor_forward.14} parent=1 // loop_exit
      _

// kernel: style_extractor_forward.15
$region0: #{style_extractor_forward.15}
  #allocation0 [shape = 'u32[]', space=smem, size = 0x4, offset = 0x4, fixed_abs, tag = 'smem constant byte address 0x4 - core index']
  #allocation1 [shape = 'u32[144,128]{1,0:T(1,128)}', space=vmem, size = 0x12000, scoped, tag = 'internal scratch']
  #allocation2 [shape = 'f32[128,128]{1,0:T(8,128)}', space=vmem, size = 0x10000, scoped, tag = 'scratch operand']
  %s0 = inlined_call_operand.vmem [shape: bf16[128,640], index: 0, kind: input, shape index: {}]
  %s1 = inlined_call_operand.vmem [shape: bf16[640,128], index: 1, kind: input, shape index: {}]
  %s2 = inlined_call_operand.vmem [shape: f32[1,128], index: 2, kind: input, shape index: {}]
  %s3 = inlined_call_operand.vmem [shape: f32[1,128], index: 3, kind: input, shape index: {}]
  %s4 = inlined_call_operand.vmem [shape: f32[128,128], index: 4, kind: input, shape index: {}]
  %s5 = inlined_call_operand.vmem [shape: f32[128,128], index: 5, kind: output, shape index: {}]
  %s6 = sld [smem:[#allocation0]]
  $region102: #{style_extractor_forward.15} parent=0
    _
  %s8 = ssub.s32 1, %s6
  %s9 = scalar_select 0, %s8, %s6
  $region1: #{style_extractor_forward.15} parent=0
    #allocation3 [shape = 'u8[65536]{0}', space=vmem, size = 0x10000, scoped, tag = 'input window, operand 0']
    loop: start=0, step=1, limit=7
    $region2: #{style_extractor_forward.15} parent=1 // loop_pre_header
      _
    $region3: #{style_extractor_forward.15} parent=1 // loop_header
      %s11 = sphi 0, %s15
      %p12 = scmp.ge.s32.totalorder %s11, 7
      %s18 = sphi 0, %s37
      %s19 = sphi 0, %s33
      %s20 = sphi 0, %s29
      %s21 = sphi 0, %s18
      %s22 = sphi 0, %s19
      %s23 = sphi 0, %s20
      %s24 = sphi 0, %s21
      %s25 = sphi 0, %s22
      %s26 = sphi 0, %s23
      %s42 = sphi 0, %s44
      %s45 = sphi 0, %s42
      %s46 = sphi 0, %s45
      %s62 = sphi 0, %s46
      %s70 = sphi 0, %s72
      %s73 = sphi 0, %s70
      %s74 = sphi 0, %s73
      %s90 = sphi 0, %s74
      %s96 = sphi 0, %s98
      %s99 = sphi 0, %s96
      %s100 = sphi 0, %s99
      %s116 = sphi 0, %s100
      %s122 = sphi 0, %s124
      %s125 = sphi 0, %s122
      %s126 = sphi 0, %s125
      %s142 = sphi 0, %s126
      %s150 = sphi 0, %s152
      %s153 = sphi 0, %s150
      %s154 = sphi 0, %s153
      %s170 = sphi 0, %s154
      %s178 = sphi 0, %s180
      %s181 = sphi 0, %s178
      %s182 = sphi 0, %s181
      %s198 = sphi 0, %s182
    $region4: #{style_extractor_forward.15} parent=1 // loop_header_branch
      %14 = sbr.rel (%p12) target = $region8
    $region5: #{style_extractor_forward.15} parent=1 // loop_body
      %s16 = ssub.s32 %s11, 1
      %s17 = ssub.s32 %s11, 2
      %s27 = sadd.s32 1, %s20
      %p28 = scmp.ge.s32.totalorder %s27, 5
      %s29 = scalar_select %p28, 0, %s27
      %s30 = sadd.s32 1, %s19
      %s31 = scalar_select %p28, %s30, %s19
      %p32 = scmp.ge.s32.totalorder %s31, 1
      %s33 = scalar_select %p32, 0, %s31
      %s34 = sadd.s32 1, %s18
      %s35 = scalar_select %p32, %s34, %s18
      %p36 = scmp.ge.s32.totalorder %s35, 1
      %s37 = scalar_select %p36, 0, %s35
      %s38 = ssub.s32 %s18, %s37
      %s39 = ssub.s32 %s20, %s29
      %s40 = sor.u32 %s38, %s39
      %p41 = scmp.eq.s32.totalorder %s40, 0
      %s43 = sadd.s32 %s42, 1
      %s44 = scalar_select %p41, %s42, %s43
      %p47 = pneg %p41
      %p48 = scmp.eq.s32.totalorder %s11, 4
      %p49 = por %p47, %p48
      %p50 = scmp.ne.s32.totalorder %s42, %s45
      %p51 = scmp.eq.s32.totalorder %s11, 0
      %p52 = por %p50, %p51
      %p53 = scmp.ne.s32.totalorder %s42, %s45
      %p54 = scmp.eq.s32.totalorder %s16, 4
      %p55 = por %p53, %p54
      %p56 = scmp.ne.s32.totalorder %s45, %s46
      %p57 = scmp.eq.s32.totalorder %s16, 0
      %p58 = por %p56, %p57
      %p59 = scmp.ne.s32.totalorder %s45, %s46
      %p60 = scmp.eq.s32.totalorder %s17, 4
      %p61 = por %p59, %p60
      %p63 = scmp.ne.s32.totalorder %s46, %s62
      %p64 = scmp.eq.s32.totalorder %s17, 0
      %p65 = por %p63, %p64
      %s66 = ssub.s32 %s20, %s29
      %s67 = ssub.s32 %s19, %s33
      %s68 = sor.u32 %s66, %s67
      %p69 = scmp.eq.s32.totalorder %s68, 0
      %s71 = sadd.s32 %s70, 1
      %s72 = scalar_select %p69, %s70, %s71
      %p75 = pneg %p69
      %p76 = scmp.eq.s32.totalorder %s11, 4
      %p77 = por %p75, %p76
      %p78 = scmp.ne.s32.totalorder %s70, %s73
      %p79 = scmp.eq.s32.totalorder %s11, 0
      %p80 = por %p78, %p79
      %p81 = scmp.ne.s32.totalorder %s70, %s73
      %p82 = scmp.eq.s32.totalorder %s16, 4
      %p83 = por %p81, %p82
      %p84 = scmp.ne.s32.totalorder %s73, %s74
      %p85 = scmp.eq.s32.totalorder %s16, 0
      %p86 = por %p84, %p85
      %p87 = scmp.ne.s32.totalorder %s73, %s74
      %p88 = scmp.eq.s32.totalorder %s17, 4
      %p89 = por %p87, %p88
      %p91 = scmp.ne.s32.totalorder %s74, %s90
      %p92 = scmp.eq.s32.totalorder %s17, 0
      %p93 = por %p91, %p92
      %s94 = ssub.s32 %s19, %s33
      %p95 = scmp.eq.s32.totalorder %s94, 0
      %s97 = sadd.s32 %s96, 1
      %s98 = scalar_select %p95, %s96, %s97
      %p101 = pneg %p95
      %p102 = scmp.eq.s32.totalorder %s11, 4
      %p103 = por %p101, %p102
      %p104 = scmp.ne.s32.totalorder %s96, %s99
      %p105 = scmp.eq.s32.totalorder %s11, 0
      %p106 = por %p104, %p105
      %p107 = scmp.ne.s32.totalorder %s96, %s99
      %p108 = scmp.eq.s32.totalorder %s16, 4
      %p109 = por %p107, %p108
      %p110 = scmp.ne.s32.totalorder %s99, %s100
      %p111 = scmp.eq.s32.totalorder %s16, 0
      %p112 = por %p110, %p111
      %p113 = scmp.ne.s32.totalorder %s99, %s100
      %p114 = scmp.eq.s32.totalorder %s17, 4
      %p115 = por %p113, %p114
      %p117 = scmp.ne.s32.totalorder %s100, %s116
      %p118 = scmp.eq.s32.totalorder %s17, 0
      %p119 = por %p117, %p118
      %s120 = ssub.s32 %s19, %s33
      %p121 = scmp.eq.s32.totalorder %s120, 0
      %s123 = sadd.s32 %s122, 1
      %s124 = scalar_select %p121, %s122, %s123
      %p127 = pneg %p121
      %p128 = scmp.eq.s32.totalorder %s11, 4
      %p129 = por %p127, %p128
      %p130 = scmp.ne.s32.totalorder %s122, %s125
      %p131 = scmp.eq.s32.totalorder %s11, 0
      %p132 = por %p130, %p131
      %p133 = scmp.ne.s32.totalorder %s122, %s125
      %p134 = scmp.eq.s32.totalorder %s16, 4
      %p135 = por %p133, %p134
      %p136 = scmp.ne.s32.totalorder %s125, %s126
      %p137 = scmp.eq.s32.totalorder %s16, 0
      %p138 = por %p136, %p137
      %p139 = scmp.ne.s32.totalorder %s125, %s126
      %p140 = scmp.eq.s32.totalorder %s17, 4
      %p141 = por %p139, %p140
      %p143 = scmp.ne.s32.totalorder %s126, %s142
      %p144 = scmp.eq.s32.totalorder %s17, 0
      %p145 = por %p143, %p144
      %s146 = ssub.s32 %s18, %s37
      %s147 = ssub.s32 %s19, %s33
      %s148 = sor.u32 %s146, %s147
      %p149 = scmp.eq.s32.totalorder %s148, 0
      %s151 = sadd.s32 %s150, 1
      %s152 = scalar_select %p149, %s150, %s151
      %p155 = pneg %p149
      %p156 = scmp.eq.s32.totalorder %s11, 4
      %p157 = por %p155, %p156
      %p158 = scmp.ne.s32.totalorder %s150, %s153
      %p159 = scmp.eq.s32.totalorder %s11, 0
      %p160 = por %p158, %p159
      %p161 = scmp.ne.s32.totalorder %s150, %s153
      %p162 = scmp.eq.s32.totalorder %s16, 4
      %p163 = por %p161, %p162
      %p164 = scmp.ne.s32.totalorder %s153, %s154
      %p165 = scmp.eq.s32.totalorder %s16, 0
      %p166 = por %p164, %p165
      %p167 = scmp.ne.s32.totalorder %s153, %s154
      %p168 = scmp.eq.s32.totalorder %s17, 4
      %p169 = por %p167, %p168
      %p171 = scmp.ne.s32.totalorder %s154, %s170
      %p172 = scmp.eq.s32.totalorder %s17, 0
      %p173 = por %p171, %p172
      %s174 = ssub.s32 %s18, %s37
      %s175 = ssub.s32 %s19, %s33
      %s176 = sor.u32 %s174, %s175
      %p177 = scmp.eq.s32.totalorder %s176, 0
      %s179 = sadd.s32 %s178, 1
      %s180 = scalar_select %p177, %s178, %s179
      %p183 = pneg %p177
      %p184 = scmp.eq.s32.totalorder %s11, 4
      %p185 = por %p183, %p184
      %p186 = scmp.ne.s32.totalorder %s178, %s181
      %p187 = scmp.eq.s32.totalorder %s11, 0
      %p188 = por %p186, %p187
      %p189 = scmp.ne.s32.totalorder %s178, %s181
      %p190 = scmp.eq.s32.totalorder %s16, 4
      %p191 = por %p189, %p190
      %p192 = scmp.ne.s32.totalorder %s181, %s182
      %p193 = scmp.eq.s32.totalorder %s16, 0
      %p194 = por %p192, %p193
      %p195 = scmp.ne.s32.totalorder %s181, %s182
      %p196 = scmp.eq.s32.totalorder %s17, 4
      %p197 = por %p195, %p196
      %p199 = scmp.ne.s32.totalorder %s182, %s198
      %p200 = scmp.eq.s32.totalorder %s17, 0
      %p201 = por %p199, %p200
      %p202 = scmp.le.s32.totalorder 1, %s11
      %p203 = scmp.lt.s32.totalorder %s11, 6
      %p204 = pnand %p202, %p203
      %p205 = pneg %p204
      // Predicated region
      $region9: #{style_extractor_forward.15} parent=5 // pred_check
        _
      $region10: #{style_extractor_forward.15} parent=5 // pred_check_branch
        %207 = sbr.rel (%p204) target = $region12
      $region11: #{style_extractor_forward.15} parent=5 // pred_region
        %s208 = ssub.s32 %s11, 1
        // Predicated region
        $region13: #{style_extractor_forward.15} parent=11 // pred_check
          %p209 = pneg %p112
        $region14: #{style_extractor_forward.15} parent=11 // pred_check_branch
          %211 = sbr.rel (%p209) target = $region16
        $region15: #{style_extractor_forward.15} parent=11 // pred_region
          %p212 = scmp.lt.s32.totalorder %s22, 0
          %s213 = scalar_select %p212, %s22, 0
          %s214 = scalar_lea.vmem %s2, %s213
        $region16: #{style_extractor_forward.15} parent=11 // pred_fallthru
          _
        // Predicated region
        $region17: #{style_extractor_forward.15} parent=11 // pred_check
          %p215 = pneg %p138
        $region18: #{style_extractor_forward.15} parent=11 // pred_check_branch
          %217 = sbr.rel (%p215) target = $region20
        $region19: #{style_extractor_forward.15} parent=11 // pred_region
          %p218 = scmp.lt.s32.totalorder %s22, 0
          %s219 = scalar_select %p218, %s22, 0
          %s220 = scalar_lea.vmem %s3, %s219
        $region20: #{style_extractor_forward.15} parent=11 // pred_fallthru
          _
        // Predicated region
        $region21: #{style_extractor_forward.15} parent=11 // pred_check
          %p221 = pneg %p166
        $region22: #{style_extractor_forward.15} parent=11 // pred_check_branch
          %223 = sbr.rel (%p221) target = $region24
        $region23: #{style_extractor_forward.15} parent=11 // pred_region
          %s224 = smul.u32 16, %s21
          %p225 = scmp.lt.s32.totalorder %s224, 15
          %s226 = scalar_select %p225, %s224, 15
          %p227 = scmp.lt.s32.totalorder %s22, 0
          %s228 = scalar_select %p227, %s22, 0
          %s229 = sadd.s32 %s228, %s226
          %s230 = smul.addr %s229, 8
          %s231 = scalar_lea.vmem %s4, %s230
          %s232 = smul.u32 16, %s21
        $region24: #{style_extractor_forward.15} parent=11 // pred_fallthru
          _
      $region12: #{style_extractor_forward.15} parent=5 // pred_fallthru
        _
      %p233 = scmp.lt.s32.totalorder %s11, 5
      // Predicated region
      $region25: #{style_extractor_forward.15} parent=5 // pred_check
        %p234 = pneg %p233
      $region26: #{style_extractor_forward.15} parent=5 // pred_check_branch
        %236 = sbr.rel (%p234) target = $region28
      $region27: #{style_extractor_forward.15} parent=5 // pred_region
        // Predicated region
        $region29: #{style_extractor_forward.15} parent=27 // pred_check
          %p237 = pneg %p52
        $region30: #{style_extractor_forward.15} parent=27 // pred_check_branch
          %239 = sbr.rel (%p237) target = $region32
        $region31: #{style_extractor_forward.15} parent=27 // pred_region
          %s240 = sand.u32 %s42, 1
          %s241 = sand.u32 %s42, 1
          %s242 = smul.addr %s241, 64
          %s243 = scalar_lea.vmem [#allocation3], %s242
          %s244 = smul.u32 16, %s18
          %s245 = smul.addr %s244, 5
          %s246 = sadd.s32 %s20, %s245
          %s247 = smul.addr %s246, 4
          %s248 = scalar_lea.vmem %s0, %s247
          // Predicated region
          $region33: #{style_extractor_forward.15} parent=31 // pred_check
            _
          $region34: #{style_extractor_forward.15} parent=31 // pred_check_branch
            %250 = sbr.rel (0) target = $region36
          $region35: #{style_extractor_forward.15} parent=31 // pred_region
            // Predicated region
            $region37: #{style_extractor_forward.15} parent=35 // pred_check
              _
            $region38: #{style_extractor_forward.15} parent=35 // pred_check_branch
              %252 = sbr.rel target = $region40
            $region39: #{style_extractor_forward.15} parent=35 // pred_region
              // Predicated region
              $region52: #{style_extractor_forward.15} parent=39 // pred_check
                _
              $region53: #{style_extractor_forward.15} parent=39 // pred_check_branch
                %297 = sbr.rel (0) target = $region55
              $region54: #{style_extractor_forward.15} parent=39 // pred_region
                loop: start=0, step=1, limit=1
                $region56: #{style_extractor_forward.15} parent=54 // loop_pre_header
                  _
                $region57: #{style_extractor_forward.15} parent=54 // loop_header
                  %s299 = sphi 0, %s303
                  %p300 = scmp.ge.s32.totalorder %s299, 1
                  %s304 = sphi %s248, %s248
                  %s305 = sphi %s243, %s243
                $region58: #{style_extractor_forward.15} parent=54 // loop_header_branch
                  %302 = sbr.rel (%p300) target = $region62
                $region59: #{style_extractor_forward.15} parent=54 // loop_body
                  _
                $region60: #{style_extractor_forward.15} parent=54 // loop_footer
                  %s303 = sadd.s32 1, %s299
                $region61: #{style_extractor_forward.15} parent=54 // loop_footer_branch
                  %298 = sbr.rel target = $region57
                $region62: #{style_extractor_forward.15} parent=54 // loop_exit
                  _
                loop: start=0, step=1, limit=1
                $region63: #{style_extractor_forward.15} parent=54 // loop_pre_header
                  _
                $region64: #{style_extractor_forward.15} parent=54 // loop_header
                  %s308 = sphi 0, %s312
                  %p309 = scmp.ge.s32.totalorder %s308, 1
                  %s313 = sphi %s248, %s248
                  %s314 = sphi %s243, %s243
                $region65: #{style_extractor_forward.15} parent=54 // loop_header_branch
                  %311 = sbr.rel (%p309) target = $region69
                $region66: #{style_extractor_forward.15} parent=54 // loop_body
                  %v315 = vld [vmem:[%s313] sm:$0xf]
                  %316 = vst [vmem:[%s314] sm:$0xf] %v315
                  %v317 = vld [vmem:[%s313 + $0x14] sm:$0xf]
                  %318 = vst [vmem:[%s314 + $0x4] sm:$0xf] %v317
                  %v319 = vld [vmem:[%s313 + $0x28] sm:$0xf]
                  %320 = vst [vmem:[%s314 + $0x8] sm:$0xf] %v319
                  %v321 = vld [vmem:[%s313 + $0x3c] sm:$0xf]
                  %322 = vst [vmem:[%s314 + $0xc] sm:$0xf] %v321
                  %v323 = vld [vmem:[%s313 + $0x50] sm:$0xf]
                  %324 = vst [vmem:[%s314 + $0x10] sm:$0xf] %v323
                  %v325 = vld [vmem:[%s313 + $0x64] sm:$0xf]
                  %326 = vst [vmem:[%s314 + $0x14] sm:$0xf] %v325
                  %v327 = vld [vmem:[%s313 + $0x78] sm:$0xf]
                  %328 = vst [vmem:[%s314 + $0x18] sm:$0xf] %v327
                  %v329 = vld [vmem:[%s313 + $0x8c] sm:$0xf]
                  %330 = vst [vmem:[%s314 + $0x1c] sm:$0xf] %v329
                  %v331 = vld [vmem:[%s313 + $0xa0] sm:$0xf]
                  %332 = vst [vmem:[%s314 + $0x20] sm:$0xf] %v331
                  %v333 = vld [vmem:[%s313 + $0xb4] sm:$0xf]
                  %334 = vst [vmem:[%s314 + $0x24] sm:$0xf] %v333
                  %v335 = vld [vmem:[%s313 + $0xc8] sm:$0xf]
                  %336 = vst [vmem:[%s314 + $0x28] sm:$0xf] %v335
                  %v337 = vld [vmem:[%s313 + $0xdc] sm:$0xf]
                  %338 = vst [vmem:[%s314 + $0x2c] sm:$0xf] %v337
                  %v339 = vld [vmem:[%s313 + $0xf0] sm:$0xf]
                  %340 = vst [vmem:[%s314 + $0x30] sm:$0xf] %v339
                  %v341 = vld [vmem:[%s313 + $0x104] sm:$0xf]
                  %342 = vst [vmem:[%s314 + $0x34] sm:$0xf] %v341
                  %v343 = vld [vmem:[%s313 + $0x118] sm:$0xf]
                  %344 = vst [vmem:[%s314 + $0x38] sm:$0xf] %v343
                  %v345 = vld [vmem:[%s313 + $0x12c] sm:$0xf]
                  %346 = vst [vmem:[%s314 + $0x3c] sm:$0xf] %v345
                $region67: #{style_extractor_forward.15} parent=54 // loop_footer
                  %s312 = sadd.s32 1, %s308
                $region68: #{style_extractor_forward.15} parent=54 // loop_footer_branch
                  %307 = sbr.rel target = $region64
                $region69: #{style_extractor_forward.15} parent=54 // loop_exit
                  _
              $region55: #{style_extractor_forward.15} parent=39 // pred_fallthru
                _
            $region40: #{style_extractor_forward.15} parent=35 // pred_fallthru
              _
            // Predicated region
            $region41: #{style_extractor_forward.15} parent=35 // pred_check
              _
            $region42: #{style_extractor_forward.15} parent=35 // pred_check_branch
              %254 = sbr.rel (0) target = $region44
            $region43: #{style_extractor_forward.15} parent=35 // pred_region
              loop: start=0, step=1, limit=1
              $region45: #{style_extractor_forward.15} parent=43 // loop_pre_header
                _
              $region46: #{style_extractor_forward.15} parent=43 // loop_header
                %s257 = sphi 0, %s261
                %p258 = scmp.ge.s32.totalorder %s257, 1
                %s262 = sphi %s248, %s248
                %s263 = sphi %s243, %s243
              $region47: #{style_extractor_forward.15} parent=43 // loop_header_branch
                %260 = sbr.rel (%p258) target = $region51
              $region48: #{style_extractor_forward.15} parent=43 // loop_body
                %v264 = vld [vmem:[%s262] sm:$0xf]
                %265 = vst [vmem:[%s263] sm:$0xf] %v264
                %v266 = vld [vmem:[%s262 + $0x14] sm:$0xf]
                %267 = vst [vmem:[%s263 + $0x4] sm:$0xf] %v266
                %v268 = vld [vmem:[%s262 + $0x28] sm:$0xf]
                %269 = vst [vmem:[%s263 + $0x8] sm:$0xf] %v268
                %v270 = vld [vmem:[%s262 + $0x3c] sm:$0xf]
                %271 = vst [vmem:[%s263 + $0xc] sm:$0xf] %v270
                %v272 = vld [vmem:[%s262 + $0x50] sm:$0xf]
                %273 = vst [vmem:[%s263 + $0x10] sm:$0xf] %v272
                %v274 = vld [vmem:[%s262 + $0x64] sm:$0xf]
                %275 = vst [vmem:[%s263 + $0x14] sm:$0xf] %v274
                %v276 = vld [vmem:[%s262 + $0x78] sm:$0xf]
                %277 = vst [vmem:[%s263 + $0x18] sm:$0xf] %v276
                %v278 = vld [vmem:[%s262 + $0x8c] sm:$0xf]
                %279 = vst [vmem:[%s263 + $0x1c] sm:$0xf] %v278
                %v280 = vld [vmem:[%s262 + $0xa0] sm:$0xf]
                %281 = vst [vmem:[%s263 + $0x20] sm:$0xf] %v280
                %v282 = vld [vmem:[%s262 + $0xb4] sm:$0xf]
                %283 = vst [vmem:[%s263 + $0x24] sm:$0xf] %v282
                %v284 = vld [vmem:[%s262 + $0xc8] sm:$0xf]
                %285 = vst [vmem:[%s263 + $0x28] sm:$0xf] %v284
                %v286 = vld [vmem:[%s262 + $0xdc] sm:$0xf]
                %287 = vst [vmem:[%s263 + $0x2c] sm:$0xf] %v286
                %v288 = vld [vmem:[%s262 + $0xf0] sm:$0xf]
                %289 = vst [vmem:[%s263 + $0x30] sm:$0xf] %v288
                %v290 = vld [vmem:[%s262 + $0x104] sm:$0xf]
                %291 = vst [vmem:[%s263 + $0x34] sm:$0xf] %v290
                %v292 = vld [vmem:[%s262 + $0x118] sm:$0xf]
                %293 = vst [vmem:[%s263 + $0x38] sm:$0xf] %v292
                %v294 = vld [vmem:[%s262 + $0x12c] sm:$0xf]
                %295 = vst [vmem:[%s263 + $0x3c] sm:$0xf] %v294
              $region49: #{style_extractor_forward.15} parent=43 // loop_footer
                %s261 = sadd.s32 1, %s257
              $region50: #{style_extractor_forward.15} parent=43 // loop_footer_branch
                %256 = sbr.rel target = $region46
              $region51: #{style_extractor_forward.15} parent=43 // loop_exit
                _
            $region44: #{style_extractor_forward.15} parent=35 // pred_fallthru
              _
          $region36: #{style_extractor_forward.15} parent=31 // pred_fallthru
            _
          %347 = vnop
        $region32: #{style_extractor_forward.15} parent=27 // pred_fallthru
          _
        // Predicated region
        $region70: #{style_extractor_forward.15} parent=27 // pred_check
          %p348 = pneg %p80
        $region71: #{style_extractor_forward.15} parent=27 // pred_check_branch
          %350 = sbr.rel (%p348) target = $region73
        $region72: #{style_extractor_forward.15} parent=27 // pred_region
          %s351 = smul.u32 16, %s20
          %p352 = scmp.lt.s32.totalorder %s351, 79
          %s353 = scalar_select %p352, %s351, 79
          %p354 = scmp.lt.s32.totalorder %s19, 0
          %s355 = scalar_select %p354, %s19, 0
          %s356 = sadd.s32 %s355, %s353
          %s357 = smul.addr %s356, 4
          %s358 = scalar_lea.vmem %s1, %s357
          %s359 = smul.u32 16, %s20
        $region73: #{style_extractor_forward.15} parent=27 // pred_fallthru
          _
      $region28: #{style_extractor_forward.15} parent=5 // pred_fallthru
        _
      %p360 = scmp.le.s32.totalorder 1, %s11
      %p361 = scmp.lt.s32.totalorder %s11, 6
      %p362 = pnand %p360, %p361
      %p363 = pneg %p362
      // Predicated region
      $region74: #{style_extractor_forward.15} parent=5 // pred_check
        _
      $region75: #{style_extractor_forward.15} parent=5 // pred_check_branch
        %365 = sbr.rel (%p362) target = $region77
      $region76: #{style_extractor_forward.15} parent=5 // pred_region
        %s366 = ssub.s32 %s11, 1
        %s367 = sand.u32 %s45, 1
        %s368 = sand.u32 %s45, 1
        %s369 = smul.addr %s368, 64
        %s370 = scalar_lea.vmem [#allocation3], %s369
        // Predicated region
        $region78: #{style_extractor_forward.15} parent=76 // pred_check
          %p371 = pneg %p58
        $region79: #{style_extractor_forward.15} parent=76 // pred_check_branch
          %373 = sbr.rel (%p371) target = $region81
        $region80: #{style_extractor_forward.15} parent=76 // pred_region
          _
        $region81: #{style_extractor_forward.15} parent=76 // pred_fallthru
          _
        %s374 = sand.u32 %s45, 1
        %s375 = sand.u32 %s45, 1
        %s376 = smul.addr %s375, 64
        %s377 = scalar_lea.vmem [#allocation3], %s376
        %p378 = pneg %p58
        %p379 = pneg %p55
        %s380 = smul.u32 16, %s23
        %p381 = scmp.lt.s32.totalorder %s380, 79
        %s382 = scalar_select %p381, %s380, 79
        %p383 = scmp.lt.s32.totalorder %s22, 0
        %s384 = scalar_select %p383, %s22, 0
        %s385 = sadd.s32 %s384, %s382
        %s386 = smul.addr %s385, 4
        %s387 = scalar_lea.vmem %s1, %s386
        %p388 = pneg %p86
        %p389 = pneg %p83
        %p390 = scmp.lt.s32.totalorder %s22, 0
        %s391 = scalar_select %p390, %s22, 0
        %s392 = scalar_lea.vmem %s2, %s391
        %p393 = pneg %p112
        %p394 = pneg %p109
        %p395 = scmp.lt.s32.totalorder %s22, 0
        %s396 = scalar_select %p395, %s22, 0
        %s397 = scalar_lea.vmem %s3, %s396
        %p398 = pneg %p138
        %p399 = pneg %p135
        %s400 = smul.u32 16, %s21
        %p401 = scmp.lt.s32.totalorder %s400, 15
        %s402 = scalar_select %p401, %s400, 15
        %p403 = scmp.lt.s32.totalorder %s22, 0
        %s404 = scalar_select %p403, %s22, 0
        %s405 = sadd.s32 %s404, %s402
        %s406 = smul.addr %s405, 8
        %s407 = scalar_lea.vmem %s4, %s406
        %p408 = pneg %p166
        %p409 = pneg %p163
        %p410 = pneg %p194
        %p411 = pneg %p191
        %s412 = smul.u32 16, %s21
        %p413 = scmp.lt.s32.totalorder %s412, 15
        %s414 = scalar_select %p413, %s412, 15
        %p415 = scmp.lt.s32.totalorder %s22, 0
        %s416 = scalar_select %p415, %s22, 0
        %s417 = sadd.s32 %s416, %s414
        %s418 = smul.addr %s417, 8
        %s419 = scalar_lea.vmem %s5, %s418
        %s420 = smul.u32 16, %s21
        %s421 = smul.u32 16, %s23
        %p422 = scmp.lt.s32.totalorder %s421, 79
        %s423 = scalar_select %p422, %s421, 79
        %p424 = scmp.lt.s32.totalorder %s22, 0
        %s425 = scalar_select %p424, %s22, 0
        %s426 = sadd.s32 %s425, %s423
        %s427 = smul.addr %s426, 4
        %s428 = scalar_lea.vmem %s1, %s427
        %s429 = smul.u32 16, %s23
        %p430 = scmp.lt.s32.totalorder %s22, 0
        %s431 = scalar_select %p430, %s22, 0
        %s432 = scalar_lea.vmem %s2, %s431
        %p433 = scmp.lt.s32.totalorder %s22, 0
        %s434 = scalar_select %p433, %s22, 0
        %s435 = scalar_lea.vmem %s3, %s434
        %s436 = smul.u32 16, %s21
        %p437 = scmp.lt.s32.totalorder %s436, 15
        %s438 = scalar_select %p437, %s436, 15
        %p439 = scmp.lt.s32.totalorder %s22, 0
        %s440 = scalar_select %p439, %s22, 0
        %s441 = sadd.s32 %s440, %s438
        %s442 = smul.addr %s441, 8
        %s443 = scalar_lea.vmem %s4, %s442
        %s444 = smul.u32 16, %s21
        %s445 = smul.u32 16, %s21
        %p446 = scmp.lt.s32.totalorder %s445, 15
        %s447 = scalar_select %p446, %s445, 15
        %p448 = scmp.lt.s32.totalorder %s22, 0
        %s449 = scalar_select %p448, %s22, 0
        %s450 = sadd.s32 %s449, %s447
        %s451 = smul.addr %s450, 8
        %s452 = scalar_lea.vmem %s5, %s451
        %s453 = smul.u32 16, %s21
        %p455 = scmp.eq.s32.totalorder %s23, 0
        // Predicated region
        $region82: #{style_extractor_forward.15} parent=76 // pred_check
          %p456 = pneg %p455
        $region83: #{style_extractor_forward.15} parent=76 // pred_check_branch
          %458 = sbr.rel (%p456) target = $region85
        $region84: #{style_extractor_forward.15} parent=76 // pred_region
          %459 = vst [vmem:[#allocation2] sm:$0xff] 0.0
          %460 = vst [vmem:[#allocation2 + $0x8] sm:$0xff] 0.0
          %461 = vst [vmem:[#allocation2 + $0x10] sm:$0xff] 0.0
          %462 = vst [vmem:[#allocation2 + $0x18] sm:$0xff] 0.0
          %463 = vst [vmem:[#allocation2 + $0x20] sm:$0xff] 0.0
          %464 = vst [vmem:[#allocation2 + $0x28] sm:$0xff] 0.0
          %465 = vst [vmem:[#allocation2 + $0x30] sm:$0xff] 0.0
          %466 = vst [vmem:[#allocation2 + $0x38] sm:$0xff] 0.0
          %467 = vst [vmem:[#allocation2 + $0x40] sm:$0xff] 0.0
          %468 = vst [vmem:[#allocation2 + $0x48] sm:$0xff] 0.0
          %469 = vst [vmem:[#allocation2 + $0x50] sm:$0xff] 0.0
          %470 = vst [vmem:[#allocation2 + $0x58] sm:$0xff] 0.0
          %471 = vst [vmem:[#allocation2 + $0x60] sm:$0xff] 0.0
          %472 = vst [vmem:[#allocation2 + $0x68] sm:$0xff] 0.0
          %473 = vst [vmem:[#allocation2 + $0x70] sm:$0xff] 0.0
          %474 = vst [vmem:[#allocation2 + $0x78] sm:$0xff] 0.0
        $region85: #{style_extractor_forward.15} parent=76 // pred_fallthru
          _
        %v475 = vld [vmem:[#allocation2] sm:$0xff]
        %v476 = vld [vmem:[#allocation2 + $0x8] sm:$0xff]
        %v477 = vld [vmem:[#allocation2 + $0x10] sm:$0xff]
        %v478 = vld [vmem:[#allocation2 + $0x18] sm:$0xff]
        %v479 = vld [vmem:[#allocation2 + $0x20] sm:$0xff]
        %v480 = vld [vmem:[#allocation2 + $0x28] sm:$0xff]
        %v481 = vld [vmem:[#allocation2 + $0x30] sm:$0xff]
        %v482 = vld [vmem:[#allocation2 + $0x38] sm:$0xff]
        %v483 = vld [vmem:[#allocation2 + $0x40] sm:$0xff]
        %v484 = vld [vmem:[#allocation2 + $0x48] sm:$0xff]
        %v485 = vld [vmem:[#allocation2 + $0x50] sm:$0xff]
        %v486 = vld [vmem:[#allocation2 + $0x58] sm:$0xff]
        %v487 = vld [vmem:[#allocation2 + $0x60] sm:$0xff]
        %v488 = vld [vmem:[#allocation2 + $0x68] sm:$0xff]
        %v489 = vld [vmem:[#allocation2 + $0x70] sm:$0xff]
        %v490 = vld [vmem:[#allocation2 + $0x78] sm:$0xff]
        %v491 = vld [vmem:[%s370] sm:$0xf]
        %v492 = vld [vmem:[%s370 + $0x4] sm:$0xf]
        %v493 = vld [vmem:[%s370 + $0x8] sm:$0xf]
        %v494 = vld [vmem:[%s370 + $0xc] sm:$0xf]
        %v495 = vld [vmem:[%s370 + $0x10] sm:$0xf]
        %v496 = vld [vmem:[%s370 + $0x14] sm:$0xf]
        %v497 = vld [vmem:[%s370 + $0x18] sm:$0xf]
        %v498 = vld [vmem:[%s370 + $0x1c] sm:$0xf]
        %v499 = vld [vmem:[%s370 + $0x20] sm:$0xf]
        %v500 = vld [vmem:[%s370 + $0x24] sm:$0xf]
        %v501 = vld [vmem:[%s370 + $0x28] sm:$0xf]
        %v502 = vld [vmem:[%s370 + $0x2c] sm:$0xf]
        %v503 = vld [vmem:[%s370 + $0x30] sm:$0xf]
        %v504 = vld [vmem:[%s370 + $0x34] sm:$0xf]
        %v505 = vld [vmem:[%s370 + $0x38] sm:$0xf]
        %v506 = vld [vmem:[%s370 + $0x3c] sm:$0xf]
        %v507 = vld [vmem:[%s428] sm:$0xf]
        %v508 = vld [vmem:[%s428 + $0x4] sm:$0xf]
        %v509 = vld [vmem:[%s428 + $0x8] sm:$0xf]
        %v510 = vld [vmem:[%s428 + $0xc] sm:$0xf]
        %v511 = vld [vmem:[%s428 + $0x10] sm:$0xf]
        %v512 = vld [vmem:[%s428 + $0x14] sm:$0xf]
        %v513 = vld [vmem:[%s428 + $0x18] sm:$0xf]
        %v514 = vld [vmem:[%s428 + $0x1c] sm:$0xf]
        %v515 = vld [vmem:[%s428 + $0x20] sm:$0xf]
        %v516 = vld [vmem:[%s428 + $0x24] sm:$0xf]
        %v517 = vld [vmem:[%s428 + $0x28] sm:$0xf]
        %v518 = vld [vmem:[%s428 + $0x2c] sm:$0xf]
        %v519 = vld [vmem:[%s428 + $0x30] sm:$0xf]
        %v520 = vld [vmem:[%s428 + $0x34] sm:$0xf]
        %v521 = vld [vmem:[%s428 + $0x38] sm:$0xf]
        %v522 = vld [vmem:[%s428 + $0x3c] sm:$0xf]
        %v539 = vunpack.c.l.b16 %v491
        %v540 = vunpack.c.l.b16 %v492
        %v541 = vunpack.c.l.b16 %v493
        %v542 = vunpack.c.l.b16 %v494
        %v543 = vunpack.c.l.b16 %v495
        %v544 = vunpack.c.l.b16 %v496
        %v545 = vunpack.c.l.b16 %v497
        %v546 = vunpack.c.l.b16 %v498
        %v547 = vunpack.c.l.b16 %v499
        %v548 = vunpack.c.l.b16 %v500
        %v549 = vunpack.c.l.b16 %v501
        %v550 = vunpack.c.l.b16 %v502
        %v551 = vunpack.c.l.b16 %v503
        %v552 = vunpack.c.l.b16 %v504
        %v553 = vunpack.c.l.b16 %v505
        %v554 = vunpack.c.l.b16 %v506
        %v555 = vpack.c.b16 %v540, %v539
        %v556 = vpack.c.b16 %v542, %v541
        %v557 = vpack.c.b16 %v544, %v543
        %v558 = vpack.c.b16 %v546, %v545
        %v559 = vpack.c.b16 %v548, %v547
        %v560 = vpack.c.b16 %v550, %v549
        %v561 = vpack.c.b16 %v552, %v551
        %v562 = vpack.c.b16 %v554, %v553
        %v587 = vunpack.c.l.b16 %v507
        %v588 = vunpack.c.l.b16 %v508
        %v589 = vunpack.c.l.b16 %v509
        %v590 = vunpack.c.l.b16 %v510
        %v591 = vunpack.c.l.b16 %v511
        %v592 = vunpack.c.l.b16 %v512
        %v593 = vunpack.c.l.b16 %v513
        %v594 = vunpack.c.l.b16 %v514
        %v595 = vunpack.c.l.b16 %v515
        %v596 = vunpack.c.l.b16 %v516
        %v597 = vunpack.c.l.b16 %v517
        %v598 = vunpack.c.l.b16 %v518
        %v599 = vunpack.c.l.b16 %v519
        %v600 = vunpack.c.l.b16 %v520
        %v601 = vunpack.c.l.b16 %v521
        %v602 = vunpack.c.l.b16 %v522
        %v603 = vpack.c.b16 %v588, %v587
        %v604 = vpack.c.b16 %v590, %v589
        %v605 = vpack.c.b16 %v592, %v591
        %v606 = vpack.c.b16 %v594, %v593
        %v607 = vpack.c.b16 %v596, %v595
        %v608 = vpack.c.b16 %v598, %v597
        %v609 = vpack.c.b16 %v600, %v599
        %v610 = vpack.c.b16 %v602, %v601
        %619 = vmatprep.subr.bf16.mxu0 0
        %620 = vmatpush1.bf16.msra.mxu0 %v603
        %621 = vmatprep.subr.bf16.mxu0 0
        %622 = vmatpush1.bf16.msra.mxu0 %v604
        %623 = vmatprep.subr.bf16.mxu0 0
        %624 = vmatpush1.bf16.msra.mxu0 %v605
        %625 = vmatprep.subr.bf16.mxu0 0
        %626 = vmatpush1.bf16.msra.mxu0 %v606
        %627 = vmatprep.subr.bf16.mxu0 0
        %628 = vmatpush1.bf16.msra.mxu0 %v607
        %629 = vmatprep.subr.bf16.mxu0 0
        %630 = vmatpush1.bf16.msra.mxu0 %v608
        %631 = vmatprep.subr.bf16.mxu0 0
        %632 = vmatpush1.bf16.msra.mxu0 %v609
        %633 = vmatprep.subr.bf16.mxu0 0
        %634 = vmatpush1.bf16.msra.mxu0 %v610
        %635 = vmatprep.subr.bf16.mxu0 0
        %636 = vmatpush1.bf16.msra.mxu0 0
        %637 = vmatprep.subr.bf16.mxu0 0
        %638 = vmatpush1.bf16.msra.mxu0 0
        %639 = vmatprep.subr.bf16.mxu0 0
        %640 = vmatpush1.bf16.msra.mxu0 0
        %641 = vmatprep.subr.bf16.mxu0 0
        %642 = vmatpush1.bf16.msra.mxu0 0
        %643 = vmatprep.subr.bf16.mxu0 0
        %644 = vmatpush1.bf16.msra.mxu0 0
        %645 = vmatprep.subr.bf16.mxu0 0
        %646 = vmatpush1.bf16.msra.mxu0 0
        %647 = vmatprep.subr.bf16.mxu0 0
        %648 = vmatpush1.bf16.msra.mxu0 0
        %649 = vmatprep.subr.bf16.mxu0 0
        %650 = vmatpush1.bf16.msra.mxu0 0
        %651 = vmatprep.mubr.bf16.mxu0 0
        %652 = vmatmul.mubr.bf16.gmra.mrb[0].mxu0 %v555
        %v653 = vpop.f32.mrb[0].mxu0
        %v654 = vadd.f32 0.0, %v653
        %v655 = vpop.f32.mrb[0].mxu0
        %v656 = vpop.f32.mrb[0].mxu0
        %v657 = vadd.f32 0.0, %v656
        %v658 = vpop.f32.mrb[0].mxu0
        %659 = vmatprep.mubr.bf16.mxu0 0
        %660 = vmatmul.mubr.bf16.gmra.mrb[0].mxu0 %v556
        %v661 = vpop.f32.mrb[0].mxu0
        %v662 = vadd.f32 0.0, %v661
        %v663 = vpop.f32.mrb[0].mxu0
        %v664 = vpop.f32.mrb[0].mxu0
        %v665 = vadd.f32 0.0, %v664
        %v666 = vpop.f32.mrb[0].mxu0
        %667 = vmatprep.mubr.bf16.mxu0 0
        %668 = vmatmul.mubr.bf16.gmra.mrb[0].mxu0 %v557
        %v669 = vpop.f32.mrb[0].mxu0
        %v670 = vadd.f32 0.0, %v669
        %v671 = vpop.f32.mrb[0].mxu0
        %v672 = vpop.f32.mrb[0].mxu0
        %v673 = vadd.f32 0.0, %v672
        %v674 = vpop.f32.mrb[0].mxu0
        %675 = vmatprep.mubr.bf16.mxu0 0
        %676 = vmatmul.mubr.bf16.gmra.mrb[0].mxu0 %v558
        %v677 = vpop.f32.mrb[0].mxu0
        %v678 = vadd.f32 0.0, %v677
        %v679 = vpop.f32.mrb[0].mxu0
        %v680 = vpop.f32.mrb[0].mxu0
        %v681 = vadd.f32 0.0, %v680
        %v682 = vpop.f32.mrb[0].mxu0
        %683 = vmatprep.mubr.bf16.mxu0 0
        %684 = vmatmul.mubr.bf16.gmra.mrb[0].mxu0 %v559
        %v685 = vpop.f32.mrb[0].mxu0
        %v686 = vadd.f32 0.0, %v685
        %v687 = vpop.f32.mrb[0].mxu0
        %v688 = vpop.f32.mrb[0].mxu0
        %v689 = vadd.f32 0.0, %v688
        %v690 = vpop.f32.mrb[0].mxu0
        %691 = vmatprep.mubr.bf16.mxu0 0
        %692 = vmatmul.mubr.bf16.gmra.mrb[0].mxu0 %v560
        %v693 = vpop.f32.mrb[0].mxu0
        %v694 = vadd.f32 0.0, %v693
        %v695 = vpop.f32.mrb[0].mxu0
        %v696 = vpop.f32.mrb[0].mxu0
        %v697 = vadd.f32 0.0, %v696
        %v698 = vpop.f32.mrb[0].mxu0
        %699 = vmatprep.mubr.bf16.mxu0 0
        %700 = vmatmul.mubr.bf16.gmra.mrb[0].mxu0 %v561
        %v701 = vpop.f32.mrb[0].mxu0
        %v702 = vadd.f32 0.0, %v701
        %v703 = vpop.f32.mrb[0].mxu0
        %v704 = vpop.f32.mrb[0].mxu0
        %v705 = vadd.f32 0.0, %v704
        %v706 = vpop.f32.mrb[0].mxu0
        %707 = vmatprep.mubr.bf16.mxu0 0
        %708 = vmatmul.mubr.bf16.gmra.mrb[0].mxu0 %v562
        %v709 = vpop.f32.mrb[0].mxu0
        %v710 = vadd.f32 0.0, %v709
        %v711 = vpop.f32.mrb[0].mxu0
        %v712 = vpop.f32.mrb[0].mxu0
        %v713 = vadd.f32 0.0, %v712
        %v714 = vpop.f32.mrb[0].mxu0
        %715 = vdwg.mxu0
        %v716 = vadd.f32 %v475, %v654
        %v717 = vadd.f32 %v476, %v657
        %v718 = vadd.f32 %v477, %v662
        %v719 = vadd.f32 %v478, %v665
        %v720 = vadd.f32 %v479, %v670
        %v721 = vadd.f32 %v480, %v673
        %v722 = vadd.f32 %v481, %v678
        %v723 = vadd.f32 %v482, %v681
        %v724 = vadd.f32 %v483, %v686
        %v725 = vadd.f32 %v484, %v689
        %v726 = vadd.f32 %v485, %v694
        %v727 = vadd.f32 %v486, %v697
        %v728 = vadd.f32 %v487, %v702
        %v729 = vadd.f32 %v488, %v705
        %v730 = vadd.f32 %v489, %v710
        %v731 = vadd.f32 %v490, %v713
        %732 = vst [vmem:[#allocation2] sm:$0xff] %v716
        %733 = vst [vmem:[#allocation2 + $0x8] sm:$0xff] %v717
        %734 = vst [vmem:[#allocation2 + $0x10] sm:$0xff] %v718
        %735 = vst [vmem:[#allocation2 + $0x18] sm:$0xff] %v719
        %736 = vst [vmem:[#allocation2 + $0x20] sm:$0xff] %v720
        %737 = vst [vmem:[#allocation2 + $0x28] sm:$0xff] %v721
        %738 = vst [vmem:[#allocation2 + $0x30] sm:$0xff] %v722
        %739 = vst [vmem:[#allocation2 + $0x38] sm:$0xff] %v723
        %740 = vst [vmem:[#allocation2 + $0x40] sm:$0xff] %v724
        %741 = vst [vmem:[#allocation2 + $0x48] sm:$0xff] %v725
        %742 = vst [vmem:[#allocation2 + $0x50] sm:$0xff] %v726
        %743 = vst [vmem:[#allocation2 + $0x58] sm:$0xff] %v727
        %744 = vst [vmem:[#allocation2 + $0x60] sm:$0xff] %v728
        %745 = vst [vmem:[#allocation2 + $0x68] sm:$0xff] %v729
        %746 = vst [vmem:[#allocation2 + $0x70] sm:$0xff] %v730
        %747 = vst [vmem:[#allocation2 + $0x78] sm:$0xff] %v731
        %p748 = scmp.eq.s32.totalorder %s23, 4
        // Predicated region
        $region86: #{style_extractor_forward.15} parent=76 // pred_check
          %p749 = pneg %p748
        $region87: #{style_extractor_forward.15} parent=76 // pred_check_branch
          %751 = sbr.rel (%p749) target = $region89
        $region88: #{style_extractor_forward.15} parent=76 // pred_region
          %v752 = vld [vmem:[#allocation2] sm:$0xff]
          %v753 = vld [vmem:[#allocation2 + $0x8] sm:$0xff]
          %v754 = vld [vmem:[#allocation2 + $0x10] sm:$0xff]
          %v755 = vld [vmem:[#allocation2 + $0x18] sm:$0xff]
          %v756 = vld [vmem:[#allocation2 + $0x20] sm:$0xff]
          %v757 = vld [vmem:[#allocation2 + $0x28] sm:$0xff]
          %v758 = vld [vmem:[#allocation2 + $0x30] sm:$0xff]
          %v759 = vld [vmem:[#allocation2 + $0x38] sm:$0xff]
          %v760 = vld [vmem:[#allocation2 + $0x40] sm:$0xff]
          %v761 = vld [vmem:[#allocation2 + $0x48] sm:$0xff]
          %v762 = vld [vmem:[#allocation2 + $0x50] sm:$0xff]
          %v763 = vld [vmem:[#allocation2 + $0x58] sm:$0xff]
          %v764 = vld [vmem:[#allocation2 + $0x60] sm:$0xff]
          %v765 = vld [vmem:[#allocation2 + $0x68] sm:$0xff]
          %v766 = vld [vmem:[#allocation2 + $0x70] sm:$0xff]
          %v767 = vld [vmem:[#allocation2 + $0x78] sm:$0xff]
          %v768 = vld [vmem:[%s432] sm:$0x1]
          %v770 = vlaneseq
          %v771 = vshrl.u32 %v770, 7
          %v772 = vsub.s32 0, %v771
          %v773 = vrot.slane %v768, %v772
          %v775 = vmul.f32 %v752, %v773
          %v776 = vmul.f32 %v753, %v773
          %v777 = vmul.f32 %v754, %v773
          %v778 = vmul.f32 %v755, %v773
          %v779 = vmul.f32 %v756, %v773
          %v780 = vmul.f32 %v757, %v773
          %v781 = vmul.f32 %v758, %v773
          %v782 = vmul.f32 %v759, %v773
          %v783 = vmul.f32 %v760, %v773
          %v784 = vmul.f32 %v761, %v773
          %v785 = vmul.f32 %v762, %v773
          %v786 = vmul.f32 %v763, %v773
          %v787 = vmul.f32 %v764, %v773
          %v788 = vmul.f32 %v765, %v773
          %v789 = vmul.f32 %v766, %v773
          %v790 = vmul.f32 %v767, %v773
          %v791 = vld [vmem:[%s435] sm:$0x1]
          %v793 = vlaneseq
          %v794 = vshrl.u32 %v793, 7
          %v795 = vsub.s32 0, %v794
          %v796 = vrot.slane %v791, %v795
          %v798 = vadd.f32 %v775, %v796
          %v799 = vadd.f32 %v776, %v796
          %v800 = vadd.f32 %v777, %v796
          %v801 = vadd.f32 %v778, %v796
          %v802 = vadd.f32 %v779, %v796
          %v803 = vadd.f32 %v780, %v796
          %v804 = vadd.f32 %v781, %v796
          %v805 = vadd.f32 %v782, %v796
          %v806 = vadd.f32 %v783, %v796
          %v807 = vadd.f32 %v784, %v796
          %v808 = vadd.f32 %v785, %v796
          %v809 = vadd.f32 %v786, %v796
          %v810 = vadd.f32 %v787, %v796
          %v811 = vadd.f32 %v788, %v796
          %v812 = vadd.f32 %v789, %v796
          %v813 = vadd.f32 %v790, %v796
          %v814 = vld [vmem:[%s443] sm:$0xff]
          %v815 = vld [vmem:[%s443 + $0x8] sm:$0xff]
          %v816 = vld [vmem:[%s443 + $0x10] sm:$0xff]
          %v817 = vld [vmem:[%s443 + $0x18] sm:$0xff]
          %v818 = vld [vmem:[%s443 + $0x20] sm:$0xff]
          %v819 = vld [vmem:[%s443 + $0x28] sm:$0xff]
          %v820 = vld [vmem:[%s443 + $0x30] sm:$0xff]
          %v821 = vld [vmem:[%s443 + $0x38] sm:$0xff]
          %v822 = vld [vmem:[%s443 + $0x40] sm:$0xff]
          %v823 = vld [vmem:[%s443 + $0x48] sm:$0xff]
          %v824 = vld [vmem:[%s443 + $0x50] sm:$0xff]
          %v825 = vld [vmem:[%s443 + $0x58] sm:$0xff]
          %v826 = vld [vmem:[%s443 + $0x60] sm:$0xff]
          %v827 = vld [vmem:[%s443 + $0x68] sm:$0xff]
          %v828 = vld [vmem:[%s443 + $0x70] sm:$0xff]
          %v829 = vld [vmem:[%s443 + $0x78] sm:$0xff]
          %v830 = vadd.f32 %v798, %v814
          %v831 = vadd.f32 %v799, %v815
          %v832 = vadd.f32 %v800, %v816
          %v833 = vadd.f32 %v801, %v817
          %v834 = vadd.f32 %v802, %v818
          %v835 = vadd.f32 %v803, %v819
          %v836 = vadd.f32 %v804, %v820
          %v837 = vadd.f32 %v805, %v821
          %v838 = vadd.f32 %v806, %v822
          %v839 = vadd.f32 %v807, %v823
          %v840 = vadd.f32 %v808, %v824
          %v841 = vadd.f32 %v809, %v825
          %v842 = vadd.f32 %v810, %v826
          %v843 = vadd.f32 %v811, %v827
          %v844 = vadd.f32 %v812, %v828
          %v845 = vadd.f32 %v813, %v829
          %v846 = vmax.f32 %v830, 0.0
          %v847 = vmax.f32 %v831, 0.0
          %v848 = vmax.f32 %v832, 0.0
          %v849 = vmax.f32 %v833, 0.0
          %v850 = vmax.f32 %v834, 0.0
          %v851 = vmax.f32 %v835, 0.0
          %v852 = vmax.f32 %v836, 0.0
          %v853 = vmax.f32 %v837, 0.0
          %v854 = vmax.f32 %v838, 0.0
          %v855 = vmax.f32 %v839, 0.0
          %v856 = vmax.f32 %v840, 0.0
          %v857 = vmax.f32 %v841, 0.0
          %v858 = vmax.f32 %v842, 0.0
          %v859 = vmax.f32 %v843, 0.0
          %v860 = vmax.f32 %v844, 0.0
          %v861 = vmax.f32 %v845, 0.0
          %862 = vst [vmem:[%s452] sm:$0xff] %v846
          %863 = vst [vmem:[%s452 + $0x8] sm:$0xff] %v847
          %864 = vst [vmem:[%s452 + $0x10] sm:$0xff] %v848
          %865 = vst [vmem:[%s452 + $0x18] sm:$0xff] %v849
          %866 = vst [vmem:[%s452 + $0x20] sm:$0xff] %v850
          %867 = vst [vmem:[%s452 + $0x28] sm:$0xff] %v851
          %868 = vst [vmem:[%s452 + $0x30] sm:$0xff] %v852
          %869 = vst [vmem:[%s452 + $0x38] sm:$0xff] %v853
          %870 = vst [vmem:[%s452 + $0x40] sm:$0xff] %v854
          %871 = vst [vmem:[%s452 + $0x48] sm:$0xff] %v855
          %872 = vst [vmem:[%s452 + $0x50] sm:$0xff] %v856
          %873 = vst [vmem:[%s452 + $0x58] sm:$0xff] %v857
          %874 = vst [vmem:[%s452 + $0x60] sm:$0xff] %v858
          %875 = vst [vmem:[%s452 + $0x68] sm:$0xff] %v859
          %876 = vst [vmem:[%s452 + $0x70] sm:$0xff] %v860
          %877 = vst [vmem:[%s452 + $0x78] sm:$0xff] %v861
        $region89: #{style_extractor_forward.15} parent=76 // pred_fallthru
          _
        %s878 = smul.u32 16, %s21
        %p879 = scmp.lt.s32.totalorder %s878, 15
        %s880 = scalar_select %p879, %s878, 15
        %p881 = scmp.lt.s32.totalorder %s22, 0
        %s882 = scalar_select %p881, %s22, 0
        %s883 = sadd.s32 %s882, %s880
        %s884 = smul.addr %s883, 8
        %s885 = scalar_lea.vmem %s5, %s884
        // Predicated region
        $region90: #{style_extractor_forward.15} parent=76 // pred_check
          %p886 = pneg %p191
        $region91: #{style_extractor_forward.15} parent=76 // pred_check_branch
          %888 = sbr.rel (%p886) target = $region93
        $region92: #{style_extractor_forward.15} parent=76 // pred_region
          %s889 = smul.u32 16, %s21
        $region93: #{style_extractor_forward.15} parent=76 // pred_fallthru
          _
        // Predicated region
        $region94: #{style_extractor_forward.15} parent=76 // pred_check
          %p890 = pneg %p191
        $region95: #{style_extractor_forward.15} parent=76 // pred_check_branch
          %892 = sbr.rel (%p890) target = $region97
        $region96: #{style_extractor_forward.15} parent=76 // pred_region
          %s893 = smul.u32 16, %s21
          %p894 = scmp.lt.s32.totalorder %s893, 15
          %s895 = scalar_select %p894, %s893, 15
          %p896 = scmp.lt.s32.totalorder %s22, 0
          %s897 = scalar_select %p896, %s22, 0
          %s898 = sadd.s32 %s897, %s895
          %s899 = smul.addr %s898, 8
          %s900 = scalar_lea.vmem %s5, %s899
        $region97: #{style_extractor_forward.15} parent=76 // pred_fallthru
          _
      $region77: #{style_extractor_forward.15} parent=5 // pred_fallthru
        _
      %p901 = scmp.le.s32.totalorder 2, %s11
      // Predicated region
      $region98: #{style_extractor_forward.15} parent=5 // pred_check
        %p902 = pneg %p901
      $region99: #{style_extractor_forward.15} parent=5 // pred_check_branch
        %904 = sbr.rel (%p902) target = $region101
      $region100: #{style_extractor_forward.15} parent=5 // pred_region
        %s905 = ssub.s32 %s11, 2
      $region101: #{style_extractor_forward.15} parent=5 // pred_fallthru
        _
    $region6: #{style_extractor_forward.15} parent=1 // loop_footer
      %s15 = sadd.s32 1, %s11
    $region7: #{style_extractor_forward.15} parent=1 // loop_footer_branch
      %10 = sbr.rel target = $region3
    $region8: #{style_extractor_forward.15} parent=1 // loop_exit
      _

// kernel: style_extractor_forward.18
$region0: #{style_extractor_forward.18}
  #allocation0 [shape = 'u32[]', space=smem, size = 0x4, offset = 0x4, fixed_abs, tag = 'smem constant byte address 0x4 - core index']
  #allocation1 [shape = 'u32[144,128]{1,0:T(1,128)}', space=vmem, size = 0x12000, scoped, tag = 'internal scratch']
  #allocation2 [shape = 'f32[32,128]{1,0:T(8,128)}', space=vmem, size = 0x4000, scoped, tag = 'scratch operand']
  %s0 = inlined_call_operand.vmem [shape: bf16[32,640], index: 0, kind: input, shape index: {}]
  %s1 = inlined_call_operand.vmem [shape: bf16[640,128], index: 1, kind: input, shape index: {}]
  %s2 = inlined_call_operand.vmem [shape: f32[1,128], index: 2, kind: input, shape index: {}]
  %s3 = inlined_call_operand.vmem [shape: f32[1,128], index: 3, kind: input, shape index: {}]
  %s4 = inlined_call_operand.vmem [shape: f32[32,128], index: 4, kind: output, shape index: {}]
  %s5 = sld [smem:[#allocation0]]
  $region98: #{style_extractor_forward.18} parent=0
    _
  %s7 = ssub.s32 1, %s5
  %s8 = scalar_select 0, %s7, %s5
  $region1: #{style_extractor_forward.18} parent=0
    #allocation3 [shape = 'u8[16384]{0}', space=vmem, size = 0x4000, scoped, tag = 'input window, operand 0']
    loop: start=0, step=1, limit=7
    $region2: #{style_extractor_forward.18} parent=1 // loop_pre_header
      _
    $region3: #{style_extractor_forward.18} parent=1 // loop_header
      %s10 = sphi 0, %s14
      %p11 = scmp.ge.s32.totalorder %s10, 7
      %s17 = sphi 0, %s36
      %s18 = sphi 0, %s32
      %s19 = sphi 0, %s28
      %s20 = sphi 0, %s17
      %s21 = sphi 0, %s18
      %s22 = sphi 0, %s19
      %s23 = sphi 0, %s20
      %s24 = sphi 0, %s21
      %s25 = sphi 0, %s22
      %s41 = sphi 0, %s43
      %s44 = sphi 0, %s41
      %s45 = sphi 0, %s44
      %s61 = sphi 0, %s45
      %s69 = sphi 0, %s71
      %s72 = sphi 0, %s69
      %s73 = sphi 0, %s72
      %s89 = sphi 0, %s73
      %s95 = sphi 0, %s97
      %s98 = sphi 0, %s95
      %s99 = sphi 0, %s98
      %s115 = sphi 0, %s99
      %s121 = sphi 0, %s123
      %s124 = sphi 0, %s121
      %s125 = sphi 0, %s124
      %s141 = sphi 0, %s125
      %s149 = sphi 0, %s151
      %s152 = sphi 0, %s149
      %s153 = sphi 0, %s152
      %s169 = sphi 0, %s153
    $region4: #{style_extractor_forward.18} parent=1 // loop_header_branch
      %13 = sbr.rel (%p11) target = $region8
    $region5: #{style_extractor_forward.18} parent=1 // loop_body
      %s15 = ssub.s32 %s10, 1
      %s16 = ssub.s32 %s10, 2
      %s26 = sadd.s32 1, %s19
      %p27 = scmp.ge.s32.totalorder %s26, 5
      %s28 = scalar_select %p27, 0, %s26
      %s29 = sadd.s32 1, %s18
      %s30 = scalar_select %p27, %s29, %s18
      %p31 = scmp.ge.s32.totalorder %s30, 1
      %s32 = scalar_select %p31, 0, %s30
      %s33 = sadd.s32 1, %s17
      %s34 = scalar_select %p31, %s33, %s17
      %p35 = scmp.ge.s32.totalorder %s34, 1
      %s36 = scalar_select %p35, 0, %s34
      %s37 = ssub.s32 %s17, %s36
      %s38 = ssub.s32 %s19, %s28
      %s39 = sor.u32 %s37, %s38
      %p40 = scmp.eq.s32.totalorder %s39, 0
      %s42 = sadd.s32 %s41, 1
      %s43 = scalar_select %p40, %s41, %s42
      %p46 = pneg %p40
      %p47 = scmp.eq.s32.totalorder %s10, 4
      %p48 = por %p46, %p47
      %p49 = scmp.ne.s32.totalorder %s41, %s44
      %p50 = scmp.eq.s32.totalorder %s10, 0
      %p51 = por %p49, %p50
      %p52 = scmp.ne.s32.totalorder %s41, %s44
      %p53 = scmp.eq.s32.totalorder %s15, 4
      %p54 = por %p52, %p53
      %p55 = scmp.ne.s32.totalorder %s44, %s45
      %p56 = scmp.eq.s32.totalorder %s15, 0
      %p57 = por %p55, %p56
      %p58 = scmp.ne.s32.totalorder %s44, %s45
      %p59 = scmp.eq.s32.totalorder %s16, 4
      %p60 = por %p58, %p59
      %p62 = scmp.ne.s32.totalorder %s45, %s61
      %p63 = scmp.eq.s32.totalorder %s16, 0
      %p64 = por %p62, %p63
      %s65 = ssub.s32 %s19, %s28
      %s66 = ssub.s32 %s18, %s32
      %s67 = sor.u32 %s65, %s66
      %p68 = scmp.eq.s32.totalorder %s67, 0
      %s70 = sadd.s32 %s69, 1
      %s71 = scalar_select %p68, %s69, %s70
      %p74 = pneg %p68
      %p75 = scmp.eq.s32.totalorder %s10, 4
      %p76 = por %p74, %p75
      %p77 = scmp.ne.s32.totalorder %s69, %s72
      %p78 = scmp.eq.s32.totalorder %s10, 0
      %p79 = por %p77, %p78
      %p80 = scmp.ne.s32.totalorder %s69, %s72
      %p81 = scmp.eq.s32.totalorder %s15, 4
      %p82 = por %p80, %p81
      %p83 = scmp.ne.s32.totalorder %s72, %s73
      %p84 = scmp.eq.s32.totalorder %s15, 0
      %p85 = por %p83, %p84
      %p86 = scmp.ne.s32.totalorder %s72, %s73
      %p87 = scmp.eq.s32.totalorder %s16, 4
      %p88 = por %p86, %p87
      %p90 = scmp.ne.s32.totalorder %s73, %s89
      %p91 = scmp.eq.s32.totalorder %s16, 0
      %p92 = por %p90, %p91
      %s93 = ssub.s32 %s18, %s32
      %p94 = scmp.eq.s32.totalorder %s93, 0
      %s96 = sadd.s32 %s95, 1
      %s97 = scalar_select %p94, %s95, %s96
      %p100 = pneg %p94
      %p101 = scmp.eq.s32.totalorder %s10, 4
      %p102 = por %p100, %p101
      %p103 = scmp.ne.s32.totalorder %s95, %s98
      %p104 = scmp.eq.s32.totalorder %s10, 0
      %p105 = por %p103, %p104
      %p106 = scmp.ne.s32.totalorder %s95, %s98
      %p107 = scmp.eq.s32.totalorder %s15, 4
      %p108 = por %p106, %p107
      %p109 = scmp.ne.s32.totalorder %s98, %s99
      %p110 = scmp.eq.s32.totalorder %s15, 0
      %p111 = por %p109, %p110
      %p112 = scmp.ne.s32.totalorder %s98, %s99
      %p113 = scmp.eq.s32.totalorder %s16, 4
      %p114 = por %p112, %p113
      %p116 = scmp.ne.s32.totalorder %s99, %s115
      %p117 = scmp.eq.s32.totalorder %s16, 0
      %p118 = por %p116, %p117
      %s119 = ssub.s32 %s18, %s32
      %p120 = scmp.eq.s32.totalorder %s119, 0
      %s122 = sadd.s32 %s121, 1
      %s123 = scalar_select %p120, %s121, %s122
      %p126 = pneg %p120
      %p127 = scmp.eq.s32.totalorder %s10, 4
      %p128 = por %p126, %p127
      %p129 = scmp.ne.s32.totalorder %s121, %s124
      %p130 = scmp.eq.s32.totalorder %s10, 0
      %p131 = por %p129, %p130
      %p132 = scmp.ne.s32.totalorder %s121, %s124
      %p133 = scmp.eq.s32.totalorder %s15, 4
      %p134 = por %p132, %p133
      %p135 = scmp.ne.s32.totalorder %s124, %s125
      %p136 = scmp.eq.s32.totalorder %s15, 0
      %p137 = por %p135, %p136
      %p138 = scmp.ne.s32.totalorder %s124, %s125
      %p139 = scmp.eq.s32.totalorder %s16, 4
      %p140 = por %p138, %p139
      %p142 = scmp.ne.s32.totalorder %s125, %s141
      %p143 = scmp.eq.s32.totalorder %s16, 0
      %p144 = por %p142, %p143
      %s145 = ssub.s32 %s17, %s36
      %s146 = ssub.s32 %s18, %s32
      %s147 = sor.u32 %s145, %s146
      %p148 = scmp.eq.s32.totalorder %s147, 0
      %s150 = sadd.s32 %s149, 1
      %s151 = scalar_select %p148, %s149, %s150
      %p154 = pneg %p148
      %p155 = scmp.eq.s32.totalorder %s10, 4
      %p156 = por %p154, %p155
      %p157 = scmp.ne.s32.totalorder %s149, %s152
      %p158 = scmp.eq.s32.totalorder %s10, 0
      %p159 = por %p157, %p158
      %p160 = scmp.ne.s32.totalorder %s149, %s152
      %p161 = scmp.eq.s32.totalorder %s15, 4
      %p162 = por %p160, %p161
      %p163 = scmp.ne.s32.totalorder %s152, %s153
      %p164 = scmp.eq.s32.totalorder %s15, 0
      %p165 = por %p163, %p164
      %p166 = scmp.ne.s32.totalorder %s152, %s153
      %p167 = scmp.eq.s32.totalorder %s16, 4
      %p168 = por %p166, %p167
      %p170 = scmp.ne.s32.totalorder %s153, %s169
      %p171 = scmp.eq.s32.totalorder %s16, 0
      %p172 = por %p170, %p171
      %p173 = scmp.le.s32.totalorder 1, %s10
      %p174 = scmp.lt.s32.totalorder %s10, 6
      %p175 = pnand %p173, %p174
      %p176 = pneg %p175
      // Predicated region
      $region9: #{style_extractor_forward.18} parent=5 // pred_check
        _
      $region10: #{style_extractor_forward.18} parent=5 // pred_check_branch
        %178 = sbr.rel (%p175) target = $region12
      $region11: #{style_extractor_forward.18} parent=5 // pred_region
        %s179 = ssub.s32 %s10, 1
        // Predicated region
        $region13: #{style_extractor_forward.18} parent=11 // pred_check
          %p180 = pneg %p111
        $region14: #{style_extractor_forward.18} parent=11 // pred_check_branch
          %182 = sbr.rel (%p180) target = $region16
        $region15: #{style_extractor_forward.18} parent=11 // pred_region
          %p183 = scmp.lt.s32.totalorder %s21, 0
          %s184 = scalar_select %p183, %s21, 0
          %s185 = scalar_lea.vmem %s2, %s184
        $region16: #{style_extractor_forward.18} parent=11 // pred_fallthru
          _
        // Predicated region
        $region17: #{style_extractor_forward.18} parent=11 // pred_check
          %p186 = pneg %p137
        $region18: #{style_extractor_forward.18} parent=11 // pred_check_branch
          %188 = sbr.rel (%p186) target = $region20
        $region19: #{style_extractor_forward.18} parent=11 // pred_region
          %p189 = scmp.lt.s32.totalorder %s21, 0
          %s190 = scalar_select %p189, %s21, 0
          %s191 = scalar_lea.vmem %s3, %s190
        $region20: #{style_extractor_forward.18} parent=11 // pred_fallthru
          _
      $region12: #{style_extractor_forward.18} parent=5 // pred_fallthru
        _
      %p192 = scmp.lt.s32.totalorder %s10, 5
      // Predicated region
      $region21: #{style_extractor_forward.18} parent=5 // pred_check
        %p193 = pneg %p192
      $region22: #{style_extractor_forward.18} parent=5 // pred_check_branch
        %195 = sbr.rel (%p193) target = $region24
      $region23: #{style_extractor_forward.18} parent=5 // pred_region
        // Predicated region
        $region25: #{style_extractor_forward.18} parent=23 // pred_check
          %p196 = pneg %p51
        $region26: #{style_extractor_forward.18} parent=23 // pred_check_branch
          %198 = sbr.rel (%p196) target = $region28
        $region27: #{style_extractor_forward.18} parent=23 // pred_region
          %s199 = sand.u32 %s41, 1
          %s200 = sand.u32 %s41, 1
          %s201 = smul.addr %s200, 16
          %s202 = scalar_lea.vmem [#allocation3], %s201
          %s203 = smul.u32 4, %s17
          %s204 = smul.addr %s203, 5
          %s205 = sadd.s32 %s19, %s204
          %s206 = smul.addr %s205, 4
          %s207 = scalar_lea.vmem %s0, %s206
          // Predicated region
          $region29: #{style_extractor_forward.18} parent=27 // pred_check
            _
          $region30: #{style_extractor_forward.18} parent=27 // pred_check_branch
            %209 = sbr.rel (0) target = $region32
          $region31: #{style_extractor_forward.18} parent=27 // pred_region
            // Predicated region
            $region33: #{style_extractor_forward.18} parent=31 // pred_check
              _
            $region34: #{style_extractor_forward.18} parent=31 // pred_check_branch
              %211 = sbr.rel target = $region36
            $region35: #{style_extractor_forward.18} parent=31 // pred_region
              // Predicated region
              $region48: #{style_extractor_forward.18} parent=35 // pred_check
                _
              $region49: #{style_extractor_forward.18} parent=35 // pred_check_branch
                %232 = sbr.rel (0) target = $region51
              $region50: #{style_extractor_forward.18} parent=35 // pred_region
                loop: start=0, step=1, limit=1
                $region52: #{style_extractor_forward.18} parent=50 // loop_pre_header
                  _
                $region53: #{style_extractor_forward.18} parent=50 // loop_header
                  %s234 = sphi 0, %s238
                  %p235 = scmp.ge.s32.totalorder %s234, 1
                  %s239 = sphi %s207, %s207
                  %s240 = sphi %s202, %s202
                $region54: #{style_extractor_forward.18} parent=50 // loop_header_branch
                  %237 = sbr.rel (%p235) target = $region58
                $region55: #{style_extractor_forward.18} parent=50 // loop_body
                  _
                $region56: #{style_extractor_forward.18} parent=50 // loop_footer
                  %s238 = sadd.s32 1, %s234
                $region57: #{style_extractor_forward.18} parent=50 // loop_footer_branch
                  %233 = sbr.rel target = $region53
                $region58: #{style_extractor_forward.18} parent=50 // loop_exit
                  _
                loop: start=0, step=1, limit=1
                $region59: #{style_extractor_forward.18} parent=50 // loop_pre_header
                  _
                $region60: #{style_extractor_forward.18} parent=50 // loop_header
                  %s243 = sphi 0, %s247
                  %p244 = scmp.ge.s32.totalorder %s243, 1
                  %s248 = sphi %s207, %s207
                  %s249 = sphi %s202, %s202
                $region61: #{style_extractor_forward.18} parent=50 // loop_header_branch
                  %246 = sbr.rel (%p244) target = $region65
                $region62: #{style_extractor_forward.18} parent=50 // loop_body
                  %v250 = vld [vmem:[%s248] sm:$0xf]
                  %251 = vst [vmem:[%s249] sm:$0xf] %v250
                  %v252 = vld [vmem:[%s248 + $0x14] sm:$0xf]
                  %253 = vst [vmem:[%s249 + $0x4] sm:$0xf] %v252
                  %v254 = vld [vmem:[%s248 + $0x28] sm:$0xf]
                  %255 = vst [vmem:[%s249 + $0x8] sm:$0xf] %v254
                  %v256 = vld [vmem:[%s248 + $0x3c] sm:$0xf]
                  %257 = vst [vmem:[%s249 + $0xc] sm:$0xf] %v256
                $region63: #{style_extractor_forward.18} parent=50 // loop_footer
                  %s247 = sadd.s32 1, %s243
                $region64: #{style_extractor_forward.18} parent=50 // loop_footer_branch
                  %242 = sbr.rel target = $region60
                $region65: #{style_extractor_forward.18} parent=50 // loop_exit
                  _
              $region51: #{style_extractor_forward.18} parent=35 // pred_fallthru
                _
            $region36: #{style_extractor_forward.18} parent=31 // pred_fallthru
              _
            // Predicated region
            $region37: #{style_extractor_forward.18} parent=31 // pred_check
              _
            $region38: #{style_extractor_forward.18} parent=31 // pred_check_branch
              %213 = sbr.rel (0) target = $region40
            $region39: #{style_extractor_forward.18} parent=31 // pred_region
              loop: start=0, step=1, limit=1
              $region41: #{style_extractor_forward.18} parent=39 // loop_pre_header
                _
              $region42: #{style_extractor_forward.18} parent=39 // loop_header
                %s216 = sphi 0, %s220
                %p217 = scmp.ge.s32.totalorder %s216, 1
                %s221 = sphi %s207, %s207
                %s222 = sphi %s202, %s202
              $region43: #{style_extractor_forward.18} parent=39 // loop_header_branch
                %219 = sbr.rel (%p217) target = $region47
              $region44: #{style_extractor_forward.18} parent=39 // loop_body
                %v223 = vld [vmem:[%s221] sm:$0xf]
                %224 = vst [vmem:[%s222] sm:$0xf] %v223
                %v225 = vld [vmem:[%s221 + $0x14] sm:$0xf]
                %226 = vst [vmem:[%s222 + $0x4] sm:$0xf] %v225
                %v227 = vld [vmem:[%s221 + $0x28] sm:$0xf]
                %228 = vst [vmem:[%s222 + $0x8] sm:$0xf] %v227
                %v229 = vld [vmem:[%s221 + $0x3c] sm:$0xf]
                %230 = vst [vmem:[%s222 + $0xc] sm:$0xf] %v229
              $region45: #{style_extractor_forward.18} parent=39 // loop_footer
                %s220 = sadd.s32 1, %s216
              $region46: #{style_extractor_forward.18} parent=39 // loop_footer_branch
                %215 = sbr.rel target = $region42
              $region47: #{style_extractor_forward.18} parent=39 // loop_exit
                _
            $region40: #{style_extractor_forward.18} parent=31 // pred_fallthru
              _
          $region32: #{style_extractor_forward.18} parent=27 // pred_fallthru
            _
          %258 = vnop
        $region28: #{style_extractor_forward.18} parent=23 // pred_fallthru
          _
        // Predicated region
        $region66: #{style_extractor_forward.18} parent=23 // pred_check
          %p259 = pneg %p79
        $region67: #{style_extractor_forward.18} parent=23 // pred_check_branch
          %261 = sbr.rel (%p259) target = $region69
        $region68: #{style_extractor_forward.18} parent=23 // pred_region
          %s262 = smul.u32 16, %s19
          %p263 = scmp.lt.s32.totalorder %s262, 79
          %s264 = scalar_select %p263, %s262, 79
          %p265 = scmp.lt.s32.totalorder %s18, 0
          %s266 = scalar_select %p265, %s18, 0
          %s267 = sadd.s32 %s266, %s264
          %s268 = smul.addr %s267, 4
          %s269 = scalar_lea.vmem %s1, %s268
          %s270 = smul.u32 16, %s19
        $region69: #{style_extractor_forward.18} parent=23 // pred_fallthru
          _
      $region24: #{style_extractor_forward.18} parent=5 // pred_fallthru
        _
      %p271 = scmp.le.s32.totalorder 1, %s10
      %p272 = scmp.lt.s32.totalorder %s10, 6
      %p273 = pnand %p271, %p272
      %p274 = pneg %p273
      // Predicated region
      $region70: #{style_extractor_forward.18} parent=5 // pred_check
        _
      $region71: #{style_extractor_forward.18} parent=5 // pred_check_branch
        %276 = sbr.rel (%p273) target = $region73
      $region72: #{style_extractor_forward.18} parent=5 // pred_region
        %s277 = ssub.s32 %s10, 1
        %s278 = sand.u32 %s44, 1
        %s279 = sand.u32 %s44, 1
        %s280 = smul.addr %s279, 16
        %s281 = scalar_lea.vmem [#allocation3], %s280
        // Predicated region
        $region74: #{style_extractor_forward.18} parent=72 // pred_check
          %p282 = pneg %p57
        $region75: #{style_extractor_forward.18} parent=72 // pred_check_branch
          %284 = sbr.rel (%p282) target = $region77
        $region76: #{style_extractor_forward.18} parent=72 // pred_region
          _
        $region77: #{style_extractor_forward.18} parent=72 // pred_fallthru
          _
        %s285 = sand.u32 %s44, 1
        %s286 = sand.u32 %s44, 1
        %s287 = smul.addr %s286, 16
        %s288 = scalar_lea.vmem [#allocation3], %s287
        %p289 = pneg %p57
        %p290 = pneg %p54
        %s291 = smul.u32 16, %s22
        %p292 = scmp.lt.s32.totalorder %s291, 79
        %s293 = scalar_select %p292, %s291, 79
        %p294 = scmp.lt.s32.totalorder %s21, 0
        %s295 = scalar_select %p294, %s21, 0
        %s296 = sadd.s32 %s295, %s293
        %s297 = smul.addr %s296, 4
        %s298 = scalar_lea.vmem %s1, %s297
        %p299 = pneg %p85
        %p300 = pneg %p82
        %p301 = scmp.lt.s32.totalorder %s21, 0
        %s302 = scalar_select %p301, %s21, 0
        %s303 = scalar_lea.vmem %s2, %s302
        %p304 = pneg %p111
        %p305 = pneg %p108
        %p306 = scmp.lt.s32.totalorder %s21, 0
        %s307 = scalar_select %p306, %s21, 0
        %s308 = scalar_lea.vmem %s3, %s307
        %p309 = pneg %p137
        %p310 = pneg %p134
        %p311 = pneg %p165
        %p312 = pneg %p162
        %s313 = smul.u32 4, %s20
        %p314 = scmp.lt.s32.totalorder %s313, 3
        %s315 = scalar_select %p314, %s313, 3
        %p316 = scmp.lt.s32.totalorder %s21, 0
        %s317 = scalar_select %p316, %s21, 0
        %s318 = sadd.s32 %s317, %s315
        %s319 = smul.addr %s318, 8
        %s320 = scalar_lea.vmem %s4, %s319
        %s321 = smul.u32 4, %s20
        %s322 = smul.u32 16, %s22
        %p323 = scmp.lt.s32.totalorder %s322, 79
        %s324 = scalar_select %p323, %s322, 79
        %p325 = scmp.lt.s32.totalorder %s21, 0
        %s326 = scalar_select %p325, %s21, 0
        %s327 = sadd.s32 %s326, %s324
        %s328 = smul.addr %s327, 4
        %s329 = scalar_lea.vmem %s1, %s328
        %s330 = smul.u32 16, %s22
        %p331 = scmp.lt.s32.totalorder %s21, 0
        %s332 = scalar_select %p331, %s21, 0
        %s333 = scalar_lea.vmem %s2, %s332
        %p334 = scmp.lt.s32.totalorder %s21, 0
        %s335 = scalar_select %p334, %s21, 0
        %s336 = scalar_lea.vmem %s3, %s335
        %s337 = smul.u32 4, %s20
        %p338 = scmp.lt.s32.totalorder %s337, 3
        %s339 = scalar_select %p338, %s337, 3
        %p340 = scmp.lt.s32.totalorder %s21, 0
        %s341 = scalar_select %p340, %s21, 0
        %s342 = sadd.s32 %s341, %s339
        %s343 = smul.addr %s342, 8
        %s344 = scalar_lea.vmem %s4, %s343
        %s345 = smul.u32 4, %s20
        %p347 = scmp.eq.s32.totalorder %s22, 0
        // Predicated region
        $region78: #{style_extractor_forward.18} parent=72 // pred_check
          %p348 = pneg %p347
        $region79: #{style_extractor_forward.18} parent=72 // pred_check_branch
          %350 = sbr.rel (%p348) target = $region81
        $region80: #{style_extractor_forward.18} parent=72 // pred_region
          %351 = vst [vmem:[#allocation2] sm:$0xff] 0.0
          %352 = vst [vmem:[#allocation2 + $0x8] sm:$0xff] 0.0
          %353 = vst [vmem:[#allocation2 + $0x10] sm:$0xff] 0.0
          %354 = vst [vmem:[#allocation2 + $0x18] sm:$0xff] 0.0
        $region81: #{style_extractor_forward.18} parent=72 // pred_fallthru
          _
        %v355 = vld [vmem:[#allocation2] sm:$0xff]
        %v356 = vld [vmem:[#allocation2 + $0x8] sm:$0xff]
        %v357 = vld [vmem:[#allocation2 + $0x10] sm:$0xff]
        %v358 = vld [vmem:[#allocation2 + $0x18] sm:$0xff]
        %v359 = vld [vmem:[%s281] sm:$0xf]
        %v360 = vld [vmem:[%s281 + $0x4] sm:$0xf]
        %v361 = vld [vmem:[%s281 + $0x8] sm:$0xf]
        %v362 = vld [vmem:[%s281 + $0xc] sm:$0xf]
        %v363 = vld [vmem:[%s329] sm:$0xf]
        %v364 = vld [vmem:[%s329 + $0x4] sm:$0xf]
        %v365 = vld [vmem:[%s329 + $0x8] sm:$0xf]
        %v366 = vld [vmem:[%s329 + $0xc] sm:$0xf]
        %v367 = vld [vmem:[%s329 + $0x10] sm:$0xf]
        %v368 = vld [vmem:[%s329 + $0x14] sm:$0xf]
        %v369 = vld [vmem:[%s329 + $0x18] sm:$0xf]
        %v370 = vld [vmem:[%s329 + $0x1c] sm:$0xf]
        %v371 = vld [vmem:[%s329 + $0x20] sm:$0xf]
        %v372 = vld [vmem:[%s329 + $0x24] sm:$0xf]
        %v373 = vld [vmem:[%s329 + $0x28] sm:$0xf]
        %v374 = vld [vmem:[%s329 + $0x2c] sm:$0xf]
        %v375 = vld [vmem:[%s329 + $0x30] sm:$0xf]
        %v376 = vld [vmem:[%s329 + $0x34] sm:$0xf]
        %v377 = vld [vmem:[%s329 + $0x38] sm:$0xf]
        %v378 = vld [vmem:[%s329 + $0x3c] sm:$0xf]
        %v383 = vunpack.c.l.b16 %v359
        %v384 = vunpack.c.l.b16 %v360
        %v385 = vunpack.c.l.b16 %v361
        %v386 = vunpack.c.l.b16 %v362
        %v387 = vpack.c.b16 %v384, %v383
        %v388 = vpack.c.b16 %v386, %v385
        %v407 = vunpack.c.l.b16 %v363
        %v408 = vunpack.c.l.b16 %v364
        %v409 = vunpack.c.l.b16 %v365
        %v410 = vunpack.c.l.b16 %v366
        %v411 = vunpack.c.l.b16 %v367
        %v412 = vunpack.c.l.b16 %v368
        %v413 = vunpack.c.l.b16 %v369
        %v414 = vunpack.c.l.b16 %v370
        %v415 = vunpack.c.l.b16 %v371
        %v416 = vunpack.c.l.b16 %v372
        %v417 = vunpack.c.l.b16 %v373
        %v418 = vunpack.c.l.b16 %v374
        %v419 = vunpack.c.l.b16 %v375
        %v420 = vunpack.c.l.b16 %v376
        %v421 = vunpack.c.l.b16 %v377
        %v422 = vunpack.c.l.b16 %v378
        %v423 = vpack.c.b16 %v408, %v407
        %v424 = vpack.c.b16 %v410, %v409
        %v425 = vpack.c.b16 %v412, %v411
        %v426 = vpack.c.b16 %v414, %v413
        %v427 = vpack.c.b16 %v416, %v415
        %v428 = vpack.c.b16 %v418, %v417
        %v429 = vpack.c.b16 %v420, %v419
        %v430 = vpack.c.b16 %v422, %v421
        %439 = vmatprep.subr.bf16.mxu0 0
        %440 = vmatpush1.bf16.msra.mxu0 %v423
        %441 = vmatprep.subr.bf16.mxu0 0
        %442 = vmatpush1.bf16.msra.mxu0 %v424
        %443 = vmatprep.subr.bf16.mxu0 0
        %444 = vmatpush1.bf16.msra.mxu0 %v425
        %445 = vmatprep.subr.bf16.mxu0 0
        %446 = vmatpush1.bf16.msra.mxu0 %v426
        %447 = vmatprep.subr.bf16.mxu0 0
        %448 = vmatpush1.bf16.msra.mxu0 %v427
        %449 = vmatprep.subr.bf16.mxu0 0
        %450 = vmatpush1.bf16.msra.mxu0 %v428
        %451 = vmatprep.subr.bf16.mxu0 0
        %452 = vmatpush1.bf16.msra.mxu0 %v429
        %453 = vmatprep.subr.bf16.mxu0 0
        %454 = vmatpush1.bf16.msra.mxu0 %v430
        %455 = vmatprep.subr.bf16.mxu0 0
        %456 = vmatpush1.bf16.msra.mxu0 0
        %457 = vmatprep.subr.bf16.mxu0 0
        %458 = vmatpush1.bf16.msra.mxu0 0
        %459 = vmatprep.subr.bf16.mxu0 0
        %460 = vmatpush1.bf16.msra.mxu0 0
        %461 = vmatprep.subr.bf16.mxu0 0
        %462 = vmatpush1.bf16.msra.mxu0 0
        %463 = vmatprep.subr.bf16.mxu0 0
        %464 = vmatpush1.bf16.msra.mxu0 0
        %465 = vmatprep.subr.bf16.mxu0 0
        %466 = vmatpush1.bf16.msra.mxu0 0
        %467 = vmatprep.subr.bf16.mxu0 0
        %468 = vmatpush1.bf16.msra.mxu0 0
        %469 = vmatprep.subr.bf16.mxu0 0
        %470 = vmatpush1.bf16.msra.mxu0 0
        %471 = vmatprep.mubr.bf16.mxu0 0
        %472 = vmatmul.mubr.bf16.gmra.mrb[0].mxu0 %v387
        %v473 = vpop.f32.mrb[0].mxu0
        %v474 = vadd.f32 0.0, %v473
        %v475 = vpop.f32.mrb[0].mxu0
        %v476 = vpop.f32.mrb[0].mxu0
        %v477 = vadd.f32 0.0, %v476
        %v478 = vpop.f32.mrb[0].mxu0
        %479 = vmatprep.mubr.bf16.mxu0 0
        %480 = vmatmul.mubr.bf16.gmra.mrb[0].mxu0 %v388
        %v481 = vpop.f32.mrb[0].mxu0
        %v482 = vadd.f32 0.0, %v481
        %v483 = vpop.f32.mrb[0].mxu0
        %v484 = vpop.f32.mrb[0].mxu0
        %v485 = vadd.f32 0.0, %v484
        %v486 = vpop.f32.mrb[0].mxu0
        %487 = vdwg.mxu0
        %v488 = vadd.f32 %v355, %v474
        %v489 = vadd.f32 %v356, %v477
        %v490 = vadd.f32 %v357, %v482
        %v491 = vadd.f32 %v358, %v485
        %492 = vst [vmem:[#allocation2] sm:$0xff] %v488
        %493 = vst [vmem:[#allocation2 + $0x8] sm:$0xff] %v489
        %494 = vst [vmem:[#allocation2 + $0x10] sm:$0xff] %v490
        %495 = vst [vmem:[#allocation2 + $0x18] sm:$0xff] %v491
        %p496 = scmp.eq.s32.totalorder %s22, 4
        // Predicated region
        $region82: #{style_extractor_forward.18} parent=72 // pred_check
          %p497 = pneg %p496
        $region83: #{style_extractor_forward.18} parent=72 // pred_check_branch
          %499 = sbr.rel (%p497) target = $region85
        $region84: #{style_extractor_forward.18} parent=72 // pred_region
          %v500 = vld [vmem:[#allocation2] sm:$0xff]
          %v501 = vld [vmem:[#allocation2 + $0x8] sm:$0xff]
          %v502 = vld [vmem:[#allocation2 + $0x10] sm:$0xff]
          %v503 = vld [vmem:[#allocation2 + $0x18] sm:$0xff]
          %v504 = vld [vmem:[%s333] sm:$0x1]
          %v506 = vlaneseq
          %v507 = vshrl.u32 %v506, 7
          %v508 = vsub.s32 0, %v507
          %v509 = vrot.slane %v504, %v508
          %v511 = vmul.f32 %v500, %v509
          %v512 = vmul.f32 %v501, %v509
          %v513 = vmul.f32 %v502, %v509
          %v514 = vmul.f32 %v503, %v509
          %v515 = vld [vmem:[%s336] sm:$0x1]
          %v517 = vlaneseq
          %v518 = vshrl.u32 %v517, 7
          %v519 = vsub.s32 0, %v518
          %v520 = vrot.slane %v515, %v519
          %v522 = vadd.f32 %v511, %v520
          %v523 = vadd.f32 %v512, %v520
          %v524 = vadd.f32 %v513, %v520
          %v525 = vadd.f32 %v514, %v520
          %v526 = vmax.f32 %v522, 0.0
          %v527 = vmax.f32 %v523, 0.0
          %v528 = vmax.f32 %v524, 0.0
          %v529 = vmax.f32 %v525, 0.0
          %530 = vst [vmem:[%s344] sm:$0xff] %v526
          %531 = vst [vmem:[%s344 + $0x8] sm:$0xff] %v527
          %532 = vst [vmem:[%s344 + $0x10] sm:$0xff] %v528
          %533 = vst [vmem:[%s344 + $0x18] sm:$0xff] %v529
        $region85: #{style_extractor_forward.18} parent=72 // pred_fallthru
          _
        %s534 = smul.u32 4, %s20
        %p535 = scmp.lt.s32.totalorder %s534, 3
        %s536 = scalar_select %p535, %s534, 3
        %p537 = scmp.lt.s32.totalorder %s21, 0
        %s538 = scalar_select %p537, %s21, 0
        %s539 = sadd.s32 %s538, %s536
        %s540 = smul.addr %s539, 8
        %s541 = scalar_lea.vmem %s4, %s540
        // Predicated region
        $region86: #{style_extractor_forward.18} parent=72 // pred_check
          %p542 = pneg %p162
        $region87: #{style_extractor_forward.18} parent=72 // pred_check_branch
          %544 = sbr.rel (%p542) target = $region89
        $region88: #{style_extractor_forward.18} parent=72 // pred_region
          %s545 = smul.u32 4, %s20
        $region89: #{style_extractor_forward.18} parent=72 // pred_fallthru
          _
        // Predicated region
        $region90: #{style_extractor_forward.18} parent=72 // pred_check
          %p546 = pneg %p162
        $region91: #{style_extractor_forward.18} parent=72 // pred_check_branch
          %548 = sbr.rel (%p546) target = $region93
        $region92: #{style_extractor_forward.18} parent=72 // pred_region
          %s549 = smul.u32 4, %s20
          %p550 = scmp.lt.s32.totalorder %s549, 3
          %s551 = scalar_select %p550, %s549, 3
          %p552 = scmp.lt.s32.totalorder %s21, 0
          %s553 = scalar_select %p552, %s21, 0
          %s554 = sadd.s32 %s553, %s551
          %s555 = smul.addr %s554, 8
          %s556 = scalar_lea.vmem %s4, %s555
        $region93: #{style_extractor_forward.18} parent=72 // pred_fallthru
          _
      $region73: #{style_extractor_forward.18} parent=5 // pred_fallthru
        _
      %p557 = scmp.le.s32.totalorder 2, %s10
      // Predicated region
      $region94: #{style_extractor_forward.18} parent=5 // pred_check
        %p558 = pneg %p557
      $region95: #{style_extractor_forward.18} parent=5 // pred_check_branch
        %560 = sbr.rel (%p558) target = $region97
      $region96: #{style_extractor_forward.18} parent=5 // pred_region
        %s561 = ssub.s32 %s10, 2
      $region97: #{style_extractor_forward.18} parent=5 // pred_fallthru
        _
    $region6: #{style_extractor_forward.18} parent=1 // loop_footer
      %s14 = sadd.s32 1, %s10
    $region7: #{style_extractor_forward.18} parent=1 // loop_footer_branch
      %9 = sbr.rel target = $region3
    $region8: #{style_extractor_forward.18} parent=1 // loop_exit
      _

// kernel: style_extractor_forward.19
$region0: #{style_extractor_forward.19}
  #allocation0 [shape = 'u32[]', space=smem, size = 0x4, offset = 0x4, fixed_abs, tag = 'smem constant byte address 0x4 - core index']
  #allocation1 [shape = 'u32[144,128]{1,0:T(1,128)}', space=vmem, size = 0x12000, scoped, tag = 'internal scratch']
  #allocation2 [shape = 'f32[32,128]{1,0:T(8,128)}', space=vmem, size = 0x4000, scoped, tag = 'scratch operand']
  %s0 = inlined_call_operand.vmem [shape: bf16[32,128], index: 0, kind: input, shape index: {}]
  %s1 = inlined_call_operand.vmem [shape: bf16[128,128], index: 1, kind: input, shape index: {}]
  %s2 = inlined_call_operand.vmem [shape: f32[1,128], index: 2, kind: input, shape index: {}]
  %s3 = inlined_call_operand.vmem [shape: f32[1,128], index: 3, kind: input, shape index: {}]
  %s4 = inlined_call_operand.vmem [shape: f32[32,128], index: 4, kind: output, shape index: {}]
  %s5 = sld [smem:[#allocation0]]
  $region34: #{style_extractor_forward.19} parent=0
    _
  %s7 = ssub.s32 1, %s5
  %s8 = scalar_select 0, %s7, %s5
  // Predicated region
  $region2: #{style_extractor_forward.19} parent=0 // pred_check
    _
  $region3: #{style_extractor_forward.19} parent=0 // pred_check_branch
    %10 = sbr.rel (0) target = $region5
  $region4: #{style_extractor_forward.19} parent=0 // pred_region
    _
  $region5: #{style_extractor_forward.19} parent=0 // pred_fallthru
    _
  // Predicated region
  $region6: #{style_extractor_forward.19} parent=0 // pred_check
    _
  $region7: #{style_extractor_forward.19} parent=0 // pred_check_branch
    %12 = sbr.rel (0) target = $region9
  $region8: #{style_extractor_forward.19} parent=0 // pred_region
    _
  $region9: #{style_extractor_forward.19} parent=0 // pred_fallthru
    _
  // Predicated region
  $region10: #{style_extractor_forward.19} parent=0 // pred_check
    _
  $region11: #{style_extractor_forward.19} parent=0 // pred_check_branch
    %14 = sbr.rel (0) target = $region13
  $region12: #{style_extractor_forward.19} parent=0 // pred_region
    _
  $region13: #{style_extractor_forward.19} parent=0 // pred_fallthru
    _
  // Predicated region
  $region14: #{style_extractor_forward.19} parent=0 // pred_check
    _
  $region15: #{style_extractor_forward.19} parent=0 // pred_check_branch
    %16 = sbr.rel (0) target = $region17
  $region16: #{style_extractor_forward.19} parent=0 // pred_region
    _
  $region17: #{style_extractor_forward.19} parent=0 // pred_fallthru
    _
  %p18 = scmp.eq.s32.totalorder 0, 0
  // Predicated region
  $region18: #{style_extractor_forward.19} parent=0 // pred_check
    %p19 = pneg %p18
  $region19: #{style_extractor_forward.19} parent=0 // pred_check_branch
    %21 = sbr.rel (%p19) target = $region21
  $region20: #{style_extractor_forward.19} parent=0 // pred_region
    %22 = vst [vmem:[#allocation2] sm:$0xff] 0.0
    %23 = vst [vmem:[#allocation2 + $0x8] sm:$0xff] 0.0
    %24 = vst [vmem:[#allocation2 + $0x10] sm:$0xff] 0.0
    %25 = vst [vmem:[#allocation2 + $0x18] sm:$0xff] 0.0
  $region21: #{style_extractor_forward.19} parent=0 // pred_fallthru
    _
  %v26 = vld [vmem:[#allocation2] sm:$0xff]
  %v27 = vld [vmem:[#allocation2 + $0x8] sm:$0xff]
  %v28 = vld [vmem:[#allocation2 + $0x10] sm:$0xff]
  %v29 = vld [vmem:[#allocation2 + $0x18] sm:$0xff]
  %v30 = vld [vmem:[%s0] sm:$0xf]
  %v31 = vld [vmem:[%s0 + $0x4] sm:$0xf]
  %v32 = vld [vmem:[%s0 + $0x8] sm:$0xf]
  %v33 = vld [vmem:[%s0 + $0xc] sm:$0xf]
  %v34 = vld [vmem:[%s1] sm:$0xf]
  %v35 = vld [vmem:[%s1 + $0x4] sm:$0xf]
  %v36 = vld [vmem:[%s1 + $0x8] sm:$0xf]
  %v37 = vld [vmem:[%s1 + $0xc] sm:$0xf]
  %v38 = vld [vmem:[%s1 + $0x10] sm:$0xf]
  %v39 = vld [vmem:[%s1 + $0x14] sm:$0xf]
  %v40 = vld [vmem:[%s1 + $0x18] sm:$0xf]
  %v41 = vld [vmem:[%s1 + $0x1c] sm:$0xf]
  %v42 = vld [vmem:[%s1 + $0x20] sm:$0xf]
  %v43 = vld [vmem:[%s1 + $0x24] sm:$0xf]
  %v44 = vld [vmem:[%s1 + $0x28] sm:$0xf]
  %v45 = vld [vmem:[%s1 + $0x2c] sm:$0xf]
  %v46 = vld [vmem:[%s1 + $0x30] sm:$0xf]
  %v47 = vld [vmem:[%s1 + $0x34] sm:$0xf]
  %v48 = vld [vmem:[%s1 + $0x38] sm:$0xf]
  %v49 = vld [vmem:[%s1 + $0x3c] sm:$0xf]
  %v54 = vunpack.c.l.b16 %v30
  %v55 = vunpack.c.l.b16 %v31
  %v56 = vunpack.c.l.b16 %v32
  %v57 = vunpack.c.l.b16 %v33
  %v58 = vpack.c.b16 %v55, %v54
  %v59 = vpack.c.b16 %v57, %v56
  %v78 = vunpack.c.l.b16 %v34
  %v79 = vunpack.c.l.b16 %v35
  %v80 = vunpack.c.l.b16 %v36
  %v81 = vunpack.c.l.b16 %v37
  %v82 = vunpack.c.l.b16 %v38
  %v83 = vunpack.c.l.b16 %v39
  %v84 = vunpack.c.l.b16 %v40
  %v85 = vunpack.c.l.b16 %v41
  %v86 = vunpack.c.l.b16 %v42
  %v87 = vunpack.c.l.b16 %v43
  %v88 = vunpack.c.l.b16 %v44
  %v89 = vunpack.c.l.b16 %v45
  %v90 = vunpack.c.l.b16 %v46
  %v91 = vunpack.c.l.b16 %v47
  %v92 = vunpack.c.l.b16 %v48
  %v93 = vunpack.c.l.b16 %v49
  %v94 = vpack.c.b16 %v79, %v78
  %v95 = vpack.c.b16 %v81, %v80
  %v96 = vpack.c.b16 %v83, %v82
  %v97 = vpack.c.b16 %v85, %v84
  %v98 = vpack.c.b16 %v87, %v86
  %v99 = vpack.c.b16 %v89, %v88
  %v100 = vpack.c.b16 %v91, %v90
  %v101 = vpack.c.b16 %v93, %v92
  %110 = vmatprep.subr.bf16.mxu0 0
  %111 = vmatpush1.bf16.msra.mxu0 %v94
  %112 = vmatprep.subr.bf16.mxu0 0
  %113 = vmatpush1.bf16.msra.mxu0 %v95
  %114 = vmatprep.subr.bf16.mxu0 0
  %115 = vmatpush1.bf16.msra.mxu0 %v96
  %116 = vmatprep.subr.bf16.mxu0 0
  %117 = vmatpush1.bf16.msra.mxu0 %v97
  %118 = vmatprep.subr.bf16.mxu0 0
  %119 = vmatpush1.bf16.msra.mxu0 %v98
  %120 = vmatprep.subr.bf16.mxu0 0
  %121 = vmatpush1.bf16.msra.mxu0 %v99
  %122 = vmatprep.subr.bf16.mxu0 0
  %123 = vmatpush1.bf16.msra.mxu0 %v100
  %124 = vmatprep.subr.bf16.mxu0 0
  %125 = vmatpush1.bf16.msra.mxu0 %v101
  %126 = vmatprep.subr.bf16.mxu0 0
  %127 = vmatpush1.bf16.msra.mxu0 0
  %128 = vmatprep.subr.bf16.mxu0 0
  %129 = vmatpush1.bf16.msra.mxu0 0
  %130 = vmatprep.subr.bf16.mxu0 0
  %131 = vmatpush1.bf16.msra.mxu0 0
  %132 = vmatprep.subr.bf16.mxu0 0
  %133 = vmatpush1.bf16.msra.mxu0 0
  %134 = vmatprep.subr.bf16.mxu0 0
  %135 = vmatpush1.bf16.msra.mxu0 0
  %136 = vmatprep.subr.bf16.mxu0 0
  %137 = vmatpush1.bf16.msra.mxu0 0
  %138 = vmatprep.subr.bf16.mxu0 0
  %139 = vmatpush1.bf16.msra.mxu0 0
  %140 = vmatprep.subr.bf16.mxu0 0
  %141 = vmatpush1.bf16.msra.mxu0 0
  %142 = vmatprep.mubr.bf16.mxu0 0
  %143 = vmatmul.mubr.bf16.gmra.mrb[0].mxu0 %v58
  %v144 = vpop.f32.mrb[0].mxu0
  %v145 = vadd.f32 0.0, %v144
  %v146 = vpop.f32.mrb[0].mxu0
  %v147 = vpop.f32.mrb[0].mxu0
  %v148 = vadd.f32 0.0, %v147
  %v149 = vpop.f32.mrb[0].mxu0
  %150 = vmatprep.mubr.bf16.mxu0 0
  %151 = vmatmul.mubr.bf16.gmra.mrb[0].mxu0 %v59
  %v152 = vpop.f32.mrb[0].mxu0
  %v153 = vadd.f32 0.0, %v152
  %v154 = vpop.f32.mrb[0].mxu0
  %v155 = vpop.f32.mrb[0].mxu0
  %v156 = vadd.f32 0.0, %v155
  %v157 = vpop.f32.mrb[0].mxu0
  %158 = vdwg.mxu0
  %v159 = vadd.f32 %v26, %v145
  %v160 = vadd.f32 %v27, %v148
  %v161 = vadd.f32 %v28, %v153
  %v162 = vadd.f32 %v29, %v156
  %163 = vst [vmem:[#allocation2] sm:$0xff] %v159
  %164 = vst [vmem:[#allocation2 + $0x8] sm:$0xff] %v160
  %165 = vst [vmem:[#allocation2 + $0x10] sm:$0xff] %v161
  %166 = vst [vmem:[#allocation2 + $0x18] sm:$0xff] %v162
  // Predicated region
  $region22: #{style_extractor_forward.19} parent=0 // pred_check
    %p167 = pneg %p18
  $region23: #{style_extractor_forward.19} parent=0 // pred_check_branch
    %169 = sbr.rel (%p167) target = $region25
  $region24: #{style_extractor_forward.19} parent=0 // pred_region
    %v170 = vld [vmem:[#allocation2] sm:$0xff]
    %v171 = vld [vmem:[#allocation2 + $0x8] sm:$0xff]
    %v172 = vld [vmem:[#allocation2 + $0x10] sm:$0xff]
    %v173 = vld [vmem:[#allocation2 + $0x18] sm:$0xff]
    %v174 = vld [vmem:[%s2] sm:$0x1]
    %v176 = vlaneseq
    %v177 = vshrl.u32 %v176, 7
    %v178 = vsub.s32 0, %v177
    %v179 = vrot.slane %v174, %v178
    %v181 = vmul.f32 %v170, %v179
    %v182 = vmul.f32 %v171, %v179
    %v183 = vmul.f32 %v172, %v179
    %v184 = vmul.f32 %v173, %v179
    %v185 = vld [vmem:[%s3] sm:$0x1]
    %v187 = vlaneseq
    %v188 = vshrl.u32 %v187, 7
    %v189 = vsub.s32 0, %v188
    %v190 = vrot.slane %v185, %v189
    %v192 = vadd.f32 %v181, %v190
    %v193 = vadd.f32 %v182, %v190
    %v194 = vadd.f32 %v183, %v190
    %v195 = vadd.f32 %v184, %v190
    %196 = vst [vmem:[%s4] sm:$0xff] %v192
    %197 = vst [vmem:[%s4 + $0x8] sm:$0xff] %v193
    %198 = vst [vmem:[%s4 + $0x10] sm:$0xff] %v194
    %199 = vst [vmem:[%s4 + $0x18] sm:$0xff] %v195
  $region25: #{style_extractor_forward.19} parent=0 // pred_fallthru
    _
  // Predicated region
  $region26: #{style_extractor_forward.19} parent=0 // pred_check
    _
  $region27: #{style_extractor_forward.19} parent=0 // pred_check_branch
    %201 = sbr.rel (0) target = $region29
  $region28: #{style_extractor_forward.19} parent=0 // pred_region
    _
  $region29: #{style_extractor_forward.19} parent=0 // pred_fallthru
    _
  // Predicated region
  $region30: #{style_extractor_forward.19} parent=0 // pred_check
    _
  $region31: #{style_extractor_forward.19} parent=0 // pred_check_branch
    %203 = sbr.rel (0) target = $region33
  $region32: #{style_extractor_forward.19} parent=0 // pred_region
    _
  $region33: #{style_extractor_forward.19} parent=0 // pred_fallthru
    _

// kernel: style_extractor_forward.20
$region0: #{style_extractor_forward.20}
  #allocation0 [shape = 'u32[]', space=smem, size = 0x4, offset = 0x4, fixed_abs, tag = 'smem constant byte address 0x4 - core index']
  #allocation1 [shape = 'u32[144,128]{1,0:T(1,128)}', space=vmem, size = 0x12000, scoped, tag = 'internal scratch']
  #allocation2 [shape = 'f32[32,128]{1,0:T(8,128)}', space=vmem, size = 0x4000, scoped, tag = 'scratch operand']
  %s0 = inlined_call_operand.vmem [shape: bf16[32,1152], index: 0, kind: input, shape index: {}]
  %s1 = inlined_call_operand.vmem [shape: bf16[1152,128], index: 1, kind: input, shape index: {}]
  %s2 = inlined_call_operand.vmem [shape: f32[1,128], index: 2, kind: input, shape index: {}]
  %s3 = inlined_call_operand.vmem [shape: f32[1,128], index: 3, kind: input, shape index: {}]
  %s4 = inlined_call_operand.vmem [shape: f32[32,128], index: 4, kind: input, shape index: {}]
  %s5 = inlined_call_operand.vmem [shape: f32[32,128], index: 5, kind: output, shape index: {}]
  %s6 = sld [smem:[#allocation0]]
  $region102: #{style_extractor_forward.20} parent=0
    _
  %s8 = ssub.s32 1, %s6
  %s9 = scalar_select 0, %s8, %s6
  $region1: #{style_extractor_forward.20} parent=0
    #allocation3 [shape = 'u8[16384]{0}', space=vmem, size = 0x4000, scoped, tag = 'input window, operand 0']
    loop: start=0, step=1, limit=11
    $region2: #{style_extractor_forward.20} parent=1 // loop_pre_header
      _
    $region3: #{style_extractor_forward.20} parent=1 // loop_header
      %s11 = sphi 0, %s15
      %p12 = scmp.ge.s32.totalorder %s11, 11
      %s18 = sphi 0, %s37
      %s19 = sphi 0, %s33
      %s20 = sphi 0, %s29
      %s21 = sphi 0, %s18
      %s22 = sphi 0, %s19
      %s23 = sphi 0, %s20
      %s24 = sphi 0, %s21
      %s25 = sphi 0, %s22
      %s26 = sphi 0, %s23
      %s42 = sphi 0, %s44
      %s45 = sphi 0, %s42
      %s46 = sphi 0, %s45
      %s62 = sphi 0, %s46
      %s70 = sphi 0, %s72
      %s73 = sphi 0, %s70
      %s74 = sphi 0, %s73
      %s90 = sphi 0, %s74
      %s96 = sphi 0, %s98
      %s99 = sphi 0, %s96
      %s100 = sphi 0, %s99
      %s116 = sphi 0, %s100
      %s122 = sphi 0, %s124
      %s125 = sphi 0, %s122
      %s126 = sphi 0, %s125
      %s142 = sphi 0, %s126
      %s150 = sphi 0, %s152
      %s153 = sphi 0, %s150
      %s154 = sphi 0, %s153
      %s170 = sphi 0, %s154
      %s178 = sphi 0, %s180
      %s181 = sphi 0, %s178
      %s182 = sphi 0, %s181
      %s198 = sphi 0, %s182
    $region4: #{style_extractor_forward.20} parent=1 // loop_header_branch
      %14 = sbr.rel (%p12) target = $region8
    $region5: #{style_extractor_forward.20} parent=1 // loop_body
      %s16 = ssub.s32 %s11, 1
      %s17 = ssub.s32 %s11, 2
      %s27 = sadd.s32 1, %s20
      %p28 = scmp.ge.s32.totalorder %s27, 9
      %s29 = scalar_select %p28, 0, %s27
      %s30 = sadd.s32 1, %s19
      %s31 = scalar_select %p28, %s30, %s19
      %p32 = scmp.ge.s32.totalorder %s31, 1
      %s33 = scalar_select %p32, 0, %s31
      %s34 = sadd.s32 1, %s18
      %s35 = scalar_select %p32, %s34, %s18
      %p36 = scmp.ge.s32.totalorder %s35, 1
      %s37 = scalar_select %p36, 0, %s35
      %s38 = ssub.s32 %s18, %s37
      %s39 = ssub.s32 %s20, %s29
      %s40 = sor.u32 %s38, %s39
      %p41 = scmp.eq.s32.totalorder %s40, 0
      %s43 = sadd.s32 %s42, 1
      %s44 = scalar_select %p41, %s42, %s43
      %p47 = pneg %p41
      %p48 = scmp.eq.s32.totalorder %s11, 8
      %p49 = por %p47, %p48
      %p50 = scmp.ne.s32.totalorder %s42, %s45
      %p51 = scmp.eq.s32.totalorder %s11, 0
      %p52 = por %p50, %p51
      %p53 = scmp.ne.s32.totalorder %s42, %s45
      %p54 = scmp.eq.s32.totalorder %s16, 8
      %p55 = por %p53, %p54
      %p56 = scmp.ne.s32.totalorder %s45, %s46
      %p57 = scmp.eq.s32.totalorder %s16, 0
      %p58 = por %p56, %p57
      %p59 = scmp.ne.s32.totalorder %s45, %s46
      %p60 = scmp.eq.s32.totalorder %s17, 8
      %p61 = por %p59, %p60
      %p63 = scmp.ne.s32.totalorder %s46, %s62
      %p64 = scmp.eq.s32.totalorder %s17, 0
      %p65 = por %p63, %p64
      %s66 = ssub.s32 %s20, %s29
      %s67 = ssub.s32 %s19, %s33
      %s68 = sor.u32 %s66, %s67
      %p69 = scmp.eq.s32.totalorder %s68, 0
      %s71 = sadd.s32 %s70, 1
      %s72 = scalar_select %p69, %s70, %s71
      %p75 = pneg %p69
      %p76 = scmp.eq.s32.totalorder %s11, 8
      %p77 = por %p75, %p76
      %p78 = scmp.ne.s32.totalorder %s70, %s73
      %p79 = scmp.eq.s32.totalorder %s11, 0
      %p80 = por %p78, %p79
      %p81 = scmp.ne.s32.totalorder %s70, %s73
      %p82 = scmp.eq.s32.totalorder %s16, 8
      %p83 = por %p81, %p82
      %p84 = scmp.ne.s32.totalorder %s73, %s74
      %p85 = scmp.eq.s32.totalorder %s16, 0
      %p86 = por %p84, %p85
      %p87 = scmp.ne.s32.totalorder %s73, %s74
      %p88 = scmp.eq.s32.totalorder %s17, 8
      %p89 = por %p87, %p88
      %p91 = scmp.ne.s32.totalorder %s74, %s90
      %p92 = scmp.eq.s32.totalorder %s17, 0
      %p93 = por %p91, %p92
      %s94 = ssub.s32 %s19, %s33
      %p95 = scmp.eq.s32.totalorder %s94, 0
      %s97 = sadd.s32 %s96, 1
      %s98 = scalar_select %p95, %s96, %s97
      %p101 = pneg %p95
      %p102 = scmp.eq.s32.totalorder %s11, 8
      %p103 = por %p101, %p102
      %p104 = scmp.ne.s32.totalorder %s96, %s99
      %p105 = scmp.eq.s32.totalorder %s11, 0
      %p106 = por %p104, %p105
      %p107 = scmp.ne.s32.totalorder %s96, %s99
      %p108 = scmp.eq.s32.totalorder %s16, 8
      %p109 = por %p107, %p108
      %p110 = scmp.ne.s32.totalorder %s99, %s100
      %p111 = scmp.eq.s32.totalorder %s16, 0
      %p112 = por %p110, %p111
      %p113 = scmp.ne.s32.totalorder %s99, %s100
      %p114 = scmp.eq.s32.totalorder %s17, 8
      %p115 = por %p113, %p114
      %p117 = scmp.ne.s32.totalorder %s100, %s116
      %p118 = scmp.eq.s32.totalorder %s17, 0
      %p119 = por %p117, %p118
      %s120 = ssub.s32 %s19, %s33
      %p121 = scmp.eq.s32.totalorder %s120, 0
      %s123 = sadd.s32 %s122, 1
      %s124 = scalar_select %p121, %s122, %s123
      %p127 = pneg %p121
      %p128 = scmp.eq.s32.totalorder %s11, 8
      %p129 = por %p127, %p128
      %p130 = scmp.ne.s32.totalorder %s122, %s125
      %p131 = scmp.eq.s32.totalorder %s11, 0
      %p132 = por %p130, %p131
      %p133 = scmp.ne.s32.totalorder %s122, %s125
      %p134 = scmp.eq.s32.totalorder %s16, 8
      %p135 = por %p133, %p134
      %p136 = scmp.ne.s32.totalorder %s125, %s126
      %p137 = scmp.eq.s32.totalorder %s16, 0
      %p138 = por %p136, %p137
      %p139 = scmp.ne.s32.totalorder %s125, %s126
      %p140 = scmp.eq.s32.totalorder %s17, 8
      %p141 = por %p139, %p140
      %p143 = scmp.ne.s32.totalorder %s126, %s142
      %p144 = scmp.eq.s32.totalorder %s17, 0
      %p145 = por %p143, %p144
      %s146 = ssub.s32 %s18, %s37
      %s147 = ssub.s32 %s19, %s33
      %s148 = sor.u32 %s146, %s147
      %p149 = scmp.eq.s32.totalorder %s148, 0
      %s151 = sadd.s32 %s150, 1
      %s152 = scalar_select %p149, %s150, %s151
      %p155 = pneg %p149
      %p156 = scmp.eq.s32.totalorder %s11, 8
      %p157 = por %p155, %p156
      %p158 = scmp.ne.s32.totalorder %s150, %s153
      %p159 = scmp.eq.s32.totalorder %s11, 0
      %p160 = por %p158, %p159
      %p161 = scmp.ne.s32.totalorder %s150, %s153
      %p162 = scmp.eq.s32.totalorder %s16, 8
      %p163 = por %p161, %p162
      %p164 = scmp.ne.s32.totalorder %s153, %s154
      %p165 = scmp.eq.s32.totalorder %s16, 0
      %p166 = por %p164, %p165
      %p167 = scmp.ne.s32.totalorder %s153, %s154
      %p168 = scmp.eq.s32.totalorder %s17, 8
      %p169 = por %p167, %p168
      %p171 = scmp.ne.s32.totalorder %s154, %s170
      %p172 = scmp.eq.s32.totalorder %s17, 0
      %p173 = por %p171, %p172
      %s174 = ssub.s32 %s18, %s37
      %s175 = ssub.s32 %s19, %s33
      %s176 = sor.u32 %s174, %s175
      %p177 = scmp.eq.s32.totalorder %s176, 0
      %s179 = sadd.s32 %s178, 1
      %s180 = scalar_select %p177, %s178, %s179
      %p183 = pneg %p177
      %p184 = scmp.eq.s32.totalorder %s11, 8
      %p185 = por %p183, %p184
      %p186 = scmp.ne.s32.totalorder %s178, %s181
      %p187 = scmp.eq.s32.totalorder %s11, 0
      %p188 = por %p186, %p187
      %p189 = scmp.ne.s32.totalorder %s178, %s181
      %p190 = scmp.eq.s32.totalorder %s16, 8
      %p191 = por %p189, %p190
      %p192 = scmp.ne.s32.totalorder %s181, %s182
      %p193 = scmp.eq.s32.totalorder %s16, 0
      %p194 = por %p192, %p193
      %p195 = scmp.ne.s32.totalorder %s181, %s182
      %p196 = scmp.eq.s32.totalorder %s17, 8
      %p197 = por %p195, %p196
      %p199 = scmp.ne.s32.totalorder %s182, %s198
      %p200 = scmp.eq.s32.totalorder %s17, 0
      %p201 = por %p199, %p200
      %p202 = scmp.le.s32.totalorder 1, %s11
      %p203 = scmp.lt.s32.totalorder %s11, 10
      %p204 = pnand %p202, %p203
      %p205 = pneg %p204
      // Predicated region
      $region9: #{style_extractor_forward.20} parent=5 // pred_check
        _
      $region10: #{style_extractor_forward.20} parent=5 // pred_check_branch
        %207 = sbr.rel (%p204) target = $region12
      $region11: #{style_extractor_forward.20} parent=5 // pred_region
        %s208 = ssub.s32 %s11, 1
        // Predicated region
        $region13: #{style_extractor_forward.20} parent=11 // pred_check
          %p209 = pneg %p112
        $region14: #{style_extractor_forward.20} parent=11 // pred_check_branch
          %211 = sbr.rel (%p209) target = $region16
        $region15: #{style_extractor_forward.20} parent=11 // pred_region
          %p212 = scmp.lt.s32.totalorder %s22, 0
          %s213 = scalar_select %p212, %s22, 0
          %s214 = scalar_lea.vmem %s2, %s213
        $region16: #{style_extractor_forward.20} parent=11 // pred_fallthru
          _
        // Predicated region
        $region17: #{style_extractor_forward.20} parent=11 // pred_check
          %p215 = pneg %p138
        $region18: #{style_extractor_forward.20} parent=11 // pred_check_branch
          %217 = sbr.rel (%p215) target = $region20
        $region19: #{style_extractor_forward.20} parent=11 // pred_region
          %p218 = scmp.lt.s32.totalorder %s22, 0
          %s219 = scalar_select %p218, %s22, 0
          %s220 = scalar_lea.vmem %s3, %s219
        $region20: #{style_extractor_forward.20} parent=11 // pred_fallthru
          _
        // Predicated region
        $region21: #{style_extractor_forward.20} parent=11 // pred_check
          %p221 = pneg %p166
        $region22: #{style_extractor_forward.20} parent=11 // pred_check_branch
          %223 = sbr.rel (%p221) target = $region24
        $region23: #{style_extractor_forward.20} parent=11 // pred_region
          %s224 = smul.u32 4, %s21
          %p225 = scmp.lt.s32.totalorder %s224, 3
          %s226 = scalar_select %p225, %s224, 3
          %p227 = scmp.lt.s32.totalorder %s22, 0
          %s228 = scalar_select %p227, %s22, 0
          %s229 = sadd.s32 %s228, %s226
          %s230 = smul.addr %s229, 8
          %s231 = scalar_lea.vmem %s4, %s230
          %s232 = smul.u32 4, %s21
        $region24: #{style_extractor_forward.20} parent=11 // pred_fallthru
          _
      $region12: #{style_extractor_forward.20} parent=5 // pred_fallthru
        _
      %p233 = scmp.lt.s32.totalorder %s11, 9
      // Predicated region
      $region25: #{style_extractor_forward.20} parent=5 // pred_check
        %p234 = pneg %p233
      $region26: #{style_extractor_forward.20} parent=5 // pred_check_branch
        %236 = sbr.rel (%p234) target = $region28
      $region27: #{style_extractor_forward.20} parent=5 // pred_region
        // Predicated region
        $region29: #{style_extractor_forward.20} parent=27 // pred_check
          %p237 = pneg %p52
        $region30: #{style_extractor_forward.20} parent=27 // pred_check_branch
          %239 = sbr.rel (%p237) target = $region32
        $region31: #{style_extractor_forward.20} parent=27 // pred_region
          %s240 = sand.u32 %s42, 1
          %s241 = sand.u32 %s42, 1
          %s242 = smul.addr %s241, 16
          %s243 = scalar_lea.vmem [#allocation3], %s242
          %s244 = smul.u32 4, %s18
          %s245 = smul.addr %s244, 9
          %s246 = sadd.s32 %s20, %s245
          %s247 = smul.addr %s246, 4
          %s248 = scalar_lea.vmem %s0, %s247
          // Predicated region
          $region33: #{style_extractor_forward.20} parent=31 // pred_check
            _
          $region34: #{style_extractor_forward.20} parent=31 // pred_check_branch
            %250 = sbr.rel (0) target = $region36
          $region35: #{style_extractor_forward.20} parent=31 // pred_region
            // Predicated region
            $region37: #{style_extractor_forward.20} parent=35 // pred_check
              _
            $region38: #{style_extractor_forward.20} parent=35 // pred_check_branch
              %252 = sbr.rel target = $region40
            $region39: #{style_extractor_forward.20} parent=35 // pred_region
              // Predicated region
              $region52: #{style_extractor_forward.20} parent=39 // pred_check
                _
              $region53: #{style_extractor_forward.20} parent=39 // pred_check_branch
                %273 = sbr.rel (0) target = $region55
              $region54: #{style_extractor_forward.20} parent=39 // pred_region
                loop: start=0, step=1, limit=1
                $region56: #{style_extractor_forward.20} parent=54 // loop_pre_header
                  _
                $region57: #{style_extractor_forward.20} parent=54 // loop_header
                  %s275 = sphi 0, %s279
                  %p276 = scmp.ge.s32.totalorder %s275, 1
                  %s280 = sphi %s248, %s248
                  %s281 = sphi %s243, %s243
                $region58: #{style_extractor_forward.20} parent=54 // loop_header_branch
                  %278 = sbr.rel (%p276) target = $region62
                $region59: #{style_extractor_forward.20} parent=54 // loop_body
                  _
                $region60: #{style_extractor_forward.20} parent=54 // loop_footer
                  %s279 = sadd.s32 1, %s275
                $region61: #{style_extractor_forward.20} parent=54 // loop_footer_branch
                  %274 = sbr.rel target = $region57
                $region62: #{style_extractor_forward.20} parent=54 // loop_exit
                  _
                loop: start=0, step=1, limit=1
                $region63: #{style_extractor_forward.20} parent=54 // loop_pre_header
                  _
                $region64: #{style_extractor_forward.20} parent=54 // loop_header
                  %s284 = sphi 0, %s288
                  %p285 = scmp.ge.s32.totalorder %s284, 1
                  %s289 = sphi %s248, %s248
                  %s290 = sphi %s243, %s243
                $region65: #{style_extractor_forward.20} parent=54 // loop_header_branch
                  %287 = sbr.rel (%p285) target = $region69
                $region66: #{style_extractor_forward.20} parent=54 // loop_body
                  %v291 = vld [vmem:[%s289] sm:$0xf]
                  %292 = vst [vmem:[%s290] sm:$0xf] %v291
                  %v293 = vld [vmem:[%s289 + $0x24] sm:$0xf]
                  %294 = vst [vmem:[%s290 + $0x4] sm:$0xf] %v293
                  %v295 = vld [vmem:[%s289 + $0x48] sm:$0xf]
                  %296 = vst [vmem:[%s290 + $0x8] sm:$0xf] %v295
                  %v297 = vld [vmem:[%s289 + $0x6c] sm:$0xf]
                  %298 = vst [vmem:[%s290 + $0xc] sm:$0xf] %v297
                $region67: #{style_extractor_forward.20} parent=54 // loop_footer
                  %s288 = sadd.s32 1, %s284
                $region68: #{style_extractor_forward.20} parent=54 // loop_footer_branch
                  %283 = sbr.rel target = $region64
                $region69: #{style_extractor_forward.20} parent=54 // loop_exit
                  _
              $region55: #{style_extractor_forward.20} parent=39 // pred_fallthru
                _
            $region40: #{style_extractor_forward.20} parent=35 // pred_fallthru
              _
            // Predicated region
            $region41: #{style_extractor_forward.20} parent=35 // pred_check
              _
            $region42: #{style_extractor_forward.20} parent=35 // pred_check_branch
              %254 = sbr.rel (0) target = $region44
            $region43: #{style_extractor_forward.20} parent=35 // pred_region
              loop: start=0, step=1, limit=1
              $region45: #{style_extractor_forward.20} parent=43 // loop_pre_header
                _
              $region46: #{style_extractor_forward.20} parent=43 // loop_header
                %s257 = sphi 0, %s261
                %p258 = scmp.ge.s32.totalorder %s257, 1
                %s262 = sphi %s248, %s248
                %s263 = sphi %s243, %s243
              $region47: #{style_extractor_forward.20} parent=43 // loop_header_branch
                %260 = sbr.rel (%p258) target = $region51
              $region48: #{style_extractor_forward.20} parent=43 // loop_body
                %v264 = vld [vmem:[%s262] sm:$0xf]
                %265 = vst [vmem:[%s263] sm:$0xf] %v264
                %v266 = vld [vmem:[%s262 + $0x24] sm:$0xf]
                %267 = vst [vmem:[%s263 + $0x4] sm:$0xf] %v266
                %v268 = vld [vmem:[%s262 + $0x48] sm:$0xf]
                %269 = vst [vmem:[%s263 + $0x8] sm:$0xf] %v268
                %v270 = vld [vmem:[%s262 + $0x6c] sm:$0xf]
                %271 = vst [vmem:[%s263 + $0xc] sm:$0xf] %v270
              $region49: #{style_extractor_forward.20} parent=43 // loop_footer
                %s261 = sadd.s32 1, %s257
              $region50: #{style_extractor_forward.20} parent=43 // loop_footer_branch
                %256 = sbr.rel target = $region46
              $region51: #{style_extractor_forward.20} parent=43 // loop_exit
                _
            $region44: #{style_extractor_forward.20} parent=35 // pred_fallthru
              _
          $region36: #{style_extractor_forward.20} parent=31 // pred_fallthru
            _
          %299 = vnop
        $region32: #{style_extractor_forward.20} parent=27 // pred_fallthru
          _
        // Predicated region
        $region70: #{style_extractor_forward.20} parent=27 // pred_check
          %p300 = pneg %p80
        $region71: #{style_extractor_forward.20} parent=27 // pred_check_branch
          %302 = sbr.rel (%p300) target = $region73
        $region72: #{style_extractor_forward.20} parent=27 // pred_region
          %s303 = smul.u32 16, %s20
          %p304 = scmp.lt.s32.totalorder %s303, 143
          %s305 = scalar_select %p304, %s303, 143
          %p306 = scmp.lt.s32.totalorder %s19, 0
          %s307 = scalar_select %p306, %s19, 0
          %s308 = sadd.s32 %s307, %s305
          %s309 = smul.addr %s308, 4
          %s310 = scalar_lea.vmem %s1, %s309
          %s311 = smul.u32 16, %s20
        $region73: #{style_extractor_forward.20} parent=27 // pred_fallthru
          _
      $region28: #{style_extractor_forward.20} parent=5 // pred_fallthru
        _
      %p312 = scmp.le.s32.totalorder 1, %s11
      %p313 = scmp.lt.s32.totalorder %s11, 10
      %p314 = pnand %p312, %p313
      %p315 = pneg %p314
      // Predicated region
      $region74: #{style_extractor_forward.20} parent=5 // pred_check
        _
      $region75: #{style_extractor_forward.20} parent=5 // pred_check_branch
        %317 = sbr.rel (%p314) target = $region77
      $region76: #{style_extractor_forward.20} parent=5 // pred_region
        %s318 = ssub.s32 %s11, 1
        %s319 = sand.u32 %s45, 1
        %s320 = sand.u32 %s45, 1
        %s321 = smul.addr %s320, 16
        %s322 = scalar_lea.vmem [#allocation3], %s321
        // Predicated region
        $region78: #{style_extractor_forward.20} parent=76 // pred_check
          %p323 = pneg %p58
        $region79: #{style_extractor_forward.20} parent=76 // pred_check_branch
          %325 = sbr.rel (%p323) target = $region81
        $region80: #{style_extractor_forward.20} parent=76 // pred_region
          _
        $region81: #{style_extractor_forward.20} parent=76 // pred_fallthru
          _
        %s326 = sand.u32 %s45, 1
        %s327 = sand.u32 %s45, 1
        %s328 = smul.addr %s327, 16
        %s329 = scalar_lea.vmem [#allocation3], %s328
        %p330 = pneg %p58
        %p331 = pneg %p55
        %s332 = smul.u32 16, %s23
        %p333 = scmp.lt.s32.totalorder %s332, 143
        %s334 = scalar_select %p333, %s332, 143
        %p335 = scmp.lt.s32.totalorder %s22, 0
        %s336 = scalar_select %p335, %s22, 0
        %s337 = sadd.s32 %s336, %s334
        %s338 = smul.addr %s337, 4
        %s339 = scalar_lea.vmem %s1, %s338
        %p340 = pneg %p86
        %p341 = pneg %p83
        %p342 = scmp.lt.s32.totalorder %s22, 0
        %s343 = scalar_select %p342, %s22, 0
        %s344 = scalar_lea.vmem %s2, %s343
        %p345 = pneg %p112
        %p346 = pneg %p109
        %p347 = scmp.lt.s32.totalorder %s22, 0
        %s348 = scalar_select %p347, %s22, 0
        %s349 = scalar_lea.vmem %s3, %s348
        %p350 = pneg %p138
        %p351 = pneg %p135
        %s352 = smul.u32 4, %s21
        %p353 = scmp.lt.s32.totalorder %s352, 3
        %s354 = scalar_select %p353, %s352, 3
        %p355 = scmp.lt.s32.totalorder %s22, 0
        %s356 = scalar_select %p355, %s22, 0
        %s357 = sadd.s32 %s356, %s354
        %s358 = smul.addr %s357, 8
        %s359 = scalar_lea.vmem %s4, %s358
        %p360 = pneg %p166
        %p361 = pneg %p163
        %p362 = pneg %p194
        %p363 = pneg %p191
        %s364 = smul.u32 4, %s21
        %p365 = scmp.lt.s32.totalorder %s364, 3
        %s366 = scalar_select %p365, %s364, 3
        %p367 = scmp.lt.s32.totalorder %s22, 0
        %s368 = scalar_select %p367, %s22, 0
        %s369 = sadd.s32 %s368, %s366
        %s370 = smul.addr %s369, 8
        %s371 = scalar_lea.vmem %s5, %s370
        %s372 = smul.u32 4, %s21
        %s373 = smul.u32 16, %s23
        %p374 = scmp.lt.s32.totalorder %s373, 143
        %s375 = scalar_select %p374, %s373, 143
        %p376 = scmp.lt.s32.totalorder %s22, 0
        %s377 = scalar_select %p376, %s22, 0
        %s378 = sadd.s32 %s377, %s375
        %s379 = smul.addr %s378, 4
        %s380 = scalar_lea.vmem %s1, %s379
        %s381 = smul.u32 16, %s23
        %p382 = scmp.lt.s32.totalorder %s22, 0
        %s383 = scalar_select %p382, %s22, 0
        %s384 = scalar_lea.vmem %s2, %s383
        %p385 = scmp.lt.s32.totalorder %s22, 0
        %s386 = scalar_select %p385, %s22, 0
        %s387 = scalar_lea.vmem %s3, %s386
        %s388 = smul.u32 4, %s21
        %p389 = scmp.lt.s32.totalorder %s388, 3
        %s390 = scalar_select %p389, %s388, 3
        %p391 = scmp.lt.s32.totalorder %s22, 0
        %s392 = scalar_select %p391, %s22, 0
        %s393 = sadd.s32 %s392, %s390
        %s394 = smul.addr %s393, 8
        %s395 = scalar_lea.vmem %s4, %s394
        %s396 = smul.u32 4, %s21
        %s397 = smul.u32 4, %s21
        %p398 = scmp.lt.s32.totalorder %s397, 3
        %s399 = scalar_select %p398, %s397, 3
        %p400 = scmp.lt.s32.totalorder %s22, 0
        %s401 = scalar_select %p400, %s22, 0
        %s402 = sadd.s32 %s401, %s399
        %s403 = smul.addr %s402, 8
        %s404 = scalar_lea.vmem %s5, %s403
        %s405 = smul.u32 4, %s21
        %p407 = scmp.eq.s32.totalorder %s23, 0
        // Predicated region
        $region82: #{style_extractor_forward.20} parent=76 // pred_check
          %p408 = pneg %p407
        $region83: #{style_extractor_forward.20} parent=76 // pred_check_branch
          %410 = sbr.rel (%p408) target = $region85
        $region84: #{style_extractor_forward.20} parent=76 // pred_region
          %411 = vst [vmem:[#allocation2] sm:$0xff] 0.0
          %412 = vst [vmem:[#allocation2 + $0x8] sm:$0xff] 0.0
          %413 = vst [vmem:[#allocation2 + $0x10] sm:$0xff] 0.0
          %414 = vst [vmem:[#allocation2 + $0x18] sm:$0xff] 0.0
        $region85: #{style_extractor_forward.20} parent=76 // pred_fallthru
          _
        %v415 = vld [vmem:[#allocation2] sm:$0xff]
        %v416 = vld [vmem:[#allocation2 + $0x8] sm:$0xff]
        %v417 = vld [vmem:[#allocation2 + $0x10] sm:$0xff]
        %v418 = vld [vmem:[#allocation2 + $0x18] sm:$0xff]
        %v419 = vld [vmem:[%s322] sm:$0xf]
        %v420 = vld [vmem:[%s322 + $0x4] sm:$0xf]
        %v421 = vld [vmem:[%s322 + $0x8] sm:$0xf]
        %v422 = vld [vmem:[%s322 + $0xc] sm:$0xf]
        %v423 = vld [vmem:[%s380] sm:$0xf]
        %v424 = vld [vmem:[%s380 + $0x4] sm:$0xf]
        %v425 = vld [vmem:[%s380 + $0x8] sm:$0xf]
        %v426 = vld [vmem:[%s380 + $0xc] sm:$0xf]
        %v427 = vld [vmem:[%s380 + $0x10] sm:$0xf]
        %v428 = vld [vmem:[%s380 + $0x14] sm:$0xf]
        %v429 = vld [vmem:[%s380 + $0x18] sm:$0xf]
        %v430 = vld [vmem:[%s380 + $0x1c] sm:$0xf]
        %v431 = vld [vmem:[%s380 + $0x20] sm:$0xf]
        %v432 = vld [vmem:[%s380 + $0x24] sm:$0xf]
        %v433 = vld [vmem:[%s380 + $0x28] sm:$0xf]
        %v434 = vld [vmem:[%s380 + $0x2c] sm:$0xf]
        %v435 = vld [vmem:[%s380 + $0x30] sm:$0xf]
        %v436 = vld [vmem:[%s380 + $0x34] sm:$0xf]
        %v437 = vld [vmem:[%s380 + $0x38] sm:$0xf]
        %v438 = vld [vmem:[%s380 + $0x3c] sm:$0xf]
        %v443 = vunpack.c.l.b16 %v419
        %v444 = vunpack.c.l.b16 %v420
        %v445 = vunpack.c.l.b16 %v421
        %v446 = vunpack.c.l.b16 %v422
        %v447 = vpack.c.b16 %v444, %v443
        %v448 = vpack.c.b16 %v446, %v445
        %v467 = vunpack.c.l.b16 %v423
        %v468 = vunpack.c.l.b16 %v424
        %v469 = vunpack.c.l.b16 %v425
        %v470 = vunpack.c.l.b16 %v426
        %v471 = vunpack.c.l.b16 %v427
        %v472 = vunpack.c.l.b16 %v428
        %v473 = vunpack.c.l.b16 %v429
        %v474 = vunpack.c.l.b16 %v430
        %v475 = vunpack.c.l.b16 %v431
        %v476 = vunpack.c.l.b16 %v432
        %v477 = vunpack.c.l.b16 %v433
        %v478 = vunpack.c.l.b16 %v434
        %v479 = vunpack.c.l.b16 %v435
        %v480 = vunpack.c.l.b16 %v436
        %v481 = vunpack.c.l.b16 %v437
        %v482 = vunpack.c.l.b16 %v438
        %v483 = vpack.c.b16 %v468, %v467
        %v484 = vpack.c.b16 %v470, %v469
        %v485 = vpack.c.b16 %v472, %v471
        %v486 = vpack.c.b16 %v474, %v473
        %v487 = vpack.c.b16 %v476, %v475
        %v488 = vpack.c.b16 %v478, %v477
        %v489 = vpack.c.b16 %v480, %v479
        %v490 = vpack.c.b16 %v482, %v481
        %499 = vmatprep.subr.bf16.mxu0 0
        %500 = vmatpush1.bf16.msra.mxu0 %v483
        %501 = vmatprep.subr.bf16.mxu0 0
        %502 = vmatpush1.bf16.msra.mxu0 %v484
        %503 = vmatprep.subr.bf16.mxu0 0
        %504 = vmatpush1.bf16.msra.mxu0 %v485
        %505 = vmatprep.subr.bf16.mxu0 0
        %506 = vmatpush1.bf16.msra.mxu0 %v486
        %507 = vmatprep.subr.bf16.mxu0 0
        %508 = vmatpush1.bf16.msra.mxu0 %v487
        %509 = vmatprep.subr.bf16.mxu0 0
        %510 = vmatpush1.bf16.msra.mxu0 %v488
        %511 = vmatprep.subr.bf16.mxu0 0
        %512 = vmatpush1.bf16.msra.mxu0 %v489
        %513 = vmatprep.subr.bf16.mxu0 0
        %514 = vmatpush1.bf16.msra.mxu0 %v490
        %515 = vmatprep.subr.bf16.mxu0 0
        %516 = vmatpush1.bf16.msra.mxu0 0
        %517 = vmatprep.subr.bf16.mxu0 0
        %518 = vmatpush1.bf16.msra.mxu0 0
        %519 = vmatprep.subr.bf16.mxu0 0
        %520 = vmatpush1.bf16.msra.mxu0 0
        %521 = vmatprep.subr.bf16.mxu0 0
        %522 = vmatpush1.bf16.msra.mxu0 0
        %523 = vmatprep.subr.bf16.mxu0 0
        %524 = vmatpush1.bf16.msra.mxu0 0
        %525 = vmatprep.subr.bf16.mxu0 0
        %526 = vmatpush1.bf16.msra.mxu0 0
        %527 = vmatprep.subr.bf16.mxu0 0
        %528 = vmatpush1.bf16.msra.mxu0 0
        %529 = vmatprep.subr.bf16.mxu0 0
        %530 = vmatpush1.bf16.msra.mxu0 0
        %531 = vmatprep.mubr.bf16.mxu0 0
        %532 = vmatmul.mubr.bf16.gmra.mrb[0].mxu0 %v447
        %v533 = vpop.f32.mrb[0].mxu0
        %v534 = vadd.f32 0.0, %v533
        %v535 = vpop.f32.mrb[0].mxu0
        %v536 = vpop.f32.mrb[0].mxu0
        %v537 = vadd.f32 0.0, %v536
        %v538 = vpop.f32.mrb[0].mxu0
        %539 = vmatprep.mubr.bf16.mxu0 0
        %540 = vmatmul.mubr.bf16.gmra.mrb[0].mxu0 %v448
        %v541 = vpop.f32.mrb[0].mxu0
        %v542 = vadd.f32 0.0, %v541
        %v543 = vpop.f32.mrb[0].mxu0
        %v544 = vpop.f32.mrb[0].mxu0
        %v545 = vadd.f32 0.0, %v544
        %v546 = vpop.f32.mrb[0].mxu0
        %547 = vdwg.mxu0
        %v548 = vadd.f32 %v415, %v534
        %v549 = vadd.f32 %v416, %v537
        %v550 = vadd.f32 %v417, %v542
        %v551 = vadd.f32 %v418, %v545
        %552 = vst [vmem:[#allocation2] sm:$0xff] %v548
        %553 = vst [vmem:[#allocation2 + $0x8] sm:$0xff] %v549
        %554 = vst [vmem:[#allocation2 + $0x10] sm:$0xff] %v550
        %555 = vst [vmem:[#allocation2 + $0x18] sm:$0xff] %v551
        %p556 = scmp.eq.s32.totalorder %s23, 8
        // Predicated region
        $region86: #{style_extractor_forward.20} parent=76 // pred_check
          %p557 = pneg %p556
        $region87: #{style_extractor_forward.20} parent=76 // pred_check_branch
          %559 = sbr.rel (%p557) target = $region89
        $region88: #{style_extractor_forward.20} parent=76 // pred_region
          %v560 = vld [vmem:[#allocation2] sm:$0xff]
          %v561 = vld [vmem:[#allocation2 + $0x8] sm:$0xff]
          %v562 = vld [vmem:[#allocation2 + $0x10] sm:$0xff]
          %v563 = vld [vmem:[#allocation2 + $0x18] sm:$0xff]
          %v564 = vld [vmem:[%s384] sm:$0x1]
          %v566 = vlaneseq
          %v567 = vshrl.u32 %v566, 7
          %v568 = vsub.s32 0, %v567
          %v569 = vrot.slane %v564, %v568
          %v571 = vmul.f32 %v560, %v569
          %v572 = vmul.f32 %v561, %v569
          %v573 = vmul.f32 %v562, %v569
          %v574 = vmul.f32 %v563, %v569
          %v575 = vld [vmem:[%s387] sm:$0x1]
          %v577 = vlaneseq
          %v578 = vshrl.u32 %v577, 7
          %v579 = vsub.s32 0, %v578
          %v580 = vrot.slane %v575, %v579
          %v582 = vadd.f32 %v571, %v580
          %v583 = vadd.f32 %v572, %v580
          %v584 = vadd.f32 %v573, %v580
          %v585 = vadd.f32 %v574, %v580
          %v586 = vld [vmem:[%s395] sm:$0xff]
          %v587 = vld [vmem:[%s395 + $0x8] sm:$0xff]
          %v588 = vld [vmem:[%s395 + $0x10] sm:$0xff]
          %v589 = vld [vmem:[%s395 + $0x18] sm:$0xff]
          %v590 = vadd.f32 %v582, %v586
          %v591 = vadd.f32 %v583, %v587
          %v592 = vadd.f32 %v584, %v588
          %v593 = vadd.f32 %v585, %v589
          %v594 = vmax.f32 %v590, 0.0
          %v595 = vmax.f32 %v591, 0.0
          %v596 = vmax.f32 %v592, 0.0
          %v597 = vmax.f32 %v593, 0.0
          %598 = vst [vmem:[%s404] sm:$0xff] %v594
          %599 = vst [vmem:[%s404 + $0x8] sm:$0xff] %v595
          %600 = vst [vmem:[%s404 + $0x10] sm:$0xff] %v596
          %601 = vst [vmem:[%s404 + $0x18] sm:$0xff] %v597
        $region89: #{style_extractor_forward.20} parent=76 // pred_fallthru
          _
        %s602 = smul.u32 4, %s21
        %p603 = scmp.lt.s32.totalorder %s602, 3
        %s604 = scalar_select %p603, %s602, 3
        %p605 = scmp.lt.s32.totalorder %s22, 0
        %s606 = scalar_select %p605, %s22, 0
        %s607 = sadd.s32 %s606, %s604
        %s608 = smul.addr %s607, 8
        %s609 = scalar_lea.vmem %s5, %s608
        // Predicated region
        $region90: #{style_extractor_forward.20} parent=76 // pred_check
          %p610 = pneg %p191
        $region91: #{style_extractor_forward.20} parent=76 // pred_check_branch
          %612 = sbr.rel (%p610) target = $region93
        $region92: #{style_extractor_forward.20} parent=76 // pred_region
          %s613 = smul.u32 4, %s21
        $region93: #{style_extractor_forward.20} parent=76 // pred_fallthru
          _
        // Predicated region
        $region94: #{style_extractor_forward.20} parent=76 // pred_check
          %p614 = pneg %p191
        $region95: #{style_extractor_forward.20} parent=76 // pred_check_branch
          %616 = sbr.rel (%p614) target = $region97
        $region96: #{style_extractor_forward.20} parent=76 // pred_region
          %s617 = smul.u32 4, %s21
          %p618 = scmp.lt.s32.totalorder %s617, 3
          %s619 = scalar_select %p618, %s617, 3
          %p620 = scmp.lt.s32.totalorder %s22, 0
          %s621 = scalar_select %p620, %s22, 0
          %s622 = sadd.s32 %s621, %s619
          %s623 = smul.addr %s622, 8
          %s624 = scalar_lea.vmem %s5, %s623
        $region97: #{style_extractor_forward.20} parent=76 // pred_fallthru
          _
      $region77: #{style_extractor_forward.20} parent=5 // pred_fallthru
        _
      %p625 = scmp.le.s32.totalorder 2, %s11
      // Predicated region
      $region98: #{style_extractor_forward.20} parent=5 // pred_check
        %p626 = pneg %p625
      $region99: #{style_extractor_forward.20} parent=5 // pred_check_branch
        %628 = sbr.rel (%p626) target = $region101
      $region100: #{style_extractor_forward.20} parent=5 // pred_region
        %s629 = ssub.s32 %s11, 2
      $region101: #{style_extractor_forward.20} parent=5 // pred_fallthru
        _
    $region6: #{style_extractor_forward.20} parent=1 // loop_footer
      %s15 = sadd.s32 1, %s11
    $region7: #{style_extractor_forward.20} parent=1 // loop_footer_branch
      %10 = sbr.rel target = $region3
    $region8: #{style_extractor_forward.20} parent=1 // loop_exit
      _

// kernel: style_extractor_forward.23
$region0: #{style_extractor_forward.23}
  #allocation0 [shape = 'u32[]', space=smem, size = 0x4, offset = 0x4, fixed_abs, tag = 'smem constant byte address 0x4 - core index']
  #allocation1 [shape = 'u32[144,128]{1,0:T(1,128)}', space=vmem, size = 0x12000, scoped, tag = 'internal scratch']
  %s0 = inlined_call_operand.vmem [shape: f32[2,16,128], index: 0, kind: input, shape index: {}]
  %s1 = inlined_call_operand.hbm [shape: f32[2,128,128], index: 1, kind: output, shape index: {}]
  %s2 = sld [smem:[#allocation0]]
  $region37: #{style_extractor_forward.23} parent=0
    _
  %s4 = ssub.s32 1, %s2
  %s5 = scalar_select 0, %s4, %s2
  $region1: #{style_extractor_forward.23} parent=0
    #allocation2 [shape = 'u8[131072]{0}', space=vmem, size = 0x20000, scoped, tag = 'output window, operand 0']
    #allocation3 [shape = 's32[2]{0}', space=sflag, size = 0x8, scoped, tag = 'scoped memory for style_extractor_forward.23']
    %6 = vsyncpa [#allocation3], 0
    %s7 = scalar_lea.sflag [#allocation3], 1
    %8 = vsyncpa %s7, 0
    loop: start=0, step=1, limit=4
    $region2: #{style_extractor_forward.23} parent=1 // loop_pre_header
      _
    $region3: #{style_extractor_forward.23} parent=1 // loop_header
      %s10 = sphi 0, %s14
      %p11 = scmp.ge.s32.totalorder %s10, 4
      %s20 = sphi 0, %s22
      %s23 = sphi 0, %s20
      %s24 = sphi 0, %s23
      %s40 = sphi 0, %s24
      %s46 = sphi 0, %s48
      %s49 = sphi 0, %s46
      %s50 = sphi 0, %s49
      %s66 = sphi 0, %s50
    $region4: #{style_extractor_forward.23} parent=1 // loop_header_branch
      %13 = sbr.rel (%p11) target = $region8
    $region5: #{style_extractor_forward.23} parent=1 // loop_body
      %s15 = ssub.s32 %s10, 1
      %s16 = ssub.s32 %s10, 2
      %s17 = sadd.s32 %s10, 1
      %s18 = ssub.s32 %s10, %s17
      %p19 = scmp.eq.s32.totalorder %s18, 0
      %s21 = sadd.s32 %s20, 1
      %s22 = scalar_select %p19, %s20, %s21
      %p25 = pneg %p19
      %p26 = scmp.eq.s32.totalorder %s10, 1
      %p27 = por %p25, %p26
      %p28 = scmp.ne.s32.totalorder %s20, %s23
      %p29 = scmp.eq.s32.totalorder %s10, 0
      %p30 = por %p28, %p29
      %p31 = scmp.ne.s32.totalorder %s20, %s23
      %p32 = scmp.eq.s32.totalorder %s15, 1
      %p33 = por %p31, %p32
      %p34 = scmp.ne.s32.totalorder %s23, %s24
      %p35 = scmp.eq.s32.totalorder %s15, 0
      %p36 = por %p34, %p35
      %p37 = scmp.ne.s32.totalorder %s23, %s24
      %p38 = scmp.eq.s32.totalorder %s16, 1
      %p39 = por %p37, %p38
      %p41 = scmp.ne.s32.totalorder %s24, %s40
      %p42 = scmp.eq.s32.totalorder %s16, 0
      %p43 = por %p41, %p42
      %s44 = ssub.s32 %s10, %s17
      %p45 = scmp.eq.s32.totalorder %s44, 0
      %s47 = sadd.s32 %s46, 1
      %s48 = scalar_select %p45, %s46, %s47
      %p51 = pneg %p45
      %p52 = scmp.eq.s32.totalorder %s10, 1
      %p53 = por %p51, %p52
      %p54 = scmp.ne.s32.totalorder %s46, %s49
      %p55 = scmp.eq.s32.totalorder %s10, 0
      %p56 = por %p54, %p55
      %p57 = scmp.ne.s32.totalorder %s46, %s49
      %p58 = scmp.eq.s32.totalorder %s15, 1
      %p59 = por %p57, %p58
      %p60 = scmp.ne.s32.totalorder %s49, %s50
      %p61 = scmp.eq.s32.totalorder %s15, 0
      %p62 = por %p60, %p61
      %p63 = scmp.ne.s32.totalorder %s49, %s50
      %p64 = scmp.eq.s32.totalorder %s16, 1
      %p65 = por %p63, %p64
      %p67 = scmp.ne.s32.totalorder %s50, %s66
      %p68 = scmp.eq.s32.totalorder %s16, 0
      %p69 = por %p67, %p68
      %p70 = scmp.le.s32.totalorder 1, %s10
      %p71 = scmp.lt.s32.totalorder %s10, 3
      %p72 = pnand %p70, %p71
      %p73 = pneg %p72
      // Predicated region
      $region9: #{style_extractor_forward.23} parent=5 // pred_check
        _
      $region10: #{style_extractor_forward.23} parent=5 // pred_check_branch
        %75 = sbr.rel (%p72) target = $region12
      $region11: #{style_extractor_forward.23} parent=5 // pred_region
        %s76 = ssub.s32 %s10, 1
      $region12: #{style_extractor_forward.23} parent=5 // pred_fallthru
        _
      %p77 = scmp.lt.s32.totalorder %s10, 2
      // Predicated region
      $region13: #{style_extractor_forward.23} parent=5 // pred_check
        %p78 = pneg %p77
      $region14: #{style_extractor_forward.23} parent=5 // pred_check_branch
        %80 = sbr.rel (%p78) target = $region16
      $region15: #{style_extractor_forward.23} parent=5 // pred_region
        // Predicated region
        $region17: #{style_extractor_forward.23} parent=15 // pred_check
          %p81 = pneg %p30
        $region18: #{style_extractor_forward.23} parent=15 // pred_check_branch
          %83 = sbr.rel (%p81) target = $region20
        $region19: #{style_extractor_forward.23} parent=15 // pred_region
          %p84 = scmp.lt.s32.totalorder %s10, 1
          %s85 = scalar_select %p84, %s10, 1
          %s86 = smul.addr %s85, 2
          %s87 = smul.addr %s86, 8
          %s88 = scalar_lea.vmem %s0, %s87
        $region20: #{style_extractor_forward.23} parent=15 // pred_fallthru
          _
      $region16: #{style_extractor_forward.23} parent=5 // pred_fallthru
        _
      %p89 = scmp.le.s32.totalorder 1, %s10
      %p90 = scmp.lt.s32.totalorder %s10, 3
      %p91 = pnand %p89, %p90
      %p92 = pneg %p91
      // Predicated region
      $region21: #{style_extractor_forward.23} parent=5 // pred_check
        _
      $region22: #{style_extractor_forward.23} parent=5 // pred_check_branch
        %94 = sbr.rel (%p91) target = $region24
      $region23: #{style_extractor_forward.23} parent=5 // pred_region
        %s95 = ssub.s32 %s10, 1
        %p96 = scmp.lt.s32.totalorder %s15, 1
        %s97 = scalar_select %p96, %s15, 1
        %s98 = smul.addr %s97, 2
        %s99 = smul.addr %s98, 8
        %s100 = scalar_lea.vmem %s0, %s99
        %p101 = pneg %p36
        %p102 = pneg %p33
        %p103 = pneg %p62
        %p104 = pneg %p59
        %s105 = sand.u32 %s49, 1
        %s106 = scalar_lea.sflag [#allocation3], %s105
        %s107 = sand.u32 %s49, 1
        %s108 = smul.addr %s107, 128
        %s109 = scalar_lea.vmem [#allocation2], %s108
        %p110 = scmp.lt.s32.totalorder %s15, 1
        %s111 = scalar_select %p110, %s15, 1
        %s112 = smul.addr %s111, 2
        %s113 = smul.addr %s112, 8
        %s114 = scalar_lea.vmem %s0, %s113
        %v115 = vld [vmem:[%s114] sm:$0xff]
        %v116 = vld [vmem:[%s114 + $0x8] sm:$0xff]
        %v117 = vadd.f32 %v115, %v116
        %v118 = vrot.slane %v117, 4
        %v119 = vadd.f32 %v117, %v118
        %v120 = vrot.slane %v119, 2
        %v121 = vadd.f32 %v119, %v120
        %v122 = vrot.slane %v121, 1
        %v123 = vadd.f32 %v121, %v122
        %v124 = vrcp.pop 16.0
        %v125 = vmul.f32 %v123, %v124
        %v126 = vsub.f32 %v115, %v125
        %v127 = vsub.f32 %v116, %v125
        %v128 = vmul.f32 %v126, %v126
        %v129 = vmul.f32 %v127, %v127
        %v130 = vadd.f32 %v128, %v129
        %v131 = vrot.slane %v130, 4
        %v132 = vadd.f32 %v130, %v131
        %v133 = vrot.slane %v132, 2
        %v134 = vadd.f32 %v132, %v133
        %v135 = vrot.slane %v134, 1
        %v136 = vadd.f32 %v134, %v135
        %v137 = vmul.f32 %v136, 0.06666667
        %v138 = vrsqrt.pop %v137
        %v139 = vmul.f32 %v137, %v138
        %vm140 = vcmp.eq.f32.partialorder %v137, inf
        %v141 = vsel %vm140, %v137, %v139
        %vm142 = vcmp.eq.f32.partialorder %v137, 0.0
        %v143 = vand.u32 %v137, 2147483648
        %v144 = vsel %vm142, %v143, %v141
        %v145 = vadd.f32 %v144, 0.01
        %v146 = vrcp.pop %v145
        %v147 = vmul.f32 %v126, %v146
        %v148 = vmul.f32 %v127, %v146
        %149 = vxpose.xlu0.b32.start [1/16] %v147, 128
        %150 = vxpose.xlu0.b32.cont [2/16] %v148, 128
        %151 = vxpose.xlu0.b32.cont [3/16] 0.0, 128
        %152 = vxpose.xlu0.b32.cont [4/16] 0.0, 128
        %153 = vxpose.xlu0.b32.cont [5/16] 0.0, 128
        %154 = vxpose.xlu0.b32.cont [6/16] 0.0, 128
        %155 = vxpose.xlu0.b32.cont [7/16] 0.0, 128
        %156 = vxpose.xlu0.b32.cont [8/16] 0.0, 128
        %157 = vxpose.xlu0.b32.cont [9/16] 0.0, 128
        %158 = vxpose.xlu0.b32.cont [10/16] 0.0, 128
        %159 = vxpose.xlu0.b32.cont [11/16] 0.0, 128
        %160 = vxpose.xlu0.b32.cont [12/16] 0.0, 128
        %161 = vxpose.xlu0.b32.cont [13/16] 0.0, 128
        %162 = vxpose.xlu0.b32.cont [14/16] 0.0, 128
        %163 = vxpose.xlu0.b32.cont [15/16] 0.0, 128
        %164 = vxpose.xlu0.b32.end [16/16] 0.0, 128
        %v165 = vpop.trf.xlu0
        %v166 = vpop.trf.xlu0
        %v167 = vpop.trf.xlu0
        %v168 = vpop.trf.xlu0
        %v169 = vpop.trf.xlu0
        %v170 = vpop.trf.xlu0
        %v171 = vpop.trf.xlu0
        %v172 = vpop.trf.xlu0
        %v173 = vpop.trf.xlu0
        %v174 = vpop.trf.xlu0
        %v175 = vpop.trf.xlu0
        %v176 = vpop.trf.xlu0
        %v177 = vpop.trf.xlu0
        %v178 = vpop.trf.xlu0
        %v179 = vpop.trf.xlu0
        %v180 = vpop.trf.xlu0
        %vm181 = vcmask 130048
        %v183 = vsel %vm181, %v165, 0
        %v186 = vsel %vm181, %v166, 0
        %v189 = vsel %vm181, %v167, 0
        %v192 = vsel %vm181, %v168, 0
        %v195 = vsel %vm181, %v169, 0
        %v198 = vsel %vm181, %v170, 0
        %v201 = vsel %vm181, %v171, 0
        %v204 = vsel %vm181, %v172, 0
        %v207 = vsel %vm181, %v173, 0
        %v210 = vsel %vm181, %v174, 0
        %v213 = vsel %vm181, %v175, 0
        %v216 = vsel %vm181, %v176, 0
        %v219 = vsel %vm181, %v177, 0
        %v222 = vsel %vm181, %v178, 0
        %v225 = vsel %vm181, %v179, 0
        %v228 = vsel %vm181, %v180, 0
        %230 = vmatprep.subr.mxu0 0.0
        %231 = vmatpush1.msra.mxu0 %v147
        %232 = vmatprep.subr.mxu0 0.0
        %233 = vmatpush1.msra.mxu0 %v148
        %234 = vmatprep.subr.mxu0 0.0
        %235 = vmatpush1.msra.mxu0 0.0
        %236 = vmatprep.subr.mxu0 0.0
        %237 = vmatpush1.msra.mxu0 0.0
        %238 = vmatprep.subr.mxu0 0.0
        %239 = vmatpush1.msra.mxu0 0.0
        %240 = vmatprep.subr.mxu0 0.0
        %241 = vmatpush1.msra.mxu0 0.0
        %242 = vmatprep.subr.mxu0 0.0
        %243 = vmatpush1.msra.mxu0 0.0
        %244 = vmatprep.subr.mxu0 0.0
        %245 = vmatpush1.msra.mxu0 0.0
        %246 = vmatprep.subr.mxu0 0.0
        %247 = vmatpush1.msra.mxu0 0.0
        %248 = vmatprep.subr.mxu0 0.0
        %249 = vmatpush1.msra.mxu0 0.0
        %250 = vmatprep.subr.mxu0 0.0
        %251 = vmatpush1.msra.mxu0 0.0
        %252 = vmatprep.subr.mxu0 0.0
        %253 = vmatpush1.msra.mxu0 0.0
        %254 = vmatprep.subr.mxu0 0.0
        %255 = vmatpush1.msra.mxu0 0.0
        %256 = vmatprep.subr.mxu0 0.0
        %257 = vmatpush1.msra.mxu0 0.0
        %258 = vmatprep.subr.mxu0 0.0
        %259 = vmatpush1.msra.mxu0 0.0
        %260 = vmatprep.subr.mxu0 0.0
        %261 = vmatpush1.msra.mxu0 0.0
        %262 = vmatprep.subr.mxu0 0.0
        %263 = vmatpush1.msra.mxu0 0.0
        %264 = vmatprep.subr.mxu0 0.0
        %265 = vmatpush1.msra.mxu0 0.0
        %266 = vmatprep.subr.mxu0 0.0
        %267 = vmatpush1.msra.mxu0 0.0
        %268 = vmatprep.subr.mxu0 0.0
        %269 = vmatpush1.msra.mxu0 0.0
        %270 = vmatprep.subr.mxu0 0.0
        %271 = vmatpush1.msra.mxu0 0.0
        %272 = vmatprep.subr.mxu0 0.0
        %273 = vmatpush1.msra.mxu0 0.0
        %274 = vmatprep.subr.mxu0 0.0
        %275 = vmatpush1.msra.mxu0 0.0
        %276 = vmatprep.subr.mxu0 0.0
        %277 = vmatpush1.msra.mxu0 0.0
        %278 = vmatprep.subr.mxu0 0.0
        %279 = vmatpush1.msra.mxu0 0.0
        %280 = vmatprep.subr.mxu0 0.0
        %281 = vmatpush1.msra.mxu0 0.0
        %282 = vmatprep.subr.mxu0 0.0
        %283 = vmatpush1.msra.mxu0 0.0
        %284 = vmatprep.subr.mxu0 0.0
        %285 = vmatpush1.msra.mxu0 0.0
        %286 = vmatprep.subr.mxu0 0.0
        %287 = vmatpush1.msra.mxu0 0.0
        %288 = vmatprep.subr.mxu0 0.0
        %289 = vmatpush1.msra.mxu0 0.0
        %290 = vmatprep.subr.mxu0 0.0
        %291 = vmatpush1.msra.mxu0 0.0
        %292 = vmatprep.subr.mxu0 0.0
        %293 = vmatpush1.msra.mxu0 0.0
        %294 = vmatprep.mubr.f32.mxu0 0.0
        %295 = vmatmul.mubr.f32.gmra.mrb[0].mxu0 %v183
        %v296 = vpop.f32.mrb[0].mxu0
        %v297 = vadd.f32 0.0, %v296
        %v298 = vpop.f32.mrb[0].mxu0
        %299 = vmatprep.mubr.f32.mxu0 0.0
        %300 = vmatmul.mubr.f32.gmra.mrb[0].mxu0 %v186
        %v301 = vpop.f32.mrb[0].mxu0
        %v302 = vadd.f32 0.0, %v301
        %v303 = vpop.f32.mrb[0].mxu0
        %304 = vmatprep.mubr.f32.mxu0 0.0
        %305 = vmatmul.mubr.f32.gmra.mrb[0].mxu0 %v189
        %v306 = vpop.f32.mrb[0].mxu0
        %v307 = vadd.f32 0.0, %v306
        %v308 = vpop.f32.mrb[0].mxu0
        %309 = vmatprep.mubr.f32.mxu0 0.0
        %310 = vmatmul.mubr.f32.gmra.mrb[0].mxu0 %v192
        %v311 = vpop.f32.mrb[0].mxu0
        %v312 = vadd.f32 0.0, %v311
        %v313 = vpop.f32.mrb[0].mxu0
        %314 = vmatprep.mubr.f32.mxu0 0.0
        %315 = vmatmul.mubr.f32.gmra.mrb[0].mxu0 %v195
        %v316 = vpop.f32.mrb[0].mxu0
        %v317 = vadd.f32 0.0, %v316
        %v318 = vpop.f32.mrb[0].mxu0
        %319 = vmatprep.mubr.f32.mxu0 0.0
        %320 = vmatmul.mubr.f32.gmra.mrb[0].mxu0 %v198
        %v321 = vpop.f32.mrb[0].mxu0
        %v322 = vadd.f32 0.0, %v321
        %v323 = vpop.f32.mrb[0].mxu0
        %324 = vmatprep.mubr.f32.mxu0 0.0
        %325 = vmatmul.mubr.f32.gmra.mrb[0].mxu0 %v201
        %v326 = vpop.f32.mrb[0].mxu0
        %v327 = vadd.f32 0.0, %v326
        %v328 = vpop.f32.mrb[0].mxu0
        %329 = vmatprep.mubr.f32.mxu0 0.0
        %330 = vmatmul.mubr.f32.gmra.mrb[0].mxu0 %v204
        %v331 = vpop.f32.mrb[0].mxu0
        %v332 = vadd.f32 0.0, %v331
        %v333 = vpop.f32.mrb[0].mxu0
        %334 = vmatprep.mubr.f32.mxu0 0.0
        %335 = vmatmul.mubr.f32.gmra.mrb[0].mxu0 %v207
        %v336 = vpop.f32.mrb[0].mxu0
        %v337 = vadd.f32 0.0, %v336
        %v338 = vpop.f32.mrb[0].mxu0
        %339 = vmatprep.mubr.f32.mxu0 0.0
        %340 = vmatmul.mubr.f32.gmra.mrb[0].mxu0 %v210
        %v341 = vpop.f32.mrb[0].mxu0
        %v342 = vadd.f32 0.0, %v341
        %v343 = vpop.f32.mrb[0].mxu0
        %344 = vmatprep.mubr.f32.mxu0 0.0
        %345 = vmatmul.mubr.f32.gmra.mrb[0].mxu0 %v213
        %v346 = vpop.f32.mrb[0].mxu0
        %v347 = vadd.f32 0.0, %v346
        %v348 = vpop.f32.mrb[0].mxu0
        %349 = vmatprep.mubr.f32.mxu0 0.0
        %350 = vmatmul.mubr.f32.gmra.mrb[0].mxu0 %v216
        %v351 = vpop.f32.mrb[0].mxu0
        %v352 = vadd.f32 0.0, %v351
        %v353 = vpop.f32.mrb[0].mxu0
        %354 = vmatprep.mubr.f32.mxu0 0.0
        %355 = vmatmul.mubr.f32.gmra.mrb[0].mxu0 %v219
        %v356 = vpop.f32.mrb[0].mxu0
        %v357 = vadd.f32 0.0, %v356
        %v358 = vpop.f32.mrb[0].mxu0
        %359 = vmatprep.mubr.f32.mxu0 0.0
        %360 = vmatmul.mubr.f32.gmra.mrb[0].mxu0 %v222
        %v361 = vpop.f32.mrb[0].mxu0
        %v362 = vadd.f32 0.0, %v361
        %v363 = vpop.f32.mrb[0].mxu0
        %364 = vmatprep.mubr.f32.mxu0 0.0
        %365 = vmatmul.mubr.f32.gmra.mrb[0].mxu0 %v225
        %v366 = vpop.f32.mrb[0].mxu0
        %v367 = vadd.f32 0.0, %v366
        %v368 = vpop.f32.mrb[0].mxu0
        %369 = vmatprep.mubr.f32.mxu0 0.0
        %370 = vmatmul.mubr.f32.gmra.mrb[0].mxu0 %v228
        %v371 = vpop.f32.mrb[0].mxu0
        %v372 = vadd.f32 0.0, %v371
        %v373 = vpop.f32.mrb[0].mxu0
        %374 = vdwg.mxu0
        %v375 = vmul.f32 %v297, 0.0625
        %v376 = vmul.f32 %v302, 0.0625
        %v377 = vmul.f32 %v307, 0.0625
        %v378 = vmul.f32 %v312, 0.0625
        %v379 = vmul.f32 %v317, 0.0625
        %v380 = vmul.f32 %v322, 0.0625
        %v381 = vmul.f32 %v327, 0.0625
        %v382 = vmul.f32 %v332, 0.0625
        %v383 = vmul.f32 %v337, 0.0625
        %v384 = vmul.f32 %v342, 0.0625
        %v385 = vmul.f32 %v347, 0.0625
        %v386 = vmul.f32 %v352, 0.0625
        %v387 = vmul.f32 %v357, 0.0625
        %v388 = vmul.f32 %v362, 0.0625
        %v389 = vmul.f32 %v367, 0.0625
        %v390 = vmul.f32 %v372, 0.0625
        %391 = vst [vmem:[%s109] sm:$0xff] %v375
        %392 = vst [vmem:[%s109 + $0x8] sm:$0xff] %v376
        %393 = vst [vmem:[%s109 + $0x10] sm:$0xff] %v377
        %394 = vst [vmem:[%s109 + $0x18] sm:$0xff] %v378
        %395 = vst [vmem:[%s109 + $0x20] sm:$0xff] %v379
        %396 = vst [vmem:[%s109 + $0x28] sm:$0xff] %v380
        %397 = vst [vmem:[%s109 + $0x30] sm:$0xff] %v381
        %398 = vst [vmem:[%s109 + $0x38] sm:$0xff] %v382
        %399 = vst [vmem:[%s109 + $0x40] sm:$0xff] %v383
        %400 = vst [vmem:[%s109 + $0x48] sm:$0xff] %v384
        %401 = vst [vmem:[%s109 + $0x50] sm:$0xff] %v385
        %402 = vst [vmem:[%s109 + $0x58] sm:$0xff] %v386
        %403 = vst [vmem:[%s109 + $0x60] sm:$0xff] %v387
        %404 = vst [vmem:[%s109 + $0x68] sm:$0xff] %v388
        %405 = vst [vmem:[%s109 + $0x70] sm:$0xff] %v389
        %406 = vst [vmem:[%s109 + $0x78] sm:$0xff] %v390
        %s407 = sand.u32 %s49, 1
        %s408 = scalar_lea.sflag [#allocation3], %s407
        %s409 = sand.u32 %s49, 1
        %s410 = smul.addr %s409, 128
        %s411 = scalar_lea.vmem [#allocation2], %s410
        // Predicated region
        $region25: #{style_extractor_forward.23} parent=23 // pred_check
          %p412 = pneg %p59
        $region26: #{style_extractor_forward.23} parent=23 // pred_check_branch
          %414 = sbr.rel (%p412) target = $region28
        $region27: #{style_extractor_forward.23} parent=23 // pred_region
          %s416 = ssub.s32 2048, 2048
          %417 = vsyncadd %s408, %s416
          %s418 = smul.addr %s15, 16
          %s419 = smul.addr %s418, 128
          %s420 = scalar_lea.hbm %s1, %s419
          %s421 = sshll.u32 %s411, 4
          %s422 = int_to_ptr.vmem [resolvable:$true] %s421
          %427 = dma.vmem_to_hbm [thread:$0]  %s422, 2048, %s420, %s408, 128, 128, 8
        $region28: #{style_extractor_forward.23} parent=23 // pred_fallthru
          _
      $region24: #{style_extractor_forward.23} parent=5 // pred_fallthru
        _
      %p428 = scmp.le.s32.totalorder 2, %s10
      // Predicated region
      $region29: #{style_extractor_forward.23} parent=5 // pred_check
        %p429 = pneg %p428
      $region30: #{style_extractor_forward.23} parent=5 // pred_check_branch
        %431 = sbr.rel (%p429) target = $region32
      $region31: #{style_extractor_forward.23} parent=5 // pred_region
        %s432 = ssub.s32 %s10, 2
        // Predicated region
        $region33: #{style_extractor_forward.23} parent=31 // pred_check
          %p433 = pneg %p65
        $region34: #{style_extractor_forward.23} parent=31 // pred_check_branch
          %435 = sbr.rel (%p433) target = $region36
        $region35: #{style_extractor_forward.23} parent=31 // pred_region
          %s436 = sand.u32 %s50, 1
          %s437 = scalar_lea.sflag [#allocation3], %s436
          %s438 = sand.u32 %s50, 1
          %s439 = smul.addr %s438, 128
          %s440 = scalar_lea.vmem [#allocation2], %s439
          %441 = dma.done %s437, 2048
        $region36: #{style_extractor_forward.23} parent=31 // pred_fallthru
          _
      $region32: #{style_extractor_forward.23} parent=5 // pred_fallthru
        _
    $region6: #{style_extractor_forward.23} parent=1 // loop_footer
      %s14 = sadd.s32 1, %s10
    $region7: #{style_extractor_forward.23} parent=1 // loop_footer_branch
      %9 = sbr.rel target = $region3
    $region8: #{style_extractor_forward.23} parent=1 // loop_exit
      _
    %442 = vsyncpa [#allocation3], 1
    %s443 = scalar_lea.sflag [#allocation3], 1
    %444 = vsyncpa %s443, 1

// kernel: style_extractor_forward.21
$region0: #{style_extractor_forward.21}
  #allocation0 [shape = 'u32[]', space=smem, size = 0x4, offset = 0x4, fixed_abs, tag = 'smem constant byte address 0x4 - core index']
  #allocation1 [shape = 'u32[144,128]{1,0:T(1,128)}', space=vmem, size = 0x12000, scoped, tag = 'internal scratch']
  #allocation2 [shape = 'f32[32,128]{1,0:T(8,128)}', space=vmem, size = 0x4000, scoped, tag = 'scratch operand']
  %s0 = inlined_call_operand.vmem [shape: bf16[32,1152], index: 0, kind: input, shape index: {}]
  %s1 = inlined_call_operand.vmem [shape: bf16[1152,128], index: 1, kind: input, shape index: {}]
  %s2 = inlined_call_operand.vmem [shape: f32[1,128], index: 2, kind: input, shape index: {}]
  %s3 = inlined_call_operand.vmem [shape: f32[1,128], index: 3, kind: input, shape index: {}]
  %s4 = inlined_call_operand.vmem [shape: f32[32,128], index: 4, kind: output, shape index: {}]
  %s5 = sld [smem:[#allocation0]]
  $region98: #{style_extractor_forward.21} parent=0
    _
  %s7 = ssub.s32 1, %s5
  %s8 = scalar_select 0, %s7, %s5
  $region1: #{style_extractor_forward.21} parent=0
    #allocation3 [shape = 'u8[16384]{0}', space=vmem, size = 0x4000, scoped, tag = 'input window, operand 0']
    loop: start=0, step=1, limit=11
    $region2: #{style_extractor_forward.21} parent=1 // loop_pre_header
      _
    $region3: #{style_extractor_forward.21} parent=1 // loop_header
      %s10 = sphi 0, %s14
      %p11 = scmp.ge.s32.totalorder %s10, 11
      %s17 = sphi 0, %s36
      %s18 = sphi 0, %s32
      %s19 = sphi 0, %s28
      %s20 = sphi 0, %s17
      %s21 = sphi 0, %s18
      %s22 = sphi 0, %s19
      %s23 = sphi 0, %s20
      %s24 = sphi 0, %s21
      %s25 = sphi 0, %s22
      %s41 = sphi 0, %s43
      %s44 = sphi 0, %s41
      %s45 = sphi 0, %s44
      %s61 = sphi 0, %s45
      %s69 = sphi 0, %s71
      %s72 = sphi 0, %s69
      %s73 = sphi 0, %s72
      %s89 = sphi 0, %s73
      %s95 = sphi 0, %s97
      %s98 = sphi 0, %s95
      %s99 = sphi 0, %s98
      %s115 = sphi 0, %s99
      %s121 = sphi 0, %s123
      %s124 = sphi 0, %s121
      %s125 = sphi 0, %s124
      %s141 = sphi 0, %s125
      %s149 = sphi 0, %s151
      %s152 = sphi 0, %s149
      %s153 = sphi 0, %s152
      %s169 = sphi 0, %s153
    $region4: #{style_extractor_forward.21} parent=1 // loop_header_branch
      %13 = sbr.rel (%p11) target = $region8
    $region5: #{style_extractor_forward.21} parent=1 // loop_body
      %s15 = ssub.s32 %s10, 1
      %s16 = ssub.s32 %s10, 2
      %s26 = sadd.s32 1, %s19
      %p27 = scmp.ge.s32.totalorder %s26, 9
      %s28 = scalar_select %p27, 0, %s26
      %s29 = sadd.s32 1, %s18
      %s30 = scalar_select %p27, %s29, %s18
      %p31 = scmp.ge.s32.totalorder %s30, 1
      %s32 = scalar_select %p31, 0, %s30
      %s33 = sadd.s32 1, %s17
      %s34 = scalar_select %p31, %s33, %s17
      %p35 = scmp.ge.s32.totalorder %s34, 1
      %s36 = scalar_select %p35, 0, %s34
      %s37 = ssub.s32 %s17, %s36
      %s38 = ssub.s32 %s19, %s28
      %s39 = sor.u32 %s37, %s38
      %p40 = scmp.eq.s32.totalorder %s39, 0
      %s42 = sadd.s32 %s41, 1
      %s43 = scalar_select %p40, %s41, %s42
      %p46 = pneg %p40
      %p47 = scmp.eq.s32.totalorder %s10, 8
      %p48 = por %p46, %p47
      %p49 = scmp.ne.s32.totalorder %s41, %s44
      %p50 = scmp.eq.s32.totalorder %s10, 0
      %p51 = por %p49, %p50
      %p52 = scmp.ne.s32.totalorder %s41, %s44
      %p53 = scmp.eq.s32.totalorder %s15, 8
      %p54 = por %p52, %p53
      %p55 = scmp.ne.s32.totalorder %s44, %s45
      %p56 = scmp.eq.s32.totalorder %s15, 0
      %p57 = por %p55, %p56
      %p58 = scmp.ne.s32.totalorder %s44, %s45
      %p59 = scmp.eq.s32.totalorder %s16, 8
      %p60 = por %p58, %p59
      %p62 = scmp.ne.s32.totalorder %s45, %s61
      %p63 = scmp.eq.s32.totalorder %s16, 0
      %p64 = por %p62, %p63
      %s65 = ssub.s32 %s19, %s28
      %s66 = ssub.s32 %s18, %s32
      %s67 = sor.u32 %s65, %s66
      %p68 = scmp.eq.s32.totalorder %s67, 0
      %s70 = sadd.s32 %s69, 1
      %s71 = scalar_select %p68, %s69, %s70
      %p74 = pneg %p68
      %p75 = scmp.eq.s32.totalorder %s10, 8
      %p76 = por %p74, %p75
      %p77 = scmp.ne.s32.totalorder %s69, %s72
      %p78 = scmp.eq.s32.totalorder %s10, 0
      %p79 = por %p77, %p78
      %p80 = scmp.ne.s32.totalorder %s69, %s72
      %p81 = scmp.eq.s32.totalorder %s15, 8
      %p82 = por %p80, %p81
      %p83 = scmp.ne.s32.totalorder %s72, %s73
      %p84 = scmp.eq.s32.totalorder %s15, 0
      %p85 = por %p83, %p84
      %p86 = scmp.ne.s32.totalorder %s72, %s73
      %p87 = scmp.eq.s32.totalorder %s16, 8
      %p88 = por %p86, %p87
      %p90 = scmp.ne.s32.totalorder %s73, %s89
      %p91 = scmp.eq.s32.totalorder %s16, 0
      %p92 = por %p90, %p91
      %s93 = ssub.s32 %s18, %s32
      %p94 = scmp.eq.s32.totalorder %s93, 0
      %s96 = sadd.s32 %s95, 1
      %s97 = scalar_select %p94, %s95, %s96
      %p100 = pneg %p94
      %p101 = scmp.eq.s32.totalorder %s10, 8
      %p102 = por %p100, %p101
      %p103 = scmp.ne.s32.totalorder %s95, %s98
      %p104 = scmp.eq.s32.totalorder %s10, 0
      %p105 = por %p103, %p104
      %p106 = scmp.ne.s32.totalorder %s95, %s98
      %p107 = scmp.eq.s32.totalorder %s15, 8
      %p108 = por %p106, %p107
      %p109 = scmp.ne.s32.totalorder %s98, %s99
      %p110 = scmp.eq.s32.totalorder %s15, 0
      %p111 = por %p109, %p110
      %p112 = scmp.ne.s32.totalorder %s98, %s99
      %p113 = scmp.eq.s32.totalorder %s16, 8
      %p114 = por %p112, %p113
      %p116 = scmp.ne.s32.totalorder %s99, %s115
      %p117 = scmp.eq.s32.totalorder %s16, 0
      %p118 = por %p116, %p117
      %s119 = ssub.s32 %s18, %s32
      %p120 = scmp.eq.s32.totalorder %s119, 0
      %s122 = sadd.s32 %s121, 1
      %s123 = scalar_select %p120, %s121, %s122
      %p126 = pneg %p120
      %p127 = scmp.eq.s32.totalorder %s10, 8
      %p128 = por %p126, %p127
      %p129 = scmp.ne.s32.totalorder %s121, %s124
      %p130 = scmp.eq.s32.totalorder %s10, 0
      %p131 = por %p129, %p130
      %p132 = scmp.ne.s32.totalorder %s121, %s124
      %p133 = scmp.eq.s32.totalorder %s15, 8
      %p134 = por %p132, %p133
      %p135 = scmp.ne.s32.totalorder %s124, %s125
      %p136 = scmp.eq.s32.totalorder %s15, 0
      %p137 = por %p135, %p136
      %p138 = scmp.ne.s32.totalorder %s124, %s125
      %p139 = scmp.eq.s32.totalorder %s16, 8
      %p140 = por %p138, %p139
      %p142 = scmp.ne.s32.totalorder %s125, %s141
      %p143 = scmp.eq.s32.totalorder %s16, 0
      %p144 = por %p142, %p143
      %s145 = ssub.s32 %s17, %s36
      %s146 = ssub.s32 %s18, %s32
      %s147 = sor.u32 %s145, %s146
      %p148 = scmp.eq.s32.totalorder %s147, 0
      %s150 = sadd.s32 %s149, 1
      %s151 = scalar_select %p148, %s149, %s150
      %p154 = pneg %p148
      %p155 = scmp.eq.s32.totalorder %s10, 8
      %p156 = por %p154, %p155
      %p157 = scmp.ne.s32.totalorder %s149, %s152
      %p158 = scmp.eq.s32.totalorder %s10, 0
      %p159 = por %p157, %p158
      %p160 = scmp.ne.s32.totalorder %s149, %s152
      %p161 = scmp.eq.s32.totalorder %s15, 8
      %p162 = por %p160, %p161
      %p163 = scmp.ne.s32.totalorder %s152, %s153
      %p164 = scmp.eq.s32.totalorder %s15, 0
      %p165 = por %p163, %p164
      %p166 = scmp.ne.s32.totalorder %s152, %s153
      %p167 = scmp.eq.s32.totalorder %s16, 8
      %p168 = por %p166, %p167
      %p170 = scmp.ne.s32.totalorder %s153, %s169
      %p171 = scmp.eq.s32.totalorder %s16, 0
      %p172 = por %p170, %p171
      %p173 = scmp.le.s32.totalorder 1, %s10
      %p174 = scmp.lt.s32.totalorder %s10, 10
      %p175 = pnand %p173, %p174
      %p176 = pneg %p175
      // Predicated region
      $region9: #{style_extractor_forward.21} parent=5 // pred_check
        _
      $region10: #{style_extractor_forward.21} parent=5 // pred_check_branch
        %178 = sbr.rel (%p175) target = $region12
      $region11: #{style_extractor_forward.21} parent=5 // pred_region
        %s179 = ssub.s32 %s10, 1
        // Predicated region
        $region13: #{style_extractor_forward.21} parent=11 // pred_check
          %p180 = pneg %p111
        $region14: #{style_extractor_forward.21} parent=11 // pred_check_branch
          %182 = sbr.rel (%p180) target = $region16
        $region15: #{style_extractor_forward.21} parent=11 // pred_region
          %p183 = scmp.lt.s32.totalorder %s21, 0
          %s184 = scalar_select %p183, %s21, 0
          %s185 = scalar_lea.vmem %s2, %s184
        $region16: #{style_extractor_forward.21} parent=11 // pred_fallthru
          _
        // Predicated region
        $region17: #{style_extractor_forward.21} parent=11 // pred_check
          %p186 = pneg %p137
        $region18: #{style_extractor_forward.21} parent=11 // pred_check_branch
          %188 = sbr.rel (%p186) target = $region20
        $region19: #{style_extractor_forward.21} parent=11 // pred_region
          %p189 = scmp.lt.s32.totalorder %s21, 0
          %s190 = scalar_select %p189, %s21, 0
          %s191 = scalar_lea.vmem %s3, %s190
        $region20: #{style_extractor_forward.21} parent=11 // pred_fallthru
          _
      $region12: #{style_extractor_forward.21} parent=5 // pred_fallthru
        _
      %p192 = scmp.lt.s32.totalorder %s10, 9
      // Predicated region
      $region21: #{style_extractor_forward.21} parent=5 // pred_check
        %p193 = pneg %p192
      $region22: #{style_extractor_forward.21} parent=5 // pred_check_branch
        %195 = sbr.rel (%p193) target = $region24
      $region23: #{style_extractor_forward.21} parent=5 // pred_region
        // Predicated region
        $region25: #{style_extractor_forward.21} parent=23 // pred_check
          %p196 = pneg %p51
        $region26: #{style_extractor_forward.21} parent=23 // pred_check_branch
          %198 = sbr.rel (%p196) target = $region28
        $region27: #{style_extractor_forward.21} parent=23 // pred_region
          %s199 = sand.u32 %s41, 1
          %s200 = sand.u32 %s41, 1
          %s201 = smul.addr %s200, 16
          %s202 = scalar_lea.vmem [#allocation3], %s201
          %s203 = smul.u32 4, %s17
          %s204 = smul.addr %s203, 9
          %s205 = sadd.s32 %s19, %s204
          %s206 = smul.addr %s205, 4
          %s207 = scalar_lea.vmem %s0, %s206
          // Predicated region
          $region29: #{style_extractor_forward.21} parent=27 // pred_check
            _
          $region30: #{style_extractor_forward.21} parent=27 // pred_check_branch
            %209 = sbr.rel (0) target = $region32
          $region31: #{style_extractor_forward.21} parent=27 // pred_region
            // Predicated region
            $region33: #{style_extractor_forward.21} parent=31 // pred_check
              _
            $region34: #{style_extractor_forward.21} parent=31 // pred_check_branch
              %211 = sbr.rel target = $region36
            $region35: #{style_extractor_forward.21} parent=31 // pred_region
              // Predicated region
              $region48: #{style_extractor_forward.21} parent=35 // pred_check
                _
              $region49: #{style_extractor_forward.21} parent=35 // pred_check_branch
                %232 = sbr.rel (0) target = $region51
              $region50: #{style_extractor_forward.21} parent=35 // pred_region
                loop: start=0, step=1, limit=1
                $region52: #{style_extractor_forward.21} parent=50 // loop_pre_header
                  _
                $region53: #{style_extractor_forward.21} parent=50 // loop_header
                  %s234 = sphi 0, %s238
                  %p235 = scmp.ge.s32.totalorder %s234, 1
                  %s239 = sphi %s207, %s207
                  %s240 = sphi %s202, %s202
                $region54: #{style_extractor_forward.21} parent=50 // loop_header_branch
                  %237 = sbr.rel (%p235) target = $region58
                $region55: #{style_extractor_forward.21} parent=50 // loop_body
                  _
                $region56: #{style_extractor_forward.21} parent=50 // loop_footer
                  %s238 = sadd.s32 1, %s234
                $region57: #{style_extractor_forward.21} parent=50 // loop_footer_branch
                  %233 = sbr.rel target = $region53
                $region58: #{style_extractor_forward.21} parent=50 // loop_exit
                  _
                loop: start=0, step=1, limit=1
                $region59: #{style_extractor_forward.21} parent=50 // loop_pre_header
                  _
                $region60: #{style_extractor_forward.21} parent=50 // loop_header
                  %s243 = sphi 0, %s247
                  %p244 = scmp.ge.s32.totalorder %s243, 1
                  %s248 = sphi %s207, %s207
                  %s249 = sphi %s202, %s202
                $region61: #{style_extractor_forward.21} parent=50 // loop_header_branch
                  %246 = sbr.rel (%p244) target = $region65
                $region62: #{style_extractor_forward.21} parent=50 // loop_body
                  %v250 = vld [vmem:[%s248] sm:$0xf]
                  %251 = vst [vmem:[%s249] sm:$0xf] %v250
                  %v252 = vld [vmem:[%s248 + $0x24] sm:$0xf]
                  %253 = vst [vmem:[%s249 + $0x4] sm:$0xf] %v252
                  %v254 = vld [vmem:[%s248 + $0x48] sm:$0xf]
                  %255 = vst [vmem:[%s249 + $0x8] sm:$0xf] %v254
                  %v256 = vld [vmem:[%s248 + $0x6c] sm:$0xf]
                  %257 = vst [vmem:[%s249 + $0xc] sm:$0xf] %v256
                $region63: #{style_extractor_forward.21} parent=50 // loop_footer
                  %s247 = sadd.s32 1, %s243
                $region64: #{style_extractor_forward.21} parent=50 // loop_footer_branch
                  %242 = sbr.rel target = $region60
                $region65: #{style_extractor_forward.21} parent=50 // loop_exit
                  _
              $region51: #{style_extractor_forward.21} parent=35 // pred_fallthru
                _
            $region36: #{style_extractor_forward.21} parent=31 // pred_fallthru
              _
            // Predicated region
            $region37: #{style_extractor_forward.21} parent=31 // pred_check
              _
            $region38: #{style_extractor_forward.21} parent=31 // pred_check_branch
              %213 = sbr.rel (0) target = $region40
            $region39: #{style_extractor_forward.21} parent=31 // pred_region
              loop: start=0, step=1, limit=1
              $region41: #{style_extractor_forward.21} parent=39 // loop_pre_header
                _
              $region42: #{style_extractor_forward.21} parent=39 // loop_header
                %s216 = sphi 0, %s220
                %p217 = scmp.ge.s32.totalorder %s216, 1
                %s221 = sphi %s207, %s207
                %s222 = sphi %s202, %s202
              $region43: #{style_extractor_forward.21} parent=39 // loop_header_branch
                %219 = sbr.rel (%p217) target = $region47
              $region44: #{style_extractor_forward.21} parent=39 // loop_body
                %v223 = vld [vmem:[%s221] sm:$0xf]
                %224 = vst [vmem:[%s222] sm:$0xf] %v223
                %v225 = vld [vmem:[%s221 + $0x24] sm:$0xf]
                %226 = vst [vmem:[%s222 + $0x4] sm:$0xf] %v225
                %v227 = vld [vmem:[%s221 + $0x48] sm:$0xf]
                %228 = vst [vmem:[%s222 + $0x8] sm:$0xf] %v227
                %v229 = vld [vmem:[%s221 + $0x6c] sm:$0xf]
                %230 = vst [vmem:[%s222 + $0xc] sm:$0xf] %v229
              $region45: #{style_extractor_forward.21} parent=39 // loop_footer
                %s220 = sadd.s32 1, %s216
              $region46: #{style_extractor_forward.21} parent=39 // loop_footer_branch
                %215 = sbr.rel target = $region42
              $region47: #{style_extractor_forward.21} parent=39 // loop_exit
                _
            $region40: #{style_extractor_forward.21} parent=31 // pred_fallthru
              _
          $region32: #{style_extractor_forward.21} parent=27 // pred_fallthru
            _
          %258 = vnop
        $region28: #{style_extractor_forward.21} parent=23 // pred_fallthru
          _
        // Predicated region
        $region66: #{style_extractor_forward.21} parent=23 // pred_check
          %p259 = pneg %p79
        $region67: #{style_extractor_forward.21} parent=23 // pred_check_branch
          %261 = sbr.rel (%p259) target = $region69
        $region68: #{style_extractor_forward.21} parent=23 // pred_region
          %s262 = smul.u32 16, %s19
          %p263 = scmp.lt.s32.totalorder %s262, 143
          %s264 = scalar_select %p263, %s262, 143
          %p265 = scmp.lt.s32.totalorder %s18, 0
          %s266 = scalar_select %p265, %s18, 0
          %s267 = sadd.s32 %s266, %s264
          %s268 = smul.addr %s267, 4
          %s269 = scalar_lea.vmem %s1, %s268
          %s270 = smul.u32 16, %s19
        $region69: #{style_extractor_forward.21} parent=23 // pred_fallthru
          _
      $region24: #{style_extractor_forward.21} parent=5 // pred_fallthru
        _
      %p271 = scmp.le.s32.totalorder 1, %s10
      %p272 = scmp.lt.s32.totalorder %s10, 10
      %p273 = pnand %p271, %p272
      %p274 = pneg %p273
      // Predicated region
      $region70: #{style_extractor_forward.21} parent=5 // pred_check
        _
      $region71: #{style_extractor_forward.21} parent=5 // pred_check_branch
        %276 = sbr.rel (%p273) target = $region73
      $region72: #{style_extractor_forward.21} parent=5 // pred_region
        %s277 = ssub.s32 %s10, 1
        %s278 = sand.u32 %s44, 1
        %s279 = sand.u32 %s44, 1
        %s280 = smul.addr %s279, 16
        %s281 = scalar_lea.vmem [#allocation3], %s280
        // Predicated region
        $region74: #{style_extractor_forward.21} parent=72 // pred_check
          %p282 = pneg %p57
        $region75: #{style_extractor_forward.21} parent=72 // pred_check_branch
          %284 = sbr.rel (%p282) target = $region77
        $region76: #{style_extractor_forward.21} parent=72 // pred_region
          _
        $region77: #{style_extractor_forward.21} parent=72 // pred_fallthru
          _
        %s285 = sand.u32 %s44, 1
        %s286 = sand.u32 %s44, 1
        %s287 = smul.addr %s286, 16
        %s288 = scalar_lea.vmem [#allocation3], %s287
        %p289 = pneg %p57
        %p290 = pneg %p54
        %s291 = smul.u32 16, %s22
        %p292 = scmp.lt.s32.totalorder %s291, 143
        %s293 = scalar_select %p292, %s291, 143
        %p294 = scmp.lt.s32.totalorder %s21, 0
        %s295 = scalar_select %p294, %s21, 0
        %s296 = sadd.s32 %s295, %s293
        %s297 = smul.addr %s296, 4
        %s298 = scalar_lea.vmem %s1, %s297
        %p299 = pneg %p85
        %p300 = pneg %p82
        %p301 = scmp.lt.s32.totalorder %s21, 0
        %s302 = scalar_select %p301, %s21, 0
        %s303 = scalar_lea.vmem %s2, %s302
        %p304 = pneg %p111
        %p305 = pneg %p108
        %p306 = scmp.lt.s32.totalorder %s21, 0
        %s307 = scalar_select %p306, %s21, 0
        %s308 = scalar_lea.vmem %s3, %s307
        %p309 = pneg %p137
        %p310 = pneg %p134
        %p311 = pneg %p165
        %p312 = pneg %p162
        %s313 = smul.u32 4, %s20
        %p314 = scmp.lt.s32.totalorder %s313, 3
        %s315 = scalar_select %p314, %s313, 3
        %p316 = scmp.lt.s32.totalorder %s21, 0
        %s317 = scalar_select %p316, %s21, 0
        %s318 = sadd.s32 %s317, %s315
        %s319 = smul.addr %s318, 8
        %s320 = scalar_lea.vmem %s4, %s319
        %s321 = smul.u32 4, %s20
        %s322 = smul.u32 16, %s22
        %p323 = scmp.lt.s32.totalorder %s322, 143
        %s324 = scalar_select %p323, %s322, 143
        %p325 = scmp.lt.s32.totalorder %s21, 0
        %s326 = scalar_select %p325, %s21, 0
        %s327 = sadd.s32 %s326, %s324
        %s328 = smul.addr %s327, 4
        %s329 = scalar_lea.vmem %s1, %s328
        %s330 = smul.u32 16, %s22
        %p331 = scmp.lt.s32.totalorder %s21, 0
        %s332 = scalar_select %p331, %s21, 0
        %s333 = scalar_lea.vmem %s2, %s332
        %p334 = scmp.lt.s32.totalorder %s21, 0
        %s335 = scalar_select %p334, %s21, 0
        %s336 = scalar_lea.vmem %s3, %s335
        %s337 = smul.u32 4, %s20
        %p338 = scmp.lt.s32.totalorder %s337, 3
        %s339 = scalar_select %p338, %s337, 3
        %p340 = scmp.lt.s32.totalorder %s21, 0
        %s341 = scalar_select %p340, %s21, 0
        %s342 = sadd.s32 %s341, %s339
        %s343 = smul.addr %s342, 8
        %s344 = scalar_lea.vmem %s4, %s343
        %s345 = smul.u32 4, %s20
        %p347 = scmp.eq.s32.totalorder %s22, 0
        // Predicated region
        $region78: #{style_extractor_forward.21} parent=72 // pred_check
          %p348 = pneg %p347
        $region79: #{style_extractor_forward.21} parent=72 // pred_check_branch
          %350 = sbr.rel (%p348) target = $region81
        $region80: #{style_extractor_forward.21} parent=72 // pred_region
          %351 = vst [vmem:[#allocation2] sm:$0xff] 0.0
          %352 = vst [vmem:[#allocation2 + $0x8] sm:$0xff] 0.0
          %353 = vst [vmem:[#allocation2 + $0x10] sm:$0xff] 0.0
          %354 = vst [vmem:[#allocation2 + $0x18] sm:$0xff] 0.0
        $region81: #{style_extractor_forward.21} parent=72 // pred_fallthru
          _
        %v355 = vld [vmem:[#allocation2] sm:$0xff]
        %v356 = vld [vmem:[#allocation2 + $0x8] sm:$0xff]
        %v357 = vld [vmem:[#allocation2 + $0x10] sm:$0xff]
        %v358 = vld [vmem:[#allocation2 + $0x18] sm:$0xff]
        %v359 = vld [vmem:[%s281] sm:$0xf]
        %v360 = vld [vmem:[%s281 + $0x4] sm:$0xf]
        %v361 = vld [vmem:[%s281 + $0x8] sm:$0xf]
        %v362 = vld [vmem:[%s281 + $0xc] sm:$0xf]
        %v363 = vld [vmem:[%s329] sm:$0xf]
        %v364 = vld [vmem:[%s329 + $0x4] sm:$0xf]
        %v365 = vld [vmem:[%s329 + $0x8] sm:$0xf]
        %v366 = vld [vmem:[%s329 + $0xc] sm:$0xf]
        %v367 = vld [vmem:[%s329 + $0x10] sm:$0xf]
        %v368 = vld [vmem:[%s329 + $0x14] sm:$0xf]
        %v369 = vld [vmem:[%s329 + $0x18] sm:$0xf]
        %v370 = vld [vmem:[%s329 + $0x1c] sm:$0xf]
        %v371 = vld [vmem:[%s329 + $0x20] sm:$0xf]
        %v372 = vld [vmem:[%s329 + $0x24] sm:$0xf]
        %v373 = vld [vmem:[%s329 + $0x28] sm:$0xf]
        %v374 = vld [vmem:[%s329 + $0x2c] sm:$0xf]
        %v375 = vld [vmem:[%s329 + $0x30] sm:$0xf]
        %v376 = vld [vmem:[%s329 + $0x34] sm:$0xf]
        %v377 = vld [vmem:[%s329 + $0x38] sm:$0xf]
        %v378 = vld [vmem:[%s329 + $0x3c] sm:$0xf]
        %v383 = vunpack.c.l.b16 %v359
        %v384 = vunpack.c.l.b16 %v360
        %v385 = vunpack.c.l.b16 %v361
        %v386 = vunpack.c.l.b16 %v362
        %v387 = vpack.c.b16 %v384, %v383
        %v388 = vpack.c.b16 %v386, %v385
        %v407 = vunpack.c.l.b16 %v363
        %v408 = vunpack.c.l.b16 %v364
        %v409 = vunpack.c.l.b16 %v365
        %v410 = vunpack.c.l.b16 %v366
        %v411 = vunpack.c.l.b16 %v367
        %v412 = vunpack.c.l.b16 %v368
        %v413 = vunpack.c.l.b16 %v369
        %v414 = vunpack.c.l.b16 %v370
        %v415 = vunpack.c.l.b16 %v371
        %v416 = vunpack.c.l.b16 %v372
        %v417 = vunpack.c.l.b16 %v373
        %v418 = vunpack.c.l.b16 %v374
        %v419 = vunpack.c.l.b16 %v375
        %v420 = vunpack.c.l.b16 %v376
        %v421 = vunpack.c.l.b16 %v377
        %v422 = vunpack.c.l.b16 %v378
        %v423 = vpack.c.b16 %v408, %v407
        %v424 = vpack.c.b16 %v410, %v409
        %v425 = vpack.c.b16 %v412, %v411
        %v426 = vpack.c.b16 %v414, %v413
        %v427 = vpack.c.b16 %v416, %v415
        %v428 = vpack.c.b16 %v418, %v417
        %v429 = vpack.c.b16 %v420, %v419
        %v430 = vpack.c.b16 %v422, %v421
        %439 = vmatprep.subr.bf16.mxu0 0
        %440 = vmatpush1.bf16.msra.mxu0 %v423
        %441 = vmatprep.subr.bf16.mxu0 0
        %442 = vmatpush1.bf16.msra.mxu0 %v424
        %443 = vmatprep.subr.bf16.mxu0 0
        %444 = vmatpush1.bf16.msra.mxu0 %v425
        %445 = vmatprep.subr.bf16.mxu0 0
        %446 = vmatpush1.bf16.msra.mxu0 %v426
        %447 = vmatprep.subr.bf16.mxu0 0
        %448 = vmatpush1.bf16.msra.mxu0 %v427
        %449 = vmatprep.subr.bf16.mxu0 0
        %450 = vmatpush1.bf16.msra.mxu0 %v428
        %451 = vmatprep.subr.bf16.mxu0 0
        %452 = vmatpush1.bf16.msra.mxu0 %v429
        %453 = vmatprep.subr.bf16.mxu0 0
        %454 = vmatpush1.bf16.msra.mxu0 %v430
        %455 = vmatprep.subr.bf16.mxu0 0
        %456 = vmatpush1.bf16.msra.mxu0 0
        %457 = vmatprep.subr.bf16.mxu0 0
        %458 = vmatpush1.bf16.msra.mxu0 0
        %459 = vmatprep.subr.bf16.mxu0 0
        %460 = vmatpush1.bf16.msra.mxu0 0
        %461 = vmatprep.subr.bf16.mxu0 0
        %462 = vmatpush1.bf16.msra.mxu0 0
        %463 = vmatprep.subr.bf16.mxu0 0
        %464 = vmatpush1.bf16.msra.mxu0 0
        %465 = vmatprep.subr.bf16.mxu0 0
        %466 = vmatpush1.bf16.msra.mxu0 0
        %467 = vmatprep.subr.bf16.mxu0 0
        %468 = vmatpush1.bf16.msra.mxu0 0
        %469 = vmatprep.subr.bf16.mxu0 0
        %470 = vmatpush1.bf16.msra.mxu0 0
        %471 = vmatprep.mubr.bf16.mxu0 0
        %472 = vmatmul.mubr.bf16.gmra.mrb[0].mxu0 %v387
        %v473 = vpop.f32.mrb[0].mxu0
        %v474 = vadd.f32 0.0, %v473
        %v475 = vpop.f32.mrb[0].mxu0
        %v476 = vpop.f32.mrb[0].mxu0
        %v477 = vadd.f32 0.0, %v476
        %v478 = vpop.f32.mrb[0].mxu0
        %479 = vmatprep.mubr.bf16.mxu0 0
        %480 = vmatmul.mubr.bf16.gmra.mrb[0].mxu0 %v388
        %v481 = vpop.f32.mrb[0].mxu0
        %v482 = vadd.f32 0.0, %v481
        %v483 = vpop.f32.mrb[0].mxu0
        %v484 = vpop.f32.mrb[0].mxu0
        %v485 = vadd.f32 0.0, %v484
        %v486 = vpop.f32.mrb[0].mxu0
        %487 = vdwg.mxu0
        %v488 = vadd.f32 %v355, %v474
        %v489 = vadd.f32 %v356, %v477
        %v490 = vadd.f32 %v357, %v482
        %v491 = vadd.f32 %v358, %v485
        %492 = vst [vmem:[#allocation2] sm:$0xff] %v488
        %493 = vst [vmem:[#allocation2 + $0x8] sm:$0xff] %v489
        %494 = vst [vmem:[#allocation2 + $0x10] sm:$0xff] %v490
        %495 = vst [vmem:[#allocation2 + $0x18] sm:$0xff] %v491
        %p496 = scmp.eq.s32.totalorder %s22, 8
        // Predicated region
        $region82: #{style_extractor_forward.21} parent=72 // pred_check
          %p497 = pneg %p496
        $region83: #{style_extractor_forward.21} parent=72 // pred_check_branch
          %499 = sbr.rel (%p497) target = $region85
        $region84: #{style_extractor_forward.21} parent=72 // pred_region
          %v500 = vld [vmem:[#allocation2] sm:$0xff]
          %v501 = vld [vmem:[#allocation2 + $0x8] sm:$0xff]
          %v502 = vld [vmem:[#allocation2 + $0x10] sm:$0xff]
          %v503 = vld [vmem:[#allocation2 + $0x18] sm:$0xff]
          %v504 = vld [vmem:[%s333] sm:$0x1]
          %v506 = vlaneseq
          %v507 = vshrl.u32 %v506, 7
          %v508 = vsub.s32 0, %v507
          %v509 = vrot.slane %v504, %v508
          %v511 = vmul.f32 %v500, %v509
          %v512 = vmul.f32 %v501, %v509
          %v513 = vmul.f32 %v502, %v509
          %v514 = vmul.f32 %v503, %v509
          %v515 = vld [vmem:[%s336] sm:$0x1]
          %v517 = vlaneseq
          %v518 = vshrl.u32 %v517, 7
          %v519 = vsub.s32 0, %v518
          %v520 = vrot.slane %v515, %v519
          %v522 = vadd.f32 %v511, %v520
          %v523 = vadd.f32 %v512, %v520
          %v524 = vadd.f32 %v513, %v520
          %v525 = vadd.f32 %v514, %v520
          %v526 = vmax.f32 %v522, 0.0
          %v527 = vmax.f32 %v523, 0.0
          %v528 = vmax.f32 %v524, 0.0
          %v529 = vmax.f32 %v525, 0.0
          %530 = vst [vmem:[%s344] sm:$0xff] %v526
          %531 = vst [vmem:[%s344 + $0x8] sm:$0xff] %v527
          %532 = vst [vmem:[%s344 + $0x10] sm:$0xff] %v528
          %533 = vst [vmem:[%s344 + $0x18] sm:$0xff] %v529
        $region85: #{style_extractor_forward.21} parent=72 // pred_fallthru
          _
        %s534 = smul.u32 4, %s20
        %p535 = scmp.lt.s32.totalorder %s534, 3
        %s536 = scalar_select %p535, %s534, 3
        %p537 = scmp.lt.s32.totalorder %s21, 0
        %s538 = scalar_select %p537, %s21, 0
        %s539 = sadd.s32 %s538, %s536
        %s540 = smul.addr %s539, 8
        %s541 = scalar_lea.vmem %s4, %s540
        // Predicated region
        $region86: #{style_extractor_forward.21} parent=72 // pred_check
          %p542 = pneg %p162
        $region87: #{style_extractor_forward.21} parent=72 // pred_check_branch
          %544 = sbr.rel (%p542) target = $region89
        $region88: #{style_extractor_forward.21} parent=72 // pred_region
          %s545 = smul.u32 4, %s20
        $region89: #{style_extractor_forward.21} parent=72 // pred_fallthru
          _
        // Predicated region
        $region90: #{style_extractor_forward.21} parent=72 // pred_check
          %p546 = pneg %p162
        $region91: #{style_extractor_forward.21} parent=72 // pred_check_branch
          %548 = sbr.rel (%p546) target = $region93
        $region92: #{style_extractor_forward.21} parent=72 // pred_region
          %s549 = smul.u32 4, %s20
          %p550 = scmp.lt.s32.totalorder %s549, 3
          %s551 = scalar_select %p550, %s549, 3
          %p552 = scmp.lt.s32.totalorder %s21, 0
          %s553 = scalar_select %p552, %s21, 0
          %s554 = sadd.s32 %s553, %s551
          %s555 = smul.addr %s554, 8
          %s556 = scalar_lea.vmem %s4, %s555
        $region93: #{style_extractor_forward.21} parent=72 // pred_fallthru
          _
      $region73: #{style_extractor_forward.21} parent=5 // pred_fallthru
        _
      %p557 = scmp.le.s32.totalorder 2, %s10
      // Predicated region
      $region94: #{style_extractor_forward.21} parent=5 // pred_check
        %p558 = pneg %p557
      $region95: #{style_extractor_forward.21} parent=5 // pred_check_branch
        %560 = sbr.rel (%p558) target = $region97
      $region96: #{style_extractor_forward.21} parent=5 // pred_region
        %s561 = ssub.s32 %s10, 2
      $region97: #{style_extractor_forward.21} parent=5 // pred_fallthru
        _
    $region6: #{style_extractor_forward.21} parent=1 // loop_footer
      %s14 = sadd.s32 1, %s10
    $region7: #{style_extractor_forward.21} parent=1 // loop_footer_branch
      %9 = sbr.rel target = $region3
    $region8: #{style_extractor_forward.21} parent=1 // loop_exit
      _

</llo_original>
